<compile_context>
chip_gen: v7x
topology: tpu7x:2x2x1
jax: 0.10.0
libtpu: 0.0.40
codegen_flags: <defaults>
</compile_context>

<pallas_src>
import numpy as np
import jax
import jax.numpy as jnp
from jax import lax
from jax.experimental import pallas as pl
from jax.experimental.pallas import tpu as pltpu

# ---------------- configuration (small synthetic shapes) ----------------
BATCH = 2
SEQ = 8
VOC_SIZE = 24
EMB_SIZE = 16
HIDDEN = 32
NUM_LAYERS = 2

LANE = 128
SUBLANE = 8
TIME_CHUNK_TARGET = 4    # toy value; at production pick ~32-64 from the VMEM budget


def _round_up(x, m):
    return (x + m - 1) // m * m


def _pick_time_chunk(seq, target=TIME_CHUNK_TARGET):
    tc = min(target, seq)
    while seq % tc:
        tc -= 1
    return tc


def _make_gru_critic_kernel(num_layers, seq_len, batch_p, hidden_p, out_p,
                            time_chunk, unroll):
    L, S, Bp, Hp, Vp, Tc = num_layers, seq_len, batch_p, hidden_p, out_p, time_chunk
    G3 = 3 * Hp
    n_chunks = S // Tc
    rows_per_chunk = Tc * Bp

    def kernel(*refs):
        x_ref, h0_ref = refs[0], refs[1]
        idx = 2
        layer_w = []
        for _ in range(L):
            layer_w.append(refs[idx:idx + 4])   # w_ih_p, b_ih_p, w_hh_p, b_hh_p
            idx += 4
        w_head_ref, b_head_ref = refs[idx], refs[idx + 1]
        idx += 2
        head_ref, hout_ref = refs[idx], refs[idx + 1]
        idx += 2
        buf0, buf1, gx_buf = refs[idx], refs[idx + 1], refs[idx + 2]
        bufs = (buf0, buf1)

        # Hoisted broadcast for the fused head bias (JAX does not CSE broadcasts).
        b_head_b = jnp.broadcast_to(b_head_ref[...], (rows_per_chunk, Vp))

        for l in range(L):
            w_ih_ref, b_ih_ref, w_hh_ref, b_hh_ref = layer_w[l]
            in_ref = x_ref if l == 0 else bufs[(l - 1) % 2]
            out_buf = bufs[l % 2]
            is_last = (l == L - 1)

            # Per-layer hoisted bias broadcasts.
            b_ih_b = jnp.broadcast_to(b_ih_ref[...], (rows_per_chunk, G3))
            b_hh_b = jnp.broadcast_to(b_hh_ref[...], (Bp, G3))

            def compute_gx_chunk(c, slot, _in_ref=in_ref, _w_ih_ref=w_ih_ref,
                                 _b_ih_b=b_ih_b):
                # Input->hidden gates for one time chunk: one MXU matmul, b_ih folded in.
                base = c * rows_per_chunk
                x_chunk = _in_ref[pl.ds(base, rows_per_chunk), :]
                gx_buf[slot] = (
                    jnp.dot(x_chunk, _w_ih_ref[...],
                            preferred_element_type=jnp.float32) + _b_ih_b)

            # Prime chunk 0, then double-buffer: issue chunk c+1's gx matmul before
            # the serial recurrence consumes chunk c (MXU work overlaps recurrence).
            compute_gx_chunk(0, 0)
            h = h0_ref[l]                                    # (Bp, Hp), padded lanes = 0
            for c in range(n_chunks):
                slot = c & 1
                if c + 1 < n_chunks:
                    compute_gx_chunk(c + 1, 1 - slot)

                gx_view = gx_buf.at[slot]                    # (Tc*Bp, 3Hp) view
                base = c * rows_per_chunk

                def step(t, h, _gx_view=gx_view, _base=base,
                         _w_hh_ref=w_hh_ref, _b_hh_b=b_hh_b, _out_buf=out_buf):
                    row = pl.multiple_of(t * Bp, SUBLANE)
                    gx = _gx_view[pl.ds(row, Bp), :]                       # (Bp, 3Hp)
                    gh = jnp.dot(h, _w_hh_ref[...],
                                 preferred_element_type=jnp.float32) + _b_hh_b
                    # PyTorch gate order [reset, update, new]; each gate block is
                    # padded to Hp (multiple of 128 lanes) -> vreg-aligned slices.
                    r = jax.nn.sigmoid(gx[:, 0:Hp] + gh[:, 0:Hp])
                    z = jax.nn.sigmoid(gx[:, Hp:2 * Hp] + gh[:, Hp:2 * Hp])
                    n = jnp.tanh(gx[:, 2 * Hp:3 * Hp] + r * gh[:, 2 * Hp:3 * Hp])
                    h_new = (1.0 - z) * n + z * h                          # pad lanes stay 0
                    out_row = pl.multiple_of(_base + t * Bp, SUBLANE)
                    _out_buf[pl.ds(out_row, Bp), :] = h_new
                    return h_new

                # Bounded unroll: keeps LLO cross-step visibility without exploding
                # vreg live ranges / code size at production S.
                h = lax.fori_loop(0, Tc, step, h, unroll=unroll)

                if is_last:
                    # Fused output+critic head for this chunk (lane-dense Vp>=128).
                    chunk_h = out_buf[pl.ds(base, rows_per_chunk), :]
                    head_ref[pl.ds(base, rows_per_chunk), :] = (
                        jnp.dot(chunk_h, w_head_ref[...],
                                preferred_element_type=jnp.float32) + b_head_b)

            hout_ref[l] = h

    return kernel


def init_params(key, voc_size, emb_size, hidden, num_layers):
    """Deterministic synthetic parameters with PyTorch-style shapes."""
    n_keys = 2 + 4 * num_layers + 4
    keys = list(jax.random.split(key, n_keys))
    k = iter(keys)
    scale = 0.1
    params = {
        'embedding': scale * jax.random.normal(next(k), (voc_size, emb_size), jnp.float32),
        'w_ih': [], 'w_hh': [], 'b_ih': [], 'b_hh': [],
    }
    for l in range(num_layers):
        in_size = emb_size if l == 0 else hidden
        params['w_ih'].append(scale * jax.random.normal(next(k), (3 * hidden, in_size), jnp.float32))
        params['w_hh'].append(scale * jax.random.normal(next(k), (3 * hidden, hidden), jnp.float32))
        params['b_ih'].append(scale * jax.random.normal(next(k), (3 * hidden,), jnp.float32))
        params['b_hh'].append(scale * jax.random.normal(next(k), (3 * hidden,), jnp.float32))
    params['w_lin'] = scale * jax.random.normal(next(k), (voc_size, hidden), jnp.float32)
    params['b_lin'] = scale * jax.random.normal(next(k), (voc_size,), jnp.float32)
    params['w_crit'] = scale * jax.random.normal(next(k), (1, hidden), jnp.float32)
    params['b_crit'] = scale * jax.random.normal(next(k), (1,), jnp.float32)
    return params


def prepare_kernel_params(params, hidden, num_layers):
    """One-time transform to kernel layout: transpose + lane-pad gates + fuse heads.

    Padded weight rows/cols and padded biases are ZERO, so padded hidden lanes stay
    exactly 0 through the recurrence and padded head columns are 0 (sliced off in the
    wrapper) -> identical math on the real lanes.
    """
    H = hidden
    Hp = _round_up(H, LANE)
    V = params['w_lin'].shape[0]
    Vp = _round_up(V + 1, LANE)
    L = num_layers

    def pad_gate_cols(w_t):                       # (in, 3H) -> (in, 3Hp)
        out = jnp.zeros((w_t.shape[0], 3 * Hp), jnp.float32)
        for g in range(3):
            out = out.at[:, g * Hp:g * Hp + H].set(w_t[:, g * H:(g + 1) * H])
        return out

    def pad_gate_bias(b):                         # (3H,) -> (1, 3Hp)
        out = jnp.zeros((3 * Hp,), jnp.float32)
        for g in range(3):
            out = out.at[g * Hp:g * Hp + H].set(b[g * H:(g + 1) * H])
        return out.reshape(1, -1)

    layers = []
    for l in range(L):
        w_ih_p = pad_gate_cols(params['w_ih'][l].T)          # (in, 3Hp)
        if l > 0:
            # layer > 0 consumes the padded hidden buffer -> pad input rows H -> Hp
            w_ih_p = jnp.pad(w_ih_p, ((0, Hp - H), (0, 0)))
        w_hh_p = jnp.pad(pad_gate_cols(params['w_hh'][l].T), ((0, Hp - H), (0, 0)))
        layers.append((w_ih_p,
                       pad_gate_bias(params['b_ih'][l]),
                       w_hh_p,
                       pad_gate_bias(params['b_hh'][l])))

    # Fused output + critic head, lane-padded to Vp columns (critic = column V).
    w_head = jnp.zeros((Hp, Vp), jnp.float32)
    w_head = w_head.at[:H, :V].set(params['w_lin'].T)
    w_head = w_head.at[:H, V:V + 1].set(params['w_crit'].T)
    b_head = jnp.zeros((1, Vp), jnp.float32)
    b_head = b_head.at[0, :V].set(params['b_lin'])
    b_head = b_head.at[0, V].set(params['b_crit'][0])

    return {
        'embedding': params['embedding'].astype(jnp.float32),
        'layers': layers,
        'w_head': w_head, 'b_head': b_head,
        'H': H, 'Hp': Hp, 'V': V, 'Vp': Vp, 'L': L,
    }


def rnn_critic_forward(kparams, input_ids, hidden_state=None):
    """Pallas-backed forward.

    Returns (output_data (B,S,V), critic_data (B,S), hidden_out (L,B,H)),
    matching RNNCritic.forward.
    """
    B, S = input_ids.shape
    L, H, Hp, V, Vp = (kparams['L'], kparams['H'], kparams['Hp'],
                       kparams['V'], kparams['Vp'])
    Bp = _round_up(max(B, 1), SUBLANE)        # sublane-aligned batch
    Tc = _pick_time_chunk(S)                  # time-chunk for gx/head pipelining
    unroll = min(Tc, 4)

    # glue: time-major embedding gather directly into (S*Bp, E); padded batch rows
    # use token 0 and are sliced off after the kernel.
    ids_tm = jnp.zeros((S, Bp), input_ids.dtype).at[:, :B].set(input_ids.T)
    x_flat = jnp.take(kparams['embedding'], ids_tm.reshape(-1), axis=0)

    h0 = jnp.zeros((L, Bp, Hp), jnp.float32)
    if hidden_state is not None:
        h0 = h0.at[:, :B, :H].set(hidden_state.astype(jnp.float32))

    ins = [x_flat, h0]
    for lw in kparams['layers']:
        ins += list(lw)
    ins += [kparams['w_head'], kparams['b_head']]

    out_shapes = (
        jax.ShapeDtypeStruct((S * Bp, Vp), jnp.float32),   # fused logits+critic slab
        jax.ShapeDtypeStruct((L, Bp, Hp), jnp.float32),    # hidden out (padded)
    )
    scratch_shapes = [
        pltpu.VMEM((S * Bp, Hp), jnp.float32),             # layer ping buffer
        pltpu.VMEM((S * Bp, Hp), jnp.float32),             # layer pong buffer
        pltpu.VMEM((2, Tc * Bp, 3 * Hp), jnp.float32),     # gx time-chunk double buffer
    ]

    # VMEM limit sized from the actual footprint (inputs/outputs are fully resident,
    # no BlockSpec pipelining) with headroom; clamped to v7x physical 64 MiB.
    def _nbytes(shape, dtype):
        return int(np.prod(shape)) * np.dtype(dtype).itemsize
    io_bytes = sum(_nbytes(a.shape, a.dtype) for a in ins)
    out_bytes = sum(_nbytes(s.shape, s.dtype) for s in out_shapes)
    scr_bytes = (2 * _nbytes((S * Bp, Hp), jnp.float32)
                 + _nbytes((2, Tc * Bp, 3 * Hp), jnp.float32))
    vmem_limit = int(min(max(2 * (io_bytes + out_bytes + scr_bytes) + (4 << 20),
                             16 << 20), 64 << 20))

    vmem = pl.BlockSpec(memory_space=pltpu.MemorySpace.VMEM)
    head_flat, hout_p = pl.pallas_call(
        _make_gru_critic_kernel(L, S, Bp, Hp, Vp, Tc, unroll),
        out_shape=out_shapes,
        in_specs=[vmem] * len(ins),
        out_specs=(vmem, vmem),
        scratch_shapes=scratch_shapes,
        compiler_params=pltpu.CompilerParams(vmem_limit_bytes=vmem_limit),
    )(*ins)

    head_tm = head_flat.reshape(S, Bp, Vp)
    output_data = jnp.transpose(head_tm[:, :B, :V], (1, 0, 2))   # (B, S, V)
    critic_data = head_tm[:, :B, V].T                            # (B, S)
    hidden_out = hout_p[:, :B, :H]                               # (L, B, H)
    return output_data, critic_data, hidden_out


def reference_forward(params, input_ids, hidden_state=None):
    """Pure-JAX reference mirroring torch semantics (batch-first GRU, gates r,z,n)."""
    B, S = input_ids.shape
    L, H = NUM_LAYERS, HIDDEN
    if hidden_state is None:
        hidden_state = jnp.zeros((L, B, H), jnp.float32)
    x = params['embedding'][input_ids]                  # (B, S, E)
    hs = []
    for l in range(L):
        h_l = hidden_state[l]
        outs = []
        for t in range(S):
            x_t = x[:, t, :]
            gx = x_t @ params['w_ih'][l].T + params['b_ih'][l]
            gh = h_l @ params['w_hh'][l].T + params['b_hh'][l]
            r = jax.nn.sigmoid(gx[:, :H] + gh[:, :H])
            z = jax.nn.sigmoid(gx[:, H:2 * H] + gh[:, H:2 * H])
            n = jnp.tanh(gx[:, 2 * H:] + r * gh[:, 2 * H:])
            h_l = (1.0 - z) * n + z * h_l
            outs.append(h_l)
        x = jnp.stack(outs, axis=1)                     # (B, S, H)
        hs.append(h_l)
    h_out = jnp.stack(hs, axis=0)
    flat = x.reshape(B * S, H)
    logits = (flat @ params['w_lin'].T + params['b_lin']).reshape(B, S, -1)
    critic = (flat @ params['w_crit'].T + params['b_crit']).reshape(B, -1)
    return logits, critic, h_out


if __name__ == "__main__":
    key = jax.random.PRNGKey(0)
    pkey, dkey = jax.random.split(key)
    params = init_params(pkey, VOC_SIZE, EMB_SIZE, HIDDEN, NUM_LAYERS)
    kparams = prepare_kernel_params(params, HIDDEN, NUM_LAYERS)  # one-time weight prep
    input_ids = jax.random.randint(dkey, (BATCH, SEQ), 0, VOC_SIZE, dtype=jnp.int32)

    out_data, critic_data, h_out = jax.block_until_ready(
        rnn_critic_forward(kparams, input_ids))

    ref_out, ref_critic, ref_h = reference_forward(params, input_ids)
    np.testing.assert_allclose(np.asarray(out_data), np.asarray(ref_out),
                               rtol=5e-3, atol=5e-3)
    np.testing.assert_allclose(np.asarray(critic_data), np.asarray(ref_critic),
                               rtol=5e-3, atol=5e-3)
    np.testing.assert_allclose(np.asarray(h_out), np.asarray(ref_h),
                               rtol=5e-3, atol=5e-3)

    assert out_data.shape == (BATCH, SEQ, VOC_SIZE)
    assert critic_data.shape == (BATCH, SEQ)
    assert h_out.shape == (NUM_LAYERS, BATCH, HIDDEN)
    print("KERNEL_OK")
</pallas_src>

<mosaic_0001>
module attributes {stable_mosaic.version = 11 : i64} {
  func.func @kernel(%arg0: memref<64x16xf32, #tpu.memory_space<vmem>>, %arg1: memref<2x8x128xf32, #tpu.memory_space<vmem>>, %arg2: memref<16x384xf32, #tpu.memory_space<vmem>>, %arg3: memref<1x384xf32, #tpu.memory_space<vmem>>, %arg4: memref<128x384xf32, #tpu.memory_space<vmem>>, %arg5: memref<1x384xf32, #tpu.memory_space<vmem>>, %arg6: memref<128x384xf32, #tpu.memory_space<vmem>>, %arg7: memref<1x384xf32, #tpu.memory_space<vmem>>, %arg8: memref<128x384xf32, #tpu.memory_space<vmem>>, %arg9: memref<1x384xf32, #tpu.memory_space<vmem>>, %arg10: memref<128x128xf32, #tpu.memory_space<vmem>>, %arg11: memref<1x128xf32, #tpu.memory_space<vmem>>, %arg12: memref<64x128xf32, #tpu.memory_space<vmem>>, %arg13: memref<2x8x128xf32, #tpu.memory_space<vmem>>, %arg14: memref<64x128xf32, #tpu.memory_space<vmem>>, %arg15: memref<64x128xf32, #tpu.memory_space<vmem>>, %arg16: memref<2x32x384xf32, #tpu.memory_space<vmem>>) attributes {dimension_semantics = [], scalar_prefetch = 0 : i64, scratch_operands = 3 : i64, tpu.core_type = #tpu.core_type<tc>} {
    %c0 = arith.constant 0 : index
    %c0_0 = arith.constant 0 : index
    %0 = vector.load %arg11[%c0, %c0_0] : memref<1x128xf32, #tpu.memory_space<vmem>>, vector<1x128xf32>
    %1 = vector.shape_cast %0 : vector<1x128xf32> to vector<1x128xf32>
    %2 = vector.broadcast %1 : vector<1x128xf32> to vector<32x128xf32>
    %c0_1 = arith.constant 0 : index
    %c0_2 = arith.constant 0 : index
    %3 = vector.load %arg3[%c0_1, %c0_2] : memref<1x384xf32, #tpu.memory_space<vmem>>, vector<1x384xf32>
    %4 = vector.shape_cast %3 : vector<1x384xf32> to vector<1x384xf32>
    %5 = vector.broadcast %4 : vector<1x384xf32> to vector<32x384xf32>
    %c0_3 = arith.constant 0 : index
    %c0_4 = arith.constant 0 : index
    %6 = vector.load %arg5[%c0_3, %c0_4] : memref<1x384xf32, #tpu.memory_space<vmem>>, vector<1x384xf32>
    %7 = vector.shape_cast %6 : vector<1x384xf32> to vector<1x384xf32>
    %8 = vector.broadcast %7 : vector<1x384xf32> to vector<8x384xf32>
    %c0_5 = arith.constant 0 : index
    %c0_6 = arith.constant 0 : index
    %9 = vector.load %arg0[%c0_5, %c0_6] : memref<64x16xf32, #tpu.memory_space<vmem>>, vector<32x16xf32>
    %c0_7 = arith.constant 0 : index
    %c0_8 = arith.constant 0 : index
    %10 = vector.load %arg2[%c0_7, %c0_8] : memref<16x384xf32, #tpu.memory_space<vmem>>, vector<16x384xf32>
    %cst = arith.constant dense<0.000000e+00> : vector<32x384xf32>
    %11 = tpu.matmul %9, %10, %cst {dimension_numbers = #tpu.dot_dimension_numbers<[1], [0], [0], [1], [0, 0, 1, 1], [], []>} : vector<32x16xf32>, vector<16x384xf32>, vector<32x384xf32> -> vector<32x384xf32>
    %12 = arith.addf %11, %5 : vector<32x384xf32>
    %c0_9 = arith.constant 0 : index
    %c0_10 = arith.constant 0 : index
    %c0_11 = arith.constant 0 : index
    %13 = vector.load %arg16[%c0_9, %c0_10, %c0_11] : memref<2x32x384xf32, #tpu.memory_space<vmem>>, vector<1x32x384xf32>
    %14 = vector.shape_cast %13 : vector<1x32x384xf32> to vector<32x384xf32>
    %15 = vector.shape_cast %12 : vector<32x384xf32> to vector<1x32x384xf32>
    tpu.vector_store %arg16[%c0_9, %c0_10, %c0_11], %15 {strides = array<i32>} : memref<2x32x384xf32, #tpu.memory_space<vmem>>, vector<1x32x384xf32>,
    %c0_12 = arith.constant 0 : index
    %c0_13 = arith.constant 0 : index
    %c0_14 = arith.constant 0 : index
    %16 = vector.load %arg1[%c0_12, %c0_13, %c0_14] : memref<2x8x128xf32, #tpu.memory_space<vmem>>, vector<1x8x128xf32>
    %17 = vector.shape_cast %16 : vector<1x8x128xf32> to vector<8x128xf32>
    %c32 = arith.constant 32 : index
    %c0_15 = arith.constant 0 : index
    %18 = vector.load %arg0[%c32, %c0_15] : memref<64x16xf32, #tpu.memory_space<vmem>>, vector<32x16xf32>
    %c0_16 = arith.constant 0 : index
    %c0_17 = arith.constant 0 : index
    %19 = vector.load %arg2[%c0_16, %c0_17] : memref<16x384xf32, #tpu.memory_space<vmem>>, vector<16x384xf32>
    %cst_18 = arith.constant dense<0.000000e+00> : vector<32x384xf32>
    %20 = tpu.matmul %18, %19, %cst_18 {dimension_numbers = #tpu.dot_dimension_numbers<[1], [0], [0], [1], [0, 0, 1, 1], [], []>} : vector<32x16xf32>, vector<16x384xf32>, vector<32x384xf32> -> vector<32x384xf32>
    %21 = arith.addf %20, %5 : vector<32x384xf32>
    %c1 = arith.constant 1 : index
    %c0_19 = arith.constant 0 : index
    %c0_20 = arith.constant 0 : index
    %22 = vector.load %arg16[%c1, %c0_19, %c0_20] : memref<2x32x384xf32, #tpu.memory_space<vmem>>, vector<1x32x384xf32>
    %23 = vector.shape_cast %22 : vector<1x32x384xf32> to vector<32x384xf32>
    %24 = vector.shape_cast %21 : vector<32x384xf32> to vector<1x32x384xf32>
    tpu.vector_store %arg16[%c1, %c0_19, %c0_20], %24 {strides = array<i32>} : memref<2x32x384xf32, #tpu.memory_space<vmem>>, vector<1x32x384xf32>,
    %c0_i32 = arith.constant 0 : i32
    %c0_i32_21 = arith.constant 0 : i32
    %c8_i32 = arith.constant 8 : i32
    %25 = arith.muli %c0_i32_21, %c8_i32 : i32
    %26 = tpu.assume_multiple %25, 8 : i32
    %c0_i32_22 = arith.constant 0 : i32
    %c0_i32_23 = arith.constant 0 : i32
    %27 = tpu.memref_slice %arg16[%c0_i32, %c0_i32_22, %c0_i32_23] : memref<2x32x384xf32, #tpu.memory_space<vmem>> -> memref<1x32x384xf32, #tpu.memory_space<vmem>>
    %28 = tpu.memref_squeeze %27 : memref<1x32x384xf32, #tpu.memory_space<vmem>> -> memref<32x384xf32, #tpu.memory_space<vmem>>
    %29 = arith.index_cast %26 : i32 to index
    %c0_24 = arith.constant 0 : index
    %30 = vector.load %28[%29, %c0_24] : memref<32x384xf32, #tpu.memory_space<vmem>>, vector<8x384xf32>
    %c0_25 = arith.constant 0 : index
    %c0_26 = arith.constant 0 : index
    %31 = vector.load %arg4[%c0_25, %c0_26] : memref<128x384xf32, #tpu.memory_space<vmem>>, vector<128x384xf32>
    %cst_27 = arith.constant dense<0.000000e+00> : vector<8x384xf32>
    %32 = tpu.matmul %17, %31, %cst_27 {dimension_numbers = #tpu.dot_dimension_numbers<[1], [0], [0], [1], [0, 0, 1, 1], [], []>} : vector<8x128xf32>, vector<128x384xf32>, vector<8x384xf32> -> vector<8x384xf32>
    %33 = arith.addf %32, %8 : vector<8x384xf32>
    %34 = vector.extract_strided_slice %30 {offsets = [0, 0], sizes = [8, 128], strides = [1, 1]} : vector<8x384xf32> to vector<8x128xf32>
    %35 = vector.extract_strided_slice %33 {offsets = [0, 0], sizes = [8, 128], strides = [1, 1]} : vector<8x384xf32> to vector<8x128xf32>
    %36 = arith.addf %34, %35 : vector<8x128xf32>
    %37 = arith.negf %36 : vector<8x128xf32>
    %38 = math.exp %37 : vector<8x128xf32>
    %cst_28 = arith.constant 1.000000e+00 : f32
    %39 = vector.broadcast %cst_28 : f32 to vector<8x128xf32>
    %40 = arith.addf %39, %38 : vector<8x128xf32>
    %41 = arith.divf %39, %40 : vector<8x128xf32>
    %42 = vector.extract_strided_slice %30 {offsets = [0, 128], sizes = [8, 128], strides = [1, 1]} : vector<8x384xf32> to vector<8x128xf32>
    %43 = vector.extract_strided_slice %33 {offsets = [0, 128], sizes = [8, 128], strides = [1, 1]} : vector<8x384xf32> to vector<8x128xf32>
    %44 = arith.addf %42, %43 : vector<8x128xf32>
    %45 = arith.negf %44 : vector<8x128xf32>
    %46 = math.exp %45 : vector<8x128xf32>
    %cst_29 = arith.constant 1.000000e+00 : f32
    %47 = vector.broadcast %cst_29 : f32 to vector<8x128xf32>
    %48 = arith.addf %47, %46 : vector<8x128xf32>
    %49 = arith.divf %47, %48 : vector<8x128xf32>
    %50 = vector.extract_strided_slice %30 {offsets = [0, 256], sizes = [8, 128], strides = [1, 1]} : vector<8x384xf32> to vector<8x128xf32>
    %51 = vector.extract_strided_slice %33 {offsets = [0, 256], sizes = [8, 128], strides = [1, 1]} : vector<8x384xf32> to vector<8x128xf32>
    %52 = arith.mulf %41, %51 : vector<8x128xf32>
    %53 = arith.addf %50, %52 : vector<8x128xf32>
    %54 = math.tanh %53 : vector<8x128xf32>
    %cst_30 = arith.constant 1.000000e+00 : f32
    %55 = vector.broadcast %cst_30 : f32 to vector<8x128xf32>
    %56 = arith.subf %55, %49 : vector<8x128xf32>
    %57 = arith.mulf %56, %54 : vector<8x128xf32>
    %58 = arith.mulf %49, %17 : vector<8x128xf32>
    %59 = arith.addf %57, %58 : vector<8x128xf32>
    %c8_i32_31 = arith.constant 8 : i32
    %60 = arith.muli %c0_i32_21, %c8_i32_31 : i32
    %c0_i32_32 = arith.constant 0 : i32
    %61 = arith.addi %c0_i32_32, %60 : i32
    %62 = tpu.assume_multiple %61, 8 : i32
    %63 = arith.index_cast %62 : i32 to index
    %c0_33 = arith.constant 0 : index
    %64 = vector.load %arg14[%63, %c0_33] : memref<64x128xf32, #tpu.memory_space<vmem>>, vector<8x128xf32>
    tpu.vector_store %arg14[%63, %c0_33], %59 {strides = array<i32>} : memref<64x128xf32, #tpu.memory_space<vmem>>, vector<8x128xf32>,
    %c1_i32 = arith.constant 1 : i32
    %c8_i32_34 = arith.constant 8 : i32
    %65 = arith.muli %c1_i32, %c8_i32_34 : i32
    %66 = tpu.assume_multiple %65, 8 : i32
    %c0_i32_35 = arith.constant 0 : i32
    %c0_i32_36 = arith.constant 0 : i32
    %67 = tpu.memref_slice %arg16[%c0_i32, %c0_i32_35, %c0_i32_36] : memref<2x32x384xf32, #tpu.memory_space<vmem>> -> memref<1x32x384xf32, #tpu.memory_space<vmem>>
    %68 = tpu.memref_squeeze %67 : memref<1x32x384xf32, #tpu.memory_space<vmem>> -> memref<32x384xf32, #tpu.memory_space<vmem>>
    %69 = arith.index_cast %66 : i32 to index
    %c0_37 = arith.constant 0 : index
    %70 = vector.load %68[%69, %c0_37] : memref<32x384xf32, #tpu.memory_space<vmem>>, vector<8x384xf32>
    %c0_38 = arith.constant 0 : index
    %c0_39 = arith.constant 0 : index
    %71 = vector.load %arg4[%c0_38, %c0_39] : memref<128x384xf32, #tpu.memory_space<vmem>>, vector<128x384xf32>
    %cst_40 = arith.constant dense<0.000000e+00> : vector<8x384xf32>
    %72 = tpu.matmul %59, %71, %cst_40 {dimension_numbers = #tpu.dot_dimension_numbers<[1], [0], [0], [1], [0, 0, 1, 1], [], []>} : vector<8x128xf32>, vector<128x384xf32>, vector<8x384xf32> -> vector<8x384xf32>
    %73 = arith.addf %72, %8 : vector<8x384xf32>
    %74 = vector.extract_strided_slice %70 {offsets = [0, 0], sizes = [8, 128], strides = [1, 1]} : vector<8x384xf32> to vector<8x128xf32>
    %75 = vector.extract_strided_slice %73 {offsets = [0, 0], sizes = [8, 128], strides = [1, 1]} : vector<8x384xf32> to vector<8x128xf32>
    %76 = arith.addf %74, %75 : vector<8x128xf32>
    %77 = arith.negf %76 : vector<8x128xf32>
    %78 = math.exp %77 : vector<8x128xf32>
    %cst_41 = arith.constant 1.000000e+00 : f32
    %79 = vector.broadcast %cst_41 : f32 to vector<8x128xf32>
    %80 = arith.addf %79, %78 : vector<8x128xf32>
    %81 = arith.divf %79, %80 : vector<8x128xf32>
    %82 = vector.extract_strided_slice %70 {offsets = [0, 128], sizes = [8, 128], strides = [1, 1]} : vector<8x384xf32> to vector<8x128xf32>
    %83 = vector.extract_strided_slice %73 {offsets = [0, 128], sizes = [8, 128], strides = [1, 1]} : vector<8x384xf32> to vector<8x128xf32>
    %84 = arith.addf %82, %83 : vector<8x128xf32>
    %85 = arith.negf %84 : vector<8x128xf32>
    %86 = math.exp %85 : vector<8x128xf32>
    %cst_42 = arith.constant 1.000000e+00 : f32
    %87 = vector.broadcast %cst_42 : f32 to vector<8x128xf32>
    %88 = arith.addf %87, %86 : vector<8x128xf32>
    %89 = arith.divf %87, %88 : vector<8x128xf32>
    %90 = vector.extract_strided_slice %70 {offsets = [0, 256], sizes = [8, 128], strides = [1, 1]} : vector<8x384xf32> to vector<8x128xf32>
    %91 = vector.extract_strided_slice %73 {offsets = [0, 256], sizes = [8, 128], strides = [1, 1]} : vector<8x384xf32> to vector<8x128xf32>
    %92 = arith.mulf %81, %91 : vector<8x128xf32>
    %93 = arith.addf %90, %92 : vector<8x128xf32>
    %94 = math.tanh %93 : vector<8x128xf32>
    %cst_43 = arith.constant 1.000000e+00 : f32
    %95 = vector.broadcast %cst_43 : f32 to vector<8x128xf32>
    %96 = arith.subf %95, %89 : vector<8x128xf32>
    %97 = arith.mulf %96, %94 : vector<8x128xf32>
    %98 = arith.mulf %89, %59 : vector<8x128xf32>
    %99 = arith.addf %97, %98 : vector<8x128xf32>
    %c8_i32_44 = arith.constant 8 : i32
    %100 = arith.muli %c1_i32, %c8_i32_44 : i32
    %c0_i32_45 = arith.constant 0 : i32
    %101 = arith.addi %c0_i32_45, %100 : i32
    %102 = tpu.assume_multiple %101, 8 : i32
    %103 = arith.index_cast %102 : i32 to index
    %c0_46 = arith.constant 0 : index
    %104 = vector.load %arg14[%103, %c0_46] : memref<64x128xf32, #tpu.memory_space<vmem>>, vector<8x128xf32>
    tpu.vector_store %arg14[%103, %c0_46], %99 {strides = array<i32>} : memref<64x128xf32, #tpu.memory_space<vmem>>, vector<8x128xf32>,
    %c2_i32 = arith.constant 2 : i32
    %c8_i32_47 = arith.constant 8 : i32
    %105 = arith.muli %c2_i32, %c8_i32_47 : i32
    %106 = tpu.assume_multiple %105, 8 : i32
    %c0_i32_48 = arith.constant 0 : i32
    %c0_i32_49 = arith.constant 0 : i32
    %107 = tpu.memref_slice %arg16[%c0_i32, %c0_i32_48, %c0_i32_49] : memref<2x32x384xf32, #tpu.memory_space<vmem>> -> memref<1x32x384xf32, #tpu.memory_space<vmem>>
    %108 = tpu.memref_squeeze %107 : memref<1x32x384xf32, #tpu.memory_space<vmem>> -> memref<32x384xf32, #tpu.memory_space<vmem>>
    %109 = arith.index_cast %106 : i32 to index
    %c0_50 = arith.constant 0 : index
    %110 = vector.load %108[%109, %c0_50] : memref<32x384xf32, #tpu.memory_space<vmem>>, vector<8x384xf32>
    %c0_51 = arith.constant 0 : index
    %c0_52 = arith.constant 0 : index
    %111 = vector.load %arg4[%c0_51, %c0_52] : memref<128x384xf32, #tpu.memory_space<vmem>>, vector<128x384xf32>
    %cst_53 = arith.constant dense<0.000000e+00> : vector<8x384xf32>
    %112 = tpu.matmul %99, %111, %cst_53 {dimension_numbers = #tpu.dot_dimension_numbers<[1], [0], [0], [1], [0, 0, 1, 1], [], []>} : vector<8x128xf32>, vector<128x384xf32>, vector<8x384xf32> -> vector<8x384xf32>
    %113 = arith.addf %112, %8 : vector<8x384xf32>
    %114 = vector.extract_strided_slice %110 {offsets = [0, 0], sizes = [8, 128], strides = [1, 1]} : vector<8x384xf32> to vector<8x128xf32>
    %115 = vector.extract_strided_slice %113 {offsets = [0, 0], sizes = [8, 128], strides = [1, 1]} : vector<8x384xf32> to vector<8x128xf32>
    %116 = arith.addf %114, %115 : vector<8x128xf32>
    %117 = arith.negf %116 : vector<8x128xf32>
    %118 = math.exp %117 : vector<8x128xf32>
    %cst_54 = arith.constant 1.000000e+00 : f32
    %119 = vector.broadcast %cst_54 : f32 to vector<8x128xf32>
    %120 = arith.addf %119, %118 : vector<8x128xf32>
    %121 = arith.divf %119, %120 : vector<8x128xf32>
    %122 = vector.extract_strided_slice %110 {offsets = [0, 128], sizes = [8, 128], strides = [1, 1]} : vector<8x384xf32> to vector<8x128xf32>
    %123 = vector.extract_strided_slice %113 {offsets = [0, 128], sizes = [8, 128], strides = [1, 1]} : vector<8x384xf32> to vector<8x128xf32>
    %124 = arith.addf %122, %123 : vector<8x128xf32>
    %125 = arith.negf %124 : vector<8x128xf32>
    %126 = math.exp %125 : vector<8x128xf32>
    %cst_55 = arith.constant 1.000000e+00 : f32
    %127 = vector.broadcast %cst_55 : f32 to vector<8x128xf32>
    %128 = arith.addf %127, %126 : vector<8x128xf32>
    %129 = arith.divf %127, %128 : vector<8x128xf32>
    %130 = vector.extract_strided_slice %110 {offsets = [0, 256], sizes = [8, 128], strides = [1, 1]} : vector<8x384xf32> to vector<8x128xf32>
    %131 = vector.extract_strided_slice %113 {offsets = [0, 256], sizes = [8, 128], strides = [1, 1]} : vector<8x384xf32> to vector<8x128xf32>
    %132 = arith.mulf %121, %131 : vector<8x128xf32>
    %133 = arith.addf %130, %132 : vector<8x128xf32>
    %134 = math.tanh %133 : vector<8x128xf32>
    %cst_56 = arith.constant 1.000000e+00 : f32
    %135 = vector.broadcast %cst_56 : f32 to vector<8x128xf32>
    %136 = arith.subf %135, %129 : vector<8x128xf32>
    %137 = arith.mulf %136, %134 : vector<8x128xf32>
    %138 = arith.mulf %129, %99 : vector<8x128xf32>
    %139 = arith.addf %137, %138 : vector<8x128xf32>
    %c8_i32_57 = arith.constant 8 : i32
    %140 = arith.muli %c2_i32, %c8_i32_57 : i32
    %c0_i32_58 = arith.constant 0 : i32
    %141 = arith.addi %c0_i32_58, %140 : i32
    %142 = tpu.assume_multiple %141, 8 : i32
    %143 = arith.index_cast %142 : i32 to index
    %c0_59 = arith.constant 0 : index
    %144 = vector.load %arg14[%143, %c0_59] : memref<64x128xf32, #tpu.memory_space<vmem>>, vector<8x128xf32>
    tpu.vector_store %arg14[%143, %c0_59], %139 {strides = array<i32>} : memref<64x128xf32, #tpu.memory_space<vmem>>, vector<8x128xf32>,
    %c3_i32 = arith.constant 3 : i32
    %c8_i32_60 = arith.constant 8 : i32
    %145 = arith.muli %c3_i32, %c8_i32_60 : i32
    %146 = tpu.assume_multiple %145, 8 : i32
    %c0_i32_61 = arith.constant 0 : i32
    %c0_i32_62 = arith.constant 0 : i32
    %147 = tpu.memref_slice %arg16[%c0_i32, %c0_i32_61, %c0_i32_62] : memref<2x32x384xf32, #tpu.memory_space<vmem>> -> memref<1x32x384xf32, #tpu.memory_space<vmem>>
    %148 = tpu.memref_squeeze %147 : memref<1x32x384xf32, #tpu.memory_space<vmem>> -> memref<32x384xf32, #tpu.memory_space<vmem>>
    %149 = arith.index_cast %146 : i32 to index
    %c0_63 = arith.constant 0 : index
    %150 = vector.load %148[%149, %c0_63] : memref<32x384xf32, #tpu.memory_space<vmem>>, vector<8x384xf32>
    %c0_64 = arith.constant 0 : index
    %c0_65 = arith.constant 0 : index
    %151 = vector.load %arg4[%c0_64, %c0_65] : memref<128x384xf32, #tpu.memory_space<vmem>>, vector<128x384xf32>
    %cst_66 = arith.constant dense<0.000000e+00> : vector<8x384xf32>
    %152 = tpu.matmul %139, %151, %cst_66 {dimension_numbers = #tpu.dot_dimension_numbers<[1], [0], [0], [1], [0, 0, 1, 1], [], []>} : vector<8x128xf32>, vector<128x384xf32>, vector<8x384xf32> -> vector<8x384xf32>
    %153 = arith.addf %152, %8 : vector<8x384xf32>
    %154 = vector.extract_strided_slice %150 {offsets = [0, 0], sizes = [8, 128], strides = [1, 1]} : vector<8x384xf32> to vector<8x128xf32>
    %155 = vector.extract_strided_slice %153 {offsets = [0, 0], sizes = [8, 128], strides = [1, 1]} : vector<8x384xf32> to vector<8x128xf32>
    %156 = arith.addf %154, %155 : vector<8x128xf32>
    %157 = arith.negf %156 : vector<8x128xf32>
    %158 = math.exp %157 : vector<8x128xf32>
    %cst_67 = arith.constant 1.000000e+00 : f32
    %159 = vector.broadcast %cst_67 : f32 to vector<8x128xf32>
    %160 = arith.addf %159, %158 : vector<8x128xf32>
    %161 = arith.divf %159, %160 : vector<8x128xf32>
    %162 = vector.extract_strided_slice %150 {offsets = [0, 128], sizes = [8, 128], strides = [1, 1]} : vector<8x384xf32> to vector<8x128xf32>
    %163 = vector.extract_strided_slice %153 {offsets = [0, 128], sizes = [8, 128], strides = [1, 1]} : vector<8x384xf32> to vector<8x128xf32>
    %164 = arith.addf %162, %163 : vector<8x128xf32>
    %165 = arith.negf %164 : vector<8x128xf32>
    %166 = math.exp %165 : vector<8x128xf32>
    %cst_68 = arith.constant 1.000000e+00 : f32
    %167 = vector.broadcast %cst_68 : f32 to vector<8x128xf32>
    %168 = arith.addf %167, %166 : vector<8x128xf32>
    %169 = arith.divf %167, %168 : vector<8x128xf32>
    %170 = vector.extract_strided_slice %150 {offsets = [0, 256], sizes = [8, 128], strides = [1, 1]} : vector<8x384xf32> to vector<8x128xf32>
    %171 = vector.extract_strided_slice %153 {offsets = [0, 256], sizes = [8, 128], strides = [1, 1]} : vector<8x384xf32> to vector<8x128xf32>
    %172 = arith.mulf %161, %171 : vector<8x128xf32>
    %173 = arith.addf %170, %172 : vector<8x128xf32>
    %174 = math.tanh %173 : vector<8x128xf32>
    %cst_69 = arith.constant 1.000000e+00 : f32
    %175 = vector.broadcast %cst_69 : f32 to vector<8x128xf32>
    %176 = arith.subf %175, %169 : vector<8x128xf32>
    %177 = arith.mulf %176, %174 : vector<8x128xf32>
    %178 = arith.mulf %169, %139 : vector<8x128xf32>
    %179 = arith.addf %177, %178 : vector<8x128xf32>
    %c8_i32_70 = arith.constant 8 : i32
    %180 = arith.muli %c3_i32, %c8_i32_70 : i32
    %c0_i32_71 = arith.constant 0 : i32
    %181 = arith.addi %c0_i32_71, %180 : i32
    %182 = tpu.assume_multiple %181, 8 : i32
    %183 = arith.index_cast %182 : i32 to index
    %c0_72 = arith.constant 0 : index
    %184 = vector.load %arg14[%183, %c0_72] : memref<64x128xf32, #tpu.memory_space<vmem>>, vector<8x128xf32>
    tpu.vector_store %arg14[%183, %c0_72], %179 {strides = array<i32>} : memref<64x128xf32, #tpu.memory_space<vmem>>, vector<8x128xf32>,
    %c4_i32 = arith.constant 4 : i32
    %c1_i32_73 = arith.constant 1 : i32
    %c0_i32_74 = arith.constant 0 : i32
    %c8_i32_75 = arith.constant 8 : i32
    %185 = arith.muli %c0_i32_74, %c8_i32_75 : i32
    %186 = tpu.assume_multiple %185, 8 : i32
    %c0_i32_76 = arith.constant 0 : i32
    %c0_i32_77 = arith.constant 0 : i32
    %187 = tpu.memref_slice %arg16[%c1_i32_73, %c0_i32_76, %c0_i32_77] : memref<2x32x384xf32, #tpu.memory_space<vmem>> -> memref<1x32x384xf32, #tpu.memory_space<vmem>>
    %188 = tpu.memref_squeeze %187 : memref<1x32x384xf32, #tpu.memory_space<vmem>> -> memref<32x384xf32, #tpu.memory_space<vmem>>
    %189 = arith.index_cast %186 : i32 to index
    %c0_78 = arith.constant 0 : index
    %190 = vector.load %188[%189, %c0_78] : memref<32x384xf32, #tpu.memory_space<vmem>>, vector<8x384xf32>
    %c0_79 = arith.constant 0 : index
    %c0_80 = arith.constant 0 : index
    %191 = vector.load %arg4[%c0_79, %c0_80] : memref<128x384xf32, #tpu.memory_space<vmem>>, vector<128x384xf32>
    %cst_81 = arith.constant dense<0.000000e+00> : vector<8x384xf32>
    %192 = tpu.matmul %179, %191, %cst_81 {dimension_numbers = #tpu.dot_dimension_numbers<[1], [0], [0], [1], [0, 0, 1, 1], [], []>} : vector<8x128xf32>, vector<128x384xf32>, vector<8x384xf32> -> vector<8x384xf32>
    %193 = arith.addf %192, %8 : vector<8x384xf32>
    %194 = vector.extract_strided_slice %190 {offsets = [0, 0], sizes = [8, 128], strides = [1, 1]} : vector<8x384xf32> to vector<8x128xf32>
    %195 = vector.extract_strided_slice %193 {offsets = [0, 0], sizes = [8, 128], strides = [1, 1]} : vector<8x384xf32> to vector<8x128xf32>
    %196 = arith.addf %194, %195 : vector<8x128xf32>
    %197 = arith.negf %196 : vector<8x128xf32>
    %198 = math.exp %197 : vector<8x128xf32>
    %cst_82 = arith.constant 1.000000e+00 : f32
    %199 = vector.broadcast %cst_82 : f32 to vector<8x128xf32>
    %200 = arith.addf %199, %198 : vector<8x128xf32>
    %201 = arith.divf %199, %200 : vector<8x128xf32>
    %202 = vector.extract_strided_slice %190 {offsets = [0, 128], sizes = [8, 128], strides = [1, 1]} : vector<8x384xf32> to vector<8x128xf32>
    %203 = vector.extract_strided_slice %193 {offsets = [0, 128], sizes = [8, 128], strides = [1, 1]} : vector<8x384xf32> to vector<8x128xf32>
    %204 = arith.addf %202, %203 : vector<8x128xf32>
    %205 = arith.negf %204 : vector<8x128xf32>
    %206 = math.exp %205 : vector<8x128xf32>
    %cst_83 = arith.constant 1.000000e+00 : f32
    %207 = vector.broadcast %cst_83 : f32 to vector<8x128xf32>
    %208 = arith.addf %207, %206 : vector<8x128xf32>
    %209 = arith.divf %207, %208 : vector<8x128xf32>
    %210 = vector.extract_strided_slice %190 {offsets = [0, 256], sizes = [8, 128], strides = [1, 1]} : vector<8x384xf32> to vector<8x128xf32>
    %211 = vector.extract_strided_slice %193 {offsets = [0, 256], sizes = [8, 128], strides = [1, 1]} : vector<8x384xf32> to vector<8x128xf32>
    %212 = arith.mulf %201, %211 : vector<8x128xf32>
    %213 = arith.addf %210, %212 : vector<8x128xf32>
    %214 = math.tanh %213 : vector<8x128xf32>
    %cst_84 = arith.constant 1.000000e+00 : f32
    %215 = vector.broadcast %cst_84 : f32 to vector<8x128xf32>
    %216 = arith.subf %215, %209 : vector<8x128xf32>
    %217 = arith.mulf %216, %214 : vector<8x128xf32>
    %218 = arith.mulf %209, %179 : vector<8x128xf32>
    %219 = arith.addf %217, %218 : vector<8x128xf32>
    %c8_i32_85 = arith.constant 8 : i32
    %220 = arith.muli %c0_i32_74, %c8_i32_85 : i32
    %c32_i32 = arith.constant 32 : i32
    %221 = arith.addi %c32_i32, %220 : i32
    %222 = tpu.assume_multiple %221, 8 : i32
    %223 = arith.index_cast %222 : i32 to index
    %c0_86 = arith.constant 0 : index
    %224 = vector.load %arg14[%223, %c0_86] : memref<64x128xf32, #tpu.memory_space<vmem>>, vector<8x128xf32>
    tpu.vector_store %arg14[%223, %c0_86], %219 {strides = array<i32>} : memref<64x128xf32, #tpu.memory_space<vmem>>, vector<8x128xf32>,
    %c1_i32_87 = arith.constant 1 : i32
    %c8_i32_88 = arith.constant 8 : i32
    %225 = arith.muli %c1_i32_87, %c8_i32_88 : i32
    %226 = tpu.assume_multiple %225, 8 : i32
    %c0_i32_89 = arith.constant 0 : i32
    %c0_i32_90 = arith.constant 0 : i32
    %227 = tpu.memref_slice %arg16[%c1_i32_73, %c0_i32_89, %c0_i32_90] : memref<2x32x384xf32, #tpu.memory_space<vmem>> -> memref<1x32x384xf32, #tpu.memory_space<vmem>>
    %228 = tpu.memref_squeeze %227 : memref<1x32x384xf32, #tpu.memory_space<vmem>> -> memref<32x384xf32, #tpu.memory_space<vmem>>
    %229 = arith.index_cast %226 : i32 to index
    %c0_91 = arith.constant 0 : index
    %230 = vector.load %228[%229, %c0_91] : memref<32x384xf32, #tpu.memory_space<vmem>>, vector<8x384xf32>
    %c0_92 = arith.constant 0 : index
    %c0_93 = arith.constant 0 : index
    %231 = vector.load %arg4[%c0_92, %c0_93] : memref<128x384xf32, #tpu.memory_space<vmem>>, vector<128x384xf32>
    %cst_94 = arith.constant dense<0.000000e+00> : vector<8x384xf32>
    %232 = tpu.matmul %219, %231, %cst_94 {dimension_numbers = #tpu.dot_dimension_numbers<[1], [0], [0], [1], [0, 0, 1, 1], [], []>} : vector<8x128xf32>, vector<128x384xf32>, vector<8x384xf32> -> vector<8x384xf32>
    %233 = arith.addf %232, %8 : vector<8x384xf32>
    %234 = vector.extract_strided_slice %230 {offsets = [0, 0], sizes = [8, 128], strides = [1, 1]} : vector<8x384xf32> to vector<8x128xf32>
    %235 = vector.extract_strided_slice %233 {offsets = [0, 0], sizes = [8, 128], strides = [1, 1]} : vector<8x384xf32> to vector<8x128xf32>
    %236 = arith.addf %234, %235 : vector<8x128xf32>
    %237 = arith.negf %236 : vector<8x128xf32>
    %238 = math.exp %237 : vector<8x128xf32>
    %cst_95 = arith.constant 1.000000e+00 : f32
    %239 = vector.broadcast %cst_95 : f32 to vector<8x128xf32>
    %240 = arith.addf %239, %238 : vector<8x128xf32>
    %241 = arith.divf %239, %240 : vector<8x128xf32>
    %242 = vector.extract_strided_slice %230 {offsets = [0, 128], sizes = [8, 128], strides = [1, 1]} : vector<8x384xf32> to vector<8x128xf32>
    %243 = vector.extract_strided_slice %233 {offsets = [0, 128], sizes = [8, 128], strides = [1, 1]} : vector<8x384xf32> to vector<8x128xf32>
    %244 = arith.addf %242, %243 : vector<8x128xf32>
    %245 = arith.negf %244 : vector<8x128xf32>
    %246 = math.exp %245 : vector<8x128xf32>
    %cst_96 = arith.constant 1.000000e+00 : f32
    %247 = vector.broadcast %cst_96 : f32 to vector<8x128xf32>
    %248 = arith.addf %247, %246 : vector<8x128xf32>
    %249 = arith.divf %247, %248 : vector<8x128xf32>
    %250 = vector.extract_strided_slice %230 {offsets = [0, 256], sizes = [8, 128], strides = [1, 1]} : vector<8x384xf32> to vector<8x128xf32>
    %251 = vector.extract_strided_slice %233 {offsets = [0, 256], sizes = [8, 128], strides = [1, 1]} : vector<8x384xf32> to vector<8x128xf32>
    %252 = arith.mulf %241, %251 : vector<8x128xf32>
    %253 = arith.addf %250, %252 : vector<8x128xf32>
    %254 = math.tanh %253 : vector<8x128xf32>
    %cst_97 = arith.constant 1.000000e+00 : f32
    %255 = vector.broadcast %cst_97 : f32 to vector<8x128xf32>
    %256 = arith.subf %255, %249 : vector<8x128xf32>
    %257 = arith.mulf %256, %254 : vector<8x128xf32>
    %258 = arith.mulf %249, %219 : vector<8x128xf32>
    %259 = arith.addf %257, %258 : vector<8x128xf32>
    %c8_i32_98 = arith.constant 8 : i32
    %260 = arith.muli %c1_i32_87, %c8_i32_98 : i32
    %c32_i32_99 = arith.constant 32 : i32
    %261 = arith.addi %c32_i32_99, %260 : i32
    %262 = tpu.assume_multiple %261, 8 : i32
    %263 = arith.index_cast %262 : i32 to index
    %c0_100 = arith.constant 0 : index
    %264 = vector.load %arg14[%263, %c0_100] : memref<64x128xf32, #tpu.memory_space<vmem>>, vector<8x128xf32>
    tpu.vector_store %arg14[%263, %c0_100], %259 {strides = array<i32>} : memref<64x128xf32, #tpu.memory_space<vmem>>, vector<8x128xf32>,
    %c2_i32_101 = arith.constant 2 : i32
    %c8_i32_102 = arith.constant 8 : i32
    %265 = arith.muli %c2_i32_101, %c8_i32_102 : i32
    %266 = tpu.assume_multiple %265, 8 : i32
    %c0_i32_103 = arith.constant 0 : i32
    %c0_i32_104 = arith.constant 0 : i32
    %267 = tpu.memref_slice %arg16[%c1_i32_73, %c0_i32_103, %c0_i32_104] : memref<2x32x384xf32, #tpu.memory_space<vmem>> -> memref<1x32x384xf32, #tpu.memory_space<vmem>>
    %268 = tpu.memref_squeeze %267 : memref<1x32x384xf32, #tpu.memory_space<vmem>> -> memref<32x384xf32, #tpu.memory_space<vmem>>
    %269 = arith.index_cast %266 : i32 to index
    %c0_105 = arith.constant 0 : index
    %270 = vector.load %268[%269, %c0_105] : memref<32x384xf32, #tpu.memory_space<vmem>>, vector<8x384xf32>
    %c0_106 = arith.constant 0 : index
    %c0_107 = arith.constant 0 : index
    %271 = vector.load %arg4[%c0_106, %c0_107] : memref<128x384xf32, #tpu.memory_space<vmem>>, vector<128x384xf32>
    %cst_108 = arith.constant dense<0.000000e+00> : vector<8x384xf32>
    %272 = tpu.matmul %259, %271, %cst_108 {dimension_numbers = #tpu.dot_dimension_numbers<[1], [0], [0], [1], [0, 0, 1, 1], [], []>} : vector<8x128xf32>, vector<128x384xf32>, vector<8x384xf32> -> vector<8x384xf32>
    %273 = arith.addf %272, %8 : vector<8x384xf32>
    %274 = vector.extract_strided_slice %270 {offsets = [0, 0], sizes = [8, 128], strides = [1, 1]} : vector<8x384xf32> to vector<8x128xf32>
    %275 = vector.extract_strided_slice %273 {offsets = [0, 0], sizes = [8, 128], strides = [1, 1]} : vector<8x384xf32> to vector<8x128xf32>
    %276 = arith.addf %274, %275 : vector<8x128xf32>
    %277 = arith.negf %276 : vector<8x128xf32>
    %278 = math.exp %277 : vector<8x128xf32>
    %cst_109 = arith.constant 1.000000e+00 : f32
    %279 = vector.broadcast %cst_109 : f32 to vector<8x128xf32>
    %280 = arith.addf %279, %278 : vector<8x128xf32>
    %281 = arith.divf %279, %280 : vector<8x128xf32>
    %282 = vector.extract_strided_slice %270 {offsets = [0, 128], sizes = [8, 128], strides = [1, 1]} : vector<8x384xf32> to vector<8x128xf32>
    %283 = vector.extract_strided_slice %273 {offsets = [0, 128], sizes = [8, 128], strides = [1, 1]} : vector<8x384xf32> to vector<8x128xf32>
    %284 = arith.addf %282, %283 : vector<8x128xf32>
    %285 = arith.negf %284 : vector<8x128xf32>
    %286 = math.exp %285 : vector<8x128xf32>
    %cst_110 = arith.constant 1.000000e+00 : f32
    %287 = vector.broadcast %cst_110 : f32 to vector<8x128xf32>
    %288 = arith.addf %287, %286 : vector<8x128xf32>
    %289 = arith.divf %287, %288 : vector<8x128xf32>
    %290 = vector.extract_strided_slice %270 {offsets = [0, 256], sizes = [8, 128], strides = [1, 1]} : vector<8x384xf32> to vector<8x128xf32>
    %291 = vector.extract_strided_slice %273 {offsets = [0, 256], sizes = [8, 128], strides = [1, 1]} : vector<8x384xf32> to vector<8x128xf32>
    %292 = arith.mulf %281, %291 : vector<8x128xf32>
    %293 = arith.addf %290, %292 : vector<8x128xf32>
    %294 = math.tanh %293 : vector<8x128xf32>
    %cst_111 = arith.constant 1.000000e+00 : f32
    %295 = vector.broadcast %cst_111 : f32 to vector<8x128xf32>
    %296 = arith.subf %295, %289 : vector<8x128xf32>
    %297 = arith.mulf %296, %294 : vector<8x128xf32>
    %298 = arith.mulf %289, %259 : vector<8x128xf32>
    %299 = arith.addf %297, %298 : vector<8x128xf32>
    %c8_i32_112 = arith.constant 8 : i32
    %300 = arith.muli %c2_i32_101, %c8_i32_112 : i32
    %c32_i32_113 = arith.constant 32 : i32
    %301 = arith.addi %c32_i32_113, %300 : i32
    %302 = tpu.assume_multiple %301, 8 : i32
    %303 = arith.index_cast %302 : i32 to index
    %c0_114 = arith.constant 0 : index
    %304 = vector.load %arg14[%303, %c0_114] : memref<64x128xf32, #tpu.memory_space<vmem>>, vector<8x128xf32>
    tpu.vector_store %arg14[%303, %c0_114], %299 {strides = array<i32>} : memref<64x128xf32, #tpu.memory_space<vmem>>, vector<8x128xf32>,
    %c3_i32_115 = arith.constant 3 : i32
    %c8_i32_116 = arith.constant 8 : i32
    %305 = arith.muli %c3_i32_115, %c8_i32_116 : i32
    %306 = tpu.assume_multiple %305, 8 : i32
    %c0_i32_117 = arith.constant 0 : i32
    %c0_i32_118 = arith.constant 0 : i32
    %307 = tpu.memref_slice %arg16[%c1_i32_73, %c0_i32_117, %c0_i32_118] : memref<2x32x384xf32, #tpu.memory_space<vmem>> -> memref<1x32x384xf32, #tpu.memory_space<vmem>>
    %308 = tpu.memref_squeeze %307 : memref<1x32x384xf32, #tpu.memory_space<vmem>> -> memref<32x384xf32, #tpu.memory_space<vmem>>
    %309 = arith.index_cast %306 : i32 to index
    %c0_119 = arith.constant 0 : index
    %310 = vector.load %308[%309, %c0_119] : memref<32x384xf32, #tpu.memory_space<vmem>>, vector<8x384xf32>
    %c0_120 = arith.constant 0 : index
    %c0_121 = arith.constant 0 : index
    %311 = vector.load %arg4[%c0_120, %c0_121] : memref<128x384xf32, #tpu.memory_space<vmem>>, vector<128x384xf32>
    %cst_122 = arith.constant dense<0.000000e+00> : vector<8x384xf32>
    %312 = tpu.matmul %299, %311, %cst_122 {dimension_numbers = #tpu.dot_dimension_numbers<[1], [0], [0], [1], [0, 0, 1, 1], [], []>} : vector<8x128xf32>, vector<128x384xf32>, vector<8x384xf32> -> vector<8x384xf32>
    %313 = arith.addf %312, %8 : vector<8x384xf32>
    %314 = vector.extract_strided_slice %310 {offsets = [0, 0], sizes = [8, 128], strides = [1, 1]} : vector<8x384xf32> to vector<8x128xf32>
    %315 = vector.extract_strided_slice %313 {offsets = [0, 0], sizes = [8, 128], strides = [1, 1]} : vector<8x384xf32> to vector<8x128xf32>
    %316 = arith.addf %314, %315 : vector<8x128xf32>
    %317 = arith.negf %316 : vector<8x128xf32>
    %318 = math.exp %317 : vector<8x128xf32>
    %cst_123 = arith.constant 1.000000e+00 : f32
    %319 = vector.broadcast %cst_123 : f32 to vector<8x128xf32>
    %320 = arith.addf %319, %318 : vector<8x128xf32>
    %321 = arith.divf %319, %320 : vector<8x128xf32>
    %322 = vector.extract_strided_slice %310 {offsets = [0, 128], sizes = [8, 128], strides = [1, 1]} : vector<8x384xf32> to vector<8x128xf32>
    %323 = vector.extract_strided_slice %313 {offsets = [0, 128], sizes = [8, 128], strides = [1, 1]} : vector<8x384xf32> to vector<8x128xf32>
    %324 = arith.addf %322, %323 : vector<8x128xf32>
    %325 = arith.negf %324 : vector<8x128xf32>
    %326 = math.exp %325 : vector<8x128xf32>
    %cst_124 = arith.constant 1.000000e+00 : f32
    %327 = vector.broadcast %cst_124 : f32 to vector<8x128xf32>
    %328 = arith.addf %327, %326 : vector<8x128xf32>
    %329 = arith.divf %327, %328 : vector<8x128xf32>
    %330 = vector.extract_strided_slice %310 {offsets = [0, 256], sizes = [8, 128], strides = [1, 1]} : vector<8x384xf32> to vector<8x128xf32>
    %331 = vector.extract_strided_slice %313 {offsets = [0, 256], sizes = [8, 128], strides = [1, 1]} : vector<8x384xf32> to vector<8x128xf32>
    %332 = arith.mulf %321, %331 : vector<8x128xf32>
    %333 = arith.addf %330, %332 : vector<8x128xf32>
    %334 = math.tanh %333 : vector<8x128xf32>
    %cst_125 = arith.constant 1.000000e+00 : f32
    %335 = vector.broadcast %cst_125 : f32 to vector<8x128xf32>
    %336 = arith.subf %335, %329 : vector<8x128xf32>
    %337 = arith.mulf %336, %334 : vector<8x128xf32>
    %338 = arith.mulf %329, %299 : vector<8x128xf32>
    %339 = arith.addf %337, %338 : vector<8x128xf32>
    %c8_i32_126 = arith.constant 8 : i32
    %340 = arith.muli %c3_i32_115, %c8_i32_126 : i32
    %c32_i32_127 = arith.constant 32 : i32
    %341 = arith.addi %c32_i32_127, %340 : i32
    %342 = tpu.assume_multiple %341, 8 : i32
    %343 = arith.index_cast %342 : i32 to index
    %c0_128 = arith.constant 0 : index
    %344 = vector.load %arg14[%343, %c0_128] : memref<64x128xf32, #tpu.memory_space<vmem>>, vector<8x128xf32>
    tpu.vector_store %arg14[%343, %c0_128], %339 {strides = array<i32>} : memref<64x128xf32, #tpu.memory_space<vmem>>, vector<8x128xf32>,
    %c4_i32_129 = arith.constant 4 : i32
    %c0_130 = arith.constant 0 : index
    %c0_131 = arith.constant 0 : index
    %c0_132 = arith.constant 0 : index
    %345 = vector.load %arg13[%c0_130, %c0_131, %c0_132] : memref<2x8x128xf32, #tpu.memory_space<vmem>>, vector<1x8x128xf32>
    %346 = vector.shape_cast %345 : vector<1x8x128xf32> to vector<8x128xf32>
    %347 = vector.shape_cast %339 : vector<8x128xf32> to vector<1x8x128xf32>
    tpu.vector_store %arg13[%c0_130, %c0_131, %c0_132], %347 {strides = array<i32>} : memref<2x8x128xf32, #tpu.memory_space<vmem>>, vector<1x8x128xf32>,
    %c0_133 = arith.constant 0 : index
    %c0_134 = arith.constant 0 : index
    %348 = vector.load %arg7[%c0_133, %c0_134] : memref<1x384xf32, #tpu.memory_space<vmem>>, vector<1x384xf32>
    %349 = vector.shape_cast %348 : vector<1x384xf32> to vector<1x384xf32>
    %350 = vector.broadcast %349 : vector<1x384xf32> to vector<32x384xf32>
    %c0_135 = arith.constant 0 : index
    %c0_136 = arith.constant 0 : index
    %351 = vector.load %arg9[%c0_135, %c0_136] : memref<1x384xf32, #tpu.memory_space<vmem>>, vector<1x384xf32>
    %352 = vector.shape_cast %351 : vector<1x384xf32> to vector<1x384xf32>
    %353 = vector.broadcast %352 : vector<1x384xf32> to vector<8x384xf32>
    %c0_137 = arith.constant 0 : index
    %c0_138 = arith.constant 0 : index
    %354 = vector.load %arg14[%c0_137, %c0_138] : memref<64x128xf32, #tpu.memory_space<vmem>>, vector<32x128xf32>
    %c0_139 = arith.constant 0 : index
    %c0_140 = arith.constant 0 : index
    %355 = vector.load %arg6[%c0_139, %c0_140] : memref<128x384xf32, #tpu.memory_space<vmem>>, vector<128x384xf32>
    %cst_141 = arith.constant dense<0.000000e+00> : vector<32x384xf32>
    %356 = tpu.matmul %354, %355, %cst_141 {dimension_numbers = #tpu.dot_dimension_numbers<[1], [0], [0], [1], [0, 0, 1, 1], [], []>} : vector<32x128xf32>, vector<128x384xf32>, vector<32x384xf32> -> vector<32x384xf32>
    %357 = arith.addf %356, %350 : vector<32x384xf32>
    %c0_142 = arith.constant 0 : index
    %c0_143 = arith.constant 0 : index
    %c0_144 = arith.constant 0 : index
    %358 = vector.load %arg16[%c0_142, %c0_143, %c0_144] : memref<2x32x384xf32, #tpu.memory_space<vmem>>, vector<1x32x384xf32>
    %359 = vector.shape_cast %358 : vector<1x32x384xf32> to vector<32x384xf32>
    %360 = vector.shape_cast %357 : vector<32x384xf32> to vector<1x32x384xf32>
    tpu.vector_store %arg16[%c0_142, %c0_143, %c0_144], %360 {strides = array<i32>} : memref<2x32x384xf32, #tpu.memory_space<vmem>>, vector<1x32x384xf32>,
    %c1_145 = arith.constant 1 : index
    %c0_146 = arith.constant 0 : index
    %c0_147 = arith.constant 0 : index
    %361 = vector.load %arg1[%c1_145, %c0_146, %c0_147] : memref<2x8x128xf32, #tpu.memory_space<vmem>>, vector<1x8x128xf32>
    %362 = vector.shape_cast %361 : vector<1x8x128xf32> to vector<8x128xf32>
    %c32_148 = arith.constant 32 : index
    %c0_149 = arith.constant 0 : index
    %363 = vector.load %arg14[%c32_148, %c0_149] : memref<64x128xf32, #tpu.memory_space<vmem>>, vector<32x128xf32>
    %c0_150 = arith.constant 0 : index
    %c0_151 = arith.constant 0 : index
    %364 = vector.load %arg6[%c0_150, %c0_151] : memref<128x384xf32, #tpu.memory_space<vmem>>, vector<128x384xf32>
    %cst_152 = arith.constant dense<0.000000e+00> : vector<32x384xf32>
    %365 = tpu.matmul %363, %364, %cst_152 {dimension_numbers = #tpu.dot_dimension_numbers<[1], [0], [0], [1], [0, 0, 1, 1], [], []>} : vector<32x128xf32>, vector<128x384xf32>, vector<32x384xf32> -> vector<32x384xf32>
    %366 = arith.addf %365, %350 : vector<32x384xf32>
    %c1_153 = arith.constant 1 : index
    %c0_154 = arith.constant 0 : index
    %c0_155 = arith.constant 0 : index
    %367 = vector.load %arg16[%c1_153, %c0_154, %c0_155] : memref<2x32x384xf32, #tpu.memory_space<vmem>>, vector<1x32x384xf32>
    %368 = vector.shape_cast %367 : vector<1x32x384xf32> to vector<32x384xf32>
    %369 = vector.shape_cast %366 : vector<32x384xf32> to vector<1x32x384xf32>
    tpu.vector_store %arg16[%c1_153, %c0_154, %c0_155], %369 {strides = array<i32>} : memref<2x32x384xf32, #tpu.memory_space<vmem>>, vector<1x32x384xf32>,
    %c0_i32_156 = arith.constant 0 : i32
    %c0_i32_157 = arith.constant 0 : i32
    %c8_i32_158 = arith.constant 8 : i32
    %370 = arith.muli %c0_i32_157, %c8_i32_158 : i32
    %371 = tpu.assume_multiple %370, 8 : i32
    %c0_i32_159 = arith.constant 0 : i32
    %c0_i32_160 = arith.constant 0 : i32
    %372 = tpu.memref_slice %arg16[%c0_i32_156, %c0_i32_159, %c0_i32_160] : memref<2x32x384xf32, #tpu.memory_space<vmem>> -> memref<1x32x384xf32, #tpu.memory_space<vmem>>
    %373 = tpu.memref_squeeze %372 : memref<1x32x384xf32, #tpu.memory_space<vmem>> -> memref<32x384xf32, #tpu.memory_space<vmem>>
    %374 = arith.index_cast %371 : i32 to index
    %c0_161 = arith.constant 0 : index
    %375 = vector.load %373[%374, %c0_161] : memref<32x384xf32, #tpu.memory_space<vmem>>, vector<8x384xf32>
    %c0_162 = arith.constant 0 : index
    %c0_163 = arith.constant 0 : index
    %376 = vector.load %arg8[%c0_162, %c0_163] : memref<128x384xf32, #tpu.memory_space<vmem>>, vector<128x384xf32>
    %cst_164 = arith.constant dense<0.000000e+00> : vector<8x384xf32>
    %377 = tpu.matmul %362, %376, %cst_164 {dimension_numbers = #tpu.dot_dimension_numbers<[1], [0], [0], [1], [0, 0, 1, 1], [], []>} : vector<8x128xf32>, vector<128x384xf32>, vector<8x384xf32> -> vector<8x384xf32>
    %378 = arith.addf %377, %353 : vector<8x384xf32>
    %379 = vector.extract_strided_slice %375 {offsets = [0, 0], sizes = [8, 128], strides = [1, 1]} : vector<8x384xf32> to vector<8x128xf32>
    %380 = vector.extract_strided_slice %378 {offsets = [0, 0], sizes = [8, 128], strides = [1, 1]} : vector<8x384xf32> to vector<8x128xf32>
    %381 = arith.addf %379, %380 : vector<8x128xf32>
    %382 = arith.negf %381 : vector<8x128xf32>
    %383 = math.exp %382 : vector<8x128xf32>
    %cst_165 = arith.constant 1.000000e+00 : f32
    %384 = vector.broadcast %cst_165 : f32 to vector<8x128xf32>
    %385 = arith.addf %384, %383 : vector<8x128xf32>
    %386 = arith.divf %384, %385 : vector<8x128xf32>
    %387 = vector.extract_strided_slice %375 {offsets = [0, 128], sizes = [8, 128], strides = [1, 1]} : vector<8x384xf32> to vector<8x128xf32>
    %388 = vector.extract_strided_slice %378 {offsets = [0, 128], sizes = [8, 128], strides = [1, 1]} : vector<8x384xf32> to vector<8x128xf32>
    %389 = arith.addf %387, %388 : vector<8x128xf32>
    %390 = arith.negf %389 : vector<8x128xf32>
    %391 = math.exp %390 : vector<8x128xf32>
    %cst_166 = arith.constant 1.000000e+00 : f32
    %392 = vector.broadcast %cst_166 : f32 to vector<8x128xf32>
    %393 = arith.addf %392, %391 : vector<8x128xf32>
    %394 = arith.divf %392, %393 : vector<8x128xf32>
    %395 = vector.extract_strided_slice %375 {offsets = [0, 256], sizes = [8, 128], strides = [1, 1]} : vector<8x384xf32> to vector<8x128xf32>
    %396 = vector.extract_strided_slice %378 {offsets = [0, 256], sizes = [8, 128], strides = [1, 1]} : vector<8x384xf32> to vector<8x128xf32>
    %397 = arith.mulf %386, %396 : vector<8x128xf32>
    %398 = arith.addf %395, %397 : vector<8x128xf32>
    %399 = math.tanh %398 : vector<8x128xf32>
    %cst_167 = arith.constant 1.000000e+00 : f32
    %400 = vector.broadcast %cst_167 : f32 to vector<8x128xf32>
    %401 = arith.subf %400, %394 : vector<8x128xf32>
    %402 = arith.mulf %401, %399 : vector<8x128xf32>
    %403 = arith.mulf %394, %362 : vector<8x128xf32>
    %404 = arith.addf %402, %403 : vector<8x128xf32>
    %c8_i32_168 = arith.constant 8 : i32
    %405 = arith.muli %c0_i32_157, %c8_i32_168 : i32
    %c0_i32_169 = arith.constant 0 : i32
    %406 = arith.addi %c0_i32_169, %405 : i32
    %407 = tpu.assume_multiple %406, 8 : i32
    %408 = arith.index_cast %407 : i32 to index
    %c0_170 = arith.constant 0 : index
    %409 = vector.load %arg15[%408, %c0_170] : memref<64x128xf32, #tpu.memory_space<vmem>>, vector<8x128xf32>
    tpu.vector_store %arg15[%408, %c0_170], %404 {strides = array<i32>} : memref<64x128xf32, #tpu.memory_space<vmem>>, vector<8x128xf32>,
    %c1_i32_171 = arith.constant 1 : i32
    %c8_i32_172 = arith.constant 8 : i32
    %410 = arith.muli %c1_i32_171, %c8_i32_172 : i32
    %411 = tpu.assume_multiple %410, 8 : i32
    %c0_i32_173 = arith.constant 0 : i32
    %c0_i32_174 = arith.constant 0 : i32
    %412 = tpu.memref_slice %arg16[%c0_i32_156, %c0_i32_173, %c0_i32_174] : memref<2x32x384xf32, #tpu.memory_space<vmem>> -> memref<1x32x384xf32, #tpu.memory_space<vmem>>
    %413 = tpu.memref_squeeze %412 : memref<1x32x384xf32, #tpu.memory_space<vmem>> -> memref<32x384xf32, #tpu.memory_space<vmem>>
    %414 = arith.index_cast %411 : i32 to index
    %c0_175 = arith.constant 0 : index
    %415 = vector.load %413[%414, %c0_175] : memref<32x384xf32, #tpu.memory_space<vmem>>, vector<8x384xf32>
    %c0_176 = arith.constant 0 : index
    %c0_177 = arith.constant 0 : index
    %416 = vector.load %arg8[%c0_176, %c0_177] : memref<128x384xf32, #tpu.memory_space<vmem>>, vector<128x384xf32>
    %cst_178 = arith.constant dense<0.000000e+00> : vector<8x384xf32>
    %417 = tpu.matmul %404, %416, %cst_178 {dimension_numbers = #tpu.dot_dimension_numbers<[1], [0], [0], [1], [0, 0, 1, 1], [], []>} : vector<8x128xf32>, vector<128x384xf32>, vector<8x384xf32> -> vector<8x384xf32>
    %418 = arith.addf %417, %353 : vector<8x384xf32>
    %419 = vector.extract_strided_slice %415 {offsets = [0, 0], sizes = [8, 128], strides = [1, 1]} : vector<8x384xf32> to vector<8x128xf32>
    %420 = vector.extract_strided_slice %418 {offsets = [0, 0], sizes = [8, 128], strides = [1, 1]} : vector<8x384xf32> to vector<8x128xf32>
    %421 = arith.addf %419, %420 : vector<8x128xf32>
    %422 = arith.negf %421 : vector<8x128xf32>
    %423 = math.exp %422 : vector<8x128xf32>
    %cst_179 = arith.constant 1.000000e+00 : f32
    %424 = vector.broadcast %cst_179 : f32 to vector<8x128xf32>
    %425 = arith.addf %424, %423 : vector<8x128xf32>
    %426 = arith.divf %424, %425 : vector<8x128xf32>
    %427 = vector.extract_strided_slice %415 {offsets = [0, 128], sizes = [8, 128], strides = [1, 1]} : vector<8x384xf32> to vector<8x128xf32>
    %428 = vector.extract_strided_slice %418 {offsets = [0, 128], sizes = [8, 128], strides = [1, 1]} : vector<8x384xf32> to vector<8x128xf32>
    %429 = arith.addf %427, %428 : vector<8x128xf32>
    %430 = arith.negf %429 : vector<8x128xf32>
    %431 = math.exp %430 : vector<8x128xf32>
    %cst_180 = arith.constant 1.000000e+00 : f32
    %432 = vector.broadcast %cst_180 : f32 to vector<8x128xf32>
    %433 = arith.addf %432, %431 : vector<8x128xf32>
    %434 = arith.divf %432, %433 : vector<8x128xf32>
    %435 = vector.extract_strided_slice %415 {offsets = [0, 256], sizes = [8, 128], strides = [1, 1]} : vector<8x384xf32> to vector<8x128xf32>
    %436 = vector.extract_strided_slice %418 {offsets = [0, 256], sizes = [8, 128], strides = [1, 1]} : vector<8x384xf32> to vector<8x128xf32>
    %437 = arith.mulf %426, %436 : vector<8x128xf32>
    %438 = arith.addf %435, %437 : vector<8x128xf32>
    %439 = math.tanh %438 : vector<8x128xf32>
    %cst_181 = arith.constant 1.000000e+00 : f32
    %440 = vector.broadcast %cst_181 : f32 to vector<8x128xf32>
    %441 = arith.subf %440, %434 : vector<8x128xf32>
    %442 = arith.mulf %441, %439 : vector<8x128xf32>
    %443 = arith.mulf %434, %404 : vector<8x128xf32>
    %444 = arith.addf %442, %443 : vector<8x128xf32>
    %c8_i32_182 = arith.constant 8 : i32
    %445 = arith.muli %c1_i32_171, %c8_i32_182 : i32
    %c0_i32_183 = arith.constant 0 : i32
    %446 = arith.addi %c0_i32_183, %445 : i32
    %447 = tpu.assume_multiple %446, 8 : i32
    %448 = arith.index_cast %447 : i32 to index
    %c0_184 = arith.constant 0 : index
    %449 = vector.load %arg15[%448, %c0_184] : memref<64x128xf32, #tpu.memory_space<vmem>>, vector<8x128xf32>
    tpu.vector_store %arg15[%448, %c0_184], %444 {strides = array<i32>} : memref<64x128xf32, #tpu.memory_space<vmem>>, vector<8x128xf32>,
    %c2_i32_185 = arith.constant 2 : i32
    %c8_i32_186 = arith.constant 8 : i32
    %450 = arith.muli %c2_i32_185, %c8_i32_186 : i32
    %451 = tpu.assume_multiple %450, 8 : i32
    %c0_i32_187 = arith.constant 0 : i32
    %c0_i32_188 = arith.constant 0 : i32
    %452 = tpu.memref_slice %arg16[%c0_i32_156, %c0_i32_187, %c0_i32_188] : memref<2x32x384xf32, #tpu.memory_space<vmem>> -> memref<1x32x384xf32, #tpu.memory_space<vmem>>
    %453 = tpu.memref_squeeze %452 : memref<1x32x384xf32, #tpu.memory_space<vmem>> -> memref<32x384xf32, #tpu.memory_space<vmem>>
    %454 = arith.index_cast %451 : i32 to index
    %c0_189 = arith.constant 0 : index
    %455 = vector.load %453[%454, %c0_189] : memref<32x384xf32, #tpu.memory_space<vmem>>, vector<8x384xf32>
    %c0_190 = arith.constant 0 : index
    %c0_191 = arith.constant 0 : index
    %456 = vector.load %arg8[%c0_190, %c0_191] : memref<128x384xf32, #tpu.memory_space<vmem>>, vector<128x384xf32>
    %cst_192 = arith.constant dense<0.000000e+00> : vector<8x384xf32>
    %457 = tpu.matmul %444, %456, %cst_192 {dimension_numbers = #tpu.dot_dimension_numbers<[1], [0], [0], [1], [0, 0, 1, 1], [], []>} : vector<8x128xf32>, vector<128x384xf32>, vector<8x384xf32> -> vector<8x384xf32>
    %458 = arith.addf %457, %353 : vector<8x384xf32>
    %459 = vector.extract_strided_slice %455 {offsets = [0, 0], sizes = [8, 128], strides = [1, 1]} : vector<8x384xf32> to vector<8x128xf32>
    %460 = vector.extract_strided_slice %458 {offsets = [0, 0], sizes = [8, 128], strides = [1, 1]} : vector<8x384xf32> to vector<8x128xf32>
    %461 = arith.addf %459, %460 : vector<8x128xf32>
    %462 = arith.negf %461 : vector<8x128xf32>
    %463 = math.exp %462 : vector<8x128xf32>
    %cst_193 = arith.constant 1.000000e+00 : f32
    %464 = vector.broadcast %cst_193 : f32 to vector<8x128xf32>
    %465 = arith.addf %464, %463 : vector<8x128xf32>
    %466 = arith.divf %464, %465 : vector<8x128xf32>
    %467 = vector.extract_strided_slice %455 {offsets = [0, 128], sizes = [8, 128], strides = [1, 1]} : vector<8x384xf32> to vector<8x128xf32>
    %468 = vector.extract_strided_slice %458 {offsets = [0, 128], sizes = [8, 128], strides = [1, 1]} : vector<8x384xf32> to vector<8x128xf32>
    %469 = arith.addf %467, %468 : vector<8x128xf32>
    %470 = arith.negf %469 : vector<8x128xf32>
    %471 = math.exp %470 : vector<8x128xf32>
    %cst_194 = arith.constant 1.000000e+00 : f32
    %472 = vector.broadcast %cst_194 : f32 to vector<8x128xf32>
    %473 = arith.addf %472, %471 : vector<8x128xf32>
    %474 = arith.divf %472, %473 : vector<8x128xf32>
    %475 = vector.extract_strided_slice %455 {offsets = [0, 256], sizes = [8, 128], strides = [1, 1]} : vector<8x384xf32> to vector<8x128xf32>
    %476 = vector.extract_strided_slice %458 {offsets = [0, 256], sizes = [8, 128], strides = [1, 1]} : vector<8x384xf32> to vector<8x128xf32>
    %477 = arith.mulf %466, %476 : vector<8x128xf32>
    %478 = arith.addf %475, %477 : vector<8x128xf32>
    %479 = math.tanh %478 : vector<8x128xf32>
    %cst_195 = arith.constant 1.000000e+00 : f32
    %480 = vector.broadcast %cst_195 : f32 to vector<8x128xf32>
    %481 = arith.subf %480, %474 : vector<8x128xf32>
    %482 = arith.mulf %481, %479 : vector<8x128xf32>
    %483 = arith.mulf %474, %444 : vector<8x128xf32>
    %484 = arith.addf %482, %483 : vector<8x128xf32>
    %c8_i32_196 = arith.constant 8 : i32
    %485 = arith.muli %c2_i32_185, %c8_i32_196 : i32
    %c0_i32_197 = arith.constant 0 : i32
    %486 = arith.addi %c0_i32_197, %485 : i32
    %487 = tpu.assume_multiple %486, 8 : i32
    %488 = arith.index_cast %487 : i32 to index
    %c0_198 = arith.constant 0 : index
    %489 = vector.load %arg15[%488, %c0_198] : memref<64x128xf32, #tpu.memory_space<vmem>>, vector<8x128xf32>
    tpu.vector_store %arg15[%488, %c0_198], %484 {strides = array<i32>} : memref<64x128xf32, #tpu.memory_space<vmem>>, vector<8x128xf32>,
    %c3_i32_199 = arith.constant 3 : i32
    %c8_i32_200 = arith.constant 8 : i32
    %490 = arith.muli %c3_i32_199, %c8_i32_200 : i32
    %491 = tpu.assume_multiple %490, 8 : i32
    %c0_i32_201 = arith.constant 0 : i32
    %c0_i32_202 = arith.constant 0 : i32
    %492 = tpu.memref_slice %arg16[%c0_i32_156, %c0_i32_201, %c0_i32_202] : memref<2x32x384xf32, #tpu.memory_space<vmem>> -> memref<1x32x384xf32, #tpu.memory_space<vmem>>
    %493 = tpu.memref_squeeze %492 : memref<1x32x384xf32, #tpu.memory_space<vmem>> -> memref<32x384xf32, #tpu.memory_space<vmem>>
    %494 = arith.index_cast %491 : i32 to index
    %c0_203 = arith.constant 0 : index
    %495 = vector.load %493[%494, %c0_203] : memref<32x384xf32, #tpu.memory_space<vmem>>, vector<8x384xf32>
    %c0_204 = arith.constant 0 : index
    %c0_205 = arith.constant 0 : index
    %496 = vector.load %arg8[%c0_204, %c0_205] : memref<128x384xf32, #tpu.memory_space<vmem>>, vector<128x384xf32>
    %cst_206 = arith.constant dense<0.000000e+00> : vector<8x384xf32>
    %497 = tpu.matmul %484, %496, %cst_206 {dimension_numbers = #tpu.dot_dimension_numbers<[1], [0], [0], [1], [0, 0, 1, 1], [], []>} : vector<8x128xf32>, vector<128x384xf32>, vector<8x384xf32> -> vector<8x384xf32>
    %498 = arith.addf %497, %353 : vector<8x384xf32>
    %499 = vector.extract_strided_slice %495 {offsets = [0, 0], sizes = [8, 128], strides = [1, 1]} : vector<8x384xf32> to vector<8x128xf32>
    %500 = vector.extract_strided_slice %498 {offsets = [0, 0], sizes = [8, 128], strides = [1, 1]} : vector<8x384xf32> to vector<8x128xf32>
    %501 = arith.addf %499, %500 : vector<8x128xf32>
    %502 = arith.negf %501 : vector<8x128xf32>
    %503 = math.exp %502 : vector<8x128xf32>
    %cst_207 = arith.constant 1.000000e+00 : f32
    %504 = vector.broadcast %cst_207 : f32 to vector<8x128xf32>
    %505 = arith.addf %504, %503 : vector<8x128xf32>
    %506 = arith.divf %504, %505 : vector<8x128xf32>
    %507 = vector.extract_strided_slice %495 {offsets = [0, 128], sizes = [8, 128], strides = [1, 1]} : vector<8x384xf32> to vector<8x128xf32>
    %508 = vector.extract_strided_slice %498 {offsets = [0, 128], sizes = [8, 128], strides = [1, 1]} : vector<8x384xf32> to vector<8x128xf32>
    %509 = arith.addf %507, %508 : vector<8x128xf32>
    %510 = arith.negf %509 : vector<8x128xf32>
    %511 = math.exp %510 : vector<8x128xf32>
    %cst_208 = arith.constant 1.000000e+00 : f32
    %512 = vector.broadcast %cst_208 : f32 to vector<8x128xf32>
    %513 = arith.addf %512, %511 : vector<8x128xf32>
    %514 = arith.divf %512, %513 : vector<8x128xf32>
    %515 = vector.extract_strided_slice %495 {offsets = [0, 256], sizes = [8, 128], strides = [1, 1]} : vector<8x384xf32> to vector<8x128xf32>
    %516 = vector.extract_strided_slice %498 {offsets = [0, 256], sizes = [8, 128], strides = [1, 1]} : vector<8x384xf32> to vector<8x128xf32>
    %517 = arith.mulf %506, %516 : vector<8x128xf32>
    %518 = arith.addf %515, %517 : vector<8x128xf32>
    %519 = math.tanh %518 : vector<8x128xf32>
    %cst_209 = arith.constant 1.000000e+00 : f32
    %520 = vector.broadcast %cst_209 : f32 to vector<8x128xf32>
    %521 = arith.subf %520, %514 : vector<8x128xf32>
    %522 = arith.mulf %521, %519 : vector<8x128xf32>
    %523 = arith.mulf %514, %484 : vector<8x128xf32>
    %524 = arith.addf %522, %523 : vector<8x128xf32>
    %c8_i32_210 = arith.constant 8 : i32
    %525 = arith.muli %c3_i32_199, %c8_i32_210 : i32
    %c0_i32_211 = arith.constant 0 : i32
    %526 = arith.addi %c0_i32_211, %525 : i32
    %527 = tpu.assume_multiple %526, 8 : i32
    %528 = arith.index_cast %527 : i32 to index
    %c0_212 = arith.constant 0 : index
    %529 = vector.load %arg15[%528, %c0_212] : memref<64x128xf32, #tpu.memory_space<vmem>>, vector<8x128xf32>
    tpu.vector_store %arg15[%528, %c0_212], %524 {strides = array<i32>} : memref<64x128xf32, #tpu.memory_space<vmem>>, vector<8x128xf32>,
    %c4_i32_213 = arith.constant 4 : i32
    %c0_214 = arith.constant 0 : index
    %c0_215 = arith.constant 0 : index
    %530 = vector.load %arg15[%c0_214, %c0_215] : memref<64x128xf32, #tpu.memory_space<vmem>>, vector<32x128xf32>
    %c0_216 = arith.constant 0 : index
    %c0_217 = arith.constant 0 : index
    %531 = vector.load %arg10[%c0_216, %c0_217] : memref<128x128xf32, #tpu.memory_space<vmem>>, vector<128x128xf32>
    %cst_218 = arith.constant dense<0.000000e+00> : vector<32x128xf32>
    %532 = tpu.matmul %530, %531, %cst_218 {dimension_numbers = #tpu.dot_dimension_numbers<[1], [0], [0], [1], [0, 0, 1, 1], [], []>} : vector<32x128xf32>, vector<128x128xf32>, vector<32x128xf32> -> vector<32x128xf32>
    %533 = arith.addf %532, %2 : vector<32x128xf32>
    %c0_219 = arith.constant 0 : index
    %c0_220 = arith.constant 0 : index
    %534 = vector.load %arg12[%c0_219, %c0_220] : memref<64x128xf32, #tpu.memory_space<vmem>>, vector<32x128xf32>
    tpu.vector_store %arg12[%c0_219, %c0_220], %533 {strides = array<i32>} : memref<64x128xf32, #tpu.memory_space<vmem>>, vector<32x128xf32>,
    %c1_i32_221 = arith.constant 1 : i32
    %c0_i32_222 = arith.constant 0 : i32
    %c8_i32_223 = arith.constant 8 : i32
    %535 = arith.muli %c0_i32_222, %c8_i32_223 : i32
    %536 = tpu.assume_multiple %535, 8 : i32
    %c0_i32_224 = arith.constant 0 : i32
    %c0_i32_225 = arith.constant 0 : i32
    %537 = tpu.memref_slice %arg16[%c1_i32_221, %c0_i32_224, %c0_i32_225] : memref<2x32x384xf32, #tpu.memory_space<vmem>> -> memref<1x32x384xf32, #tpu.memory_space<vmem>>
    %538 = tpu.memref_squeeze %537 : memref<1x32x384xf32, #tpu.memory_space<vmem>> -> memref<32x384xf32, #tpu.memory_space<vmem>>
    %539 = arith.index_cast %536 : i32 to index
    %c0_226 = arith.constant 0 : index
    %540 = vector.load %538[%539, %c0_226] : memref<32x384xf32, #tpu.memory_space<vmem>>, vector<8x384xf32>
    %c0_227 = arith.constant 0 : index
    %c0_228 = arith.constant 0 : index
    %541 = vector.load %arg8[%c0_227, %c0_228] : memref<128x384xf32, #tpu.memory_space<vmem>>, vector<128x384xf32>
    %cst_229 = arith.constant dense<0.000000e+00> : vector<8x384xf32>
    %542 = tpu.matmul %524, %541, %cst_229 {dimension_numbers = #tpu.dot_dimension_numbers<[1], [0], [0], [1], [0, 0, 1, 1], [], []>} : vector<8x128xf32>, vector<128x384xf32>, vector<8x384xf32> -> vector<8x384xf32>
    %543 = arith.addf %542, %353 : vector<8x384xf32>
    %544 = vector.extract_strided_slice %540 {offsets = [0, 0], sizes = [8, 128], strides = [1, 1]} : vector<8x384xf32> to vector<8x128xf32>
    %545 = vector.extract_strided_slice %543 {offsets = [0, 0], sizes = [8, 128], strides = [1, 1]} : vector<8x384xf32> to vector<8x128xf32>
    %546 = arith.addf %544, %545 : vector<8x128xf32>
    %547 = arith.negf %546 : vector<8x128xf32>
    %548 = math.exp %547 : vector<8x128xf32>
    %cst_230 = arith.constant 1.000000e+00 : f32
    %549 = vector.broadcast %cst_230 : f32 to vector<8x128xf32>
    %550 = arith.addf %549, %548 : vector<8x128xf32>
    %551 = arith.divf %549, %550 : vector<8x128xf32>
    %552 = vector.extract_strided_slice %540 {offsets = [0, 128], sizes = [8, 128], strides = [1, 1]} : vector<8x384xf32> to vector<8x128xf32>
    %553 = vector.extract_strided_slice %543 {offsets = [0, 128], sizes = [8, 128], strides = [1, 1]} : vector<8x384xf32> to vector<8x128xf32>
    %554 = arith.addf %552, %553 : vector<8x128xf32>
    %555 = arith.negf %554 : vector<8x128xf32>
    %556 = math.exp %555 : vector<8x128xf32>
    %cst_231 = arith.constant 1.000000e+00 : f32
    %557 = vector.broadcast %cst_231 : f32 to vector<8x128xf32>
    %558 = arith.addf %557, %556 : vector<8x128xf32>
    %559 = arith.divf %557, %558 : vector<8x128xf32>
    %560 = vector.extract_strided_slice %540 {offsets = [0, 256], sizes = [8, 128], strides = [1, 1]} : vector<8x384xf32> to vector<8x128xf32>
    %561 = vector.extract_strided_slice %543 {offsets = [0, 256], sizes = [8, 128], strides = [1, 1]} : vector<8x384xf32> to vector<8x128xf32>
    %562 = arith.mulf %551, %561 : vector<8x128xf32>
    %563 = arith.addf %560, %562 : vector<8x128xf32>
    %564 = math.tanh %563 : vector<8x128xf32>
    %cst_232 = arith.constant 1.000000e+00 : f32
    %565 = vector.broadcast %cst_232 : f32 to vector<8x128xf32>
    %566 = arith.subf %565, %559 : vector<8x128xf32>
    %567 = arith.mulf %566, %564 : vector<8x128xf32>
    %568 = arith.mulf %559, %524 : vector<8x128xf32>
    %569 = arith.addf %567, %568 : vector<8x128xf32>
    %c8_i32_233 = arith.constant 8 : i32
    %570 = arith.muli %c0_i32_222, %c8_i32_233 : i32
    %c32_i32_234 = arith.constant 32 : i32
    %571 = arith.addi %c32_i32_234, %570 : i32
    %572 = tpu.assume_multiple %571, 8 : i32
    %573 = arith.index_cast %572 : i32 to index
    %c0_235 = arith.constant 0 : index
    %574 = vector.load %arg15[%573, %c0_235] : memref<64x128xf32, #tpu.memory_space<vmem>>, vector<8x128xf32>
    tpu.vector_store %arg15[%573, %c0_235], %569 {strides = array<i32>} : memref<64x128xf32, #tpu.memory_space<vmem>>, vector<8x128xf32>,
    %c1_i32_236 = arith.constant 1 : i32
    %c8_i32_237 = arith.constant 8 : i32
    %575 = arith.muli %c1_i32_236, %c8_i32_237 : i32
    %576 = tpu.assume_multiple %575, 8 : i32
    %c0_i32_238 = arith.constant 0 : i32
    %c0_i32_239 = arith.constant 0 : i32
    %577 = tpu.memref_slice %arg16[%c1_i32_221, %c0_i32_238, %c0_i32_239] : memref<2x32x384xf32, #tpu.memory_space<vmem>> -> memref<1x32x384xf32, #tpu.memory_space<vmem>>
    %578 = tpu.memref_squeeze %577 : memref<1x32x384xf32, #tpu.memory_space<vmem>> -> memref<32x384xf32, #tpu.memory_space<vmem>>
    %579 = arith.index_cast %576 : i32 to index
    %c0_240 = arith.constant 0 : index
    %580 = vector.load %578[%579, %c0_240] : memref<32x384xf32, #tpu.memory_space<vmem>>, vector<8x384xf32>
    %c0_241 = arith.constant 0 : index
    %c0_242 = arith.constant 0 : index
    %581 = vector.load %arg8[%c0_241, %c0_242] : memref<128x384xf32, #tpu.memory_space<vmem>>, vector<128x384xf32>
    %cst_243 = arith.constant dense<0.000000e+00> : vector<8x384xf32>
    %582 = tpu.matmul %569, %581, %cst_243 {dimension_numbers = #tpu.dot_dimension_numbers<[1], [0], [0], [1], [0, 0, 1, 1], [], []>} : vector<8x128xf32>, vector<128x384xf32>, vector<8x384xf32> -> vector<8x384xf32>
    %583 = arith.addf %582, %353 : vector<8x384xf32>
    %584 = vector.extract_strided_slice %580 {offsets = [0, 0], sizes = [8, 128], strides = [1, 1]} : vector<8x384xf32> to vector<8x128xf32>
    %585 = vector.extract_strided_slice %583 {offsets = [0, 0], sizes = [8, 128], strides = [1, 1]} : vector<8x384xf32> to vector<8x128xf32>
    %586 = arith.addf %584, %585 : vector<8x128xf32>
    %587 = arith.negf %586 : vector<8x128xf32>
    %588 = math.exp %587 : vector<8x128xf32>
    %cst_244 = arith.constant 1.000000e+00 : f32
    %589 = vector.broadcast %cst_244 : f32 to vector<8x128xf32>
    %590 = arith.addf %589, %588 : vector<8x128xf32>
    %591 = arith.divf %589, %590 : vector<8x128xf32>
    %592 = vector.extract_strided_slice %580 {offsets = [0, 128], sizes = [8, 128], strides = [1, 1]} : vector<8x384xf32> to vector<8x128xf32>
    %593 = vector.extract_strided_slice %583 {offsets = [0, 128], sizes = [8, 128], strides = [1, 1]} : vector<8x384xf32> to vector<8x128xf32>
    %594 = arith.addf %592, %593 : vector<8x128xf32>
    %595 = arith.negf %594 : vector<8x128xf32>
    %596 = math.exp %595 : vector<8x128xf32>
    %cst_245 = arith.constant 1.000000e+00 : f32
    %597 = vector.broadcast %cst_245 : f32 to vector<8x128xf32>
    %598 = arith.addf %597, %596 : vector<8x128xf32>
    %599 = arith.divf %597, %598 : vector<8x128xf32>
    %600 = vector.extract_strided_slice %580 {offsets = [0, 256], sizes = [8, 128], strides = [1, 1]} : vector<8x384xf32> to vector<8x128xf32>
    %601 = vector.extract_strided_slice %583 {offsets = [0, 256], sizes = [8, 128], strides = [1, 1]} : vector<8x384xf32> to vector<8x128xf32>
    %602 = arith.mulf %591, %601 : vector<8x128xf32>
    %603 = arith.addf %600, %602 : vector<8x128xf32>
    %604 = math.tanh %603 : vector<8x128xf32>
    %cst_246 = arith.constant 1.000000e+00 : f32
    %605 = vector.broadcast %cst_246 : f32 to vector<8x128xf32>
    %606 = arith.subf %605, %599 : vector<8x128xf32>
    %607 = arith.mulf %606, %604 : vector<8x128xf32>
    %608 = arith.mulf %599, %569 : vector<8x128xf32>
    %609 = arith.addf %607, %608 : vector<8x128xf32>
    %c8_i32_247 = arith.constant 8 : i32
    %610 = arith.muli %c1_i32_236, %c8_i32_247 : i32
    %c32_i32_248 = arith.constant 32 : i32
    %611 = arith.addi %c32_i32_248, %610 : i32
    %612 = tpu.assume_multiple %611, 8 : i32
    %613 = arith.index_cast %612 : i32 to index
    %c0_249 = arith.constant 0 : index
    %614 = vector.load %arg15[%613, %c0_249] : memref<64x128xf32, #tpu.memory_space<vmem>>, vector<8x128xf32>
    tpu.vector_store %arg15[%613, %c0_249], %609 {strides = array<i32>} : memref<64x128xf32, #tpu.memory_space<vmem>>, vector<8x128xf32>,
    %c2_i32_250 = arith.constant 2 : i32
    %c8_i32_251 = arith.constant 8 : i32
    %615 = arith.muli %c2_i32_250, %c8_i32_251 : i32
    %616 = tpu.assume_multiple %615, 8 : i32
    %c0_i32_252 = arith.constant 0 : i32
    %c0_i32_253 = arith.constant 0 : i32
    %617 = tpu.memref_slice %arg16[%c1_i32_221, %c0_i32_252, %c0_i32_253] : memref<2x32x384xf32, #tpu.memory_space<vmem>> -> memref<1x32x384xf32, #tpu.memory_space<vmem>>
    %618 = tpu.memref_squeeze %617 : memref<1x32x384xf32, #tpu.memory_space<vmem>> -> memref<32x384xf32, #tpu.memory_space<vmem>>
    %619 = arith.index_cast %616 : i32 to index
    %c0_254 = arith.constant 0 : index
    %620 = vector.load %618[%619, %c0_254] : memref<32x384xf32, #tpu.memory_space<vmem>>, vector<8x384xf32>
    %c0_255 = arith.constant 0 : index
    %c0_256 = arith.constant 0 : index
    %621 = vector.load %arg8[%c0_255, %c0_256] : memref<128x384xf32, #tpu.memory_space<vmem>>, vector<128x384xf32>
    %cst_257 = arith.constant dense<0.000000e+00> : vector<8x384xf32>
    %622 = tpu.matmul %609, %621, %cst_257 {dimension_numbers = #tpu.dot_dimension_numbers<[1], [0], [0], [1], [0, 0, 1, 1], [], []>} : vector<8x128xf32>, vector<128x384xf32>, vector<8x384xf32> -> vector<8x384xf32>
    %623 = arith.addf %622, %353 : vector<8x384xf32>
    %624 = vector.extract_strided_slice %620 {offsets = [0, 0], sizes = [8, 128], strides = [1, 1]} : vector<8x384xf32> to vector<8x128xf32>
    %625 = vector.extract_strided_slice %623 {offsets = [0, 0], sizes = [8, 128], strides = [1, 1]} : vector<8x384xf32> to vector<8x128xf32>
    %626 = arith.addf %624, %625 : vector<8x128xf32>
    %627 = arith.negf %626 : vector<8x128xf32>
    %628 = math.exp %627 : vector<8x128xf32>
    %cst_258 = arith.constant 1.000000e+00 : f32
    %629 = vector.broadcast %cst_258 : f32 to vector<8x128xf32>
    %630 = arith.addf %629, %628 : vector<8x128xf32>
    %631 = arith.divf %629, %630 : vector<8x128xf32>
    %632 = vector.extract_strided_slice %620 {offsets = [0, 128], sizes = [8, 128], strides = [1, 1]} : vector<8x384xf32> to vector<8x128xf32>
    %633 = vector.extract_strided_slice %623 {offsets = [0, 128], sizes = [8, 128], strides = [1, 1]} : vector<8x384xf32> to vector<8x128xf32>
    %634 = arith.addf %632, %633 : vector<8x128xf32>
    %635 = arith.negf %634 : vector<8x128xf32>
    %636 = math.exp %635 : vector<8x128xf32>
    %cst_259 = arith.constant 1.000000e+00 : f32
    %637 = vector.broadcast %cst_259 : f32 to vector<8x128xf32>
    %638 = arith.addf %637, %636 : vector<8x128xf32>
    %639 = arith.divf %637, %638 : vector<8x128xf32>
    %640 = vector.extract_strided_slice %620 {offsets = [0, 256], sizes = [8, 128], strides = [1, 1]} : vector<8x384xf32> to vector<8x128xf32>
    %641 = vector.extract_strided_slice %623 {offsets = [0, 256], sizes = [8, 128], strides = [1, 1]} : vector<8x384xf32> to vector<8x128xf32>
    %642 = arith.mulf %631, %641 : vector<8x128xf32>
    %643 = arith.addf %640, %642 : vector<8x128xf32>
    %644 = math.tanh %643 : vector<8x128xf32>
    %cst_260 = arith.constant 1.000000e+00 : f32
    %645 = vector.broadcast %cst_260 : f32 to vector<8x128xf32>
    %646 = arith.subf %645, %639 : vector<8x128xf32>
    %647 = arith.mulf %646, %644 : vector<8x128xf32>
    %648 = arith.mulf %639, %609 : vector<8x128xf32>
    %649 = arith.addf %647, %648 : vector<8x128xf32>
    %c8_i32_261 = arith.constant 8 : i32
    %650 = arith.muli %c2_i32_250, %c8_i32_261 : i32
    %c32_i32_262 = arith.constant 32 : i32
    %651 = arith.addi %c32_i32_262, %650 : i32
    %652 = tpu.assume_multiple %651, 8 : i32
    %653 = arith.index_cast %652 : i32 to index
    %c0_263 = arith.constant 0 : index
    %654 = vector.load %arg15[%653, %c0_263] : memref<64x128xf32, #tpu.memory_space<vmem>>, vector<8x128xf32>
    tpu.vector_store %arg15[%653, %c0_263], %649 {strides = array<i32>} : memref<64x128xf32, #tpu.memory_space<vmem>>, vector<8x128xf32>,
    %c3_i32_264 = arith.constant 3 : i32
    %c8_i32_265 = arith.constant 8 : i32
    %655 = arith.muli %c3_i32_264, %c8_i32_265 : i32
    %656 = tpu.assume_multiple %655, 8 : i32
    %c0_i32_266 = arith.constant 0 : i32
    %c0_i32_267 = arith.constant 0 : i32
    %657 = tpu.memref_slice %arg16[%c1_i32_221, %c0_i32_266, %c0_i32_267] : memref<2x32x384xf32, #tpu.memory_space<vmem>> -> memref<1x32x384xf32, #tpu.memory_space<vmem>>
    %658 = tpu.memref_squeeze %657 : memref<1x32x384xf32, #tpu.memory_space<vmem>> -> memref<32x384xf32, #tpu.memory_space<vmem>>
    %659 = arith.index_cast %656 : i32 to index
    %c0_268 = arith.constant 0 : index
    %660 = vector.load %658[%659, %c0_268] : memref<32x384xf32, #tpu.memory_space<vmem>>, vector<8x384xf32>
    %c0_269 = arith.constant 0 : index
    %c0_270 = arith.constant 0 : index
    %661 = vector.load %arg8[%c0_269, %c0_270] : memref<128x384xf32, #tpu.memory_space<vmem>>, vector<128x384xf32>
    %cst_271 = arith.constant dense<0.000000e+00> : vector<8x384xf32>
    %662 = tpu.matmul %649, %661, %cst_271 {dimension_numbers = #tpu.dot_dimension_numbers<[1], [0], [0], [1], [0, 0, 1, 1], [], []>} : vector<8x128xf32>, vector<128x384xf32>, vector<8x384xf32> -> vector<8x384xf32>
    %663 = arith.addf %662, %353 : vector<8x384xf32>
    %664 = vector.extract_strided_slice %660 {offsets = [0, 0], sizes = [8, 128], strides = [1, 1]} : vector<8x384xf32> to vector<8x128xf32>
    %665 = vector.extract_strided_slice %663 {offsets = [0, 0], sizes = [8, 128], strides = [1, 1]} : vector<8x384xf32> to vector<8x128xf32>
    %666 = arith.addf %664, %665 : vector<8x128xf32>
    %667 = arith.negf %666 : vector<8x128xf32>
    %668 = math.exp %667 : vector<8x128xf32>
    %cst_272 = arith.constant 1.000000e+00 : f32
    %669 = vector.broadcast %cst_272 : f32 to vector<8x128xf32>
    %670 = arith.addf %669, %668 : vector<8x128xf32>
    %671 = arith.divf %669, %670 : vector<8x128xf32>
    %672 = vector.extract_strided_slice %660 {offsets = [0, 128], sizes = [8, 128], strides = [1, 1]} : vector<8x384xf32> to vector<8x128xf32>
    %673 = vector.extract_strided_slice %663 {offsets = [0, 128], sizes = [8, 128], strides = [1, 1]} : vector<8x384xf32> to vector<8x128xf32>
    %674 = arith.addf %672, %673 : vector<8x128xf32>
    %675 = arith.negf %674 : vector<8x128xf32>
    %676 = math.exp %675 : vector<8x128xf32>
    %cst_273 = arith.constant 1.000000e+00 : f32
    %677 = vector.broadcast %cst_273 : f32 to vector<8x128xf32>
    %678 = arith.addf %677, %676 : vector<8x128xf32>
    %679 = arith.divf %677, %678 : vector<8x128xf32>
    %680 = vector.extract_strided_slice %660 {offsets = [0, 256], sizes = [8, 128], strides = [1, 1]} : vector<8x384xf32> to vector<8x128xf32>
    %681 = vector.extract_strided_slice %663 {offsets = [0, 256], sizes = [8, 128], strides = [1, 1]} : vector<8x384xf32> to vector<8x128xf32>
    %682 = arith.mulf %671, %681 : vector<8x128xf32>
    %683 = arith.addf %680, %682 : vector<8x128xf32>
    %684 = math.tanh %683 : vector<8x128xf32>
    %cst_274 = arith.constant 1.000000e+00 : f32
    %685 = vector.broadcast %cst_274 : f32 to vector<8x128xf32>
    %686 = arith.subf %685, %679 : vector<8x128xf32>
    %687 = arith.mulf %686, %684 : vector<8x128xf32>
    %688 = arith.mulf %679, %649 : vector<8x128xf32>
    %689 = arith.addf %687, %688 : vector<8x128xf32>
    %c8_i32_275 = arith.constant 8 : i32
    %690 = arith.muli %c3_i32_264, %c8_i32_275 : i32
    %c32_i32_276 = arith.constant 32 : i32
    %691 = arith.addi %c32_i32_276, %690 : i32
    %692 = tpu.assume_multiple %691, 8 : i32
    %693 = arith.index_cast %692 : i32 to index
    %c0_277 = arith.constant 0 : index
    %694 = vector.load %arg15[%693, %c0_277] : memref<64x128xf32, #tpu.memory_space<vmem>>, vector<8x128xf32>
    tpu.vector_store %arg15[%693, %c0_277], %689 {strides = array<i32>} : memref<64x128xf32, #tpu.memory_space<vmem>>, vector<8x128xf32>,
    %c4_i32_278 = arith.constant 4 : i32
    %c32_279 = arith.constant 32 : index
    %c0_280 = arith.constant 0 : index
    %695 = vector.load %arg15[%c32_279, %c0_280] : memref<64x128xf32, #tpu.memory_space<vmem>>, vector<32x128xf32>
    %c0_281 = arith.constant 0 : index
    %c0_282 = arith.constant 0 : index
    %696 = vector.load %arg10[%c0_281, %c0_282] : memref<128x128xf32, #tpu.memory_space<vmem>>, vector<128x128xf32>
    %cst_283 = arith.constant dense<0.000000e+00> : vector<32x128xf32>
    %697 = tpu.matmul %695, %696, %cst_283 {dimension_numbers = #tpu.dot_dimension_numbers<[1], [0], [0], [1], [0, 0, 1, 1], [], []>} : vector<32x128xf32>, vector<128x128xf32>, vector<32x128xf32> -> vector<32x128xf32>
    %698 = arith.addf %697, %2 : vector<32x128xf32>
    %c32_284 = arith.constant 32 : index
    %c0_285 = arith.constant 0 : index
    %699 = vector.load %arg12[%c32_284, %c0_285] : memref<64x128xf32, #tpu.memory_space<vmem>>, vector<32x128xf32>
    tpu.vector_store %arg12[%c32_284, %c0_285], %698 {strides = array<i32>} : memref<64x128xf32, #tpu.memory_space<vmem>>, vector<32x128xf32>,
    %c1_286 = arith.constant 1 : index
    %c0_287 = arith.constant 0 : index
    %c0_288 = arith.constant 0 : index
    %700 = vector.load %arg13[%c1_286, %c0_287, %c0_288] : memref<2x8x128xf32, #tpu.memory_space<vmem>>, vector<1x8x128xf32>
    %701 = vector.shape_cast %700 : vector<1x8x128xf32> to vector<8x128xf32>
    %702 = vector.shape_cast %689 : vector<8x128xf32> to vector<1x8x128xf32>
    tpu.vector_store %arg13[%c1_286, %c0_287, %c0_288], %702 {strides = array<i32>} : memref<2x8x128xf32, #tpu.memory_space<vmem>>, vector<1x8x128xf32>,
    return
  }
}

</mosaic_0001>

<llo_original>
// kernel: tpu_custom_call.1
$region0: #{tpu_custom_call.1}
  #allocation0 [shape = 'u32[]', space=smem, size = 0x4, offset = 0x4, fixed_abs, tag = 'smem constant byte address 0x4 - core index']
  #allocation1 [shape = 'u32[144,128]{1,0:T(1,128)}', space=vmem, size = 0x12000, scoped, tag = 'internal scratch']
  #allocation2 [shape = 'f32[64,128]{1,0:T(8,128)}', space=vmem, size = 0x8000, scoped, tag = 'scratch operand']
  #allocation3 [shape = 'f32[64,128]{1,0:T(8,128)}', space=vmem, size = 0x8000, scoped, tag = 'scratch operand']
  #allocation4 [shape = 'f32[2,32,384]{2,1,0:T(8,128)}', space=vmem, size = 0x18000, scoped, tag = 'scratch operand']
  %s0 = inlined_call_operand.vmem [shape: f32[64,16], index: 0, kind: input, shape index: {}]
  %s1 = inlined_call_operand.vmem [shape: f32[2,8,128], index: 1, kind: input, shape index: {}]
  %s2 = inlined_call_operand.vmem [shape: f32[16,384], index: 2, kind: input, shape index: {}]
  %s3 = inlined_call_operand.vmem [shape: f32[1,384], index: 3, kind: input, shape index: {}]
  %s4 = inlined_call_operand.hbm [shape: f32[128,384], index: 4, kind: input, shape index: {}]
  %s5 = inlined_call_operand.vmem [shape: f32[1,384], index: 5, kind: input, shape index: {}]
  %s6 = inlined_call_operand.hbm [shape: f32[128,384], index: 6, kind: input, shape index: {}]
  %s7 = inlined_call_operand.vmem [shape: f32[1,384], index: 7, kind: input, shape index: {}]
  %s8 = inlined_call_operand.hbm [shape: f32[128,384], index: 8, kind: input, shape index: {}]
  %s9 = inlined_call_operand.vmem [shape: f32[1,384], index: 9, kind: input, shape index: {}]
  %s10 = inlined_call_operand.hbm [shape: f32[128,128], index: 10, kind: input, shape index: {}]
  %s11 = inlined_call_operand.vmem [shape: f32[1,128], index: 11, kind: input, shape index: {}]
  %s12 = inlined_call_operand.hbm [shape: f32[64,128], index: 12, kind: output, shape index: {0}]
  %s13 = inlined_call_operand.hbm [shape: f32[2,8,128], index: 13, kind: output, shape index: {1}]
  %14 = xla_tuple %s12, %s13
  %s15 = sld [smem:[#allocation0]]
  $region82: #{tpu_custom_call.1} parent=0
    _
  %s17 = ssub.s32 1, %s15
  %s18 = scalar_select 0, %s17, %s15
  $region1: #{tpu_custom_call.1} parent=0
    #allocation5 [shape = 'u8[196608]{0}', space=vmem, size = 0x30000, scoped, tag = 'input window, operand 4, single buffered']
    #allocation6 [shape = 's32[1]{0}', space=sflag, size = 0x4, scoped, tag = 'scoped memory for tpu_custom_call.1']
    #allocation7 [shape = 's32[1]{0}', space=sflag, size = 0x4, scoped, tag = 'scoped memory for tpu_custom_call.1']
    #allocation8 [shape = 'u8[196608]{0}', space=vmem, size = 0x30000, scoped, tag = 'input window, operand 6, single buffered']
    #allocation9 [shape = 's32[1]{0}', space=sflag, size = 0x4, scoped, tag = 'scoped memory for tpu_custom_call.1']
    #allocation10 [shape = 'u8[196608]{0}', space=vmem, size = 0x30000, scoped, tag = 'input window, operand 8, single buffered']
    #allocation11 [shape = 'u8[65536]{0}', space=vmem, size = 0x10000, scoped, tag = 'input window, operand 10, single buffered']
    #allocation12 [shape = 's32[1]{0}', space=sflag, size = 0x4, scoped, tag = 'scoped memory for tpu_custom_call.1']
    #allocation13 [shape = 'u8[32768]{0}', space=vmem, size = 0x8000, scoped, tag = 'output window, operand 0, single buffered']
    #allocation14 [shape = 'u8[8192]{0}', space=vmem, size = 0x2000, scoped, tag = 'output window, operand 1, single buffered']
    #allocation15 [shape = 's32[1]{0}', space=sflag, size = 0x4, scoped, tag = 'scoped memory for tpu_custom_call.1']
    %19 = vsyncpa [#allocation6], 0
    %20 = vsyncpa [#allocation9], 0
    %21 = vsyncpa [#allocation12], 0
    %22 = vsyncpa [#allocation7], 0
    %23 = vsyncpa [#allocation15], 0
    // Predicated region
    $region2: #{tpu_custom_call.1} parent=1 // pred_check
      _
    $region3: #{tpu_custom_call.1} parent=1 // pred_check_branch
      %25 = sbr.rel (0) target = $region5
    $region4: #{tpu_custom_call.1} parent=1 // pred_region
      _
    $region5: #{tpu_custom_call.1} parent=1 // pred_fallthru
      _
    // Predicated region
    $region6: #{tpu_custom_call.1} parent=1 // pred_check
      _
    $region7: #{tpu_custom_call.1} parent=1 // pred_check_branch
      %27 = sbr.rel (0) target = $region9
    $region8: #{tpu_custom_call.1} parent=1 // pred_region
      _
    $region9: #{tpu_custom_call.1} parent=1 // pred_fallthru
      _
    // Predicated region
    $region10: #{tpu_custom_call.1} parent=1 // pred_check
      _
    $region11: #{tpu_custom_call.1} parent=1 // pred_check_branch
      %29 = sbr.rel (0) target = $region13
    $region12: #{tpu_custom_call.1} parent=1 // pred_region
      _
    $region13: #{tpu_custom_call.1} parent=1 // pred_fallthru
      _
    // Predicated region
    $region14: #{tpu_custom_call.1} parent=1 // pred_check
      _
    $region15: #{tpu_custom_call.1} parent=1 // pred_check_branch
      %31 = sbr.rel (0) target = $region17
    $region16: #{tpu_custom_call.1} parent=1 // pred_region
      _
    $region17: #{tpu_custom_call.1} parent=1 // pred_fallthru
      _
    // Predicated region
    $region18: #{tpu_custom_call.1} parent=1 // pred_check
      _
    $region19: #{tpu_custom_call.1} parent=1 // pred_check_branch
      %33 = sbr.rel (0) target = $region21
    $region20: #{tpu_custom_call.1} parent=1 // pred_region
      %s35 = ssub.s32 6144, 6144
      %36 = vsyncadd [#allocation6], %s35
      %s37 = sshll.u32 [#allocation5], 4
      %s38 = int_to_ptr.vmem [resolvable:$true] %s37
      %43 = dma.hbm_to_vmem [thread:$0]  %s4, 6144, %s38, [#allocation6], 384, 384, 24
    $region21: #{tpu_custom_call.1} parent=1 // pred_fallthru
      _
    // Predicated region
    $region22: #{tpu_custom_call.1} parent=1 // pred_check
      _
    $region23: #{tpu_custom_call.1} parent=1 // pred_check_branch
      %45 = sbr.rel (0) target = $region25
    $region24: #{tpu_custom_call.1} parent=1 // pred_region
      _
    $region25: #{tpu_custom_call.1} parent=1 // pred_fallthru
      _
    // Predicated region
    $region26: #{tpu_custom_call.1} parent=1 // pred_check
      _
    $region27: #{tpu_custom_call.1} parent=1 // pred_check_branch
      %47 = sbr.rel (0) target = $region29
    $region28: #{tpu_custom_call.1} parent=1 // pred_region
      %s49 = ssub.s32 6144, 6144
      %50 = vsyncadd [#allocation9], %s49
      %s51 = sshll.u32 [#allocation8], 4
      %s52 = int_to_ptr.vmem [resolvable:$true] %s51
      %57 = dma.hbm_to_vmem [thread:$0]  %s6, 6144, %s52, [#allocation9], 384, 384, 24
    $region29: #{tpu_custom_call.1} parent=1 // pred_fallthru
      _
    // Predicated region
    $region30: #{tpu_custom_call.1} parent=1 // pred_check
      _
    $region31: #{tpu_custom_call.1} parent=1 // pred_check_branch
      %59 = sbr.rel (0) target = $region33
    $region32: #{tpu_custom_call.1} parent=1 // pred_region
      _
    $region33: #{tpu_custom_call.1} parent=1 // pred_fallthru
      _
    // Predicated region
    $region34: #{tpu_custom_call.1} parent=1 // pred_check
      _
    $region35: #{tpu_custom_call.1} parent=1 // pred_check_branch
      %61 = sbr.rel (0) target = $region37
    $region36: #{tpu_custom_call.1} parent=1 // pred_region
      %s63 = ssub.s32 6144, 6144
      %64 = vsyncadd [#allocation9], %s63
      %s65 = sshll.u32 [#allocation10], 4
      %s66 = int_to_ptr.vmem [resolvable:$true] %s65
      %71 = dma.hbm_to_vmem [thread:$0]  %s8, 6144, %s66, [#allocation9], 384, 384, 24
    $region37: #{tpu_custom_call.1} parent=1 // pred_fallthru
      _
    // Predicated region
    $region38: #{tpu_custom_call.1} parent=1 // pred_check
      _
    $region39: #{tpu_custom_call.1} parent=1 // pred_check_branch
      %73 = sbr.rel (0) target = $region41
    $region40: #{tpu_custom_call.1} parent=1 // pred_region
      _
    $region41: #{tpu_custom_call.1} parent=1 // pred_fallthru
      _
    // Predicated region
    $region42: #{tpu_custom_call.1} parent=1 // pred_check
      _
    $region43: #{tpu_custom_call.1} parent=1 // pred_check_branch
      %75 = sbr.rel (0) target = $region45
    $region44: #{tpu_custom_call.1} parent=1 // pred_region
      %s77 = ssub.s32 2048, 2048
      %78 = vsyncadd [#allocation12], %s77
      %s79 = sshll.u32 [#allocation11], 4
      %s80 = int_to_ptr.vmem [resolvable:$true] %s79
      %85 = dma.hbm_to_vmem [thread:$0]  %s10, 2048, %s80, [#allocation12], 128, 128, 8
    $region45: #{tpu_custom_call.1} parent=1 // pred_fallthru
      _
    // Predicated region
    $region46: #{tpu_custom_call.1} parent=1 // pred_check
      _
    $region47: #{tpu_custom_call.1} parent=1 // pred_check_branch
      %87 = sbr.rel (0) target = $region49
    $region48: #{tpu_custom_call.1} parent=1 // pred_region
      _
    $region49: #{tpu_custom_call.1} parent=1 // pred_fallthru
      _
    // Predicated region
    $region50: #{tpu_custom_call.1} parent=1 // pred_check
      _
    $region51: #{tpu_custom_call.1} parent=1 // pred_check_branch
      %89 = sbr.rel (0) target = $region53
    $region52: #{tpu_custom_call.1} parent=1 // pred_region
      %90 = dma.done [#allocation6], 6144
    $region53: #{tpu_custom_call.1} parent=1 // pred_fallthru
      _
    // Predicated region
    $region54: #{tpu_custom_call.1} parent=1 // pred_check
      _
    $region55: #{tpu_custom_call.1} parent=1 // pred_check_branch
      %92 = sbr.rel (0) target = $region57
    $region56: #{tpu_custom_call.1} parent=1 // pred_region
      %93 = dma.done [#allocation9], 6144
    $region57: #{tpu_custom_call.1} parent=1 // pred_fallthru
      _
    // Predicated region
    $region58: #{tpu_custom_call.1} parent=1 // pred_check
      _
    $region59: #{tpu_custom_call.1} parent=1 // pred_check_branch
      %95 = sbr.rel (0) target = $region61
    $region60: #{tpu_custom_call.1} parent=1 // pred_region
      %96 = dma.done [#allocation9], 6144
    $region61: #{tpu_custom_call.1} parent=1 // pred_fallthru
      _
    // Predicated region
    $region62: #{tpu_custom_call.1} parent=1 // pred_check
      _
    $region63: #{tpu_custom_call.1} parent=1 // pred_check_branch
      %98 = sbr.rel (0) target = $region65
    $region64: #{tpu_custom_call.1} parent=1 // pred_region
      %99 = dma.done [#allocation12], 2048
    $region65: #{tpu_custom_call.1} parent=1 // pred_fallthru
      _
    %v100 = vld [vmem:[%s11] sm:$0x1]
    %v102 = vlaneseq
    %v103 = vshrl.u32 %v102, 7
    %v104 = vsub.s32 0, %v103
    %v105 = vrot.slane %v100, %v104
    %v107 = vld [vmem:[%s3] sm:$0x7]
    %v109 = vlaneseq
    %v110 = vshrl.u32 %v109, 7
    %v111 = vsub.s32 0, %v110
    %v112 = vrot.slane %v107, %v111
    %v113 = vlaneseq
    %v114 = vshrl.u32 %v113, 7
    %v115 = vsub.s32 1, %v114
    %v116 = vrot.slane %v107, %v115
    %v117 = vlaneseq
    %v118 = vshrl.u32 %v117, 7
    %v119 = vsub.s32 2, %v118
    %v120 = vrot.slane %v107, %v119
    %v124 = vld [vmem:[%s5] sm:$0x7]
    %v126 = vlaneseq
    %v127 = vshrl.u32 %v126, 7
    %v128 = vsub.s32 0, %v127
    %v129 = vrot.slane %v124, %v128
    %v130 = vlaneseq
    %v131 = vshrl.u32 %v130, 7
    %v132 = vsub.s32 1, %v131
    %v133 = vrot.slane %v124, %v132
    %v134 = vlaneseq
    %v135 = vshrl.u32 %v134, 7
    %v136 = vsub.s32 2, %v135
    %v137 = vrot.slane %v124, %v136
    %v141 = vld [vmem:[%s0] sm:$0xff]
    %v142 = vld [vmem:[%s0 + $0x8] sm:$0xff]
    %v143 = vld [vmem:[%s0 + $0x10] sm:$0xff]
    %v144 = vld [vmem:[%s0 + $0x18] sm:$0xff]
    %v145 = vld [vmem:[%s2] sm:$0xff]
    %v146 = vld [vmem:[%s2 + $0x8] sm:$0xff]
    %v147 = vld [vmem:[%s2 + $0x10] sm:$0xff]
    %v148 = vld [vmem:[%s2 + $0x18] sm:$0xff]
    %v149 = vld [vmem:[%s2 + $0x20] sm:$0xff]
    %v150 = vld [vmem:[%s2 + $0x28] sm:$0xff]
    %vm151 = vcmask 130048
    %v153 = vsel %vm151, %v141, 0
    %v156 = vsel %vm151, %v142, 0
    %v159 = vsel %vm151, %v143, 0
    %v162 = vsel %vm151, %v144, 0
    %164 = vmatprep.subr.mxu0 %v146
    %165 = vmatpush1.msra.mxu0 %v145
    %166 = vmatprep.subr.mxu0 %v149
    %167 = vmatpush1.msra.mxu0 %v148
    %168 = vmatprep.subr.mxu0 0.0
    %169 = vmatpush1.msra.mxu0 0.0
    %170 = vmatprep.subr.mxu0 0.0
    %171 = vmatpush1.msra.mxu0 0.0
    %172 = vmatprep.subr.mxu0 0.0
    %173 = vmatpush1.msra.mxu0 0.0
    %174 = vmatprep.subr.mxu0 0.0
    %175 = vmatpush1.msra.mxu0 0.0
    %176 = vmatprep.subr.mxu0 0.0
    %177 = vmatpush1.msra.mxu0 0.0
    %178 = vmatprep.subr.mxu0 0.0
    %179 = vmatpush1.msra.mxu0 0.0
    %180 = vmatprep.subr.mxu0 0.0
    %181 = vmatpush1.msra.mxu0 0.0
    %182 = vmatprep.subr.mxu0 0.0
    %183 = vmatpush1.msra.mxu0 0.0
    %184 = vmatprep.subr.mxu0 0.0
    %185 = vmatpush1.msra.mxu0 0.0
    %186 = vmatprep.subr.mxu0 0.0
    %187 = vmatpush1.msra.mxu0 0.0
    %188 = vmatprep.subr.mxu0 0.0
    %189 = vmatpush1.msra.mxu0 0.0
    %190 = vmatprep.subr.mxu0 0.0
    %191 = vmatpush1.msra.mxu0 0.0
    %192 = vmatprep.subr.mxu0 0.0
    %193 = vmatpush1.msra.mxu0 0.0
    %194 = vmatprep.subr.mxu0 0.0
    %195 = vmatpush1.msra.mxu0 0.0
    %196 = vmatprep.subr.mxu0 0.0
    %197 = vmatpush1.msra.mxu0 0.0
    %198 = vmatprep.subr.mxu0 0.0
    %199 = vmatpush1.msra.mxu0 0.0
    %200 = vmatprep.subr.mxu0 0.0
    %201 = vmatpush1.msra.mxu0 0.0
    %202 = vmatprep.subr.mxu0 0.0
    %203 = vmatpush1.msra.mxu0 0.0
    %204 = vmatprep.subr.mxu0 0.0
    %205 = vmatpush1.msra.mxu0 0.0
    %206 = vmatprep.subr.mxu0 0.0
    %207 = vmatpush1.msra.mxu0 0.0
    %208 = vmatprep.subr.mxu0 0.0
    %209 = vmatpush1.msra.mxu0 0.0
    %210 = vmatprep.subr.mxu0 0.0
    %211 = vmatpush1.msra.mxu0 0.0
    %212 = vmatprep.subr.mxu0 0.0
    %213 = vmatpush1.msra.mxu0 0.0
    %214 = vmatprep.subr.mxu0 0.0
    %215 = vmatpush1.msra.mxu0 0.0
    %216 = vmatprep.subr.mxu0 0.0
    %217 = vmatpush1.msra.mxu0 0.0
    %218 = vmatprep.subr.mxu0 0.0
    %219 = vmatpush1.msra.mxu0 0.0
    %220 = vmatprep.subr.mxu0 0.0
    %221 = vmatpush1.msra.mxu0 0.0
    %222 = vmatprep.subr.mxu0 0.0
    %223 = vmatpush1.msra.mxu0 0.0
    %224 = vmatprep.subr.mxu0 0.0
    %225 = vmatpush1.msra.mxu0 0.0
    %226 = vmatprep.subr.mxu0 0.0
    %227 = vmatpush1.msra.mxu0 0.0
    %228 = vmatprep.mubr.f32.mxu0 0.0
    %229 = vmatmul.mubr.f32.gmra.mrb[0].mxu0 %v153
    %v230 = vpop.f32.mrb[0].mxu0
    %v231 = vadd.f32 %v112, %v230
    %v232 = vpop.f32.mrb[0].mxu0
    %v233 = vadd.f32 %v116, %v232
    %234 = vmatprep.mubr.f32.mxu0 0.0
    %235 = vmatmul.mubr.f32.gmra.mrb[0].mxu0 %v156
    %v236 = vpop.f32.mrb[0].mxu0
    %v237 = vadd.f32 %v112, %v236
    %v238 = vpop.f32.mrb[0].mxu0
    %v239 = vadd.f32 %v116, %v238
    %240 = vmatprep.mubr.f32.mxu0 0.0
    %241 = vmatmul.mubr.f32.gmra.mrb[0].mxu0 %v159
    %v242 = vpop.f32.mrb[0].mxu0
    %v243 = vadd.f32 %v112, %v242
    %v244 = vpop.f32.mrb[0].mxu0
    %v245 = vadd.f32 %v116, %v244
    %246 = vmatprep.mubr.f32.mxu0 0.0
    %247 = vmatmul.mubr.f32.gmra.mrb[0].mxu0 %v162
    %v248 = vpop.f32.mrb[0].mxu0
    %v249 = vadd.f32 %v112, %v248
    %v250 = vpop.f32.mrb[0].mxu0
    %v251 = vadd.f32 %v116, %v250
    %252 = vdwg.mxu0
    %253 = vmatprep.subr.mxu0 0.0
    %254 = vmatpush1.msra.mxu0 %v147
    %255 = vmatprep.subr.mxu0 0.0
    %256 = vmatpush1.msra.mxu0 %v150
    %257 = vmatprep.subr.mxu0 0.0
    %258 = vmatpush1.msra.mxu0 0.0
    %259 = vmatprep.subr.mxu0 0.0
    %260 = vmatpush1.msra.mxu0 0.0
    %261 = vmatprep.subr.mxu0 0.0
    %262 = vmatpush1.msra.mxu0 0.0
    %263 = vmatprep.subr.mxu0 0.0
    %264 = vmatpush1.msra.mxu0 0.0
    %265 = vmatprep.subr.mxu0 0.0
    %266 = vmatpush1.msra.mxu0 0.0
    %267 = vmatprep.subr.mxu0 0.0
    %268 = vmatpush1.msra.mxu0 0.0
    %269 = vmatprep.subr.mxu0 0.0
    %270 = vmatpush1.msra.mxu0 0.0
    %271 = vmatprep.subr.mxu0 0.0
    %272 = vmatpush1.msra.mxu0 0.0
    %273 = vmatprep.subr.mxu0 0.0
    %274 = vmatpush1.msra.mxu0 0.0
    %275 = vmatprep.subr.mxu0 0.0
    %276 = vmatpush1.msra.mxu0 0.0
    %277 = vmatprep.subr.mxu0 0.0
    %278 = vmatpush1.msra.mxu0 0.0
    %279 = vmatprep.subr.mxu0 0.0
    %280 = vmatpush1.msra.mxu0 0.0
    %281 = vmatprep.subr.mxu0 0.0
    %282 = vmatpush1.msra.mxu0 0.0
    %283 = vmatprep.subr.mxu0 0.0
    %284 = vmatpush1.msra.mxu0 0.0
    %285 = vmatprep.subr.mxu0 0.0
    %286 = vmatpush1.msra.mxu0 0.0
    %287 = vmatprep.subr.mxu0 0.0
    %288 = vmatpush1.msra.mxu0 0.0
    %289 = vmatprep.subr.mxu0 0.0
    %290 = vmatpush1.msra.mxu0 0.0
    %291 = vmatprep.subr.mxu0 0.0
    %292 = vmatpush1.msra.mxu0 0.0
    %293 = vmatprep.subr.mxu0 0.0
    %294 = vmatpush1.msra.mxu0 0.0
    %295 = vmatprep.subr.mxu0 0.0
    %296 = vmatpush1.msra.mxu0 0.0
    %297 = vmatprep.subr.mxu0 0.0
    %298 = vmatpush1.msra.mxu0 0.0
    %299 = vmatprep.subr.mxu0 0.0
    %300 = vmatpush1.msra.mxu0 0.0
    %301 = vmatprep.subr.mxu0 0.0
    %302 = vmatpush1.msra.mxu0 0.0
    %303 = vmatprep.subr.mxu0 0.0
    %304 = vmatpush1.msra.mxu0 0.0
    %305 = vmatprep.subr.mxu0 0.0
    %306 = vmatpush1.msra.mxu0 0.0
    %307 = vmatprep.subr.mxu0 0.0
    %308 = vmatpush1.msra.mxu0 0.0
    %309 = vmatprep.subr.mxu0 0.0
    %310 = vmatpush1.msra.mxu0 0.0
    %311 = vmatprep.subr.mxu0 0.0
    %312 = vmatpush1.msra.mxu0 0.0
    %313 = vmatprep.subr.mxu0 0.0
    %314 = vmatpush1.msra.mxu0 0.0
    %315 = vmatprep.subr.mxu0 0.0
    %316 = vmatpush1.msra.mxu0 0.0
    %317 = vmatprep.mubr.f32.mxu0 0.0
    %318 = vmatmul.mubr.f32.gmra.mrb[0].mxu0 %v153
    %v319 = vpop.f32.mrb[0].mxu0
    %v320 = vadd.f32 %v120, %v319
    %v321 = vpop.f32.mrb[0].mxu0
    %322 = vmatprep.mubr.f32.mxu0 0.0
    %323 = vmatmul.mubr.f32.gmra.mrb[0].mxu0 %v156
    %v324 = vpop.f32.mrb[0].mxu0
    %v325 = vadd.f32 %v120, %v324
    %v326 = vpop.f32.mrb[0].mxu0
    %327 = vmatprep.mubr.f32.mxu0 0.0
    %328 = vmatmul.mubr.f32.gmra.mrb[0].mxu0 %v159
    %v329 = vpop.f32.mrb[0].mxu0
    %v330 = vadd.f32 %v120, %v329
    %v331 = vpop.f32.mrb[0].mxu0
    %332 = vmatprep.mubr.f32.mxu0 0.0
    %333 = vmatmul.mubr.f32.gmra.mrb[0].mxu0 %v162
    %v334 = vpop.f32.mrb[0].mxu0
    %v335 = vadd.f32 %v120, %v334
    %v336 = vpop.f32.mrb[0].mxu0
    %337 = vdwg.mxu0
    %338 = vst [vmem:[#allocation4] sm:$0xff] %v231
    %339 = vst [vmem:[#allocation4 + $0x8] sm:$0xff] %v233
    %340 = vst [vmem:[#allocation4 + $0x10] sm:$0xff] %v320
    %341 = vst [vmem:[#allocation4 + $0x18] sm:$0xff] %v237
    %342 = vst [vmem:[#allocation4 + $0x20] sm:$0xff] %v239
    %343 = vst [vmem:[#allocation4 + $0x28] sm:$0xff] %v325
    %344 = vst [vmem:[#allocation4 + $0x30] sm:$0xff] %v243
    %345 = vst [vmem:[#allocation4 + $0x38] sm:$0xff] %v245
    %346 = vst [vmem:[#allocation4 + $0x40] sm:$0xff] %v330
    %347 = vst [vmem:[#allocation4 + $0x48] sm:$0xff] %v249
    %348 = vst [vmem:[#allocation4 + $0x50] sm:$0xff] %v251
    %349 = vst [vmem:[#allocation4 + $0x58] sm:$0xff] %v335
    %v350 = vld [vmem:[%s1] sm:$0xff]
    %v351 = vld [vmem:[%s0 + $0x20] sm:$0xff]
    %v352 = vld [vmem:[%s0 + $0x28] sm:$0xff]
    %v353 = vld [vmem:[%s0 + $0x30] sm:$0xff]
    %v354 = vld [vmem:[%s0 + $0x38] sm:$0xff]
    %v355 = vld [vmem:[%s2] sm:$0xff]
    %v356 = vld [vmem:[%s2 + $0x8] sm:$0xff]
    %v357 = vld [vmem:[%s2 + $0x10] sm:$0xff]
    %v358 = vld [vmem:[%s2 + $0x18] sm:$0xff]
    %v359 = vld [vmem:[%s2 + $0x20] sm:$0xff]
    %v360 = vld [vmem:[%s2 + $0x28] sm:$0xff]
    %v362 = vsel %vm151, %v351, 0
    %v365 = vsel %vm151, %v352, 0
    %v368 = vsel %vm151, %v353, 0
    %v371 = vsel %vm151, %v354, 0
    %373 = vmatprep.subr.mxu0 %v356
    %374 = vmatpush1.msra.mxu0 %v355
    %375 = vmatprep.subr.mxu0 %v359
    %376 = vmatpush1.msra.mxu0 %v358
    %377 = vmatprep.subr.mxu0 0.0
    %378 = vmatpush1.msra.mxu0 0.0
    %379 = vmatprep.subr.mxu0 0.0
    %380 = vmatpush1.msra.mxu0 0.0
    %381 = vmatprep.subr.mxu0 0.0
    %382 = vmatpush1.msra.mxu0 0.0
    %383 = vmatprep.subr.mxu0 0.0
    %384 = vmatpush1.msra.mxu0 0.0
    %385 = vmatprep.subr.mxu0 0.0
    %386 = vmatpush1.msra.mxu0 0.0
    %387 = vmatprep.subr.mxu0 0.0
    %388 = vmatpush1.msra.mxu0 0.0
    %389 = vmatprep.subr.mxu0 0.0
    %390 = vmatpush1.msra.mxu0 0.0
    %391 = vmatprep.subr.mxu0 0.0
    %392 = vmatpush1.msra.mxu0 0.0
    %393 = vmatprep.subr.mxu0 0.0
    %394 = vmatpush1.msra.mxu0 0.0
    %395 = vmatprep.subr.mxu0 0.0
    %396 = vmatpush1.msra.mxu0 0.0
    %397 = vmatprep.subr.mxu0 0.0
    %398 = vmatpush1.msra.mxu0 0.0
    %399 = vmatprep.subr.mxu0 0.0
    %400 = vmatpush1.msra.mxu0 0.0
    %401 = vmatprep.subr.mxu0 0.0
    %402 = vmatpush1.msra.mxu0 0.0
    %403 = vmatprep.subr.mxu0 0.0
    %404 = vmatpush1.msra.mxu0 0.0
    %405 = vmatprep.subr.mxu0 0.0
    %406 = vmatpush1.msra.mxu0 0.0
    %407 = vmatprep.subr.mxu0 0.0
    %408 = vmatpush1.msra.mxu0 0.0
    %409 = vmatprep.subr.mxu0 0.0
    %410 = vmatpush1.msra.mxu0 0.0
    %411 = vmatprep.subr.mxu0 0.0
    %412 = vmatpush1.msra.mxu0 0.0
    %413 = vmatprep.subr.mxu0 0.0
    %414 = vmatpush1.msra.mxu0 0.0
    %415 = vmatprep.subr.mxu0 0.0
    %416 = vmatpush1.msra.mxu0 0.0
    %417 = vmatprep.subr.mxu0 0.0
    %418 = vmatpush1.msra.mxu0 0.0
    %419 = vmatprep.subr.mxu0 0.0
    %420 = vmatpush1.msra.mxu0 0.0
    %421 = vmatprep.subr.mxu0 0.0
    %422 = vmatpush1.msra.mxu0 0.0
    %423 = vmatprep.subr.mxu0 0.0
    %424 = vmatpush1.msra.mxu0 0.0
    %425 = vmatprep.subr.mxu0 0.0
    %426 = vmatpush1.msra.mxu0 0.0
    %427 = vmatprep.subr.mxu0 0.0
    %428 = vmatpush1.msra.mxu0 0.0
    %429 = vmatprep.subr.mxu0 0.0
    %430 = vmatpush1.msra.mxu0 0.0
    %431 = vmatprep.subr.mxu0 0.0
    %432 = vmatpush1.msra.mxu0 0.0
    %433 = vmatprep.subr.mxu0 0.0
    %434 = vmatpush1.msra.mxu0 0.0
    %435 = vmatprep.subr.mxu0 0.0
    %436 = vmatpush1.msra.mxu0 0.0
    %437 = vmatprep.mubr.f32.mxu0 0.0
    %438 = vmatmul.mubr.f32.gmra.mrb[0].mxu0 %v362
    %v439 = vpop.f32.mrb[0].mxu0
    %v440 = vadd.f32 %v112, %v439
    %v441 = vpop.f32.mrb[0].mxu0
    %v442 = vadd.f32 %v116, %v441
    %443 = vmatprep.mubr.f32.mxu0 0.0
    %444 = vmatmul.mubr.f32.gmra.mrb[0].mxu0 %v365
    %v445 = vpop.f32.mrb[0].mxu0
    %v446 = vadd.f32 %v112, %v445
    %v447 = vpop.f32.mrb[0].mxu0
    %v448 = vadd.f32 %v116, %v447
    %449 = vmatprep.mubr.f32.mxu0 0.0
    %450 = vmatmul.mubr.f32.gmra.mrb[0].mxu0 %v368
    %v451 = vpop.f32.mrb[0].mxu0
    %v452 = vadd.f32 %v112, %v451
    %v453 = vpop.f32.mrb[0].mxu0
    %v454 = vadd.f32 %v116, %v453
    %455 = vmatprep.mubr.f32.mxu0 0.0
    %456 = vmatmul.mubr.f32.gmra.mrb[0].mxu0 %v371
    %v457 = vpop.f32.mrb[0].mxu0
    %v458 = vadd.f32 %v112, %v457
    %v459 = vpop.f32.mrb[0].mxu0
    %v460 = vadd.f32 %v116, %v459
    %461 = vdwg.mxu0
    %462 = vmatprep.subr.mxu0 0.0
    %463 = vmatpush1.msra.mxu0 %v357
    %464 = vmatprep.subr.mxu0 0.0
    %465 = vmatpush1.msra.mxu0 %v360
    %466 = vmatprep.subr.mxu0 0.0
    %467 = vmatpush1.msra.mxu0 0.0
    %468 = vmatprep.subr.mxu0 0.0
    %469 = vmatpush1.msra.mxu0 0.0
    %470 = vmatprep.subr.mxu0 0.0
    %471 = vmatpush1.msra.mxu0 0.0
    %472 = vmatprep.subr.mxu0 0.0
    %473 = vmatpush1.msra.mxu0 0.0
    %474 = vmatprep.subr.mxu0 0.0
    %475 = vmatpush1.msra.mxu0 0.0
    %476 = vmatprep.subr.mxu0 0.0
    %477 = vmatpush1.msra.mxu0 0.0
    %478 = vmatprep.subr.mxu0 0.0
    %479 = vmatpush1.msra.mxu0 0.0
    %480 = vmatprep.subr.mxu0 0.0
    %481 = vmatpush1.msra.mxu0 0.0
    %482 = vmatprep.subr.mxu0 0.0
    %483 = vmatpush1.msra.mxu0 0.0
    %484 = vmatprep.subr.mxu0 0.0
    %485 = vmatpush1.msra.mxu0 0.0
    %486 = vmatprep.subr.mxu0 0.0
    %487 = vmatpush1.msra.mxu0 0.0
    %488 = vmatprep.subr.mxu0 0.0
    %489 = vmatpush1.msra.mxu0 0.0
    %490 = vmatprep.subr.mxu0 0.0
    %491 = vmatpush1.msra.mxu0 0.0
    %492 = vmatprep.subr.mxu0 0.0
    %493 = vmatpush1.msra.mxu0 0.0
    %494 = vmatprep.subr.mxu0 0.0
    %495 = vmatpush1.msra.mxu0 0.0
    %496 = vmatprep.subr.mxu0 0.0
    %497 = vmatpush1.msra.mxu0 0.0
    %498 = vmatprep.subr.mxu0 0.0
    %499 = vmatpush1.msra.mxu0 0.0
    %500 = vmatprep.subr.mxu0 0.0
    %501 = vmatpush1.msra.mxu0 0.0
    %502 = vmatprep.subr.mxu0 0.0
    %503 = vmatpush1.msra.mxu0 0.0
    %504 = vmatprep.subr.mxu0 0.0
    %505 = vmatpush1.msra.mxu0 0.0
    %506 = vmatprep.subr.mxu0 0.0
    %507 = vmatpush1.msra.mxu0 0.0
    %508 = vmatprep.subr.mxu0 0.0
    %509 = vmatpush1.msra.mxu0 0.0
    %510 = vmatprep.subr.mxu0 0.0
    %511 = vmatpush1.msra.mxu0 0.0
    %512 = vmatprep.subr.mxu0 0.0
    %513 = vmatpush1.msra.mxu0 0.0
    %514 = vmatprep.subr.mxu0 0.0
    %515 = vmatpush1.msra.mxu0 0.0
    %516 = vmatprep.subr.mxu0 0.0
    %517 = vmatpush1.msra.mxu0 0.0
    %518 = vmatprep.subr.mxu0 0.0
    %519 = vmatpush1.msra.mxu0 0.0
    %520 = vmatprep.subr.mxu0 0.0
    %521 = vmatpush1.msra.mxu0 0.0
    %522 = vmatprep.subr.mxu0 0.0
    %523 = vmatpush1.msra.mxu0 0.0
    %524 = vmatprep.subr.mxu0 0.0
    %525 = vmatpush1.msra.mxu0 0.0
    %526 = vmatprep.mubr.f32.mxu0 0.0
    %527 = vmatmul.mubr.f32.gmra.mrb[0].mxu0 %v362
    %v528 = vpop.f32.mrb[0].mxu0
    %v529 = vadd.f32 %v120, %v528
    %v530 = vpop.f32.mrb[0].mxu0
    %531 = vmatprep.mubr.f32.mxu0 0.0
    %532 = vmatmul.mubr.f32.gmra.mrb[0].mxu0 %v365
    %v533 = vpop.f32.mrb[0].mxu0
    %v534 = vadd.f32 %v120, %v533
    %v535 = vpop.f32.mrb[0].mxu0
    %536 = vmatprep.mubr.f32.mxu0 0.0
    %537 = vmatmul.mubr.f32.gmra.mrb[0].mxu0 %v368
    %v538 = vpop.f32.mrb[0].mxu0
    %v539 = vadd.f32 %v120, %v538
    %v540 = vpop.f32.mrb[0].mxu0
    %541 = vmatprep.mubr.f32.mxu0 0.0
    %542 = vmatmul.mubr.f32.gmra.mrb[0].mxu0 %v371
    %v543 = vpop.f32.mrb[0].mxu0
    %v544 = vadd.f32 %v120, %v543
    %v545 = vpop.f32.mrb[0].mxu0
    %546 = vdwg.mxu0
    %s547 = scalar_lea.vmem [#allocation4], 96
    %548 = vst [vmem:[%s547] sm:$0xff] %v440
    %549 = vst [vmem:[%s547 + $0x8] sm:$0xff] %v442
    %550 = vst [vmem:[%s547 + $0x10] sm:$0xff] %v529
    %551 = vst [vmem:[%s547 + $0x18] sm:$0xff] %v446
    %552 = vst [vmem:[%s547 + $0x20] sm:$0xff] %v448
    %553 = vst [vmem:[%s547 + $0x28] sm:$0xff] %v534
    %554 = vst [vmem:[%s547 + $0x30] sm:$0xff] %v452
    %555 = vst [vmem:[%s547 + $0x38] sm:$0xff] %v454
    %556 = vst [vmem:[%s547 + $0x40] sm:$0xff] %v539
    %557 = vst [vmem:[%s547 + $0x48] sm:$0xff] %v458
    %558 = vst [vmem:[%s547 + $0x50] sm:$0xff] %v460
    %559 = vst [vmem:[%s547 + $0x58] sm:$0xff] %v544
    %s560 = smul.u32 0, 3
    %s561 = smul.addr %s560, 8
    %s562 = scalar_lea.vmem [#allocation4], %s561
    %v563 = vld [vmem:[%s562] sm:$0xff]
    %v564 = vld [vmem:[%s562 + $0x8] sm:$0xff]
    %v565 = vld [vmem:[%s562 + $0x10] sm:$0xff]
    %v566 = vld [vmem:[#allocation5] sm:$0xff]
    %v567 = vld [vmem:[#allocation5 + $0x8] sm:$0xff]
    %v568 = vld [vmem:[#allocation5 + $0x10] sm:$0xff]
    %v569 = vld [vmem:[#allocation5 + $0x18] sm:$0xff]
    %v570 = vld [vmem:[#allocation5 + $0x20] sm:$0xff]
    %v571 = vld [vmem:[#allocation5 + $0x28] sm:$0xff]
    %v572 = vld [vmem:[#allocation5 + $0x30] sm:$0xff]
    %v573 = vld [vmem:[#allocation5 + $0x38] sm:$0xff]
    %v574 = vld [vmem:[#allocation5 + $0x40] sm:$0xff]
    %v575 = vld [vmem:[#allocation5 + $0x48] sm:$0xff]
    %v576 = vld [vmem:[#allocation5 + $0x50] sm:$0xff]
    %v577 = vld [vmem:[#allocation5 + $0x58] sm:$0xff]
    %v578 = vld [vmem:[#allocation5 + $0x60] sm:$0xff]
    %v579 = vld [vmem:[#allocation5 + $0x68] sm:$0xff]
    %v580 = vld [vmem:[#allocation5 + $0x70] sm:$0xff]
    %v581 = vld [vmem:[#allocation5 + $0x78] sm:$0xff]
    %v582 = vld [vmem:[#allocation5 + $0x80] sm:$0xff]
    %v583 = vld [vmem:[#allocation5 + $0x88] sm:$0xff]
    %v584 = vld [vmem:[#allocation5 + $0x90] sm:$0xff]
    %v585 = vld [vmem:[#allocation5 + $0x98] sm:$0xff]
    %v586 = vld [vmem:[#allocation5 + $0xa0] sm:$0xff]
    %v587 = vld [vmem:[#allocation5 + $0xa8] sm:$0xff]
    %v588 = vld [vmem:[#allocation5 + $0xb0] sm:$0xff]
    %v589 = vld [vmem:[#allocation5 + $0xb8] sm:$0xff]
    %v590 = vld [vmem:[#allocation5 + $0xc0] sm:$0xff]
    %v591 = vld [vmem:[#allocation5 + $0xc8] sm:$0xff]
    %v592 = vld [vmem:[#allocation5 + $0xd0] sm:$0xff]
    %v593 = vld [vmem:[#allocation5 + $0xd8] sm:$0xff]
    %v594 = vld [vmem:[#allocation5 + $0xe0] sm:$0xff]
    %v595 = vld [vmem:[#allocation5 + $0xe8] sm:$0xff]
    %v596 = vld [vmem:[#allocation5 + $0xf0] sm:$0xff]
    %v597 = vld [vmem:[#allocation5 + $0xf8] sm:$0xff]
    %v598 = vld [vmem:[#allocation5 + $0x100] sm:$0xff]
    %v599 = vld [vmem:[#allocation5 + $0x108] sm:$0xff]
    %v600 = vld [vmem:[#allocation5 + $0x110] sm:$0xff]
    %v601 = vld [vmem:[#allocation5 + $0x118] sm:$0xff]
    %v602 = vld [vmem:[#allocation5 + $0x120] sm:$0xff]
    %v603 = vld [vmem:[#allocation5 + $0x128] sm:$0xff]
    %v604 = vld [vmem:[#allocation5 + $0x130] sm:$0xff]
    %v605 = vld [vmem:[#allocation5 + $0x138] sm:$0xff]
    %v606 = vld [vmem:[#allocation5 + $0x140] sm:$0xff]
    %v607 = vld [vmem:[#allocation5 + $0x148] sm:$0xff]
    %v608 = vld [vmem:[#allocation5 + $0x150] sm:$0xff]
    %v609 = vld [vmem:[#allocation5 + $0x158] sm:$0xff]
    %v610 = vld [vmem:[#allocation5 + $0x160] sm:$0xff]
    %v611 = vld [vmem:[#allocation5 + $0x168] sm:$0xff]
    %v612 = vld [vmem:[#allocation5 + $0x170] sm:$0xff]
    %v613 = vld [vmem:[#allocation5 + $0x178] sm:$0xff]
    %614 = vmatprep.subr.mxu0 %v567
    %615 = vmatpush1.msra.mxu0 %v566
    %616 = vmatprep.subr.mxu0 %v570
    %617 = vmatpush1.msra.mxu0 %v569
    %618 = vmatprep.subr.mxu0 %v573
    %619 = vmatpush1.msra.mxu0 %v572
    %620 = vmatprep.subr.mxu0 %v576
    %621 = vmatpush1.msra.mxu0 %v575
    %622 = vmatprep.subr.mxu0 %v579
    %623 = vmatpush1.msra.mxu0 %v578
    %624 = vmatprep.subr.mxu0 %v582
    %625 = vmatpush1.msra.mxu0 %v581
    %626 = vmatprep.subr.mxu0 %v585
    %627 = vmatpush1.msra.mxu0 %v584
    %628 = vmatprep.subr.mxu0 %v588
    %629 = vmatpush1.msra.mxu0 %v587
    %630 = vmatprep.subr.mxu0 %v591
    %631 = vmatpush1.msra.mxu0 %v590
    %632 = vmatprep.subr.mxu0 %v594
    %633 = vmatpush1.msra.mxu0 %v593
    %634 = vmatprep.subr.mxu0 %v597
    %635 = vmatpush1.msra.mxu0 %v596
    %636 = vmatprep.subr.mxu0 %v600
    %637 = vmatpush1.msra.mxu0 %v599
    %638 = vmatprep.subr.mxu0 %v603
    %639 = vmatpush1.msra.mxu0 %v602
    %640 = vmatprep.subr.mxu0 %v606
    %641 = vmatpush1.msra.mxu0 %v605
    %642 = vmatprep.subr.mxu0 %v609
    %643 = vmatpush1.msra.mxu0 %v608
    %644 = vmatprep.subr.mxu0 %v612
    %645 = vmatpush1.msra.mxu0 %v611
    %646 = vmatprep.subr.mxu0 0.0
    %647 = vmatpush1.msra.mxu0 0.0
    %648 = vmatprep.subr.mxu0 0.0
    %649 = vmatpush1.msra.mxu0 0.0
    %650 = vmatprep.subr.mxu0 0.0
    %651 = vmatpush1.msra.mxu0 0.0
    %652 = vmatprep.subr.mxu0 0.0
    %653 = vmatpush1.msra.mxu0 0.0
    %654 = vmatprep.subr.mxu0 0.0
    %655 = vmatpush1.msra.mxu0 0.0
    %656 = vmatprep.subr.mxu0 0.0
    %657 = vmatpush1.msra.mxu0 0.0
    %658 = vmatprep.subr.mxu0 0.0
    %659 = vmatpush1.msra.mxu0 0.0
    %660 = vmatprep.subr.mxu0 0.0
    %661 = vmatpush1.msra.mxu0 0.0
    %662 = vmatprep.subr.mxu0 0.0
    %663 = vmatpush1.msra.mxu0 0.0
    %664 = vmatprep.subr.mxu0 0.0
    %665 = vmatpush1.msra.mxu0 0.0
    %666 = vmatprep.subr.mxu0 0.0
    %667 = vmatpush1.msra.mxu0 0.0
    %668 = vmatprep.subr.mxu0 0.0
    %669 = vmatpush1.msra.mxu0 0.0
    %670 = vmatprep.subr.mxu0 0.0
    %671 = vmatpush1.msra.mxu0 0.0
    %672 = vmatprep.subr.mxu0 0.0
    %673 = vmatpush1.msra.mxu0 0.0
    %674 = vmatprep.subr.mxu0 0.0
    %675 = vmatpush1.msra.mxu0 0.0
    %676 = vmatprep.subr.mxu0 0.0
    %677 = vmatpush1.msra.mxu0 0.0
    %678 = vmatprep.mubr.f32.mxu0 0.0
    %679 = vmatmul.mubr.f32.gmra.mrb[0].mxu0 %v350
    %v680 = vpop.f32.mrb[0].mxu0
    %v681 = vadd.f32 %v129, %v680
    %v682 = vpop.f32.mrb[0].mxu0
    %v683 = vadd.f32 %v133, %v682
    %684 = vdwg.mxu0
    %685 = vmatprep.subr.mxu0 0.0
    %686 = vmatpush1.msra.mxu0 %v568
    %687 = vmatprep.subr.mxu0 0.0
    %688 = vmatpush1.msra.mxu0 %v571
    %689 = vmatprep.subr.mxu0 0.0
    %690 = vmatpush1.msra.mxu0 %v574
    %691 = vmatprep.subr.mxu0 0.0
    %692 = vmatpush1.msra.mxu0 %v577
    %693 = vmatprep.subr.mxu0 0.0
    %694 = vmatpush1.msra.mxu0 %v580
    %695 = vmatprep.subr.mxu0 0.0
    %696 = vmatpush1.msra.mxu0 %v583
    %697 = vmatprep.subr.mxu0 0.0
    %698 = vmatpush1.msra.mxu0 %v586
    %699 = vmatprep.subr.mxu0 0.0
    %700 = vmatpush1.msra.mxu0 %v589
    %701 = vmatprep.subr.mxu0 0.0
    %702 = vmatpush1.msra.mxu0 %v592
    %703 = vmatprep.subr.mxu0 0.0
    %704 = vmatpush1.msra.mxu0 %v595
    %705 = vmatprep.subr.mxu0 0.0
    %706 = vmatpush1.msra.mxu0 %v598
    %707 = vmatprep.subr.mxu0 0.0
    %708 = vmatpush1.msra.mxu0 %v601
    %709 = vmatprep.subr.mxu0 0.0
    %710 = vmatpush1.msra.mxu0 %v604
    %711 = vmatprep.subr.mxu0 0.0
    %712 = vmatpush1.msra.mxu0 %v607
    %713 = vmatprep.subr.mxu0 0.0
    %714 = vmatpush1.msra.mxu0 %v610
    %715 = vmatprep.subr.mxu0 0.0
    %716 = vmatpush1.msra.mxu0 %v613
    %717 = vmatprep.subr.mxu0 0.0
    %718 = vmatpush1.msra.mxu0 0.0
    %719 = vmatprep.subr.mxu0 0.0
    %720 = vmatpush1.msra.mxu0 0.0
    %721 = vmatprep.subr.mxu0 0.0
    %722 = vmatpush1.msra.mxu0 0.0
    %723 = vmatprep.subr.mxu0 0.0
    %724 = vmatpush1.msra.mxu0 0.0
    %725 = vmatprep.subr.mxu0 0.0
    %726 = vmatpush1.msra.mxu0 0.0
    %727 = vmatprep.subr.mxu0 0.0
    %728 = vmatpush1.msra.mxu0 0.0
    %729 = vmatprep.subr.mxu0 0.0
    %730 = vmatpush1.msra.mxu0 0.0
    %731 = vmatprep.subr.mxu0 0.0
    %732 = vmatpush1.msra.mxu0 0.0
    %733 = vmatprep.subr.mxu0 0.0
    %734 = vmatpush1.msra.mxu0 0.0
    %735 = vmatprep.subr.mxu0 0.0
    %736 = vmatpush1.msra.mxu0 0.0
    %737 = vmatprep.subr.mxu0 0.0
    %738 = vmatpush1.msra.mxu0 0.0
    %739 = vmatprep.subr.mxu0 0.0
    %740 = vmatpush1.msra.mxu0 0.0
    %741 = vmatprep.subr.mxu0 0.0
    %742 = vmatpush1.msra.mxu0 0.0
    %743 = vmatprep.subr.mxu0 0.0
    %744 = vmatpush1.msra.mxu0 0.0
    %745 = vmatprep.subr.mxu0 0.0
    %746 = vmatpush1.msra.mxu0 0.0
    %747 = vmatprep.subr.mxu0 0.0
    %748 = vmatpush1.msra.mxu0 0.0
    %749 = vmatprep.mubr.f32.mxu0 0.0
    %750 = vmatmul.mubr.f32.gmra.mrb[0].mxu0 %v350
    %v751 = vpop.f32.mrb[0].mxu0
    %v752 = vadd.f32 %v137, %v751
    %v753 = vpop.f32.mrb[0].mxu0
    %754 = vdwg.mxu0
    %v755 = vadd.f32 %v563, %v681
    %v756 = vxor.u32 %v755, 2147483648
    %v757 = vmul.f32 %v756, 1.442695
    %v758 = vpow.pop %v757
    %v759 = vadd.f32 %v758, 1.0
    %v760 = vrcp.pop %v759
    %v761 = vmul.f32 1.0, %v760
    %v762 = vadd.f32 %v564, %v683
    %v763 = vxor.u32 %v762, 2147483648
    %v764 = vmul.f32 %v763, 1.442695
    %v765 = vpow.pop %v764
    %v766 = vadd.f32 %v765, 1.0
    %v767 = vrcp.pop %v766
    %v768 = vmul.f32 1.0, %v767
    %v769 = vmul.f32 %v761, %v752
    %v770 = vadd.f32 %v565, %v769
    %v771 = vtanh.pop %v770
    %v772 = vsub.f32 1.0, %v768
    %v773 = vmul.f32 %v772, %v771
    %v774 = vmul.f32 %v768, %v350
    %v775 = vadd.f32 %v773, %v774
    %776 = vst [vmem:[#allocation2] sm:$0xff] %v775
    %s777 = smul.u32 1, 3
    %s778 = smul.addr %s777, 8
    %s779 = scalar_lea.vmem [#allocation4], %s778
    %v780 = vld [vmem:[%s779] sm:$0xff]
    %v781 = vld [vmem:[%s779 + $0x8] sm:$0xff]
    %v782 = vld [vmem:[%s779 + $0x10] sm:$0xff]
    %v783 = vld [vmem:[#allocation5] sm:$0xff]
    %v784 = vld [vmem:[#allocation5 + $0x8] sm:$0xff]
    %v785 = vld [vmem:[#allocation5 + $0x10] sm:$0xff]
    %v786 = vld [vmem:[#allocation5 + $0x18] sm:$0xff]
    %v787 = vld [vmem:[#allocation5 + $0x20] sm:$0xff]
    %v788 = vld [vmem:[#allocation5 + $0x28] sm:$0xff]
    %v789 = vld [vmem:[#allocation5 + $0x30] sm:$0xff]
    %v790 = vld [vmem:[#allocation5 + $0x38] sm:$0xff]
    %v791 = vld [vmem:[#allocation5 + $0x40] sm:$0xff]
    %v792 = vld [vmem:[#allocation5 + $0x48] sm:$0xff]
    %v793 = vld [vmem:[#allocation5 + $0x50] sm:$0xff]
    %v794 = vld [vmem:[#allocation5 + $0x58] sm:$0xff]
    %v795 = vld [vmem:[#allocation5 + $0x60] sm:$0xff]
    %v796 = vld [vmem:[#allocation5 + $0x68] sm:$0xff]
    %v797 = vld [vmem:[#allocation5 + $0x70] sm:$0xff]
    %v798 = vld [vmem:[#allocation5 + $0x78] sm:$0xff]
    %v799 = vld [vmem:[#allocation5 + $0x80] sm:$0xff]
    %v800 = vld [vmem:[#allocation5 + $0x88] sm:$0xff]
    %v801 = vld [vmem:[#allocation5 + $0x90] sm:$0xff]
    %v802 = vld [vmem:[#allocation5 + $0x98] sm:$0xff]
    %v803 = vld [vmem:[#allocation5 + $0xa0] sm:$0xff]
    %v804 = vld [vmem:[#allocation5 + $0xa8] sm:$0xff]
    %v805 = vld [vmem:[#allocation5 + $0xb0] sm:$0xff]
    %v806 = vld [vmem:[#allocation5 + $0xb8] sm:$0xff]
    %v807 = vld [vmem:[#allocation5 + $0xc0] sm:$0xff]
    %v808 = vld [vmem:[#allocation5 + $0xc8] sm:$0xff]
    %v809 = vld [vmem:[#allocation5 + $0xd0] sm:$0xff]
    %v810 = vld [vmem:[#allocation5 + $0xd8] sm:$0xff]
    %v811 = vld [vmem:[#allocation5 + $0xe0] sm:$0xff]
    %v812 = vld [vmem:[#allocation5 + $0xe8] sm:$0xff]
    %v813 = vld [vmem:[#allocation5 + $0xf0] sm:$0xff]
    %v814 = vld [vmem:[#allocation5 + $0xf8] sm:$0xff]
    %v815 = vld [vmem:[#allocation5 + $0x100] sm:$0xff]
    %v816 = vld [vmem:[#allocation5 + $0x108] sm:$0xff]
    %v817 = vld [vmem:[#allocation5 + $0x110] sm:$0xff]
    %v818 = vld [vmem:[#allocation5 + $0x118] sm:$0xff]
    %v819 = vld [vmem:[#allocation5 + $0x120] sm:$0xff]
    %v820 = vld [vmem:[#allocation5 + $0x128] sm:$0xff]
    %v821 = vld [vmem:[#allocation5 + $0x130] sm:$0xff]
    %v822 = vld [vmem:[#allocation5 + $0x138] sm:$0xff]
    %v823 = vld [vmem:[#allocation5 + $0x140] sm:$0xff]
    %v824 = vld [vmem:[#allocation5 + $0x148] sm:$0xff]
    %v825 = vld [vmem:[#allocation5 + $0x150] sm:$0xff]
    %v826 = vld [vmem:[#allocation5 + $0x158] sm:$0xff]
    %v827 = vld [vmem:[#allocation5 + $0x160] sm:$0xff]
    %v828 = vld [vmem:[#allocation5 + $0x168] sm:$0xff]
    %v829 = vld [vmem:[#allocation5 + $0x170] sm:$0xff]
    %v830 = vld [vmem:[#allocation5 + $0x178] sm:$0xff]
    %831 = vmatprep.subr.mxu0 %v784
    %832 = vmatpush1.msra.mxu0 %v783
    %833 = vmatprep.subr.mxu0 %v787
    %834 = vmatpush1.msra.mxu0 %v786
    %835 = vmatprep.subr.mxu0 %v790
    %836 = vmatpush1.msra.mxu0 %v789
    %837 = vmatprep.subr.mxu0 %v793
    %838 = vmatpush1.msra.mxu0 %v792
    %839 = vmatprep.subr.mxu0 %v796
    %840 = vmatpush1.msra.mxu0 %v795
    %841 = vmatprep.subr.mxu0 %v799
    %842 = vmatpush1.msra.mxu0 %v798
    %843 = vmatprep.subr.mxu0 %v802
    %844 = vmatpush1.msra.mxu0 %v801
    %845 = vmatprep.subr.mxu0 %v805
    %846 = vmatpush1.msra.mxu0 %v804
    %847 = vmatprep.subr.mxu0 %v808
    %848 = vmatpush1.msra.mxu0 %v807
    %849 = vmatprep.subr.mxu0 %v811
    %850 = vmatpush1.msra.mxu0 %v810
    %851 = vmatprep.subr.mxu0 %v814
    %852 = vmatpush1.msra.mxu0 %v813
    %853 = vmatprep.subr.mxu0 %v817
    %854 = vmatpush1.msra.mxu0 %v816
    %855 = vmatprep.subr.mxu0 %v820
    %856 = vmatpush1.msra.mxu0 %v819
    %857 = vmatprep.subr.mxu0 %v823
    %858 = vmatpush1.msra.mxu0 %v822
    %859 = vmatprep.subr.mxu0 %v826
    %860 = vmatpush1.msra.mxu0 %v825
    %861 = vmatprep.subr.mxu0 %v829
    %862 = vmatpush1.msra.mxu0 %v828
    %863 = vmatprep.subr.mxu0 0.0
    %864 = vmatpush1.msra.mxu0 0.0
    %865 = vmatprep.subr.mxu0 0.0
    %866 = vmatpush1.msra.mxu0 0.0
    %867 = vmatprep.subr.mxu0 0.0
    %868 = vmatpush1.msra.mxu0 0.0
    %869 = vmatprep.subr.mxu0 0.0
    %870 = vmatpush1.msra.mxu0 0.0
    %871 = vmatprep.subr.mxu0 0.0
    %872 = vmatpush1.msra.mxu0 0.0
    %873 = vmatprep.subr.mxu0 0.0
    %874 = vmatpush1.msra.mxu0 0.0
    %875 = vmatprep.subr.mxu0 0.0
    %876 = vmatpush1.msra.mxu0 0.0
    %877 = vmatprep.subr.mxu0 0.0
    %878 = vmatpush1.msra.mxu0 0.0
    %879 = vmatprep.subr.mxu0 0.0
    %880 = vmatpush1.msra.mxu0 0.0
    %881 = vmatprep.subr.mxu0 0.0
    %882 = vmatpush1.msra.mxu0 0.0
    %883 = vmatprep.subr.mxu0 0.0
    %884 = vmatpush1.msra.mxu0 0.0
    %885 = vmatprep.subr.mxu0 0.0
    %886 = vmatpush1.msra.mxu0 0.0
    %887 = vmatprep.subr.mxu0 0.0
    %888 = vmatpush1.msra.mxu0 0.0
    %889 = vmatprep.subr.mxu0 0.0
    %890 = vmatpush1.msra.mxu0 0.0
    %891 = vmatprep.subr.mxu0 0.0
    %892 = vmatpush1.msra.mxu0 0.0
    %893 = vmatprep.subr.mxu0 0.0
    %894 = vmatpush1.msra.mxu0 0.0
    %895 = vmatprep.mubr.f32.mxu0 0.0
    %896 = vmatmul.mubr.f32.gmra.mrb[0].mxu0 %v775
    %v897 = vpop.f32.mrb[0].mxu0
    %v898 = vadd.f32 %v129, %v897
    %v899 = vpop.f32.mrb[0].mxu0
    %v900 = vadd.f32 %v133, %v899
    %901 = vdwg.mxu0
    %902 = vmatprep.subr.mxu0 0.0
    %903 = vmatpush1.msra.mxu0 %v785
    %904 = vmatprep.subr.mxu0 0.0
    %905 = vmatpush1.msra.mxu0 %v788
    %906 = vmatprep.subr.mxu0 0.0
    %907 = vmatpush1.msra.mxu0 %v791
    %908 = vmatprep.subr.mxu0 0.0
    %909 = vmatpush1.msra.mxu0 %v794
    %910 = vmatprep.subr.mxu0 0.0
    %911 = vmatpush1.msra.mxu0 %v797
    %912 = vmatprep.subr.mxu0 0.0
    %913 = vmatpush1.msra.mxu0 %v800
    %914 = vmatprep.subr.mxu0 0.0
    %915 = vmatpush1.msra.mxu0 %v803
    %916 = vmatprep.subr.mxu0 0.0
    %917 = vmatpush1.msra.mxu0 %v806
    %918 = vmatprep.subr.mxu0 0.0
    %919 = vmatpush1.msra.mxu0 %v809
    %920 = vmatprep.subr.mxu0 0.0
    %921 = vmatpush1.msra.mxu0 %v812
    %922 = vmatprep.subr.mxu0 0.0
    %923 = vmatpush1.msra.mxu0 %v815
    %924 = vmatprep.subr.mxu0 0.0
    %925 = vmatpush1.msra.mxu0 %v818
    %926 = vmatprep.subr.mxu0 0.0
    %927 = vmatpush1.msra.mxu0 %v821
    %928 = vmatprep.subr.mxu0 0.0
    %929 = vmatpush1.msra.mxu0 %v824
    %930 = vmatprep.subr.mxu0 0.0
    %931 = vmatpush1.msra.mxu0 %v827
    %932 = vmatprep.subr.mxu0 0.0
    %933 = vmatpush1.msra.mxu0 %v830
    %934 = vmatprep.subr.mxu0 0.0
    %935 = vmatpush1.msra.mxu0 0.0
    %936 = vmatprep.subr.mxu0 0.0
    %937 = vmatpush1.msra.mxu0 0.0
    %938 = vmatprep.subr.mxu0 0.0
    %939 = vmatpush1.msra.mxu0 0.0
    %940 = vmatprep.subr.mxu0 0.0
    %941 = vmatpush1.msra.mxu0 0.0
    %942 = vmatprep.subr.mxu0 0.0
    %943 = vmatpush1.msra.mxu0 0.0
    %944 = vmatprep.subr.mxu0 0.0
    %945 = vmatpush1.msra.mxu0 0.0
    %946 = vmatprep.subr.mxu0 0.0
    %947 = vmatpush1.msra.mxu0 0.0
    %948 = vmatprep.subr.mxu0 0.0
    %949 = vmatpush1.msra.mxu0 0.0
    %950 = vmatprep.subr.mxu0 0.0
    %951 = vmatpush1.msra.mxu0 0.0
    %952 = vmatprep.subr.mxu0 0.0
    %953 = vmatpush1.msra.mxu0 0.0
    %954 = vmatprep.subr.mxu0 0.0
    %955 = vmatpush1.msra.mxu0 0.0
    %956 = vmatprep.subr.mxu0 0.0
    %957 = vmatpush1.msra.mxu0 0.0
    %958 = vmatprep.subr.mxu0 0.0
    %959 = vmatpush1.msra.mxu0 0.0
    %960 = vmatprep.subr.mxu0 0.0
    %961 = vmatpush1.msra.mxu0 0.0
    %962 = vmatprep.subr.mxu0 0.0
    %963 = vmatpush1.msra.mxu0 0.0
    %964 = vmatprep.subr.mxu0 0.0
    %965 = vmatpush1.msra.mxu0 0.0
    %966 = vmatprep.mubr.f32.mxu0 0.0
    %967 = vmatmul.mubr.f32.gmra.mrb[0].mxu0 %v775
    %v968 = vpop.f32.mrb[0].mxu0
    %v969 = vadd.f32 %v137, %v968
    %v970 = vpop.f32.mrb[0].mxu0
    %971 = vdwg.mxu0
    %v972 = vadd.f32 %v780, %v898
    %v973 = vxor.u32 %v972, 2147483648
    %v974 = vmul.f32 %v973, 1.442695
    %v975 = vpow.pop %v974
    %v976 = vadd.f32 %v975, 1.0
    %v977 = vrcp.pop %v976
    %v978 = vmul.f32 1.0, %v977
    %v979 = vadd.f32 %v781, %v900
    %v980 = vxor.u32 %v979, 2147483648
    %v981 = vmul.f32 %v980, 1.442695
    %v982 = vpow.pop %v981
    %v983 = vadd.f32 %v982, 1.0
    %v984 = vrcp.pop %v983
    %v985 = vmul.f32 1.0, %v984
    %v986 = vmul.f32 %v978, %v969
    %v987 = vadd.f32 %v782, %v986
    %v988 = vtanh.pop %v987
    %v989 = vsub.f32 1.0, %v985
    %v990 = vmul.f32 %v989, %v988
    %v991 = vmul.f32 %v985, %v775
    %v992 = vadd.f32 %v990, %v991
    %s993 = scalar_lea.vmem [#allocation2], 8
    %994 = vst [vmem:[%s993] sm:$0xff] %v992
    %s995 = smul.u32 2, 3
    %s996 = smul.addr %s995, 8
    %s997 = scalar_lea.vmem [#allocation4], %s996
    %v998 = vld [vmem:[%s997] sm:$0xff]
    %v999 = vld [vmem:[%s997 + $0x8] sm:$0xff]
    %v1000 = vld [vmem:[%s997 + $0x10] sm:$0xff]
    %v1001 = vld [vmem:[#allocation5] sm:$0xff]
    %v1002 = vld [vmem:[#allocation5 + $0x8] sm:$0xff]
    %v1003 = vld [vmem:[#allocation5 + $0x10] sm:$0xff]
    %v1004 = vld [vmem:[#allocation5 + $0x18] sm:$0xff]
    %v1005 = vld [vmem:[#allocation5 + $0x20] sm:$0xff]
    %v1006 = vld [vmem:[#allocation5 + $0x28] sm:$0xff]
    %v1007 = vld [vmem:[#allocation5 + $0x30] sm:$0xff]
    %v1008 = vld [vmem:[#allocation5 + $0x38] sm:$0xff]
    %v1009 = vld [vmem:[#allocation5 + $0x40] sm:$0xff]
    %v1010 = vld [vmem:[#allocation5 + $0x48] sm:$0xff]
    %v1011 = vld [vmem:[#allocation5 + $0x50] sm:$0xff]
    %v1012 = vld [vmem:[#allocation5 + $0x58] sm:$0xff]
    %v1013 = vld [vmem:[#allocation5 + $0x60] sm:$0xff]
    %v1014 = vld [vmem:[#allocation5 + $0x68] sm:$0xff]
    %v1015 = vld [vmem:[#allocation5 + $0x70] sm:$0xff]
    %v1016 = vld [vmem:[#allocation5 + $0x78] sm:$0xff]
    %v1017 = vld [vmem:[#allocation5 + $0x80] sm:$0xff]
    %v1018 = vld [vmem:[#allocation5 + $0x88] sm:$0xff]
    %v1019 = vld [vmem:[#allocation5 + $0x90] sm:$0xff]
    %v1020 = vld [vmem:[#allocation5 + $0x98] sm:$0xff]
    %v1021 = vld [vmem:[#allocation5 + $0xa0] sm:$0xff]
    %v1022 = vld [vmem:[#allocation5 + $0xa8] sm:$0xff]
    %v1023 = vld [vmem:[#allocation5 + $0xb0] sm:$0xff]
    %v1024 = vld [vmem:[#allocation5 + $0xb8] sm:$0xff]
    %v1025 = vld [vmem:[#allocation5 + $0xc0] sm:$0xff]
    %v1026 = vld [vmem:[#allocation5 + $0xc8] sm:$0xff]
    %v1027 = vld [vmem:[#allocation5 + $0xd0] sm:$0xff]
    %v1028 = vld [vmem:[#allocation5 + $0xd8] sm:$0xff]
    %v1029 = vld [vmem:[#allocation5 + $0xe0] sm:$0xff]
    %v1030 = vld [vmem:[#allocation5 + $0xe8] sm:$0xff]
    %v1031 = vld [vmem:[#allocation5 + $0xf0] sm:$0xff]
    %v1032 = vld [vmem:[#allocation5 + $0xf8] sm:$0xff]
    %v1033 = vld [vmem:[#allocation5 + $0x100] sm:$0xff]
    %v1034 = vld [vmem:[#allocation5 + $0x108] sm:$0xff]
    %v1035 = vld [vmem:[#allocation5 + $0x110] sm:$0xff]
    %v1036 = vld [vmem:[#allocation5 + $0x118] sm:$0xff]
    %v1037 = vld [vmem:[#allocation5 + $0x120] sm:$0xff]
    %v1038 = vld [vmem:[#allocation5 + $0x128] sm:$0xff]
    %v1039 = vld [vmem:[#allocation5 + $0x130] sm:$0xff]
    %v1040 = vld [vmem:[#allocation5 + $0x138] sm:$0xff]
    %v1041 = vld [vmem:[#allocation5 + $0x140] sm:$0xff]
    %v1042 = vld [vmem:[#allocation5 + $0x148] sm:$0xff]
    %v1043 = vld [vmem:[#allocation5 + $0x150] sm:$0xff]
    %v1044 = vld [vmem:[#allocation5 + $0x158] sm:$0xff]
    %v1045 = vld [vmem:[#allocation5 + $0x160] sm:$0xff]
    %v1046 = vld [vmem:[#allocation5 + $0x168] sm:$0xff]
    %v1047 = vld [vmem:[#allocation5 + $0x170] sm:$0xff]
    %v1048 = vld [vmem:[#allocation5 + $0x178] sm:$0xff]
    %1049 = vmatprep.subr.mxu0 %v1002
    %1050 = vmatpush1.msra.mxu0 %v1001
    %1051 = vmatprep.subr.mxu0 %v1005
    %1052 = vmatpush1.msra.mxu0 %v1004
    %1053 = vmatprep.subr.mxu0 %v1008
    %1054 = vmatpush1.msra.mxu0 %v1007
    %1055 = vmatprep.subr.mxu0 %v1011
    %1056 = vmatpush1.msra.mxu0 %v1010
    %1057 = vmatprep.subr.mxu0 %v1014
    %1058 = vmatpush1.msra.mxu0 %v1013
    %1059 = vmatprep.subr.mxu0 %v1017
    %1060 = vmatpush1.msra.mxu0 %v1016
    %1061 = vmatprep.subr.mxu0 %v1020
    %1062 = vmatpush1.msra.mxu0 %v1019
    %1063 = vmatprep.subr.mxu0 %v1023
    %1064 = vmatpush1.msra.mxu0 %v1022
    %1065 = vmatprep.subr.mxu0 %v1026
    %1066 = vmatpush1.msra.mxu0 %v1025
    %1067 = vmatprep.subr.mxu0 %v1029
    %1068 = vmatpush1.msra.mxu0 %v1028
    %1069 = vmatprep.subr.mxu0 %v1032
    %1070 = vmatpush1.msra.mxu0 %v1031
    %1071 = vmatprep.subr.mxu0 %v1035
    %1072 = vmatpush1.msra.mxu0 %v1034
    %1073 = vmatprep.subr.mxu0 %v1038
    %1074 = vmatpush1.msra.mxu0 %v1037
    %1075 = vmatprep.subr.mxu0 %v1041
    %1076 = vmatpush1.msra.mxu0 %v1040
    %1077 = vmatprep.subr.mxu0 %v1044
    %1078 = vmatpush1.msra.mxu0 %v1043
    %1079 = vmatprep.subr.mxu0 %v1047
    %1080 = vmatpush1.msra.mxu0 %v1046
    %1081 = vmatprep.subr.mxu0 0.0
    %1082 = vmatpush1.msra.mxu0 0.0
    %1083 = vmatprep.subr.mxu0 0.0
    %1084 = vmatpush1.msra.mxu0 0.0
    %1085 = vmatprep.subr.mxu0 0.0
    %1086 = vmatpush1.msra.mxu0 0.0
    %1087 = vmatprep.subr.mxu0 0.0
    %1088 = vmatpush1.msra.mxu0 0.0
    %1089 = vmatprep.subr.mxu0 0.0
    %1090 = vmatpush1.msra.mxu0 0.0
    %1091 = vmatprep.subr.mxu0 0.0
    %1092 = vmatpush1.msra.mxu0 0.0
    %1093 = vmatprep.subr.mxu0 0.0
    %1094 = vmatpush1.msra.mxu0 0.0
    %1095 = vmatprep.subr.mxu0 0.0
    %1096 = vmatpush1.msra.mxu0 0.0
    %1097 = vmatprep.subr.mxu0 0.0
    %1098 = vmatpush1.msra.mxu0 0.0
    %1099 = vmatprep.subr.mxu0 0.0
    %1100 = vmatpush1.msra.mxu0 0.0
    %1101 = vmatprep.subr.mxu0 0.0
    %1102 = vmatpush1.msra.mxu0 0.0
    %1103 = vmatprep.subr.mxu0 0.0
    %1104 = vmatpush1.msra.mxu0 0.0
    %1105 = vmatprep.subr.mxu0 0.0
    %1106 = vmatpush1.msra.mxu0 0.0
    %1107 = vmatprep.subr.mxu0 0.0
    %1108 = vmatpush1.msra.mxu0 0.0
    %1109 = vmatprep.subr.mxu0 0.0
    %1110 = vmatpush1.msra.mxu0 0.0
    %1111 = vmatprep.subr.mxu0 0.0
    %1112 = vmatpush1.msra.mxu0 0.0
    %1113 = vmatprep.mubr.f32.mxu0 0.0
    %1114 = vmatmul.mubr.f32.gmra.mrb[0].mxu0 %v992
    %v1115 = vpop.f32.mrb[0].mxu0
    %v1116 = vadd.f32 %v129, %v1115
    %v1117 = vpop.f32.mrb[0].mxu0
    %v1118 = vadd.f32 %v133, %v1117
    %1119 = vdwg.mxu0
    %1120 = vmatprep.subr.mxu0 0.0
    %1121 = vmatpush1.msra.mxu0 %v1003
    %1122 = vmatprep.subr.mxu0 0.0
    %1123 = vmatpush1.msra.mxu0 %v1006
    %1124 = vmatprep.subr.mxu0 0.0
    %1125 = vmatpush1.msra.mxu0 %v1009
    %1126 = vmatprep.subr.mxu0 0.0
    %1127 = vmatpush1.msra.mxu0 %v1012
    %1128 = vmatprep.subr.mxu0 0.0
    %1129 = vmatpush1.msra.mxu0 %v1015
    %1130 = vmatprep.subr.mxu0 0.0
    %1131 = vmatpush1.msra.mxu0 %v1018
    %1132 = vmatprep.subr.mxu0 0.0
    %1133 = vmatpush1.msra.mxu0 %v1021
    %1134 = vmatprep.subr.mxu0 0.0
    %1135 = vmatpush1.msra.mxu0 %v1024
    %1136 = vmatprep.subr.mxu0 0.0
    %1137 = vmatpush1.msra.mxu0 %v1027
    %1138 = vmatprep.subr.mxu0 0.0
    %1139 = vmatpush1.msra.mxu0 %v1030
    %1140 = vmatprep.subr.mxu0 0.0
    %1141 = vmatpush1.msra.mxu0 %v1033
    %1142 = vmatprep.subr.mxu0 0.0
    %1143 = vmatpush1.msra.mxu0 %v1036
    %1144 = vmatprep.subr.mxu0 0.0
    %1145 = vmatpush1.msra.mxu0 %v1039
    %1146 = vmatprep.subr.mxu0 0.0
    %1147 = vmatpush1.msra.mxu0 %v1042
    %1148 = vmatprep.subr.mxu0 0.0
    %1149 = vmatpush1.msra.mxu0 %v1045
    %1150 = vmatprep.subr.mxu0 0.0
    %1151 = vmatpush1.msra.mxu0 %v1048
    %1152 = vmatprep.subr.mxu0 0.0
    %1153 = vmatpush1.msra.mxu0 0.0
    %1154 = vmatprep.subr.mxu0 0.0
    %1155 = vmatpush1.msra.mxu0 0.0
    %1156 = vmatprep.subr.mxu0 0.0
    %1157 = vmatpush1.msra.mxu0 0.0
    %1158 = vmatprep.subr.mxu0 0.0
    %1159 = vmatpush1.msra.mxu0 0.0
    %1160 = vmatprep.subr.mxu0 0.0
    %1161 = vmatpush1.msra.mxu0 0.0
    %1162 = vmatprep.subr.mxu0 0.0
    %1163 = vmatpush1.msra.mxu0 0.0
    %1164 = vmatprep.subr.mxu0 0.0
    %1165 = vmatpush1.msra.mxu0 0.0
    %1166 = vmatprep.subr.mxu0 0.0
    %1167 = vmatpush1.msra.mxu0 0.0
    %1168 = vmatprep.subr.mxu0 0.0
    %1169 = vmatpush1.msra.mxu0 0.0
    %1170 = vmatprep.subr.mxu0 0.0
    %1171 = vmatpush1.msra.mxu0 0.0
    %1172 = vmatprep.subr.mxu0 0.0
    %1173 = vmatpush1.msra.mxu0 0.0
    %1174 = vmatprep.subr.mxu0 0.0
    %1175 = vmatpush1.msra.mxu0 0.0
    %1176 = vmatprep.subr.mxu0 0.0
    %1177 = vmatpush1.msra.mxu0 0.0
    %1178 = vmatprep.subr.mxu0 0.0
    %1179 = vmatpush1.msra.mxu0 0.0
    %1180 = vmatprep.subr.mxu0 0.0
    %1181 = vmatpush1.msra.mxu0 0.0
    %1182 = vmatprep.subr.mxu0 0.0
    %1183 = vmatpush1.msra.mxu0 0.0
    %1184 = vmatprep.mubr.f32.mxu0 0.0
    %1185 = vmatmul.mubr.f32.gmra.mrb[0].mxu0 %v992
    %v1186 = vpop.f32.mrb[0].mxu0
    %v1187 = vadd.f32 %v137, %v1186
    %v1188 = vpop.f32.mrb[0].mxu0
    %1189 = vdwg.mxu0
    %v1190 = vadd.f32 %v998, %v1116
    %v1191 = vxor.u32 %v1190, 2147483648
    %v1192 = vmul.f32 %v1191, 1.442695
    %v1193 = vpow.pop %v1192
    %v1194 = vadd.f32 %v1193, 1.0
    %v1195 = vrcp.pop %v1194
    %v1196 = vmul.f32 1.0, %v1195
    %v1197 = vadd.f32 %v999, %v1118
    %v1198 = vxor.u32 %v1197, 2147483648
    %v1199 = vmul.f32 %v1198, 1.442695
    %v1200 = vpow.pop %v1199
    %v1201 = vadd.f32 %v1200, 1.0
    %v1202 = vrcp.pop %v1201
    %v1203 = vmul.f32 1.0, %v1202
    %v1204 = vmul.f32 %v1196, %v1187
    %v1205 = vadd.f32 %v1000, %v1204
    %v1206 = vtanh.pop %v1205
    %v1207 = vsub.f32 1.0, %v1203
    %v1208 = vmul.f32 %v1207, %v1206
    %v1209 = vmul.f32 %v1203, %v992
    %v1210 = vadd.f32 %v1208, %v1209
    %s1211 = scalar_lea.vmem [#allocation2], 16
    %1212 = vst [vmem:[%s1211] sm:$0xff] %v1210
    %s1213 = smul.u32 3, 3
    %s1214 = smul.addr %s1213, 8
    %s1215 = scalar_lea.vmem [#allocation4], %s1214
    %v1216 = vld [vmem:[%s1215] sm:$0xff]
    %v1217 = vld [vmem:[%s1215 + $0x8] sm:$0xff]
    %v1218 = vld [vmem:[%s1215 + $0x10] sm:$0xff]
    %v1219 = vld [vmem:[#allocation5] sm:$0xff]
    %v1220 = vld [vmem:[#allocation5 + $0x8] sm:$0xff]
    %v1221 = vld [vmem:[#allocation5 + $0x10] sm:$0xff]
    %v1222 = vld [vmem:[#allocation5 + $0x18] sm:$0xff]
    %v1223 = vld [vmem:[#allocation5 + $0x20] sm:$0xff]
    %v1224 = vld [vmem:[#allocation5 + $0x28] sm:$0xff]
    %v1225 = vld [vmem:[#allocation5 + $0x30] sm:$0xff]
    %v1226 = vld [vmem:[#allocation5 + $0x38] sm:$0xff]
    %v1227 = vld [vmem:[#allocation5 + $0x40] sm:$0xff]
    %v1228 = vld [vmem:[#allocation5 + $0x48] sm:$0xff]
    %v1229 = vld [vmem:[#allocation5 + $0x50] sm:$0xff]
    %v1230 = vld [vmem:[#allocation5 + $0x58] sm:$0xff]
    %v1231 = vld [vmem:[#allocation5 + $0x60] sm:$0xff]
    %v1232 = vld [vmem:[#allocation5 + $0x68] sm:$0xff]
    %v1233 = vld [vmem:[#allocation5 + $0x70] sm:$0xff]
    %v1234 = vld [vmem:[#allocation5 + $0x78] sm:$0xff]
    %v1235 = vld [vmem:[#allocation5 + $0x80] sm:$0xff]
    %v1236 = vld [vmem:[#allocation5 + $0x88] sm:$0xff]
    %v1237 = vld [vmem:[#allocation5 + $0x90] sm:$0xff]
    %v1238 = vld [vmem:[#allocation5 + $0x98] sm:$0xff]
    %v1239 = vld [vmem:[#allocation5 + $0xa0] sm:$0xff]
    %v1240 = vld [vmem:[#allocation5 + $0xa8] sm:$0xff]
    %v1241 = vld [vmem:[#allocation5 + $0xb0] sm:$0xff]
    %v1242 = vld [vmem:[#allocation5 + $0xb8] sm:$0xff]
    %v1243 = vld [vmem:[#allocation5 + $0xc0] sm:$0xff]
    %v1244 = vld [vmem:[#allocation5 + $0xc8] sm:$0xff]
    %v1245 = vld [vmem:[#allocation5 + $0xd0] sm:$0xff]
    %v1246 = vld [vmem:[#allocation5 + $0xd8] sm:$0xff]
    %v1247 = vld [vmem:[#allocation5 + $0xe0] sm:$0xff]
    %v1248 = vld [vmem:[#allocation5 + $0xe8] sm:$0xff]
    %v1249 = vld [vmem:[#allocation5 + $0xf0] sm:$0xff]
    %v1250 = vld [vmem:[#allocation5 + $0xf8] sm:$0xff]
    %v1251 = vld [vmem:[#allocation5 + $0x100] sm:$0xff]
    %v1252 = vld [vmem:[#allocation5 + $0x108] sm:$0xff]
    %v1253 = vld [vmem:[#allocation5 + $0x110] sm:$0xff]
    %v1254 = vld [vmem:[#allocation5 + $0x118] sm:$0xff]
    %v1255 = vld [vmem:[#allocation5 + $0x120] sm:$0xff]
    %v1256 = vld [vmem:[#allocation5 + $0x128] sm:$0xff]
    %v1257 = vld [vmem:[#allocation5 + $0x130] sm:$0xff]
    %v1258 = vld [vmem:[#allocation5 + $0x138] sm:$0xff]
    %v1259 = vld [vmem:[#allocation5 + $0x140] sm:$0xff]
    %v1260 = vld [vmem:[#allocation5 + $0x148] sm:$0xff]
    %v1261 = vld [vmem:[#allocation5 + $0x150] sm:$0xff]
    %v1262 = vld [vmem:[#allocation5 + $0x158] sm:$0xff]
    %v1263 = vld [vmem:[#allocation5 + $0x160] sm:$0xff]
    %v1264 = vld [vmem:[#allocation5 + $0x168] sm:$0xff]
    %v1265 = vld [vmem:[#allocation5 + $0x170] sm:$0xff]
    %v1266 = vld [vmem:[#allocation5 + $0x178] sm:$0xff]
    %1267 = vmatprep.subr.mxu0 %v1220
    %1268 = vmatpush1.msra.mxu0 %v1219
    %1269 = vmatprep.subr.mxu0 %v1223
    %1270 = vmatpush1.msra.mxu0 %v1222
    %1271 = vmatprep.subr.mxu0 %v1226
    %1272 = vmatpush1.msra.mxu0 %v1225
    %1273 = vmatprep.subr.mxu0 %v1229
    %1274 = vmatpush1.msra.mxu0 %v1228
    %1275 = vmatprep.subr.mxu0 %v1232
    %1276 = vmatpush1.msra.mxu0 %v1231
    %1277 = vmatprep.subr.mxu0 %v1235
    %1278 = vmatpush1.msra.mxu0 %v1234
    %1279 = vmatprep.subr.mxu0 %v1238
    %1280 = vmatpush1.msra.mxu0 %v1237
    %1281 = vmatprep.subr.mxu0 %v1241
    %1282 = vmatpush1.msra.mxu0 %v1240
    %1283 = vmatprep.subr.mxu0 %v1244
    %1284 = vmatpush1.msra.mxu0 %v1243
    %1285 = vmatprep.subr.mxu0 %v1247
    %1286 = vmatpush1.msra.mxu0 %v1246
    %1287 = vmatprep.subr.mxu0 %v1250
    %1288 = vmatpush1.msra.mxu0 %v1249
    %1289 = vmatprep.subr.mxu0 %v1253
    %1290 = vmatpush1.msra.mxu0 %v1252
    %1291 = vmatprep.subr.mxu0 %v1256
    %1292 = vmatpush1.msra.mxu0 %v1255
    %1293 = vmatprep.subr.mxu0 %v1259
    %1294 = vmatpush1.msra.mxu0 %v1258
    %1295 = vmatprep.subr.mxu0 %v1262
    %1296 = vmatpush1.msra.mxu0 %v1261
    %1297 = vmatprep.subr.mxu0 %v1265
    %1298 = vmatpush1.msra.mxu0 %v1264
    %1299 = vmatprep.subr.mxu0 0.0
    %1300 = vmatpush1.msra.mxu0 0.0
    %1301 = vmatprep.subr.mxu0 0.0
    %1302 = vmatpush1.msra.mxu0 0.0
    %1303 = vmatprep.subr.mxu0 0.0
    %1304 = vmatpush1.msra.mxu0 0.0
    %1305 = vmatprep.subr.mxu0 0.0
    %1306 = vmatpush1.msra.mxu0 0.0
    %1307 = vmatprep.subr.mxu0 0.0
    %1308 = vmatpush1.msra.mxu0 0.0
    %1309 = vmatprep.subr.mxu0 0.0
    %1310 = vmatpush1.msra.mxu0 0.0
    %1311 = vmatprep.subr.mxu0 0.0
    %1312 = vmatpush1.msra.mxu0 0.0
    %1313 = vmatprep.subr.mxu0 0.0
    %1314 = vmatpush1.msra.mxu0 0.0
    %1315 = vmatprep.subr.mxu0 0.0
    %1316 = vmatpush1.msra.mxu0 0.0
    %1317 = vmatprep.subr.mxu0 0.0
    %1318 = vmatpush1.msra.mxu0 0.0
    %1319 = vmatprep.subr.mxu0 0.0
    %1320 = vmatpush1.msra.mxu0 0.0
    %1321 = vmatprep.subr.mxu0 0.0
    %1322 = vmatpush1.msra.mxu0 0.0
    %1323 = vmatprep.subr.mxu0 0.0
    %1324 = vmatpush1.msra.mxu0 0.0
    %1325 = vmatprep.subr.mxu0 0.0
    %1326 = vmatpush1.msra.mxu0 0.0
    %1327 = vmatprep.subr.mxu0 0.0
    %1328 = vmatpush1.msra.mxu0 0.0
    %1329 = vmatprep.subr.mxu0 0.0
    %1330 = vmatpush1.msra.mxu0 0.0
    %1331 = vmatprep.mubr.f32.mxu0 0.0
    %1332 = vmatmul.mubr.f32.gmra.mrb[0].mxu0 %v1210
    %v1333 = vpop.f32.mrb[0].mxu0
    %v1334 = vadd.f32 %v129, %v1333
    %v1335 = vpop.f32.mrb[0].mxu0
    %v1336 = vadd.f32 %v133, %v1335
    %1337 = vdwg.mxu0
    %1338 = vmatprep.subr.mxu0 0.0
    %1339 = vmatpush1.msra.mxu0 %v1221
    %1340 = vmatprep.subr.mxu0 0.0
    %1341 = vmatpush1.msra.mxu0 %v1224
    %1342 = vmatprep.subr.mxu0 0.0
    %1343 = vmatpush1.msra.mxu0 %v1227
    %1344 = vmatprep.subr.mxu0 0.0
    %1345 = vmatpush1.msra.mxu0 %v1230
    %1346 = vmatprep.subr.mxu0 0.0
    %1347 = vmatpush1.msra.mxu0 %v1233
    %1348 = vmatprep.subr.mxu0 0.0
    %1349 = vmatpush1.msra.mxu0 %v1236
    %1350 = vmatprep.subr.mxu0 0.0
    %1351 = vmatpush1.msra.mxu0 %v1239
    %1352 = vmatprep.subr.mxu0 0.0
    %1353 = vmatpush1.msra.mxu0 %v1242
    %1354 = vmatprep.subr.mxu0 0.0
    %1355 = vmatpush1.msra.mxu0 %v1245
    %1356 = vmatprep.subr.mxu0 0.0
    %1357 = vmatpush1.msra.mxu0 %v1248
    %1358 = vmatprep.subr.mxu0 0.0
    %1359 = vmatpush1.msra.mxu0 %v1251
    %1360 = vmatprep.subr.mxu0 0.0
    %1361 = vmatpush1.msra.mxu0 %v1254
    %1362 = vmatprep.subr.mxu0 0.0
    %1363 = vmatpush1.msra.mxu0 %v1257
    %1364 = vmatprep.subr.mxu0 0.0
    %1365 = vmatpush1.msra.mxu0 %v1260
    %1366 = vmatprep.subr.mxu0 0.0
    %1367 = vmatpush1.msra.mxu0 %v1263
    %1368 = vmatprep.subr.mxu0 0.0
    %1369 = vmatpush1.msra.mxu0 %v1266
    %1370 = vmatprep.subr.mxu0 0.0
    %1371 = vmatpush1.msra.mxu0 0.0
    %1372 = vmatprep.subr.mxu0 0.0
    %1373 = vmatpush1.msra.mxu0 0.0
    %1374 = vmatprep.subr.mxu0 0.0
    %1375 = vmatpush1.msra.mxu0 0.0
    %1376 = vmatprep.subr.mxu0 0.0
    %1377 = vmatpush1.msra.mxu0 0.0
    %1378 = vmatprep.subr.mxu0 0.0
    %1379 = vmatpush1.msra.mxu0 0.0
    %1380 = vmatprep.subr.mxu0 0.0
    %1381 = vmatpush1.msra.mxu0 0.0
    %1382 = vmatprep.subr.mxu0 0.0
    %1383 = vmatpush1.msra.mxu0 0.0
    %1384 = vmatprep.subr.mxu0 0.0
    %1385 = vmatpush1.msra.mxu0 0.0
    %1386 = vmatprep.subr.mxu0 0.0
    %1387 = vmatpush1.msra.mxu0 0.0
    %1388 = vmatprep.subr.mxu0 0.0
    %1389 = vmatpush1.msra.mxu0 0.0
    %1390 = vmatprep.subr.mxu0 0.0
    %1391 = vmatpush1.msra.mxu0 0.0
    %1392 = vmatprep.subr.mxu0 0.0
    %1393 = vmatpush1.msra.mxu0 0.0
    %1394 = vmatprep.subr.mxu0 0.0
    %1395 = vmatpush1.msra.mxu0 0.0
    %1396 = vmatprep.subr.mxu0 0.0
    %1397 = vmatpush1.msra.mxu0 0.0
    %1398 = vmatprep.subr.mxu0 0.0
    %1399 = vmatpush1.msra.mxu0 0.0
    %1400 = vmatprep.subr.mxu0 0.0
    %1401 = vmatpush1.msra.mxu0 0.0
    %1402 = vmatprep.mubr.f32.mxu0 0.0
    %1403 = vmatmul.mubr.f32.gmra.mrb[0].mxu0 %v1210
    %v1404 = vpop.f32.mrb[0].mxu0
    %v1405 = vadd.f32 %v137, %v1404
    %v1406 = vpop.f32.mrb[0].mxu0
    %1407 = vdwg.mxu0
    %v1408 = vadd.f32 %v1216, %v1334
    %v1409 = vxor.u32 %v1408, 2147483648
    %v1410 = vmul.f32 %v1409, 1.442695
    %v1411 = vpow.pop %v1410
    %v1412 = vadd.f32 %v1411, 1.0
    %v1413 = vrcp.pop %v1412
    %v1414 = vmul.f32 1.0, %v1413
    %v1415 = vadd.f32 %v1217, %v1336
    %v1416 = vxor.u32 %v1415, 2147483648
    %v1417 = vmul.f32 %v1416, 1.442695
    %v1418 = vpow.pop %v1417
    %v1419 = vadd.f32 %v1418, 1.0
    %v1420 = vrcp.pop %v1419
    %v1421 = vmul.f32 1.0, %v1420
    %v1422 = vmul.f32 %v1414, %v1405
    %v1423 = vadd.f32 %v1218, %v1422
    %v1424 = vtanh.pop %v1423
    %v1425 = vsub.f32 1.0, %v1421
    %v1426 = vmul.f32 %v1425, %v1424
    %v1427 = vmul.f32 %v1421, %v1210
    %v1428 = vadd.f32 %v1426, %v1427
    %s1429 = scalar_lea.vmem [#allocation2], 24
    %1430 = vst [vmem:[%s1429] sm:$0xff] %v1428
    %s1431 = smul.addr %s560, 8
    %s1432 = scalar_lea.vmem %s547, %s1431 [#allocation4]
    %v1433 = vld [vmem:[%s1432] sm:$0xff]
    %v1434 = vld [vmem:[%s1432 + $0x8] sm:$0xff]
    %v1435 = vld [vmem:[%s1432 + $0x10] sm:$0xff]
    %v1436 = vld [vmem:[#allocation5] sm:$0xff]
    %v1437 = vld [vmem:[#allocation5 + $0x8] sm:$0xff]
    %v1438 = vld [vmem:[#allocation5 + $0x10] sm:$0xff]
    %v1439 = vld [vmem:[#allocation5 + $0x18] sm:$0xff]
    %v1440 = vld [vmem:[#allocation5 + $0x20] sm:$0xff]
    %v1441 = vld [vmem:[#allocation5 + $0x28] sm:$0xff]
    %v1442 = vld [vmem:[#allocation5 + $0x30] sm:$0xff]
    %v1443 = vld [vmem:[#allocation5 + $0x38] sm:$0xff]
    %v1444 = vld [vmem:[#allocation5 + $0x40] sm:$0xff]
    %v1445 = vld [vmem:[#allocation5 + $0x48] sm:$0xff]
    %v1446 = vld [vmem:[#allocation5 + $0x50] sm:$0xff]
    %v1447 = vld [vmem:[#allocation5 + $0x58] sm:$0xff]
    %v1448 = vld [vmem:[#allocation5 + $0x60] sm:$0xff]
    %v1449 = vld [vmem:[#allocation5 + $0x68] sm:$0xff]
    %v1450 = vld [vmem:[#allocation5 + $0x70] sm:$0xff]
    %v1451 = vld [vmem:[#allocation5 + $0x78] sm:$0xff]
    %v1452 = vld [vmem:[#allocation5 + $0x80] sm:$0xff]
    %v1453 = vld [vmem:[#allocation5 + $0x88] sm:$0xff]
    %v1454 = vld [vmem:[#allocation5 + $0x90] sm:$0xff]
    %v1455 = vld [vmem:[#allocation5 + $0x98] sm:$0xff]
    %v1456 = vld [vmem:[#allocation5 + $0xa0] sm:$0xff]
    %v1457 = vld [vmem:[#allocation5 + $0xa8] sm:$0xff]
    %v1458 = vld [vmem:[#allocation5 + $0xb0] sm:$0xff]
    %v1459 = vld [vmem:[#allocation5 + $0xb8] sm:$0xff]
    %v1460 = vld [vmem:[#allocation5 + $0xc0] sm:$0xff]
    %v1461 = vld [vmem:[#allocation5 + $0xc8] sm:$0xff]
    %v1462 = vld [vmem:[#allocation5 + $0xd0] sm:$0xff]
    %v1463 = vld [vmem:[#allocation5 + $0xd8] sm:$0xff]
    %v1464 = vld [vmem:[#allocation5 + $0xe0] sm:$0xff]
    %v1465 = vld [vmem:[#allocation5 + $0xe8] sm:$0xff]
    %v1466 = vld [vmem:[#allocation5 + $0xf0] sm:$0xff]
    %v1467 = vld [vmem:[#allocation5 + $0xf8] sm:$0xff]
    %v1468 = vld [vmem:[#allocation5 + $0x100] sm:$0xff]
    %v1469 = vld [vmem:[#allocation5 + $0x108] sm:$0xff]
    %v1470 = vld [vmem:[#allocation5 + $0x110] sm:$0xff]
    %v1471 = vld [vmem:[#allocation5 + $0x118] sm:$0xff]
    %v1472 = vld [vmem:[#allocation5 + $0x120] sm:$0xff]
    %v1473 = vld [vmem:[#allocation5 + $0x128] sm:$0xff]
    %v1474 = vld [vmem:[#allocation5 + $0x130] sm:$0xff]
    %v1475 = vld [vmem:[#allocation5 + $0x138] sm:$0xff]
    %v1476 = vld [vmem:[#allocation5 + $0x140] sm:$0xff]
    %v1477 = vld [vmem:[#allocation5 + $0x148] sm:$0xff]
    %v1478 = vld [vmem:[#allocation5 + $0x150] sm:$0xff]
    %v1479 = vld [vmem:[#allocation5 + $0x158] sm:$0xff]
    %v1480 = vld [vmem:[#allocation5 + $0x160] sm:$0xff]
    %v1481 = vld [vmem:[#allocation5 + $0x168] sm:$0xff]
    %v1482 = vld [vmem:[#allocation5 + $0x170] sm:$0xff]
    %v1483 = vld [vmem:[#allocation5 + $0x178] sm:$0xff]
    %1484 = vmatprep.subr.mxu0 %v1437
    %1485 = vmatpush1.msra.mxu0 %v1436
    %1486 = vmatprep.subr.mxu0 %v1440
    %1487 = vmatpush1.msra.mxu0 %v1439
    %1488 = vmatprep.subr.mxu0 %v1443
    %1489 = vmatpush1.msra.mxu0 %v1442
    %1490 = vmatprep.subr.mxu0 %v1446
    %1491 = vmatpush1.msra.mxu0 %v1445
    %1492 = vmatprep.subr.mxu0 %v1449
    %1493 = vmatpush1.msra.mxu0 %v1448
    %1494 = vmatprep.subr.mxu0 %v1452
    %1495 = vmatpush1.msra.mxu0 %v1451
    %1496 = vmatprep.subr.mxu0 %v1455
    %1497 = vmatpush1.msra.mxu0 %v1454
    %1498 = vmatprep.subr.mxu0 %v1458
    %1499 = vmatpush1.msra.mxu0 %v1457
    %1500 = vmatprep.subr.mxu0 %v1461
    %1501 = vmatpush1.msra.mxu0 %v1460
    %1502 = vmatprep.subr.mxu0 %v1464
    %1503 = vmatpush1.msra.mxu0 %v1463
    %1504 = vmatprep.subr.mxu0 %v1467
    %1505 = vmatpush1.msra.mxu0 %v1466
    %1506 = vmatprep.subr.mxu0 %v1470
    %1507 = vmatpush1.msra.mxu0 %v1469
    %1508 = vmatprep.subr.mxu0 %v1473
    %1509 = vmatpush1.msra.mxu0 %v1472
    %1510 = vmatprep.subr.mxu0 %v1476
    %1511 = vmatpush1.msra.mxu0 %v1475
    %1512 = vmatprep.subr.mxu0 %v1479
    %1513 = vmatpush1.msra.mxu0 %v1478
    %1514 = vmatprep.subr.mxu0 %v1482
    %1515 = vmatpush1.msra.mxu0 %v1481
    %1516 = vmatprep.subr.mxu0 0.0
    %1517 = vmatpush1.msra.mxu0 0.0
    %1518 = vmatprep.subr.mxu0 0.0
    %1519 = vmatpush1.msra.mxu0 0.0
    %1520 = vmatprep.subr.mxu0 0.0
    %1521 = vmatpush1.msra.mxu0 0.0
    %1522 = vmatprep.subr.mxu0 0.0
    %1523 = vmatpush1.msra.mxu0 0.0
    %1524 = vmatprep.subr.mxu0 0.0
    %1525 = vmatpush1.msra.mxu0 0.0
    %1526 = vmatprep.subr.mxu0 0.0
    %1527 = vmatpush1.msra.mxu0 0.0
    %1528 = vmatprep.subr.mxu0 0.0
    %1529 = vmatpush1.msra.mxu0 0.0
    %1530 = vmatprep.subr.mxu0 0.0
    %1531 = vmatpush1.msra.mxu0 0.0
    %1532 = vmatprep.subr.mxu0 0.0
    %1533 = vmatpush1.msra.mxu0 0.0
    %1534 = vmatprep.subr.mxu0 0.0
    %1535 = vmatpush1.msra.mxu0 0.0
    %1536 = vmatprep.subr.mxu0 0.0
    %1537 = vmatpush1.msra.mxu0 0.0
    %1538 = vmatprep.subr.mxu0 0.0
    %1539 = vmatpush1.msra.mxu0 0.0
    %1540 = vmatprep.subr.mxu0 0.0
    %1541 = vmatpush1.msra.mxu0 0.0
    %1542 = vmatprep.subr.mxu0 0.0
    %1543 = vmatpush1.msra.mxu0 0.0
    %1544 = vmatprep.subr.mxu0 0.0
    %1545 = vmatpush1.msra.mxu0 0.0
    %1546 = vmatprep.subr.mxu0 0.0
    %1547 = vmatpush1.msra.mxu0 0.0
    %1548 = vmatprep.mubr.f32.mxu0 0.0
    %1549 = vmatmul.mubr.f32.gmra.mrb[0].mxu0 %v1428
    %v1550 = vpop.f32.mrb[0].mxu0
    %v1551 = vadd.f32 %v129, %v1550
    %v1552 = vpop.f32.mrb[0].mxu0
    %v1553 = vadd.f32 %v133, %v1552
    %1554 = vdwg.mxu0
    %1555 = vmatprep.subr.mxu0 0.0
    %1556 = vmatpush1.msra.mxu0 %v1438
    %1557 = vmatprep.subr.mxu0 0.0
    %1558 = vmatpush1.msra.mxu0 %v1441
    %1559 = vmatprep.subr.mxu0 0.0
    %1560 = vmatpush1.msra.mxu0 %v1444
    %1561 = vmatprep.subr.mxu0 0.0
    %1562 = vmatpush1.msra.mxu0 %v1447
    %1563 = vmatprep.subr.mxu0 0.0
    %1564 = vmatpush1.msra.mxu0 %v1450
    %1565 = vmatprep.subr.mxu0 0.0
    %1566 = vmatpush1.msra.mxu0 %v1453
    %1567 = vmatprep.subr.mxu0 0.0
    %1568 = vmatpush1.msra.mxu0 %v1456
    %1569 = vmatprep.subr.mxu0 0.0
    %1570 = vmatpush1.msra.mxu0 %v1459
    %1571 = vmatprep.subr.mxu0 0.0
    %1572 = vmatpush1.msra.mxu0 %v1462
    %1573 = vmatprep.subr.mxu0 0.0
    %1574 = vmatpush1.msra.mxu0 %v1465
    %1575 = vmatprep.subr.mxu0 0.0
    %1576 = vmatpush1.msra.mxu0 %v1468
    %1577 = vmatprep.subr.mxu0 0.0
    %1578 = vmatpush1.msra.mxu0 %v1471
    %1579 = vmatprep.subr.mxu0 0.0
    %1580 = vmatpush1.msra.mxu0 %v1474
    %1581 = vmatprep.subr.mxu0 0.0
    %1582 = vmatpush1.msra.mxu0 %v1477
    %1583 = vmatprep.subr.mxu0 0.0
    %1584 = vmatpush1.msra.mxu0 %v1480
    %1585 = vmatprep.subr.mxu0 0.0
    %1586 = vmatpush1.msra.mxu0 %v1483
    %1587 = vmatprep.subr.mxu0 0.0
    %1588 = vmatpush1.msra.mxu0 0.0
    %1589 = vmatprep.subr.mxu0 0.0
    %1590 = vmatpush1.msra.mxu0 0.0
    %1591 = vmatprep.subr.mxu0 0.0
    %1592 = vmatpush1.msra.mxu0 0.0
    %1593 = vmatprep.subr.mxu0 0.0
    %1594 = vmatpush1.msra.mxu0 0.0
    %1595 = vmatprep.subr.mxu0 0.0
    %1596 = vmatpush1.msra.mxu0 0.0
    %1597 = vmatprep.subr.mxu0 0.0
    %1598 = vmatpush1.msra.mxu0 0.0
    %1599 = vmatprep.subr.mxu0 0.0
    %1600 = vmatpush1.msra.mxu0 0.0
    %1601 = vmatprep.subr.mxu0 0.0
    %1602 = vmatpush1.msra.mxu0 0.0
    %1603 = vmatprep.subr.mxu0 0.0
    %1604 = vmatpush1.msra.mxu0 0.0
    %1605 = vmatprep.subr.mxu0 0.0
    %1606 = vmatpush1.msra.mxu0 0.0
    %1607 = vmatprep.subr.mxu0 0.0
    %1608 = vmatpush1.msra.mxu0 0.0
    %1609 = vmatprep.subr.mxu0 0.0
    %1610 = vmatpush1.msra.mxu0 0.0
    %1611 = vmatprep.subr.mxu0 0.0
    %1612 = vmatpush1.msra.mxu0 0.0
    %1613 = vmatprep.subr.mxu0 0.0
    %1614 = vmatpush1.msra.mxu0 0.0
    %1615 = vmatprep.subr.mxu0 0.0
    %1616 = vmatpush1.msra.mxu0 0.0
    %1617 = vmatprep.subr.mxu0 0.0
    %1618 = vmatpush1.msra.mxu0 0.0
    %1619 = vmatprep.mubr.f32.mxu0 0.0
    %1620 = vmatmul.mubr.f32.gmra.mrb[0].mxu0 %v1428
    %v1621 = vpop.f32.mrb[0].mxu0
    %v1622 = vadd.f32 %v137, %v1621
    %v1623 = vpop.f32.mrb[0].mxu0
    %1624 = vdwg.mxu0
    %v1625 = vadd.f32 %v1433, %v1551
    %v1626 = vxor.u32 %v1625, 2147483648
    %v1627 = vmul.f32 %v1626, 1.442695
    %v1628 = vpow.pop %v1627
    %v1629 = vadd.f32 %v1628, 1.0
    %v1630 = vrcp.pop %v1629
    %v1631 = vmul.f32 1.0, %v1630
    %v1632 = vadd.f32 %v1434, %v1553
    %v1633 = vxor.u32 %v1632, 2147483648
    %v1634 = vmul.f32 %v1633, 1.442695
    %v1635 = vpow.pop %v1634
    %v1636 = vadd.f32 %v1635, 1.0
    %v1637 = vrcp.pop %v1636
    %v1638 = vmul.f32 1.0, %v1637
    %v1639 = vmul.f32 %v1631, %v1622
    %v1640 = vadd.f32 %v1435, %v1639
    %v1641 = vtanh.pop %v1640
    %v1642 = vsub.f32 1.0, %v1638
    %v1643 = vmul.f32 %v1642, %v1641
    %v1644 = vmul.f32 %v1638, %v1428
    %v1645 = vadd.f32 %v1643, %v1644
    %s1646 = scalar_lea.vmem [#allocation2], 32
    %1647 = vst [vmem:[%s1646] sm:$0xff] %v1645
    %s1648 = smul.addr %s777, 8
    %s1649 = scalar_lea.vmem %s547, %s1648 [#allocation4]
    %v1650 = vld [vmem:[%s1649] sm:$0xff]
    %v1651 = vld [vmem:[%s1649 + $0x8] sm:$0xff]
    %v1652 = vld [vmem:[%s1649 + $0x10] sm:$0xff]
    %v1653 = vld [vmem:[#allocation5] sm:$0xff]
    %v1654 = vld [vmem:[#allocation5 + $0x8] sm:$0xff]
    %v1655 = vld [vmem:[#allocation5 + $0x10] sm:$0xff]
    %v1656 = vld [vmem:[#allocation5 + $0x18] sm:$0xff]
    %v1657 = vld [vmem:[#allocation5 + $0x20] sm:$0xff]
    %v1658 = vld [vmem:[#allocation5 + $0x28] sm:$0xff]
    %v1659 = vld [vmem:[#allocation5 + $0x30] sm:$0xff]
    %v1660 = vld [vmem:[#allocation5 + $0x38] sm:$0xff]
    %v1661 = vld [vmem:[#allocation5 + $0x40] sm:$0xff]
    %v1662 = vld [vmem:[#allocation5 + $0x48] sm:$0xff]
    %v1663 = vld [vmem:[#allocation5 + $0x50] sm:$0xff]
    %v1664 = vld [vmem:[#allocation5 + $0x58] sm:$0xff]
    %v1665 = vld [vmem:[#allocation5 + $0x60] sm:$0xff]
    %v1666 = vld [vmem:[#allocation5 + $0x68] sm:$0xff]
    %v1667 = vld [vmem:[#allocation5 + $0x70] sm:$0xff]
    %v1668 = vld [vmem:[#allocation5 + $0x78] sm:$0xff]
    %v1669 = vld [vmem:[#allocation5 + $0x80] sm:$0xff]
    %v1670 = vld [vmem:[#allocation5 + $0x88] sm:$0xff]
    %v1671 = vld [vmem:[#allocation5 + $0x90] sm:$0xff]
    %v1672 = vld [vmem:[#allocation5 + $0x98] sm:$0xff]
    %v1673 = vld [vmem:[#allocation5 + $0xa0] sm:$0xff]
    %v1674 = vld [vmem:[#allocation5 + $0xa8] sm:$0xff]
    %v1675 = vld [vmem:[#allocation5 + $0xb0] sm:$0xff]
    %v1676 = vld [vmem:[#allocation5 + $0xb8] sm:$0xff]
    %v1677 = vld [vmem:[#allocation5 + $0xc0] sm:$0xff]
    %v1678 = vld [vmem:[#allocation5 + $0xc8] sm:$0xff]
    %v1679 = vld [vmem:[#allocation5 + $0xd0] sm:$0xff]
    %v1680 = vld [vmem:[#allocation5 + $0xd8] sm:$0xff]
    %v1681 = vld [vmem:[#allocation5 + $0xe0] sm:$0xff]
    %v1682 = vld [vmem:[#allocation5 + $0xe8] sm:$0xff]
    %v1683 = vld [vmem:[#allocation5 + $0xf0] sm:$0xff]
    %v1684 = vld [vmem:[#allocation5 + $0xf8] sm:$0xff]
    %v1685 = vld [vmem:[#allocation5 + $0x100] sm:$0xff]
    %v1686 = vld [vmem:[#allocation5 + $0x108] sm:$0xff]
    %v1687 = vld [vmem:[#allocation5 + $0x110] sm:$0xff]
    %v1688 = vld [vmem:[#allocation5 + $0x118] sm:$0xff]
    %v1689 = vld [vmem:[#allocation5 + $0x120] sm:$0xff]
    %v1690 = vld [vmem:[#allocation5 + $0x128] sm:$0xff]
    %v1691 = vld [vmem:[#allocation5 + $0x130] sm:$0xff]
    %v1692 = vld [vmem:[#allocation5 + $0x138] sm:$0xff]
    %v1693 = vld [vmem:[#allocation5 + $0x140] sm:$0xff]
    %v1694 = vld [vmem:[#allocation5 + $0x148] sm:$0xff]
    %v1695 = vld [vmem:[#allocation5 + $0x150] sm:$0xff]
    %v1696 = vld [vmem:[#allocation5 + $0x158] sm:$0xff]
    %v1697 = vld [vmem:[#allocation5 + $0x160] sm:$0xff]
    %v1698 = vld [vmem:[#allocation5 + $0x168] sm:$0xff]
    %v1699 = vld [vmem:[#allocation5 + $0x170] sm:$0xff]
    %v1700 = vld [vmem:[#allocation5 + $0x178] sm:$0xff]
    %1701 = vmatprep.subr.mxu0 %v1654
    %1702 = vmatpush1.msra.mxu0 %v1653
    %1703 = vmatprep.subr.mxu0 %v1657
    %1704 = vmatpush1.msra.mxu0 %v1656
    %1705 = vmatprep.subr.mxu0 %v1660
    %1706 = vmatpush1.msra.mxu0 %v1659
    %1707 = vmatprep.subr.mxu0 %v1663
    %1708 = vmatpush1.msra.mxu0 %v1662
    %1709 = vmatprep.subr.mxu0 %v1666
    %1710 = vmatpush1.msra.mxu0 %v1665
    %1711 = vmatprep.subr.mxu0 %v1669
    %1712 = vmatpush1.msra.mxu0 %v1668
    %1713 = vmatprep.subr.mxu0 %v1672
    %1714 = vmatpush1.msra.mxu0 %v1671
    %1715 = vmatprep.subr.mxu0 %v1675
    %1716 = vmatpush1.msra.mxu0 %v1674
    %1717 = vmatprep.subr.mxu0 %v1678
    %1718 = vmatpush1.msra.mxu0 %v1677
    %1719 = vmatprep.subr.mxu0 %v1681
    %1720 = vmatpush1.msra.mxu0 %v1680
    %1721 = vmatprep.subr.mxu0 %v1684
    %1722 = vmatpush1.msra.mxu0 %v1683
    %1723 = vmatprep.subr.mxu0 %v1687
    %1724 = vmatpush1.msra.mxu0 %v1686
    %1725 = vmatprep.subr.mxu0 %v1690
    %1726 = vmatpush1.msra.mxu0 %v1689
    %1727 = vmatprep.subr.mxu0 %v1693
    %1728 = vmatpush1.msra.mxu0 %v1692
    %1729 = vmatprep.subr.mxu0 %v1696
    %1730 = vmatpush1.msra.mxu0 %v1695
    %1731 = vmatprep.subr.mxu0 %v1699
    %1732 = vmatpush1.msra.mxu0 %v1698
    %1733 = vmatprep.subr.mxu0 0.0
    %1734 = vmatpush1.msra.mxu0 0.0
    %1735 = vmatprep.subr.mxu0 0.0
    %1736 = vmatpush1.msra.mxu0 0.0
    %1737 = vmatprep.subr.mxu0 0.0
    %1738 = vmatpush1.msra.mxu0 0.0
    %1739 = vmatprep.subr.mxu0 0.0
    %1740 = vmatpush1.msra.mxu0 0.0
    %1741 = vmatprep.subr.mxu0 0.0
    %1742 = vmatpush1.msra.mxu0 0.0
    %1743 = vmatprep.subr.mxu0 0.0
    %1744 = vmatpush1.msra.mxu0 0.0
    %1745 = vmatprep.subr.mxu0 0.0
    %1746 = vmatpush1.msra.mxu0 0.0
    %1747 = vmatprep.subr.mxu0 0.0
    %1748 = vmatpush1.msra.mxu0 0.0
    %1749 = vmatprep.subr.mxu0 0.0
    %1750 = vmatpush1.msra.mxu0 0.0
    %1751 = vmatprep.subr.mxu0 0.0
    %1752 = vmatpush1.msra.mxu0 0.0
    %1753 = vmatprep.subr.mxu0 0.0
    %1754 = vmatpush1.msra.mxu0 0.0
    %1755 = vmatprep.subr.mxu0 0.0
    %1756 = vmatpush1.msra.mxu0 0.0
    %1757 = vmatprep.subr.mxu0 0.0
    %1758 = vmatpush1.msra.mxu0 0.0
    %1759 = vmatprep.subr.mxu0 0.0
    %1760 = vmatpush1.msra.mxu0 0.0
    %1761 = vmatprep.subr.mxu0 0.0
    %1762 = vmatpush1.msra.mxu0 0.0
    %1763 = vmatprep.subr.mxu0 0.0
    %1764 = vmatpush1.msra.mxu0 0.0
    %1765 = vmatprep.mubr.f32.mxu0 0.0
    %1766 = vmatmul.mubr.f32.gmra.mrb[0].mxu0 %v1645
    %v1767 = vpop.f32.mrb[0].mxu0
    %v1768 = vadd.f32 %v129, %v1767
    %v1769 = vpop.f32.mrb[0].mxu0
    %v1770 = vadd.f32 %v133, %v1769
    %1771 = vdwg.mxu0
    %1772 = vmatprep.subr.mxu0 0.0
    %1773 = vmatpush1.msra.mxu0 %v1655
    %1774 = vmatprep.subr.mxu0 0.0
    %1775 = vmatpush1.msra.mxu0 %v1658
    %1776 = vmatprep.subr.mxu0 0.0
    %1777 = vmatpush1.msra.mxu0 %v1661
    %1778 = vmatprep.subr.mxu0 0.0
    %1779 = vmatpush1.msra.mxu0 %v1664
    %1780 = vmatprep.subr.mxu0 0.0
    %1781 = vmatpush1.msra.mxu0 %v1667
    %1782 = vmatprep.subr.mxu0 0.0
    %1783 = vmatpush1.msra.mxu0 %v1670
    %1784 = vmatprep.subr.mxu0 0.0
    %1785 = vmatpush1.msra.mxu0 %v1673
    %1786 = vmatprep.subr.mxu0 0.0
    %1787 = vmatpush1.msra.mxu0 %v1676
    %1788 = vmatprep.subr.mxu0 0.0
    %1789 = vmatpush1.msra.mxu0 %v1679
    %1790 = vmatprep.subr.mxu0 0.0
    %1791 = vmatpush1.msra.mxu0 %v1682
    %1792 = vmatprep.subr.mxu0 0.0
    %1793 = vmatpush1.msra.mxu0 %v1685
    %1794 = vmatprep.subr.mxu0 0.0
    %1795 = vmatpush1.msra.mxu0 %v1688
    %1796 = vmatprep.subr.mxu0 0.0
    %1797 = vmatpush1.msra.mxu0 %v1691
    %1798 = vmatprep.subr.mxu0 0.0
    %1799 = vmatpush1.msra.mxu0 %v1694
    %1800 = vmatprep.subr.mxu0 0.0
    %1801 = vmatpush1.msra.mxu0 %v1697
    %1802 = vmatprep.subr.mxu0 0.0
    %1803 = vmatpush1.msra.mxu0 %v1700
    %1804 = vmatprep.subr.mxu0 0.0
    %1805 = vmatpush1.msra.mxu0 0.0
    %1806 = vmatprep.subr.mxu0 0.0
    %1807 = vmatpush1.msra.mxu0 0.0
    %1808 = vmatprep.subr.mxu0 0.0
    %1809 = vmatpush1.msra.mxu0 0.0
    %1810 = vmatprep.subr.mxu0 0.0
    %1811 = vmatpush1.msra.mxu0 0.0
    %1812 = vmatprep.subr.mxu0 0.0
    %1813 = vmatpush1.msra.mxu0 0.0
    %1814 = vmatprep.subr.mxu0 0.0
    %1815 = vmatpush1.msra.mxu0 0.0
    %1816 = vmatprep.subr.mxu0 0.0
    %1817 = vmatpush1.msra.mxu0 0.0
    %1818 = vmatprep.subr.mxu0 0.0
    %1819 = vmatpush1.msra.mxu0 0.0
    %1820 = vmatprep.subr.mxu0 0.0
    %1821 = vmatpush1.msra.mxu0 0.0
    %1822 = vmatprep.subr.mxu0 0.0
    %1823 = vmatpush1.msra.mxu0 0.0
    %1824 = vmatprep.subr.mxu0 0.0
    %1825 = vmatpush1.msra.mxu0 0.0
    %1826 = vmatprep.subr.mxu0 0.0
    %1827 = vmatpush1.msra.mxu0 0.0
    %1828 = vmatprep.subr.mxu0 0.0
    %1829 = vmatpush1.msra.mxu0 0.0
    %1830 = vmatprep.subr.mxu0 0.0
    %1831 = vmatpush1.msra.mxu0 0.0
    %1832 = vmatprep.subr.mxu0 0.0
    %1833 = vmatpush1.msra.mxu0 0.0
    %1834 = vmatprep.subr.mxu0 0.0
    %1835 = vmatpush1.msra.mxu0 0.0
    %1836 = vmatprep.mubr.f32.mxu0 0.0
    %1837 = vmatmul.mubr.f32.gmra.mrb[0].mxu0 %v1645
    %v1838 = vpop.f32.mrb[0].mxu0
    %v1839 = vadd.f32 %v137, %v1838
    %v1840 = vpop.f32.mrb[0].mxu0
    %1841 = vdwg.mxu0
    %v1842 = vadd.f32 %v1650, %v1768
    %v1843 = vxor.u32 %v1842, 2147483648
    %v1844 = vmul.f32 %v1843, 1.442695
    %v1845 = vpow.pop %v1844
    %v1846 = vadd.f32 %v1845, 1.0
    %v1847 = vrcp.pop %v1846
    %v1848 = vmul.f32 1.0, %v1847
    %v1849 = vadd.f32 %v1651, %v1770
    %v1850 = vxor.u32 %v1849, 2147483648
    %v1851 = vmul.f32 %v1850, 1.442695
    %v1852 = vpow.pop %v1851
    %v1853 = vadd.f32 %v1852, 1.0
    %v1854 = vrcp.pop %v1853
    %v1855 = vmul.f32 1.0, %v1854
    %v1856 = vmul.f32 %v1848, %v1839
    %v1857 = vadd.f32 %v1652, %v1856
    %v1858 = vtanh.pop %v1857
    %v1859 = vsub.f32 1.0, %v1855
    %v1860 = vmul.f32 %v1859, %v1858
    %v1861 = vmul.f32 %v1855, %v1645
    %v1862 = vadd.f32 %v1860, %v1861
    %s1863 = scalar_lea.vmem [#allocation2], 40
    %1864 = vst [vmem:[%s1863] sm:$0xff] %v1862
    %s1865 = smul.addr %s995, 8
    %s1866 = scalar_lea.vmem %s547, %s1865 [#allocation4]
    %v1867 = vld [vmem:[%s1866] sm:$0xff]
    %v1868 = vld [vmem:[%s1866 + $0x8] sm:$0xff]
    %v1869 = vld [vmem:[%s1866 + $0x10] sm:$0xff]
    %v1870 = vld [vmem:[#allocation5] sm:$0xff]
    %v1871 = vld [vmem:[#allocation5 + $0x8] sm:$0xff]
    %v1872 = vld [vmem:[#allocation5 + $0x10] sm:$0xff]
    %v1873 = vld [vmem:[#allocation5 + $0x18] sm:$0xff]
    %v1874 = vld [vmem:[#allocation5 + $0x20] sm:$0xff]
    %v1875 = vld [vmem:[#allocation5 + $0x28] sm:$0xff]
    %v1876 = vld [vmem:[#allocation5 + $0x30] sm:$0xff]
    %v1877 = vld [vmem:[#allocation5 + $0x38] sm:$0xff]
    %v1878 = vld [vmem:[#allocation5 + $0x40] sm:$0xff]
    %v1879 = vld [vmem:[#allocation5 + $0x48] sm:$0xff]
    %v1880 = vld [vmem:[#allocation5 + $0x50] sm:$0xff]
    %v1881 = vld [vmem:[#allocation5 + $0x58] sm:$0xff]
    %v1882 = vld [vmem:[#allocation5 + $0x60] sm:$0xff]
    %v1883 = vld [vmem:[#allocation5 + $0x68] sm:$0xff]
    %v1884 = vld [vmem:[#allocation5 + $0x70] sm:$0xff]
    %v1885 = vld [vmem:[#allocation5 + $0x78] sm:$0xff]
    %v1886 = vld [vmem:[#allocation5 + $0x80] sm:$0xff]
    %v1887 = vld [vmem:[#allocation5 + $0x88] sm:$0xff]
    %v1888 = vld [vmem:[#allocation5 + $0x90] sm:$0xff]
    %v1889 = vld [vmem:[#allocation5 + $0x98] sm:$0xff]
    %v1890 = vld [vmem:[#allocation5 + $0xa0] sm:$0xff]
    %v1891 = vld [vmem:[#allocation5 + $0xa8] sm:$0xff]
    %v1892 = vld [vmem:[#allocation5 + $0xb0] sm:$0xff]
    %v1893 = vld [vmem:[#allocation5 + $0xb8] sm:$0xff]
    %v1894 = vld [vmem:[#allocation5 + $0xc0] sm:$0xff]
    %v1895 = vld [vmem:[#allocation5 + $0xc8] sm:$0xff]
    %v1896 = vld [vmem:[#allocation5 + $0xd0] sm:$0xff]
    %v1897 = vld [vmem:[#allocation5 + $0xd8] sm:$0xff]
    %v1898 = vld [vmem:[#allocation5 + $0xe0] sm:$0xff]
    %v1899 = vld [vmem:[#allocation5 + $0xe8] sm:$0xff]
    %v1900 = vld [vmem:[#allocation5 + $0xf0] sm:$0xff]
    %v1901 = vld [vmem:[#allocation5 + $0xf8] sm:$0xff]
    %v1902 = vld [vmem:[#allocation5 + $0x100] sm:$0xff]
    %v1903 = vld [vmem:[#allocation5 + $0x108] sm:$0xff]
    %v1904 = vld [vmem:[#allocation5 + $0x110] sm:$0xff]
    %v1905 = vld [vmem:[#allocation5 + $0x118] sm:$0xff]
    %v1906 = vld [vmem:[#allocation5 + $0x120] sm:$0xff]
    %v1907 = vld [vmem:[#allocation5 + $0x128] sm:$0xff]
    %v1908 = vld [vmem:[#allocation5 + $0x130] sm:$0xff]
    %v1909 = vld [vmem:[#allocation5 + $0x138] sm:$0xff]
    %v1910 = vld [vmem:[#allocation5 + $0x140] sm:$0xff]
    %v1911 = vld [vmem:[#allocation5 + $0x148] sm:$0xff]
    %v1912 = vld [vmem:[#allocation5 + $0x150] sm:$0xff]
    %v1913 = vld [vmem:[#allocation5 + $0x158] sm:$0xff]
    %v1914 = vld [vmem:[#allocation5 + $0x160] sm:$0xff]
    %v1915 = vld [vmem:[#allocation5 + $0x168] sm:$0xff]
    %v1916 = vld [vmem:[#allocation5 + $0x170] sm:$0xff]
    %v1917 = vld [vmem:[#allocation5 + $0x178] sm:$0xff]
    %1918 = vmatprep.subr.mxu0 %v1871
    %1919 = vmatpush1.msra.mxu0 %v1870
    %1920 = vmatprep.subr.mxu0 %v1874
    %1921 = vmatpush1.msra.mxu0 %v1873
    %1922 = vmatprep.subr.mxu0 %v1877
    %1923 = vmatpush1.msra.mxu0 %v1876
    %1924 = vmatprep.subr.mxu0 %v1880
    %1925 = vmatpush1.msra.mxu0 %v1879
    %1926 = vmatprep.subr.mxu0 %v1883
    %1927 = vmatpush1.msra.mxu0 %v1882
    %1928 = vmatprep.subr.mxu0 %v1886
    %1929 = vmatpush1.msra.mxu0 %v1885
    %1930 = vmatprep.subr.mxu0 %v1889
    %1931 = vmatpush1.msra.mxu0 %v1888
    %1932 = vmatprep.subr.mxu0 %v1892
    %1933 = vmatpush1.msra.mxu0 %v1891
    %1934 = vmatprep.subr.mxu0 %v1895
    %1935 = vmatpush1.msra.mxu0 %v1894
    %1936 = vmatprep.subr.mxu0 %v1898
    %1937 = vmatpush1.msra.mxu0 %v1897
    %1938 = vmatprep.subr.mxu0 %v1901
    %1939 = vmatpush1.msra.mxu0 %v1900
    %1940 = vmatprep.subr.mxu0 %v1904
    %1941 = vmatpush1.msra.mxu0 %v1903
    %1942 = vmatprep.subr.mxu0 %v1907
    %1943 = vmatpush1.msra.mxu0 %v1906
    %1944 = vmatprep.subr.mxu0 %v1910
    %1945 = vmatpush1.msra.mxu0 %v1909
    %1946 = vmatprep.subr.mxu0 %v1913
    %1947 = vmatpush1.msra.mxu0 %v1912
    %1948 = vmatprep.subr.mxu0 %v1916
    %1949 = vmatpush1.msra.mxu0 %v1915
    %1950 = vmatprep.subr.mxu0 0.0
    %1951 = vmatpush1.msra.mxu0 0.0
    %1952 = vmatprep.subr.mxu0 0.0
    %1953 = vmatpush1.msra.mxu0 0.0
    %1954 = vmatprep.subr.mxu0 0.0
    %1955 = vmatpush1.msra.mxu0 0.0
    %1956 = vmatprep.subr.mxu0 0.0
    %1957 = vmatpush1.msra.mxu0 0.0
    %1958 = vmatprep.subr.mxu0 0.0
    %1959 = vmatpush1.msra.mxu0 0.0
    %1960 = vmatprep.subr.mxu0 0.0
    %1961 = vmatpush1.msra.mxu0 0.0
    %1962 = vmatprep.subr.mxu0 0.0
    %1963 = vmatpush1.msra.mxu0 0.0
    %1964 = vmatprep.subr.mxu0 0.0
    %1965 = vmatpush1.msra.mxu0 0.0
    %1966 = vmatprep.subr.mxu0 0.0
    %1967 = vmatpush1.msra.mxu0 0.0
    %1968 = vmatprep.subr.mxu0 0.0
    %1969 = vmatpush1.msra.mxu0 0.0
    %1970 = vmatprep.subr.mxu0 0.0
    %1971 = vmatpush1.msra.mxu0 0.0
    %1972 = vmatprep.subr.mxu0 0.0
    %1973 = vmatpush1.msra.mxu0 0.0
    %1974 = vmatprep.subr.mxu0 0.0
    %1975 = vmatpush1.msra.mxu0 0.0
    %1976 = vmatprep.subr.mxu0 0.0
    %1977 = vmatpush1.msra.mxu0 0.0
    %1978 = vmatprep.subr.mxu0 0.0
    %1979 = vmatpush1.msra.mxu0 0.0
    %1980 = vmatprep.subr.mxu0 0.0
    %1981 = vmatpush1.msra.mxu0 0.0
    %1982 = vmatprep.mubr.f32.mxu0 0.0
    %1983 = vmatmul.mubr.f32.gmra.mrb[0].mxu0 %v1862
    %v1984 = vpop.f32.mrb[0].mxu0
    %v1985 = vadd.f32 %v129, %v1984
    %v1986 = vpop.f32.mrb[0].mxu0
    %v1987 = vadd.f32 %v133, %v1986
    %1988 = vdwg.mxu0
    %1989 = vmatprep.subr.mxu0 0.0
    %1990 = vmatpush1.msra.mxu0 %v1872
    %1991 = vmatprep.subr.mxu0 0.0
    %1992 = vmatpush1.msra.mxu0 %v1875
    %1993 = vmatprep.subr.mxu0 0.0
    %1994 = vmatpush1.msra.mxu0 %v1878
    %1995 = vmatprep.subr.mxu0 0.0
    %1996 = vmatpush1.msra.mxu0 %v1881
    %1997 = vmatprep.subr.mxu0 0.0
    %1998 = vmatpush1.msra.mxu0 %v1884
    %1999 = vmatprep.subr.mxu0 0.0
    %2000 = vmatpush1.msra.mxu0 %v1887
    %2001 = vmatprep.subr.mxu0 0.0
    %2002 = vmatpush1.msra.mxu0 %v1890
    %2003 = vmatprep.subr.mxu0 0.0
    %2004 = vmatpush1.msra.mxu0 %v1893
    %2005 = vmatprep.subr.mxu0 0.0
    %2006 = vmatpush1.msra.mxu0 %v1896
    %2007 = vmatprep.subr.mxu0 0.0
    %2008 = vmatpush1.msra.mxu0 %v1899
    %2009 = vmatprep.subr.mxu0 0.0
    %2010 = vmatpush1.msra.mxu0 %v1902
    %2011 = vmatprep.subr.mxu0 0.0
    %2012 = vmatpush1.msra.mxu0 %v1905
    %2013 = vmatprep.subr.mxu0 0.0
    %2014 = vmatpush1.msra.mxu0 %v1908
    %2015 = vmatprep.subr.mxu0 0.0
    %2016 = vmatpush1.msra.mxu0 %v1911
    %2017 = vmatprep.subr.mxu0 0.0
    %2018 = vmatpush1.msra.mxu0 %v1914
    %2019 = vmatprep.subr.mxu0 0.0
    %2020 = vmatpush1.msra.mxu0 %v1917
    %2021 = vmatprep.subr.mxu0 0.0
    %2022 = vmatpush1.msra.mxu0 0.0
    %2023 = vmatprep.subr.mxu0 0.0
    %2024 = vmatpush1.msra.mxu0 0.0
    %2025 = vmatprep.subr.mxu0 0.0
    %2026 = vmatpush1.msra.mxu0 0.0
    %2027 = vmatprep.subr.mxu0 0.0
    %2028 = vmatpush1.msra.mxu0 0.0
    %2029 = vmatprep.subr.mxu0 0.0
    %2030 = vmatpush1.msra.mxu0 0.0
    %2031 = vmatprep.subr.mxu0 0.0
    %2032 = vmatpush1.msra.mxu0 0.0
    %2033 = vmatprep.subr.mxu0 0.0
    %2034 = vmatpush1.msra.mxu0 0.0
    %2035 = vmatprep.subr.mxu0 0.0
    %2036 = vmatpush1.msra.mxu0 0.0
    %2037 = vmatprep.subr.mxu0 0.0
    %2038 = vmatpush1.msra.mxu0 0.0
    %2039 = vmatprep.subr.mxu0 0.0
    %2040 = vmatpush1.msra.mxu0 0.0
    %2041 = vmatprep.subr.mxu0 0.0
    %2042 = vmatpush1.msra.mxu0 0.0
    %2043 = vmatprep.subr.mxu0 0.0
    %2044 = vmatpush1.msra.mxu0 0.0
    %2045 = vmatprep.subr.mxu0 0.0
    %2046 = vmatpush1.msra.mxu0 0.0
    %2047 = vmatprep.subr.mxu0 0.0
    %2048 = vmatpush1.msra.mxu0 0.0
    %2049 = vmatprep.subr.mxu0 0.0
    %2050 = vmatpush1.msra.mxu0 0.0
    %2051 = vmatprep.subr.mxu0 0.0
    %2052 = vmatpush1.msra.mxu0 0.0
    %2053 = vmatprep.mubr.f32.mxu0 0.0
    %2054 = vmatmul.mubr.f32.gmra.mrb[0].mxu0 %v1862
    %v2055 = vpop.f32.mrb[0].mxu0
    %v2056 = vadd.f32 %v137, %v2055
    %v2057 = vpop.f32.mrb[0].mxu0
    %2058 = vdwg.mxu0
    %v2059 = vadd.f32 %v1867, %v1985
    %v2060 = vxor.u32 %v2059, 2147483648
    %v2061 = vmul.f32 %v2060, 1.442695
    %v2062 = vpow.pop %v2061
    %v2063 = vadd.f32 %v2062, 1.0
    %v2064 = vrcp.pop %v2063
    %v2065 = vmul.f32 1.0, %v2064
    %v2066 = vadd.f32 %v1868, %v1987
    %v2067 = vxor.u32 %v2066, 2147483648
    %v2068 = vmul.f32 %v2067, 1.442695
    %v2069 = vpow.pop %v2068
    %v2070 = vadd.f32 %v2069, 1.0
    %v2071 = vrcp.pop %v2070
    %v2072 = vmul.f32 1.0, %v2071
    %v2073 = vmul.f32 %v2065, %v2056
    %v2074 = vadd.f32 %v1869, %v2073
    %v2075 = vtanh.pop %v2074
    %v2076 = vsub.f32 1.0, %v2072
    %v2077 = vmul.f32 %v2076, %v2075
    %v2078 = vmul.f32 %v2072, %v1862
    %v2079 = vadd.f32 %v2077, %v2078
    %s2080 = scalar_lea.vmem [#allocation2], 48
    %2081 = vst [vmem:[%s2080] sm:$0xff] %v2079
    %s2082 = smul.addr %s1213, 8
    %s2083 = scalar_lea.vmem %s547, %s2082 [#allocation4]
    %v2084 = vld [vmem:[%s2083] sm:$0xff]
    %v2085 = vld [vmem:[%s2083 + $0x8] sm:$0xff]
    %v2086 = vld [vmem:[%s2083 + $0x10] sm:$0xff]
    %v2087 = vld [vmem:[#allocation5] sm:$0xff]
    %v2088 = vld [vmem:[#allocation5 + $0x8] sm:$0xff]
    %v2089 = vld [vmem:[#allocation5 + $0x10] sm:$0xff]
    %v2090 = vld [vmem:[#allocation5 + $0x18] sm:$0xff]
    %v2091 = vld [vmem:[#allocation5 + $0x20] sm:$0xff]
    %v2092 = vld [vmem:[#allocation5 + $0x28] sm:$0xff]
    %v2093 = vld [vmem:[#allocation5 + $0x30] sm:$0xff]
    %v2094 = vld [vmem:[#allocation5 + $0x38] sm:$0xff]
    %v2095 = vld [vmem:[#allocation5 + $0x40] sm:$0xff]
    %v2096 = vld [vmem:[#allocation5 + $0x48] sm:$0xff]
    %v2097 = vld [vmem:[#allocation5 + $0x50] sm:$0xff]
    %v2098 = vld [vmem:[#allocation5 + $0x58] sm:$0xff]
    %v2099 = vld [vmem:[#allocation5 + $0x60] sm:$0xff]
    %v2100 = vld [vmem:[#allocation5 + $0x68] sm:$0xff]
    %v2101 = vld [vmem:[#allocation5 + $0x70] sm:$0xff]
    %v2102 = vld [vmem:[#allocation5 + $0x78] sm:$0xff]
    %v2103 = vld [vmem:[#allocation5 + $0x80] sm:$0xff]
    %v2104 = vld [vmem:[#allocation5 + $0x88] sm:$0xff]
    %v2105 = vld [vmem:[#allocation5 + $0x90] sm:$0xff]
    %v2106 = vld [vmem:[#allocation5 + $0x98] sm:$0xff]
    %v2107 = vld [vmem:[#allocation5 + $0xa0] sm:$0xff]
    %v2108 = vld [vmem:[#allocation5 + $0xa8] sm:$0xff]
    %v2109 = vld [vmem:[#allocation5 + $0xb0] sm:$0xff]
    %v2110 = vld [vmem:[#allocation5 + $0xb8] sm:$0xff]
    %v2111 = vld [vmem:[#allocation5 + $0xc0] sm:$0xff]
    %v2112 = vld [vmem:[#allocation5 + $0xc8] sm:$0xff]
    %v2113 = vld [vmem:[#allocation5 + $0xd0] sm:$0xff]
    %v2114 = vld [vmem:[#allocation5 + $0xd8] sm:$0xff]
    %v2115 = vld [vmem:[#allocation5 + $0xe0] sm:$0xff]
    %v2116 = vld [vmem:[#allocation5 + $0xe8] sm:$0xff]
    %v2117 = vld [vmem:[#allocation5 + $0xf0] sm:$0xff]
    %v2118 = vld [vmem:[#allocation5 + $0xf8] sm:$0xff]
    %v2119 = vld [vmem:[#allocation5 + $0x100] sm:$0xff]
    %v2120 = vld [vmem:[#allocation5 + $0x108] sm:$0xff]
    %v2121 = vld [vmem:[#allocation5 + $0x110] sm:$0xff]
    %v2122 = vld [vmem:[#allocation5 + $0x118] sm:$0xff]
    %v2123 = vld [vmem:[#allocation5 + $0x120] sm:$0xff]
    %v2124 = vld [vmem:[#allocation5 + $0x128] sm:$0xff]
    %v2125 = vld [vmem:[#allocation5 + $0x130] sm:$0xff]
    %v2126 = vld [vmem:[#allocation5 + $0x138] sm:$0xff]
    %v2127 = vld [vmem:[#allocation5 + $0x140] sm:$0xff]
    %v2128 = vld [vmem:[#allocation5 + $0x148] sm:$0xff]
    %v2129 = vld [vmem:[#allocation5 + $0x150] sm:$0xff]
    %v2130 = vld [vmem:[#allocation5 + $0x158] sm:$0xff]
    %v2131 = vld [vmem:[#allocation5 + $0x160] sm:$0xff]
    %v2132 = vld [vmem:[#allocation5 + $0x168] sm:$0xff]
    %v2133 = vld [vmem:[#allocation5 + $0x170] sm:$0xff]
    %v2134 = vld [vmem:[#allocation5 + $0x178] sm:$0xff]
    %2135 = vmatprep.subr.mxu0 %v2088
    %2136 = vmatpush1.msra.mxu0 %v2087
    %2137 = vmatprep.subr.mxu0 %v2091
    %2138 = vmatpush1.msra.mxu0 %v2090
    %2139 = vmatprep.subr.mxu0 %v2094
    %2140 = vmatpush1.msra.mxu0 %v2093
    %2141 = vmatprep.subr.mxu0 %v2097
    %2142 = vmatpush1.msra.mxu0 %v2096
    %2143 = vmatprep.subr.mxu0 %v2100
    %2144 = vmatpush1.msra.mxu0 %v2099
    %2145 = vmatprep.subr.mxu0 %v2103
    %2146 = vmatpush1.msra.mxu0 %v2102
    %2147 = vmatprep.subr.mxu0 %v2106
    %2148 = vmatpush1.msra.mxu0 %v2105
    %2149 = vmatprep.subr.mxu0 %v2109
    %2150 = vmatpush1.msra.mxu0 %v2108
    %2151 = vmatprep.subr.mxu0 %v2112
    %2152 = vmatpush1.msra.mxu0 %v2111
    %2153 = vmatprep.subr.mxu0 %v2115
    %2154 = vmatpush1.msra.mxu0 %v2114
    %2155 = vmatprep.subr.mxu0 %v2118
    %2156 = vmatpush1.msra.mxu0 %v2117
    %2157 = vmatprep.subr.mxu0 %v2121
    %2158 = vmatpush1.msra.mxu0 %v2120
    %2159 = vmatprep.subr.mxu0 %v2124
    %2160 = vmatpush1.msra.mxu0 %v2123
    %2161 = vmatprep.subr.mxu0 %v2127
    %2162 = vmatpush1.msra.mxu0 %v2126
    %2163 = vmatprep.subr.mxu0 %v2130
    %2164 = vmatpush1.msra.mxu0 %v2129
    %2165 = vmatprep.subr.mxu0 %v2133
    %2166 = vmatpush1.msra.mxu0 %v2132
    %2167 = vmatprep.subr.mxu0 0.0
    %2168 = vmatpush1.msra.mxu0 0.0
    %2169 = vmatprep.subr.mxu0 0.0
    %2170 = vmatpush1.msra.mxu0 0.0
    %2171 = vmatprep.subr.mxu0 0.0
    %2172 = vmatpush1.msra.mxu0 0.0
    %2173 = vmatprep.subr.mxu0 0.0
    %2174 = vmatpush1.msra.mxu0 0.0
    %2175 = vmatprep.subr.mxu0 0.0
    %2176 = vmatpush1.msra.mxu0 0.0
    %2177 = vmatprep.subr.mxu0 0.0
    %2178 = vmatpush1.msra.mxu0 0.0
    %2179 = vmatprep.subr.mxu0 0.0
    %2180 = vmatpush1.msra.mxu0 0.0
    %2181 = vmatprep.subr.mxu0 0.0
    %2182 = vmatpush1.msra.mxu0 0.0
    %2183 = vmatprep.subr.mxu0 0.0
    %2184 = vmatpush1.msra.mxu0 0.0
    %2185 = vmatprep.subr.mxu0 0.0
    %2186 = vmatpush1.msra.mxu0 0.0
    %2187 = vmatprep.subr.mxu0 0.0
    %2188 = vmatpush1.msra.mxu0 0.0
    %2189 = vmatprep.subr.mxu0 0.0
    %2190 = vmatpush1.msra.mxu0 0.0
    %2191 = vmatprep.subr.mxu0 0.0
    %2192 = vmatpush1.msra.mxu0 0.0
    %2193 = vmatprep.subr.mxu0 0.0
    %2194 = vmatpush1.msra.mxu0 0.0
    %2195 = vmatprep.subr.mxu0 0.0
    %2196 = vmatpush1.msra.mxu0 0.0
    %2197 = vmatprep.subr.mxu0 0.0
    %2198 = vmatpush1.msra.mxu0 0.0
    %2199 = vmatprep.mubr.f32.mxu0 0.0
    %2200 = vmatmul.mubr.f32.gmra.mrb[0].mxu0 %v2079
    %v2201 = vpop.f32.mrb[0].mxu0
    %v2202 = vadd.f32 %v129, %v2201
    %v2203 = vpop.f32.mrb[0].mxu0
    %v2204 = vadd.f32 %v133, %v2203
    %2205 = vdwg.mxu0
    %2206 = vmatprep.subr.mxu0 0.0
    %2207 = vmatpush1.msra.mxu0 %v2089
    %2208 = vmatprep.subr.mxu0 0.0
    %2209 = vmatpush1.msra.mxu0 %v2092
    %2210 = vmatprep.subr.mxu0 0.0
    %2211 = vmatpush1.msra.mxu0 %v2095
    %2212 = vmatprep.subr.mxu0 0.0
    %2213 = vmatpush1.msra.mxu0 %v2098
    %2214 = vmatprep.subr.mxu0 0.0
    %2215 = vmatpush1.msra.mxu0 %v2101
    %2216 = vmatprep.subr.mxu0 0.0
    %2217 = vmatpush1.msra.mxu0 %v2104
    %2218 = vmatprep.subr.mxu0 0.0
    %2219 = vmatpush1.msra.mxu0 %v2107
    %2220 = vmatprep.subr.mxu0 0.0
    %2221 = vmatpush1.msra.mxu0 %v2110
    %2222 = vmatprep.subr.mxu0 0.0
    %2223 = vmatpush1.msra.mxu0 %v2113
    %2224 = vmatprep.subr.mxu0 0.0
    %2225 = vmatpush1.msra.mxu0 %v2116
    %2226 = vmatprep.subr.mxu0 0.0
    %2227 = vmatpush1.msra.mxu0 %v2119
    %2228 = vmatprep.subr.mxu0 0.0
    %2229 = vmatpush1.msra.mxu0 %v2122
    %2230 = vmatprep.subr.mxu0 0.0
    %2231 = vmatpush1.msra.mxu0 %v2125
    %2232 = vmatprep.subr.mxu0 0.0
    %2233 = vmatpush1.msra.mxu0 %v2128
    %2234 = vmatprep.subr.mxu0 0.0
    %2235 = vmatpush1.msra.mxu0 %v2131
    %2236 = vmatprep.subr.mxu0 0.0
    %2237 = vmatpush1.msra.mxu0 %v2134
    %2238 = vmatprep.subr.mxu0 0.0
    %2239 = vmatpush1.msra.mxu0 0.0
    %2240 = vmatprep.subr.mxu0 0.0
    %2241 = vmatpush1.msra.mxu0 0.0
    %2242 = vmatprep.subr.mxu0 0.0
    %2243 = vmatpush1.msra.mxu0 0.0
    %2244 = vmatprep.subr.mxu0 0.0
    %2245 = vmatpush1.msra.mxu0 0.0
    %2246 = vmatprep.subr.mxu0 0.0
    %2247 = vmatpush1.msra.mxu0 0.0
    %2248 = vmatprep.subr.mxu0 0.0
    %2249 = vmatpush1.msra.mxu0 0.0
    %2250 = vmatprep.subr.mxu0 0.0
    %2251 = vmatpush1.msra.mxu0 0.0
    %2252 = vmatprep.subr.mxu0 0.0
    %2253 = vmatpush1.msra.mxu0 0.0
    %2254 = vmatprep.subr.mxu0 0.0
    %2255 = vmatpush1.msra.mxu0 0.0
    %2256 = vmatprep.subr.mxu0 0.0
    %2257 = vmatpush1.msra.mxu0 0.0
    %2258 = vmatprep.subr.mxu0 0.0
    %2259 = vmatpush1.msra.mxu0 0.0
    %2260 = vmatprep.subr.mxu0 0.0
    %2261 = vmatpush1.msra.mxu0 0.0
    %2262 = vmatprep.subr.mxu0 0.0
    %2263 = vmatpush1.msra.mxu0 0.0
    %2264 = vmatprep.subr.mxu0 0.0
    %2265 = vmatpush1.msra.mxu0 0.0
    %2266 = vmatprep.subr.mxu0 0.0
    %2267 = vmatpush1.msra.mxu0 0.0
    %2268 = vmatprep.subr.mxu0 0.0
    %2269 = vmatpush1.msra.mxu0 0.0
    %2270 = vmatprep.mubr.f32.mxu0 0.0
    %2271 = vmatmul.mubr.f32.gmra.mrb[0].mxu0 %v2079
    %v2272 = vpop.f32.mrb[0].mxu0
    %v2273 = vadd.f32 %v137, %v2272
    %v2274 = vpop.f32.mrb[0].mxu0
    %2275 = vdwg.mxu0
    %v2276 = vadd.f32 %v2084, %v2202
    %v2277 = vxor.u32 %v2276, 2147483648
    %v2278 = vmul.f32 %v2277, 1.442695
    %v2279 = vpow.pop %v2278
    %v2280 = vadd.f32 %v2279, 1.0
    %v2281 = vrcp.pop %v2280
    %v2282 = vmul.f32 1.0, %v2281
    %v2283 = vadd.f32 %v2085, %v2204
    %v2284 = vxor.u32 %v2283, 2147483648
    %v2285 = vmul.f32 %v2284, 1.442695
    %v2286 = vpow.pop %v2285
    %v2287 = vadd.f32 %v2286, 1.0
    %v2288 = vrcp.pop %v2287
    %v2289 = vmul.f32 1.0, %v2288
    %v2290 = vmul.f32 %v2282, %v2273
    %v2291 = vadd.f32 %v2086, %v2290
    %v2292 = vtanh.pop %v2291
    %v2293 = vsub.f32 1.0, %v2289
    %v2294 = vmul.f32 %v2293, %v2292
    %v2295 = vmul.f32 %v2289, %v2079
    %v2296 = vadd.f32 %v2294, %v2295
    %s2297 = scalar_lea.vmem [#allocation2], 56
    %2298 = vst [vmem:[%s2297] sm:$0xff] %v2296
    %2299 = vst [vmem:[#allocation14] sm:$0xff] %v2296
    %v2300 = vld [vmem:[%s7] sm:$0x7]
    %v2302 = vlaneseq
    %v2303 = vshrl.u32 %v2302, 7
    %v2304 = vsub.s32 0, %v2303
    %v2305 = vrot.slane %v2300, %v2304
    %v2306 = vlaneseq
    %v2307 = vshrl.u32 %v2306, 7
    %v2308 = vsub.s32 1, %v2307
    %v2309 = vrot.slane %v2300, %v2308
    %v2310 = vlaneseq
    %v2311 = vshrl.u32 %v2310, 7
    %v2312 = vsub.s32 2, %v2311
    %v2313 = vrot.slane %v2300, %v2312
    %v2317 = vld [vmem:[%s9] sm:$0x7]
    %v2319 = vlaneseq
    %v2320 = vshrl.u32 %v2319, 7
    %v2321 = vsub.s32 0, %v2320
    %v2322 = vrot.slane %v2317, %v2321
    %v2323 = vlaneseq
    %v2324 = vshrl.u32 %v2323, 7
    %v2325 = vsub.s32 1, %v2324
    %v2326 = vrot.slane %v2317, %v2325
    %v2327 = vlaneseq
    %v2328 = vshrl.u32 %v2327, 7
    %v2329 = vsub.s32 2, %v2328
    %v2330 = vrot.slane %v2317, %v2329
    %v2334 = vld [vmem:[#allocation2] sm:$0xff]
    %v2335 = vld [vmem:[#allocation2 + $0x8] sm:$0xff]
    %v2336 = vld [vmem:[#allocation2 + $0x10] sm:$0xff]
    %v2337 = vld [vmem:[#allocation2 + $0x18] sm:$0xff]
    %v2338 = vld [vmem:[#allocation8] sm:$0xff]
    %v2339 = vld [vmem:[#allocation8 + $0x8] sm:$0xff]
    %v2340 = vld [vmem:[#allocation8 + $0x10] sm:$0xff]
    %v2341 = vld [vmem:[#allocation8 + $0x18] sm:$0xff]
    %v2342 = vld [vmem:[#allocation8 + $0x20] sm:$0xff]
    %v2343 = vld [vmem:[#allocation8 + $0x28] sm:$0xff]
    %v2344 = vld [vmem:[#allocation8 + $0x30] sm:$0xff]
    %v2345 = vld [vmem:[#allocation8 + $0x38] sm:$0xff]
    %v2346 = vld [vmem:[#allocation8 + $0x40] sm:$0xff]
    %v2347 = vld [vmem:[#allocation8 + $0x48] sm:$0xff]
    %v2348 = vld [vmem:[#allocation8 + $0x50] sm:$0xff]
    %v2349 = vld [vmem:[#allocation8 + $0x58] sm:$0xff]
    %v2350 = vld [vmem:[#allocation8 + $0x60] sm:$0xff]
    %v2351 = vld [vmem:[#allocation8 + $0x68] sm:$0xff]
    %v2352 = vld [vmem:[#allocation8 + $0x70] sm:$0xff]
    %v2353 = vld [vmem:[#allocation8 + $0x78] sm:$0xff]
    %v2354 = vld [vmem:[#allocation8 + $0x80] sm:$0xff]
    %v2355 = vld [vmem:[#allocation8 + $0x88] sm:$0xff]
    %v2356 = vld [vmem:[#allocation8 + $0x90] sm:$0xff]
    %v2357 = vld [vmem:[#allocation8 + $0x98] sm:$0xff]
    %v2358 = vld [vmem:[#allocation8 + $0xa0] sm:$0xff]
    %v2359 = vld [vmem:[#allocation8 + $0xa8] sm:$0xff]
    %v2360 = vld [vmem:[#allocation8 + $0xb0] sm:$0xff]
    %v2361 = vld [vmem:[#allocation8 + $0xb8] sm:$0xff]
    %v2362 = vld [vmem:[#allocation8 + $0xc0] sm:$0xff]
    %v2363 = vld [vmem:[#allocation8 + $0xc8] sm:$0xff]
    %v2364 = vld [vmem:[#allocation8 + $0xd0] sm:$0xff]
    %v2365 = vld [vmem:[#allocation8 + $0xd8] sm:$0xff]
    %v2366 = vld [vmem:[#allocation8 + $0xe0] sm:$0xff]
    %v2367 = vld [vmem:[#allocation8 + $0xe8] sm:$0xff]
    %v2368 = vld [vmem:[#allocation8 + $0xf0] sm:$0xff]
    %v2369 = vld [vmem:[#allocation8 + $0xf8] sm:$0xff]
    %v2370 = vld [vmem:[#allocation8 + $0x100] sm:$0xff]
    %v2371 = vld [vmem:[#allocation8 + $0x108] sm:$0xff]
    %v2372 = vld [vmem:[#allocation8 + $0x110] sm:$0xff]
    %v2373 = vld [vmem:[#allocation8 + $0x118] sm:$0xff]
    %v2374 = vld [vmem:[#allocation8 + $0x120] sm:$0xff]
    %v2375 = vld [vmem:[#allocation8 + $0x128] sm:$0xff]
    %v2376 = vld [vmem:[#allocation8 + $0x130] sm:$0xff]
    %v2377 = vld [vmem:[#allocation8 + $0x138] sm:$0xff]
    %v2378 = vld [vmem:[#allocation8 + $0x140] sm:$0xff]
    %v2379 = vld [vmem:[#allocation8 + $0x148] sm:$0xff]
    %v2380 = vld [vmem:[#allocation8 + $0x150] sm:$0xff]
    %v2381 = vld [vmem:[#allocation8 + $0x158] sm:$0xff]
    %v2382 = vld [vmem:[#allocation8 + $0x160] sm:$0xff]
    %v2383 = vld [vmem:[#allocation8 + $0x168] sm:$0xff]
    %v2384 = vld [vmem:[#allocation8 + $0x170] sm:$0xff]
    %v2385 = vld [vmem:[#allocation8 + $0x178] sm:$0xff]
    %2386 = vmatprep.subr.mxu0 %v2339
    %2387 = vmatpush1.msra.mxu0 %v2338
    %2388 = vmatprep.subr.mxu0 %v2342
    %2389 = vmatpush1.msra.mxu0 %v2341
    %2390 = vmatprep.subr.mxu0 %v2345
    %2391 = vmatpush1.msra.mxu0 %v2344
    %2392 = vmatprep.subr.mxu0 %v2348
    %2393 = vmatpush1.msra.mxu0 %v2347
    %2394 = vmatprep.subr.mxu0 %v2351
    %2395 = vmatpush1.msra.mxu0 %v2350
    %2396 = vmatprep.subr.mxu0 %v2354
    %2397 = vmatpush1.msra.mxu0 %v2353
    %2398 = vmatprep.subr.mxu0 %v2357
    %2399 = vmatpush1.msra.mxu0 %v2356
    %2400 = vmatprep.subr.mxu0 %v2360
    %2401 = vmatpush1.msra.mxu0 %v2359
    %2402 = vmatprep.subr.mxu0 %v2363
    %2403 = vmatpush1.msra.mxu0 %v2362
    %2404 = vmatprep.subr.mxu0 %v2366
    %2405 = vmatpush1.msra.mxu0 %v2365
    %2406 = vmatprep.subr.mxu0 %v2369
    %2407 = vmatpush1.msra.mxu0 %v2368
    %2408 = vmatprep.subr.mxu0 %v2372
    %2409 = vmatpush1.msra.mxu0 %v2371
    %2410 = vmatprep.subr.mxu0 %v2375
    %2411 = vmatpush1.msra.mxu0 %v2374
    %2412 = vmatprep.subr.mxu0 %v2378
    %2413 = vmatpush1.msra.mxu0 %v2377
    %2414 = vmatprep.subr.mxu0 %v2381
    %2415 = vmatpush1.msra.mxu0 %v2380
    %2416 = vmatprep.subr.mxu0 %v2384
    %2417 = vmatpush1.msra.mxu0 %v2383
    %2418 = vmatprep.subr.mxu0 0.0
    %2419 = vmatpush1.msra.mxu0 0.0
    %2420 = vmatprep.subr.mxu0 0.0
    %2421 = vmatpush1.msra.mxu0 0.0
    %2422 = vmatprep.subr.mxu0 0.0
    %2423 = vmatpush1.msra.mxu0 0.0
    %2424 = vmatprep.subr.mxu0 0.0
    %2425 = vmatpush1.msra.mxu0 0.0
    %2426 = vmatprep.subr.mxu0 0.0
    %2427 = vmatpush1.msra.mxu0 0.0
    %2428 = vmatprep.subr.mxu0 0.0
    %2429 = vmatpush1.msra.mxu0 0.0
    %2430 = vmatprep.subr.mxu0 0.0
    %2431 = vmatpush1.msra.mxu0 0.0
    %2432 = vmatprep.subr.mxu0 0.0
    %2433 = vmatpush1.msra.mxu0 0.0
    %2434 = vmatprep.subr.mxu0 0.0
    %2435 = vmatpush1.msra.mxu0 0.0
    %2436 = vmatprep.subr.mxu0 0.0
    %2437 = vmatpush1.msra.mxu0 0.0
    %2438 = vmatprep.subr.mxu0 0.0
    %2439 = vmatpush1.msra.mxu0 0.0
    %2440 = vmatprep.subr.mxu0 0.0
    %2441 = vmatpush1.msra.mxu0 0.0
    %2442 = vmatprep.subr.mxu0 0.0
    %2443 = vmatpush1.msra.mxu0 0.0
    %2444 = vmatprep.subr.mxu0 0.0
    %2445 = vmatpush1.msra.mxu0 0.0
    %2446 = vmatprep.subr.mxu0 0.0
    %2447 = vmatpush1.msra.mxu0 0.0
    %2448 = vmatprep.subr.mxu0 0.0
    %2449 = vmatpush1.msra.mxu0 0.0
    %2450 = vmatprep.mubr.f32.mxu0 0.0
    %2451 = vmatmul.mubr.f32.gmra.mrb[0].mxu0 %v2334
    %v2452 = vpop.f32.mrb[0].mxu0
    %v2453 = vadd.f32 %v2305, %v2452
    %v2454 = vpop.f32.mrb[0].mxu0
    %v2455 = vadd.f32 %v2309, %v2454
    %2456 = vmatprep.mubr.f32.mxu0 0.0
    %2457 = vmatmul.mubr.f32.gmra.mrb[0].mxu0 %v2335
    %v2458 = vpop.f32.mrb[0].mxu0
    %v2459 = vadd.f32 %v2305, %v2458
    %v2460 = vpop.f32.mrb[0].mxu0
    %v2461 = vadd.f32 %v2309, %v2460
    %2462 = vmatprep.mubr.f32.mxu0 0.0
    %2463 = vmatmul.mubr.f32.gmra.mrb[0].mxu0 %v2336
    %v2464 = vpop.f32.mrb[0].mxu0
    %v2465 = vadd.f32 %v2305, %v2464
    %v2466 = vpop.f32.mrb[0].mxu0
    %v2467 = vadd.f32 %v2309, %v2466
    %2468 = vmatprep.mubr.f32.mxu0 0.0
    %2469 = vmatmul.mubr.f32.gmra.mrb[0].mxu0 %v2337
    %v2470 = vpop.f32.mrb[0].mxu0
    %v2471 = vadd.f32 %v2305, %v2470
    %v2472 = vpop.f32.mrb[0].mxu0
    %v2473 = vadd.f32 %v2309, %v2472
    %2474 = vdwg.mxu0
    %2475 = vmatprep.subr.mxu0 0.0
    %2476 = vmatpush1.msra.mxu0 %v2340
    %2477 = vmatprep.subr.mxu0 0.0
    %2478 = vmatpush1.msra.mxu0 %v2343
    %2479 = vmatprep.subr.mxu0 0.0
    %2480 = vmatpush1.msra.mxu0 %v2346
    %2481 = vmatprep.subr.mxu0 0.0
    %2482 = vmatpush1.msra.mxu0 %v2349
    %2483 = vmatprep.subr.mxu0 0.0
    %2484 = vmatpush1.msra.mxu0 %v2352
    %2485 = vmatprep.subr.mxu0 0.0
    %2486 = vmatpush1.msra.mxu0 %v2355
    %2487 = vmatprep.subr.mxu0 0.0
    %2488 = vmatpush1.msra.mxu0 %v2358
    %2489 = vmatprep.subr.mxu0 0.0
    %2490 = vmatpush1.msra.mxu0 %v2361
    %2491 = vmatprep.subr.mxu0 0.0
    %2492 = vmatpush1.msra.mxu0 %v2364
    %2493 = vmatprep.subr.mxu0 0.0
    %2494 = vmatpush1.msra.mxu0 %v2367
    %2495 = vmatprep.subr.mxu0 0.0
    %2496 = vmatpush1.msra.mxu0 %v2370
    %2497 = vmatprep.subr.mxu0 0.0
    %2498 = vmatpush1.msra.mxu0 %v2373
    %2499 = vmatprep.subr.mxu0 0.0
    %2500 = vmatpush1.msra.mxu0 %v2376
    %2501 = vmatprep.subr.mxu0 0.0
    %2502 = vmatpush1.msra.mxu0 %v2379
    %2503 = vmatprep.subr.mxu0 0.0
    %2504 = vmatpush1.msra.mxu0 %v2382
    %2505 = vmatprep.subr.mxu0 0.0
    %2506 = vmatpush1.msra.mxu0 %v2385
    %2507 = vmatprep.subr.mxu0 0.0
    %2508 = vmatpush1.msra.mxu0 0.0
    %2509 = vmatprep.subr.mxu0 0.0
    %2510 = vmatpush1.msra.mxu0 0.0
    %2511 = vmatprep.subr.mxu0 0.0
    %2512 = vmatpush1.msra.mxu0 0.0
    %2513 = vmatprep.subr.mxu0 0.0
    %2514 = vmatpush1.msra.mxu0 0.0
    %2515 = vmatprep.subr.mxu0 0.0
    %2516 = vmatpush1.msra.mxu0 0.0
    %2517 = vmatprep.subr.mxu0 0.0
    %2518 = vmatpush1.msra.mxu0 0.0
    %2519 = vmatprep.subr.mxu0 0.0
    %2520 = vmatpush1.msra.mxu0 0.0
    %2521 = vmatprep.subr.mxu0 0.0
    %2522 = vmatpush1.msra.mxu0 0.0
    %2523 = vmatprep.subr.mxu0 0.0
    %2524 = vmatpush1.msra.mxu0 0.0
    %2525 = vmatprep.subr.mxu0 0.0
    %2526 = vmatpush1.msra.mxu0 0.0
    %2527 = vmatprep.subr.mxu0 0.0
    %2528 = vmatpush1.msra.mxu0 0.0
    %2529 = vmatprep.subr.mxu0 0.0
    %2530 = vmatpush1.msra.mxu0 0.0
    %2531 = vmatprep.subr.mxu0 0.0
    %2532 = vmatpush1.msra.mxu0 0.0
    %2533 = vmatprep.subr.mxu0 0.0
    %2534 = vmatpush1.msra.mxu0 0.0
    %2535 = vmatprep.subr.mxu0 0.0
    %2536 = vmatpush1.msra.mxu0 0.0
    %2537 = vmatprep.subr.mxu0 0.0
    %2538 = vmatpush1.msra.mxu0 0.0
    %2539 = vmatprep.mubr.f32.mxu0 0.0
    %2540 = vmatmul.mubr.f32.gmra.mrb[0].mxu0 %v2334
    %v2541 = vpop.f32.mrb[0].mxu0
    %v2542 = vadd.f32 %v2313, %v2541
    %v2543 = vpop.f32.mrb[0].mxu0
    %2544 = vmatprep.mubr.f32.mxu0 0.0
    %2545 = vmatmul.mubr.f32.gmra.mrb[0].mxu0 %v2335
    %v2546 = vpop.f32.mrb[0].mxu0
    %v2547 = vadd.f32 %v2313, %v2546
    %v2548 = vpop.f32.mrb[0].mxu0
    %2549 = vmatprep.mubr.f32.mxu0 0.0
    %2550 = vmatmul.mubr.f32.gmra.mrb[0].mxu0 %v2336
    %v2551 = vpop.f32.mrb[0].mxu0
    %v2552 = vadd.f32 %v2313, %v2551
    %v2553 = vpop.f32.mrb[0].mxu0
    %2554 = vmatprep.mubr.f32.mxu0 0.0
    %2555 = vmatmul.mubr.f32.gmra.mrb[0].mxu0 %v2337
    %v2556 = vpop.f32.mrb[0].mxu0
    %v2557 = vadd.f32 %v2313, %v2556
    %v2558 = vpop.f32.mrb[0].mxu0
    %2559 = vdwg.mxu0
    %2560 = vst [vmem:[#allocation4] sm:$0xff] %v2453
    %2561 = vst [vmem:[#allocation4 + $0x8] sm:$0xff] %v2455
    %2562 = vst [vmem:[#allocation4 + $0x10] sm:$0xff] %v2542
    %2563 = vst [vmem:[#allocation4 + $0x18] sm:$0xff] %v2459
    %2564 = vst [vmem:[#allocation4 + $0x20] sm:$0xff] %v2461
    %2565 = vst [vmem:[#allocation4 + $0x28] sm:$0xff] %v2547
    %2566 = vst [vmem:[#allocation4 + $0x30] sm:$0xff] %v2465
    %2567 = vst [vmem:[#allocation4 + $0x38] sm:$0xff] %v2467
    %2568 = vst [vmem:[#allocation4 + $0x40] sm:$0xff] %v2552
    %2569 = vst [vmem:[#allocation4 + $0x48] sm:$0xff] %v2471
    %2570 = vst [vmem:[#allocation4 + $0x50] sm:$0xff] %v2473
    %2571 = vst [vmem:[#allocation4 + $0x58] sm:$0xff] %v2557
    %s2572 = scalar_lea.vmem %s1, 8
    %v2573 = vld [vmem:[%s2572] sm:$0xff]
    %v2574 = vld [vmem:[#allocation2 + $0x20] sm:$0xff]
    %v2575 = vld [vmem:[#allocation2 + $0x28] sm:$0xff]
    %v2576 = vld [vmem:[#allocation2 + $0x30] sm:$0xff]
    %v2577 = vld [vmem:[#allocation2 + $0x38] sm:$0xff]
    %v2578 = vld [vmem:[#allocation8] sm:$0xff]
    %v2579 = vld [vmem:[#allocation8 + $0x8] sm:$0xff]
    %v2580 = vld [vmem:[#allocation8 + $0x10] sm:$0xff]
    %v2581 = vld [vmem:[#allocation8 + $0x18] sm:$0xff]
    %v2582 = vld [vmem:[#allocation8 + $0x20] sm:$0xff]
    %v2583 = vld [vmem:[#allocation8 + $0x28] sm:$0xff]
    %v2584 = vld [vmem:[#allocation8 + $0x30] sm:$0xff]
    %v2585 = vld [vmem:[#allocation8 + $0x38] sm:$0xff]
    %v2586 = vld [vmem:[#allocation8 + $0x40] sm:$0xff]
    %v2587 = vld [vmem:[#allocation8 + $0x48] sm:$0xff]
    %v2588 = vld [vmem:[#allocation8 + $0x50] sm:$0xff]
    %v2589 = vld [vmem:[#allocation8 + $0x58] sm:$0xff]
    %v2590 = vld [vmem:[#allocation8 + $0x60] sm:$0xff]
    %v2591 = vld [vmem:[#allocation8 + $0x68] sm:$0xff]
    %v2592 = vld [vmem:[#allocation8 + $0x70] sm:$0xff]
    %v2593 = vld [vmem:[#allocation8 + $0x78] sm:$0xff]
    %v2594 = vld [vmem:[#allocation8 + $0x80] sm:$0xff]
    %v2595 = vld [vmem:[#allocation8 + $0x88] sm:$0xff]
    %v2596 = vld [vmem:[#allocation8 + $0x90] sm:$0xff]
    %v2597 = vld [vmem:[#allocation8 + $0x98] sm:$0xff]
    %v2598 = vld [vmem:[#allocation8 + $0xa0] sm:$0xff]
    %v2599 = vld [vmem:[#allocation8 + $0xa8] sm:$0xff]
    %v2600 = vld [vmem:[#allocation8 + $0xb0] sm:$0xff]
    %v2601 = vld [vmem:[#allocation8 + $0xb8] sm:$0xff]
    %v2602 = vld [vmem:[#allocation8 + $0xc0] sm:$0xff]
    %v2603 = vld [vmem:[#allocation8 + $0xc8] sm:$0xff]
    %v2604 = vld [vmem:[#allocation8 + $0xd0] sm:$0xff]
    %v2605 = vld [vmem:[#allocation8 + $0xd8] sm:$0xff]
    %v2606 = vld [vmem:[#allocation8 + $0xe0] sm:$0xff]
    %v2607 = vld [vmem:[#allocation8 + $0xe8] sm:$0xff]
    %v2608 = vld [vmem:[#allocation8 + $0xf0] sm:$0xff]
    %v2609 = vld [vmem:[#allocation8 + $0xf8] sm:$0xff]
    %v2610 = vld [vmem:[#allocation8 + $0x100] sm:$0xff]
    %v2611 = vld [vmem:[#allocation8 + $0x108] sm:$0xff]
    %v2612 = vld [vmem:[#allocation8 + $0x110] sm:$0xff]
    %v2613 = vld [vmem:[#allocation8 + $0x118] sm:$0xff]
    %v2614 = vld [vmem:[#allocation8 + $0x120] sm:$0xff]
    %v2615 = vld [vmem:[#allocation8 + $0x128] sm:$0xff]
    %v2616 = vld [vmem:[#allocation8 + $0x130] sm:$0xff]
    %v2617 = vld [vmem:[#allocation8 + $0x138] sm:$0xff]
    %v2618 = vld [vmem:[#allocation8 + $0x140] sm:$0xff]
    %v2619 = vld [vmem:[#allocation8 + $0x148] sm:$0xff]
    %v2620 = vld [vmem:[#allocation8 + $0x150] sm:$0xff]
    %v2621 = vld [vmem:[#allocation8 + $0x158] sm:$0xff]
    %v2622 = vld [vmem:[#allocation8 + $0x160] sm:$0xff]
    %v2623 = vld [vmem:[#allocation8 + $0x168] sm:$0xff]
    %v2624 = vld [vmem:[#allocation8 + $0x170] sm:$0xff]
    %v2625 = vld [vmem:[#allocation8 + $0x178] sm:$0xff]
    %2626 = vmatprep.subr.mxu0 %v2579
    %2627 = vmatpush1.msra.mxu0 %v2578
    %2628 = vmatprep.subr.mxu0 %v2582
    %2629 = vmatpush1.msra.mxu0 %v2581
    %2630 = vmatprep.subr.mxu0 %v2585
    %2631 = vmatpush1.msra.mxu0 %v2584
    %2632 = vmatprep.subr.mxu0 %v2588
    %2633 = vmatpush1.msra.mxu0 %v2587
    %2634 = vmatprep.subr.mxu0 %v2591
    %2635 = vmatpush1.msra.mxu0 %v2590
    %2636 = vmatprep.subr.mxu0 %v2594
    %2637 = vmatpush1.msra.mxu0 %v2593
    %2638 = vmatprep.subr.mxu0 %v2597
    %2639 = vmatpush1.msra.mxu0 %v2596
    %2640 = vmatprep.subr.mxu0 %v2600
    %2641 = vmatpush1.msra.mxu0 %v2599
    %2642 = vmatprep.subr.mxu0 %v2603
    %2643 = vmatpush1.msra.mxu0 %v2602
    %2644 = vmatprep.subr.mxu0 %v2606
    %2645 = vmatpush1.msra.mxu0 %v2605
    %2646 = vmatprep.subr.mxu0 %v2609
    %2647 = vmatpush1.msra.mxu0 %v2608
    %2648 = vmatprep.subr.mxu0 %v2612
    %2649 = vmatpush1.msra.mxu0 %v2611
    %2650 = vmatprep.subr.mxu0 %v2615
    %2651 = vmatpush1.msra.mxu0 %v2614
    %2652 = vmatprep.subr.mxu0 %v2618
    %2653 = vmatpush1.msra.mxu0 %v2617
    %2654 = vmatprep.subr.mxu0 %v2621
    %2655 = vmatpush1.msra.mxu0 %v2620
    %2656 = vmatprep.subr.mxu0 %v2624
    %2657 = vmatpush1.msra.mxu0 %v2623
    %2658 = vmatprep.subr.mxu0 0.0
    %2659 = vmatpush1.msra.mxu0 0.0
    %2660 = vmatprep.subr.mxu0 0.0
    %2661 = vmatpush1.msra.mxu0 0.0
    %2662 = vmatprep.subr.mxu0 0.0
    %2663 = vmatpush1.msra.mxu0 0.0
    %2664 = vmatprep.subr.mxu0 0.0
    %2665 = vmatpush1.msra.mxu0 0.0
    %2666 = vmatprep.subr.mxu0 0.0
    %2667 = vmatpush1.msra.mxu0 0.0
    %2668 = vmatprep.subr.mxu0 0.0
    %2669 = vmatpush1.msra.mxu0 0.0
    %2670 = vmatprep.subr.mxu0 0.0
    %2671 = vmatpush1.msra.mxu0 0.0
    %2672 = vmatprep.subr.mxu0 0.0
    %2673 = vmatpush1.msra.mxu0 0.0
    %2674 = vmatprep.subr.mxu0 0.0
    %2675 = vmatpush1.msra.mxu0 0.0
    %2676 = vmatprep.subr.mxu0 0.0
    %2677 = vmatpush1.msra.mxu0 0.0
    %2678 = vmatprep.subr.mxu0 0.0
    %2679 = vmatpush1.msra.mxu0 0.0
    %2680 = vmatprep.subr.mxu0 0.0
    %2681 = vmatpush1.msra.mxu0 0.0
    %2682 = vmatprep.subr.mxu0 0.0
    %2683 = vmatpush1.msra.mxu0 0.0
    %2684 = vmatprep.subr.mxu0 0.0
    %2685 = vmatpush1.msra.mxu0 0.0
    %2686 = vmatprep.subr.mxu0 0.0
    %2687 = vmatpush1.msra.mxu0 0.0
    %2688 = vmatprep.subr.mxu0 0.0
    %2689 = vmatpush1.msra.mxu0 0.0
    %2690 = vmatprep.mubr.f32.mxu0 0.0
    %2691 = vmatmul.mubr.f32.gmra.mrb[0].mxu0 %v2574
    %v2692 = vpop.f32.mrb[0].mxu0
    %v2693 = vadd.f32 %v2305, %v2692
    %v2694 = vpop.f32.mrb[0].mxu0
    %v2695 = vadd.f32 %v2309, %v2694
    %2696 = vmatprep.mubr.f32.mxu0 0.0
    %2697 = vmatmul.mubr.f32.gmra.mrb[0].mxu0 %v2575
    %v2698 = vpop.f32.mrb[0].mxu0
    %v2699 = vadd.f32 %v2305, %v2698
    %v2700 = vpop.f32.mrb[0].mxu0
    %v2701 = vadd.f32 %v2309, %v2700
    %2702 = vmatprep.mubr.f32.mxu0 0.0
    %2703 = vmatmul.mubr.f32.gmra.mrb[0].mxu0 %v2576
    %v2704 = vpop.f32.mrb[0].mxu0
    %v2705 = vadd.f32 %v2305, %v2704
    %v2706 = vpop.f32.mrb[0].mxu0
    %v2707 = vadd.f32 %v2309, %v2706
    %2708 = vmatprep.mubr.f32.mxu0 0.0
    %2709 = vmatmul.mubr.f32.gmra.mrb[0].mxu0 %v2577
    %v2710 = vpop.f32.mrb[0].mxu0
    %v2711 = vadd.f32 %v2305, %v2710
    %v2712 = vpop.f32.mrb[0].mxu0
    %v2713 = vadd.f32 %v2309, %v2712
    %2714 = vdwg.mxu0
    %2715 = vmatprep.subr.mxu0 0.0
    %2716 = vmatpush1.msra.mxu0 %v2580
    %2717 = vmatprep.subr.mxu0 0.0
    %2718 = vmatpush1.msra.mxu0 %v2583
    %2719 = vmatprep.subr.mxu0 0.0
    %2720 = vmatpush1.msra.mxu0 %v2586
    %2721 = vmatprep.subr.mxu0 0.0
    %2722 = vmatpush1.msra.mxu0 %v2589
    %2723 = vmatprep.subr.mxu0 0.0
    %2724 = vmatpush1.msra.mxu0 %v2592
    %2725 = vmatprep.subr.mxu0 0.0
    %2726 = vmatpush1.msra.mxu0 %v2595
    %2727 = vmatprep.subr.mxu0 0.0
    %2728 = vmatpush1.msra.mxu0 %v2598
    %2729 = vmatprep.subr.mxu0 0.0
    %2730 = vmatpush1.msra.mxu0 %v2601
    %2731 = vmatprep.subr.mxu0 0.0
    %2732 = vmatpush1.msra.mxu0 %v2604
    %2733 = vmatprep.subr.mxu0 0.0
    %2734 = vmatpush1.msra.mxu0 %v2607
    %2735 = vmatprep.subr.mxu0 0.0
    %2736 = vmatpush1.msra.mxu0 %v2610
    %2737 = vmatprep.subr.mxu0 0.0
    %2738 = vmatpush1.msra.mxu0 %v2613
    %2739 = vmatprep.subr.mxu0 0.0
    %2740 = vmatpush1.msra.mxu0 %v2616
    %2741 = vmatprep.subr.mxu0 0.0
    %2742 = vmatpush1.msra.mxu0 %v2619
    %2743 = vmatprep.subr.mxu0 0.0
    %2744 = vmatpush1.msra.mxu0 %v2622
    %2745 = vmatprep.subr.mxu0 0.0
    %2746 = vmatpush1.msra.mxu0 %v2625
    %2747 = vmatprep.subr.mxu0 0.0
    %2748 = vmatpush1.msra.mxu0 0.0
    %2749 = vmatprep.subr.mxu0 0.0
    %2750 = vmatpush1.msra.mxu0 0.0
    %2751 = vmatprep.subr.mxu0 0.0
    %2752 = vmatpush1.msra.mxu0 0.0
    %2753 = vmatprep.subr.mxu0 0.0
    %2754 = vmatpush1.msra.mxu0 0.0
    %2755 = vmatprep.subr.mxu0 0.0
    %2756 = vmatpush1.msra.mxu0 0.0
    %2757 = vmatprep.subr.mxu0 0.0
    %2758 = vmatpush1.msra.mxu0 0.0
    %2759 = vmatprep.subr.mxu0 0.0
    %2760 = vmatpush1.msra.mxu0 0.0
    %2761 = vmatprep.subr.mxu0 0.0
    %2762 = vmatpush1.msra.mxu0 0.0
    %2763 = vmatprep.subr.mxu0 0.0
    %2764 = vmatpush1.msra.mxu0 0.0
    %2765 = vmatprep.subr.mxu0 0.0
    %2766 = vmatpush1.msra.mxu0 0.0
    %2767 = vmatprep.subr.mxu0 0.0
    %2768 = vmatpush1.msra.mxu0 0.0
    %2769 = vmatprep.subr.mxu0 0.0
    %2770 = vmatpush1.msra.mxu0 0.0
    %2771 = vmatprep.subr.mxu0 0.0
    %2772 = vmatpush1.msra.mxu0 0.0
    %2773 = vmatprep.subr.mxu0 0.0
    %2774 = vmatpush1.msra.mxu0 0.0
    %2775 = vmatprep.subr.mxu0 0.0
    %2776 = vmatpush1.msra.mxu0 0.0
    %2777 = vmatprep.subr.mxu0 0.0
    %2778 = vmatpush1.msra.mxu0 0.0
    %2779 = vmatprep.mubr.f32.mxu0 0.0
    %2780 = vmatmul.mubr.f32.gmra.mrb[0].mxu0 %v2574
    %v2781 = vpop.f32.mrb[0].mxu0
    %v2782 = vadd.f32 %v2313, %v2781
    %v2783 = vpop.f32.mrb[0].mxu0
    %2784 = vmatprep.mubr.f32.mxu0 0.0
    %2785 = vmatmul.mubr.f32.gmra.mrb[0].mxu0 %v2575
    %v2786 = vpop.f32.mrb[0].mxu0
    %v2787 = vadd.f32 %v2313, %v2786
    %v2788 = vpop.f32.mrb[0].mxu0
    %2789 = vmatprep.mubr.f32.mxu0 0.0
    %2790 = vmatmul.mubr.f32.gmra.mrb[0].mxu0 %v2576
    %v2791 = vpop.f32.mrb[0].mxu0
    %v2792 = vadd.f32 %v2313, %v2791
    %v2793 = vpop.f32.mrb[0].mxu0
    %2794 = vmatprep.mubr.f32.mxu0 0.0
    %2795 = vmatmul.mubr.f32.gmra.mrb[0].mxu0 %v2577
    %v2796 = vpop.f32.mrb[0].mxu0
    %v2797 = vadd.f32 %v2313, %v2796
    %v2798 = vpop.f32.mrb[0].mxu0
    %2799 = vdwg.mxu0
    %2800 = vst [vmem:[%s547] sm:$0xff] %v2693
    %2801 = vst [vmem:[%s547 + $0x8] sm:$0xff] %v2695
    %2802 = vst [vmem:[%s547 + $0x10] sm:$0xff] %v2782
    %2803 = vst [vmem:[%s547 + $0x18] sm:$0xff] %v2699
    %2804 = vst [vmem:[%s547 + $0x20] sm:$0xff] %v2701
    %2805 = vst [vmem:[%s547 + $0x28] sm:$0xff] %v2787
    %2806 = vst [vmem:[%s547 + $0x30] sm:$0xff] %v2705
    %2807 = vst [vmem:[%s547 + $0x38] sm:$0xff] %v2707
    %2808 = vst [vmem:[%s547 + $0x40] sm:$0xff] %v2792
    %2809 = vst [vmem:[%s547 + $0x48] sm:$0xff] %v2711
    %2810 = vst [vmem:[%s547 + $0x50] sm:$0xff] %v2713
    %2811 = vst [vmem:[%s547 + $0x58] sm:$0xff] %v2797
    %v2812 = vld [vmem:[%s562] sm:$0xff]
    %v2813 = vld [vmem:[%s562 + $0x8] sm:$0xff]
    %v2814 = vld [vmem:[%s562 + $0x10] sm:$0xff]
    %v2815 = vld [vmem:[#allocation10] sm:$0xff]
    %v2816 = vld [vmem:[#allocation10 + $0x8] sm:$0xff]
    %v2817 = vld [vmem:[#allocation10 + $0x10] sm:$0xff]
    %v2818 = vld [vmem:[#allocation10 + $0x18] sm:$0xff]
    %v2819 = vld [vmem:[#allocation10 + $0x20] sm:$0xff]
    %v2820 = vld [vmem:[#allocation10 + $0x28] sm:$0xff]
    %v2821 = vld [vmem:[#allocation10 + $0x30] sm:$0xff]
    %v2822 = vld [vmem:[#allocation10 + $0x38] sm:$0xff]
    %v2823 = vld [vmem:[#allocation10 + $0x40] sm:$0xff]
    %v2824 = vld [vmem:[#allocation10 + $0x48] sm:$0xff]
    %v2825 = vld [vmem:[#allocation10 + $0x50] sm:$0xff]
    %v2826 = vld [vmem:[#allocation10 + $0x58] sm:$0xff]
    %v2827 = vld [vmem:[#allocation10 + $0x60] sm:$0xff]
    %v2828 = vld [vmem:[#allocation10 + $0x68] sm:$0xff]
    %v2829 = vld [vmem:[#allocation10 + $0x70] sm:$0xff]
    %v2830 = vld [vmem:[#allocation10 + $0x78] sm:$0xff]
    %v2831 = vld [vmem:[#allocation10 + $0x80] sm:$0xff]
    %v2832 = vld [vmem:[#allocation10 + $0x88] sm:$0xff]
    %v2833 = vld [vmem:[#allocation10 + $0x90] sm:$0xff]
    %v2834 = vld [vmem:[#allocation10 + $0x98] sm:$0xff]
    %v2835 = vld [vmem:[#allocation10 + $0xa0] sm:$0xff]
    %v2836 = vld [vmem:[#allocation10 + $0xa8] sm:$0xff]
    %v2837 = vld [vmem:[#allocation10 + $0xb0] sm:$0xff]
    %v2838 = vld [vmem:[#allocation10 + $0xb8] sm:$0xff]
    %v2839 = vld [vmem:[#allocation10 + $0xc0] sm:$0xff]
    %v2840 = vld [vmem:[#allocation10 + $0xc8] sm:$0xff]
    %v2841 = vld [vmem:[#allocation10 + $0xd0] sm:$0xff]
    %v2842 = vld [vmem:[#allocation10 + $0xd8] sm:$0xff]
    %v2843 = vld [vmem:[#allocation10 + $0xe0] sm:$0xff]
    %v2844 = vld [vmem:[#allocation10 + $0xe8] sm:$0xff]
    %v2845 = vld [vmem:[#allocation10 + $0xf0] sm:$0xff]
    %v2846 = vld [vmem:[#allocation10 + $0xf8] sm:$0xff]
    %v2847 = vld [vmem:[#allocation10 + $0x100] sm:$0xff]
    %v2848 = vld [vmem:[#allocation10 + $0x108] sm:$0xff]
    %v2849 = vld [vmem:[#allocation10 + $0x110] sm:$0xff]
    %v2850 = vld [vmem:[#allocation10 + $0x118] sm:$0xff]
    %v2851 = vld [vmem:[#allocation10 + $0x120] sm:$0xff]
    %v2852 = vld [vmem:[#allocation10 + $0x128] sm:$0xff]
    %v2853 = vld [vmem:[#allocation10 + $0x130] sm:$0xff]
    %v2854 = vld [vmem:[#allocation10 + $0x138] sm:$0xff]
    %v2855 = vld [vmem:[#allocation10 + $0x140] sm:$0xff]
    %v2856 = vld [vmem:[#allocation10 + $0x148] sm:$0xff]
    %v2857 = vld [vmem:[#allocation10 + $0x150] sm:$0xff]
    %v2858 = vld [vmem:[#allocation10 + $0x158] sm:$0xff]
    %v2859 = vld [vmem:[#allocation10 + $0x160] sm:$0xff]
    %v2860 = vld [vmem:[#allocation10 + $0x168] sm:$0xff]
    %v2861 = vld [vmem:[#allocation10 + $0x170] sm:$0xff]
    %v2862 = vld [vmem:[#allocation10 + $0x178] sm:$0xff]
    %2863 = vmatprep.subr.mxu0 %v2816
    %2864 = vmatpush1.msra.mxu0 %v2815
    %2865 = vmatprep.subr.mxu0 %v2819
    %2866 = vmatpush1.msra.mxu0 %v2818
    %2867 = vmatprep.subr.mxu0 %v2822
    %2868 = vmatpush1.msra.mxu0 %v2821
    %2869 = vmatprep.subr.mxu0 %v2825
    %2870 = vmatpush1.msra.mxu0 %v2824
    %2871 = vmatprep.subr.mxu0 %v2828
    %2872 = vmatpush1.msra.mxu0 %v2827
    %2873 = vmatprep.subr.mxu0 %v2831
    %2874 = vmatpush1.msra.mxu0 %v2830
    %2875 = vmatprep.subr.mxu0 %v2834
    %2876 = vmatpush1.msra.mxu0 %v2833
    %2877 = vmatprep.subr.mxu0 %v2837
    %2878 = vmatpush1.msra.mxu0 %v2836
    %2879 = vmatprep.subr.mxu0 %v2840
    %2880 = vmatpush1.msra.mxu0 %v2839
    %2881 = vmatprep.subr.mxu0 %v2843
    %2882 = vmatpush1.msra.mxu0 %v2842
    %2883 = vmatprep.subr.mxu0 %v2846
    %2884 = vmatpush1.msra.mxu0 %v2845
    %2885 = vmatprep.subr.mxu0 %v2849
    %2886 = vmatpush1.msra.mxu0 %v2848
    %2887 = vmatprep.subr.mxu0 %v2852
    %2888 = vmatpush1.msra.mxu0 %v2851
    %2889 = vmatprep.subr.mxu0 %v2855
    %2890 = vmatpush1.msra.mxu0 %v2854
    %2891 = vmatprep.subr.mxu0 %v2858
    %2892 = vmatpush1.msra.mxu0 %v2857
    %2893 = vmatprep.subr.mxu0 %v2861
    %2894 = vmatpush1.msra.mxu0 %v2860
    %2895 = vmatprep.subr.mxu0 0.0
    %2896 = vmatpush1.msra.mxu0 0.0
    %2897 = vmatprep.subr.mxu0 0.0
    %2898 = vmatpush1.msra.mxu0 0.0
    %2899 = vmatprep.subr.mxu0 0.0
    %2900 = vmatpush1.msra.mxu0 0.0
    %2901 = vmatprep.subr.mxu0 0.0
    %2902 = vmatpush1.msra.mxu0 0.0
    %2903 = vmatprep.subr.mxu0 0.0
    %2904 = vmatpush1.msra.mxu0 0.0
    %2905 = vmatprep.subr.mxu0 0.0
    %2906 = vmatpush1.msra.mxu0 0.0
    %2907 = vmatprep.subr.mxu0 0.0
    %2908 = vmatpush1.msra.mxu0 0.0
    %2909 = vmatprep.subr.mxu0 0.0
    %2910 = vmatpush1.msra.mxu0 0.0
    %2911 = vmatprep.subr.mxu0 0.0
    %2912 = vmatpush1.msra.mxu0 0.0
    %2913 = vmatprep.subr.mxu0 0.0
    %2914 = vmatpush1.msra.mxu0 0.0
    %2915 = vmatprep.subr.mxu0 0.0
    %2916 = vmatpush1.msra.mxu0 0.0
    %2917 = vmatprep.subr.mxu0 0.0
    %2918 = vmatpush1.msra.mxu0 0.0
    %2919 = vmatprep.subr.mxu0 0.0
    %2920 = vmatpush1.msra.mxu0 0.0
    %2921 = vmatprep.subr.mxu0 0.0
    %2922 = vmatpush1.msra.mxu0 0.0
    %2923 = vmatprep.subr.mxu0 0.0
    %2924 = vmatpush1.msra.mxu0 0.0
    %2925 = vmatprep.subr.mxu0 0.0
    %2926 = vmatpush1.msra.mxu0 0.0
    %2927 = vmatprep.mubr.f32.mxu0 0.0
    %2928 = vmatmul.mubr.f32.gmra.mrb[0].mxu0 %v2573
    %v2929 = vpop.f32.mrb[0].mxu0
    %v2930 = vadd.f32 %v2322, %v2929
    %v2931 = vpop.f32.mrb[0].mxu0
    %v2932 = vadd.f32 %v2326, %v2931
    %2933 = vdwg.mxu0
    %2934 = vmatprep.subr.mxu0 0.0
    %2935 = vmatpush1.msra.mxu0 %v2817
    %2936 = vmatprep.subr.mxu0 0.0
    %2937 = vmatpush1.msra.mxu0 %v2820
    %2938 = vmatprep.subr.mxu0 0.0
    %2939 = vmatpush1.msra.mxu0 %v2823
    %2940 = vmatprep.subr.mxu0 0.0
    %2941 = vmatpush1.msra.mxu0 %v2826
    %2942 = vmatprep.subr.mxu0 0.0
    %2943 = vmatpush1.msra.mxu0 %v2829
    %2944 = vmatprep.subr.mxu0 0.0
    %2945 = vmatpush1.msra.mxu0 %v2832
    %2946 = vmatprep.subr.mxu0 0.0
    %2947 = vmatpush1.msra.mxu0 %v2835
    %2948 = vmatprep.subr.mxu0 0.0
    %2949 = vmatpush1.msra.mxu0 %v2838
    %2950 = vmatprep.subr.mxu0 0.0
    %2951 = vmatpush1.msra.mxu0 %v2841
    %2952 = vmatprep.subr.mxu0 0.0
    %2953 = vmatpush1.msra.mxu0 %v2844
    %2954 = vmatprep.subr.mxu0 0.0
    %2955 = vmatpush1.msra.mxu0 %v2847
    %2956 = vmatprep.subr.mxu0 0.0
    %2957 = vmatpush1.msra.mxu0 %v2850
    %2958 = vmatprep.subr.mxu0 0.0
    %2959 = vmatpush1.msra.mxu0 %v2853
    %2960 = vmatprep.subr.mxu0 0.0
    %2961 = vmatpush1.msra.mxu0 %v2856
    %2962 = vmatprep.subr.mxu0 0.0
    %2963 = vmatpush1.msra.mxu0 %v2859
    %2964 = vmatprep.subr.mxu0 0.0
    %2965 = vmatpush1.msra.mxu0 %v2862
    %2966 = vmatprep.subr.mxu0 0.0
    %2967 = vmatpush1.msra.mxu0 0.0
    %2968 = vmatprep.subr.mxu0 0.0
    %2969 = vmatpush1.msra.mxu0 0.0
    %2970 = vmatprep.subr.mxu0 0.0
    %2971 = vmatpush1.msra.mxu0 0.0
    %2972 = vmatprep.subr.mxu0 0.0
    %2973 = vmatpush1.msra.mxu0 0.0
    %2974 = vmatprep.subr.mxu0 0.0
    %2975 = vmatpush1.msra.mxu0 0.0
    %2976 = vmatprep.subr.mxu0 0.0
    %2977 = vmatpush1.msra.mxu0 0.0
    %2978 = vmatprep.subr.mxu0 0.0
    %2979 = vmatpush1.msra.mxu0 0.0
    %2980 = vmatprep.subr.mxu0 0.0
    %2981 = vmatpush1.msra.mxu0 0.0
    %2982 = vmatprep.subr.mxu0 0.0
    %2983 = vmatpush1.msra.mxu0 0.0
    %2984 = vmatprep.subr.mxu0 0.0
    %2985 = vmatpush1.msra.mxu0 0.0
    %2986 = vmatprep.subr.mxu0 0.0
    %2987 = vmatpush1.msra.mxu0 0.0
    %2988 = vmatprep.subr.mxu0 0.0
    %2989 = vmatpush1.msra.mxu0 0.0
    %2990 = vmatprep.subr.mxu0 0.0
    %2991 = vmatpush1.msra.mxu0 0.0
    %2992 = vmatprep.subr.mxu0 0.0
    %2993 = vmatpush1.msra.mxu0 0.0
    %2994 = vmatprep.subr.mxu0 0.0
    %2995 = vmatpush1.msra.mxu0 0.0
    %2996 = vmatprep.subr.mxu0 0.0
    %2997 = vmatpush1.msra.mxu0 0.0
    %2998 = vmatprep.mubr.f32.mxu0 0.0
    %2999 = vmatmul.mubr.f32.gmra.mrb[0].mxu0 %v2573
    %v3000 = vpop.f32.mrb[0].mxu0
    %v3001 = vadd.f32 %v2330, %v3000
    %v3002 = vpop.f32.mrb[0].mxu0
    %3003 = vdwg.mxu0
    %v3004 = vadd.f32 %v2812, %v2930
    %v3005 = vxor.u32 %v3004, 2147483648
    %v3006 = vmul.f32 %v3005, 1.442695
    %v3007 = vpow.pop %v3006
    %v3008 = vadd.f32 %v3007, 1.0
    %v3009 = vrcp.pop %v3008
    %v3010 = vmul.f32 1.0, %v3009
    %v3011 = vadd.f32 %v2813, %v2932
    %v3012 = vxor.u32 %v3011, 2147483648
    %v3013 = vmul.f32 %v3012, 1.442695
    %v3014 = vpow.pop %v3013
    %v3015 = vadd.f32 %v3014, 1.0
    %v3016 = vrcp.pop %v3015
    %v3017 = vmul.f32 1.0, %v3016
    %v3018 = vmul.f32 %v3010, %v3001
    %v3019 = vadd.f32 %v2814, %v3018
    %v3020 = vtanh.pop %v3019
    %v3021 = vsub.f32 1.0, %v3017
    %v3022 = vmul.f32 %v3021, %v3020
    %v3023 = vmul.f32 %v3017, %v2573
    %v3024 = vadd.f32 %v3022, %v3023
    %3025 = vst [vmem:[#allocation3] sm:$0xff] %v3024
    %v3026 = vld [vmem:[%s779] sm:$0xff]
    %v3027 = vld [vmem:[%s779 + $0x8] sm:$0xff]
    %v3028 = vld [vmem:[%s779 + $0x10] sm:$0xff]
    %v3029 = vld [vmem:[#allocation10] sm:$0xff]
    %v3030 = vld [vmem:[#allocation10 + $0x8] sm:$0xff]
    %v3031 = vld [vmem:[#allocation10 + $0x10] sm:$0xff]
    %v3032 = vld [vmem:[#allocation10 + $0x18] sm:$0xff]
    %v3033 = vld [vmem:[#allocation10 + $0x20] sm:$0xff]
    %v3034 = vld [vmem:[#allocation10 + $0x28] sm:$0xff]
    %v3035 = vld [vmem:[#allocation10 + $0x30] sm:$0xff]
    %v3036 = vld [vmem:[#allocation10 + $0x38] sm:$0xff]
    %v3037 = vld [vmem:[#allocation10 + $0x40] sm:$0xff]
    %v3038 = vld [vmem:[#allocation10 + $0x48] sm:$0xff]
    %v3039 = vld [vmem:[#allocation10 + $0x50] sm:$0xff]
    %v3040 = vld [vmem:[#allocation10 + $0x58] sm:$0xff]
    %v3041 = vld [vmem:[#allocation10 + $0x60] sm:$0xff]
    %v3042 = vld [vmem:[#allocation10 + $0x68] sm:$0xff]
    %v3043 = vld [vmem:[#allocation10 + $0x70] sm:$0xff]
    %v3044 = vld [vmem:[#allocation10 + $0x78] sm:$0xff]
    %v3045 = vld [vmem:[#allocation10 + $0x80] sm:$0xff]
    %v3046 = vld [vmem:[#allocation10 + $0x88] sm:$0xff]
    %v3047 = vld [vmem:[#allocation10 + $0x90] sm:$0xff]
    %v3048 = vld [vmem:[#allocation10 + $0x98] sm:$0xff]
    %v3049 = vld [vmem:[#allocation10 + $0xa0] sm:$0xff]
    %v3050 = vld [vmem:[#allocation10 + $0xa8] sm:$0xff]
    %v3051 = vld [vmem:[#allocation10 + $0xb0] sm:$0xff]
    %v3052 = vld [vmem:[#allocation10 + $0xb8] sm:$0xff]
    %v3053 = vld [vmem:[#allocation10 + $0xc0] sm:$0xff]
    %v3054 = vld [vmem:[#allocation10 + $0xc8] sm:$0xff]
    %v3055 = vld [vmem:[#allocation10 + $0xd0] sm:$0xff]
    %v3056 = vld [vmem:[#allocation10 + $0xd8] sm:$0xff]
    %v3057 = vld [vmem:[#allocation10 + $0xe0] sm:$0xff]
    %v3058 = vld [vmem:[#allocation10 + $0xe8] sm:$0xff]
    %v3059 = vld [vmem:[#allocation10 + $0xf0] sm:$0xff]
    %v3060 = vld [vmem:[#allocation10 + $0xf8] sm:$0xff]
    %v3061 = vld [vmem:[#allocation10 + $0x100] sm:$0xff]
    %v3062 = vld [vmem:[#allocation10 + $0x108] sm:$0xff]
    %v3063 = vld [vmem:[#allocation10 + $0x110] sm:$0xff]
    %v3064 = vld [vmem:[#allocation10 + $0x118] sm:$0xff]
    %v3065 = vld [vmem:[#allocation10 + $0x120] sm:$0xff]
    %v3066 = vld [vmem:[#allocation10 + $0x128] sm:$0xff]
    %v3067 = vld [vmem:[#allocation10 + $0x130] sm:$0xff]
    %v3068 = vld [vmem:[#allocation10 + $0x138] sm:$0xff]
    %v3069 = vld [vmem:[#allocation10 + $0x140] sm:$0xff]
    %v3070 = vld [vmem:[#allocation10 + $0x148] sm:$0xff]
    %v3071 = vld [vmem:[#allocation10 + $0x150] sm:$0xff]
    %v3072 = vld [vmem:[#allocation10 + $0x158] sm:$0xff]
    %v3073 = vld [vmem:[#allocation10 + $0x160] sm:$0xff]
    %v3074 = vld [vmem:[#allocation10 + $0x168] sm:$0xff]
    %v3075 = vld [vmem:[#allocation10 + $0x170] sm:$0xff]
    %v3076 = vld [vmem:[#allocation10 + $0x178] sm:$0xff]
    %3077 = vmatprep.subr.mxu0 %v3030
    %3078 = vmatpush1.msra.mxu0 %v3029
    %3079 = vmatprep.subr.mxu0 %v3033
    %3080 = vmatpush1.msra.mxu0 %v3032
    %3081 = vmatprep.subr.mxu0 %v3036
    %3082 = vmatpush1.msra.mxu0 %v3035
    %3083 = vmatprep.subr.mxu0 %v3039
    %3084 = vmatpush1.msra.mxu0 %v3038
    %3085 = vmatprep.subr.mxu0 %v3042
    %3086 = vmatpush1.msra.mxu0 %v3041
    %3087 = vmatprep.subr.mxu0 %v3045
    %3088 = vmatpush1.msra.mxu0 %v3044
    %3089 = vmatprep.subr.mxu0 %v3048
    %3090 = vmatpush1.msra.mxu0 %v3047
    %3091 = vmatprep.subr.mxu0 %v3051
    %3092 = vmatpush1.msra.mxu0 %v3050
    %3093 = vmatprep.subr.mxu0 %v3054
    %3094 = vmatpush1.msra.mxu0 %v3053
    %3095 = vmatprep.subr.mxu0 %v3057
    %3096 = vmatpush1.msra.mxu0 %v3056
    %3097 = vmatprep.subr.mxu0 %v3060
    %3098 = vmatpush1.msra.mxu0 %v3059
    %3099 = vmatprep.subr.mxu0 %v3063
    %3100 = vmatpush1.msra.mxu0 %v3062
    %3101 = vmatprep.subr.mxu0 %v3066
    %3102 = vmatpush1.msra.mxu0 %v3065
    %3103 = vmatprep.subr.mxu0 %v3069
    %3104 = vmatpush1.msra.mxu0 %v3068
    %3105 = vmatprep.subr.mxu0 %v3072
    %3106 = vmatpush1.msra.mxu0 %v3071
    %3107 = vmatprep.subr.mxu0 %v3075
    %3108 = vmatpush1.msra.mxu0 %v3074
    %3109 = vmatprep.subr.mxu0 0.0
    %3110 = vmatpush1.msra.mxu0 0.0
    %3111 = vmatprep.subr.mxu0 0.0
    %3112 = vmatpush1.msra.mxu0 0.0
    %3113 = vmatprep.subr.mxu0 0.0
    %3114 = vmatpush1.msra.mxu0 0.0
    %3115 = vmatprep.subr.mxu0 0.0
    %3116 = vmatpush1.msra.mxu0 0.0
    %3117 = vmatprep.subr.mxu0 0.0
    %3118 = vmatpush1.msra.mxu0 0.0
    %3119 = vmatprep.subr.mxu0 0.0
    %3120 = vmatpush1.msra.mxu0 0.0
    %3121 = vmatprep.subr.mxu0 0.0
    %3122 = vmatpush1.msra.mxu0 0.0
    %3123 = vmatprep.subr.mxu0 0.0
    %3124 = vmatpush1.msra.mxu0 0.0
    %3125 = vmatprep.subr.mxu0 0.0
    %3126 = vmatpush1.msra.mxu0 0.0
    %3127 = vmatprep.subr.mxu0 0.0
    %3128 = vmatpush1.msra.mxu0 0.0
    %3129 = vmatprep.subr.mxu0 0.0
    %3130 = vmatpush1.msra.mxu0 0.0
    %3131 = vmatprep.subr.mxu0 0.0
    %3132 = vmatpush1.msra.mxu0 0.0
    %3133 = vmatprep.subr.mxu0 0.0
    %3134 = vmatpush1.msra.mxu0 0.0
    %3135 = vmatprep.subr.mxu0 0.0
    %3136 = vmatpush1.msra.mxu0 0.0
    %3137 = vmatprep.subr.mxu0 0.0
    %3138 = vmatpush1.msra.mxu0 0.0
    %3139 = vmatprep.subr.mxu0 0.0
    %3140 = vmatpush1.msra.mxu0 0.0
    %3141 = vmatprep.mubr.f32.mxu0 0.0
    %3142 = vmatmul.mubr.f32.gmra.mrb[0].mxu0 %v3024
    %v3143 = vpop.f32.mrb[0].mxu0
    %v3144 = vadd.f32 %v2322, %v3143
    %v3145 = vpop.f32.mrb[0].mxu0
    %v3146 = vadd.f32 %v2326, %v3145
    %3147 = vdwg.mxu0
    %3148 = vmatprep.subr.mxu0 0.0
    %3149 = vmatpush1.msra.mxu0 %v3031
    %3150 = vmatprep.subr.mxu0 0.0
    %3151 = vmatpush1.msra.mxu0 %v3034
    %3152 = vmatprep.subr.mxu0 0.0
    %3153 = vmatpush1.msra.mxu0 %v3037
    %3154 = vmatprep.subr.mxu0 0.0
    %3155 = vmatpush1.msra.mxu0 %v3040
    %3156 = vmatprep.subr.mxu0 0.0
    %3157 = vmatpush1.msra.mxu0 %v3043
    %3158 = vmatprep.subr.mxu0 0.0
    %3159 = vmatpush1.msra.mxu0 %v3046
    %3160 = vmatprep.subr.mxu0 0.0
    %3161 = vmatpush1.msra.mxu0 %v3049
    %3162 = vmatprep.subr.mxu0 0.0
    %3163 = vmatpush1.msra.mxu0 %v3052
    %3164 = vmatprep.subr.mxu0 0.0
    %3165 = vmatpush1.msra.mxu0 %v3055
    %3166 = vmatprep.subr.mxu0 0.0
    %3167 = vmatpush1.msra.mxu0 %v3058
    %3168 = vmatprep.subr.mxu0 0.0
    %3169 = vmatpush1.msra.mxu0 %v3061
    %3170 = vmatprep.subr.mxu0 0.0
    %3171 = vmatpush1.msra.mxu0 %v3064
    %3172 = vmatprep.subr.mxu0 0.0
    %3173 = vmatpush1.msra.mxu0 %v3067
    %3174 = vmatprep.subr.mxu0 0.0
    %3175 = vmatpush1.msra.mxu0 %v3070
    %3176 = vmatprep.subr.mxu0 0.0
    %3177 = vmatpush1.msra.mxu0 %v3073
    %3178 = vmatprep.subr.mxu0 0.0
    %3179 = vmatpush1.msra.mxu0 %v3076
    %3180 = vmatprep.subr.mxu0 0.0
    %3181 = vmatpush1.msra.mxu0 0.0
    %3182 = vmatprep.subr.mxu0 0.0
    %3183 = vmatpush1.msra.mxu0 0.0
    %3184 = vmatprep.subr.mxu0 0.0
    %3185 = vmatpush1.msra.mxu0 0.0
    %3186 = vmatprep.subr.mxu0 0.0
    %3187 = vmatpush1.msra.mxu0 0.0
    %3188 = vmatprep.subr.mxu0 0.0
    %3189 = vmatpush1.msra.mxu0 0.0
    %3190 = vmatprep.subr.mxu0 0.0
    %3191 = vmatpush1.msra.mxu0 0.0
    %3192 = vmatprep.subr.mxu0 0.0
    %3193 = vmatpush1.msra.mxu0 0.0
    %3194 = vmatprep.subr.mxu0 0.0
    %3195 = vmatpush1.msra.mxu0 0.0
    %3196 = vmatprep.subr.mxu0 0.0
    %3197 = vmatpush1.msra.mxu0 0.0
    %3198 = vmatprep.subr.mxu0 0.0
    %3199 = vmatpush1.msra.mxu0 0.0
    %3200 = vmatprep.subr.mxu0 0.0
    %3201 = vmatpush1.msra.mxu0 0.0
    %3202 = vmatprep.subr.mxu0 0.0
    %3203 = vmatpush1.msra.mxu0 0.0
    %3204 = vmatprep.subr.mxu0 0.0
    %3205 = vmatpush1.msra.mxu0 0.0
    %3206 = vmatprep.subr.mxu0 0.0
    %3207 = vmatpush1.msra.mxu0 0.0
    %3208 = vmatprep.subr.mxu0 0.0
    %3209 = vmatpush1.msra.mxu0 0.0
    %3210 = vmatprep.subr.mxu0 0.0
    %3211 = vmatpush1.msra.mxu0 0.0
    %3212 = vmatprep.mubr.f32.mxu0 0.0
    %3213 = vmatmul.mubr.f32.gmra.mrb[0].mxu0 %v3024
    %v3214 = vpop.f32.mrb[0].mxu0
    %v3215 = vadd.f32 %v2330, %v3214
    %v3216 = vpop.f32.mrb[0].mxu0
    %3217 = vdwg.mxu0
    %v3218 = vadd.f32 %v3026, %v3144
    %v3219 = vxor.u32 %v3218, 2147483648
    %v3220 = vmul.f32 %v3219, 1.442695
    %v3221 = vpow.pop %v3220
    %v3222 = vadd.f32 %v3221, 1.0
    %v3223 = vrcp.pop %v3222
    %v3224 = vmul.f32 1.0, %v3223
    %v3225 = vadd.f32 %v3027, %v3146
    %v3226 = vxor.u32 %v3225, 2147483648
    %v3227 = vmul.f32 %v3226, 1.442695
    %v3228 = vpow.pop %v3227
    %v3229 = vadd.f32 %v3228, 1.0
    %v3230 = vrcp.pop %v3229
    %v3231 = vmul.f32 1.0, %v3230
    %v3232 = vmul.f32 %v3224, %v3215
    %v3233 = vadd.f32 %v3028, %v3232
    %v3234 = vtanh.pop %v3233
    %v3235 = vsub.f32 1.0, %v3231
    %v3236 = vmul.f32 %v3235, %v3234
    %v3237 = vmul.f32 %v3231, %v3024
    %v3238 = vadd.f32 %v3236, %v3237
    %s3239 = scalar_lea.vmem [#allocation3], 8
    %3240 = vst [vmem:[%s3239] sm:$0xff] %v3238
    %v3241 = vld [vmem:[%s997] sm:$0xff]
    %v3242 = vld [vmem:[%s997 + $0x8] sm:$0xff]
    %v3243 = vld [vmem:[%s997 + $0x10] sm:$0xff]
    %v3244 = vld [vmem:[#allocation10] sm:$0xff]
    %v3245 = vld [vmem:[#allocation10 + $0x8] sm:$0xff]
    %v3246 = vld [vmem:[#allocation10 + $0x10] sm:$0xff]
    %v3247 = vld [vmem:[#allocation10 + $0x18] sm:$0xff]
    %v3248 = vld [vmem:[#allocation10 + $0x20] sm:$0xff]
    %v3249 = vld [vmem:[#allocation10 + $0x28] sm:$0xff]
    %v3250 = vld [vmem:[#allocation10 + $0x30] sm:$0xff]
    %v3251 = vld [vmem:[#allocation10 + $0x38] sm:$0xff]
    %v3252 = vld [vmem:[#allocation10 + $0x40] sm:$0xff]
    %v3253 = vld [vmem:[#allocation10 + $0x48] sm:$0xff]
    %v3254 = vld [vmem:[#allocation10 + $0x50] sm:$0xff]
    %v3255 = vld [vmem:[#allocation10 + $0x58] sm:$0xff]
    %v3256 = vld [vmem:[#allocation10 + $0x60] sm:$0xff]
    %v3257 = vld [vmem:[#allocation10 + $0x68] sm:$0xff]
    %v3258 = vld [vmem:[#allocation10 + $0x70] sm:$0xff]
    %v3259 = vld [vmem:[#allocation10 + $0x78] sm:$0xff]
    %v3260 = vld [vmem:[#allocation10 + $0x80] sm:$0xff]
    %v3261 = vld [vmem:[#allocation10 + $0x88] sm:$0xff]
    %v3262 = vld [vmem:[#allocation10 + $0x90] sm:$0xff]
    %v3263 = vld [vmem:[#allocation10 + $0x98] sm:$0xff]
    %v3264 = vld [vmem:[#allocation10 + $0xa0] sm:$0xff]
    %v3265 = vld [vmem:[#allocation10 + $0xa8] sm:$0xff]
    %v3266 = vld [vmem:[#allocation10 + $0xb0] sm:$0xff]
    %v3267 = vld [vmem:[#allocation10 + $0xb8] sm:$0xff]
    %v3268 = vld [vmem:[#allocation10 + $0xc0] sm:$0xff]
    %v3269 = vld [vmem:[#allocation10 + $0xc8] sm:$0xff]
    %v3270 = vld [vmem:[#allocation10 + $0xd0] sm:$0xff]
    %v3271 = vld [vmem:[#allocation10 + $0xd8] sm:$0xff]
    %v3272 = vld [vmem:[#allocation10 + $0xe0] sm:$0xff]
    %v3273 = vld [vmem:[#allocation10 + $0xe8] sm:$0xff]
    %v3274 = vld [vmem:[#allocation10 + $0xf0] sm:$0xff]
    %v3275 = vld [vmem:[#allocation10 + $0xf8] sm:$0xff]
    %v3276 = vld [vmem:[#allocation10 + $0x100] sm:$0xff]
    %v3277 = vld [vmem:[#allocation10 + $0x108] sm:$0xff]
    %v3278 = vld [vmem:[#allocation10 + $0x110] sm:$0xff]
    %v3279 = vld [vmem:[#allocation10 + $0x118] sm:$0xff]
    %v3280 = vld [vmem:[#allocation10 + $0x120] sm:$0xff]
    %v3281 = vld [vmem:[#allocation10 + $0x128] sm:$0xff]
    %v3282 = vld [vmem:[#allocation10 + $0x130] sm:$0xff]
    %v3283 = vld [vmem:[#allocation10 + $0x138] sm:$0xff]
    %v3284 = vld [vmem:[#allocation10 + $0x140] sm:$0xff]
    %v3285 = vld [vmem:[#allocation10 + $0x148] sm:$0xff]
    %v3286 = vld [vmem:[#allocation10 + $0x150] sm:$0xff]
    %v3287 = vld [vmem:[#allocation10 + $0x158] sm:$0xff]
    %v3288 = vld [vmem:[#allocation10 + $0x160] sm:$0xff]
    %v3289 = vld [vmem:[#allocation10 + $0x168] sm:$0xff]
    %v3290 = vld [vmem:[#allocation10 + $0x170] sm:$0xff]
    %v3291 = vld [vmem:[#allocation10 + $0x178] sm:$0xff]
    %3292 = vmatprep.subr.mxu0 %v3245
    %3293 = vmatpush1.msra.mxu0 %v3244
    %3294 = vmatprep.subr.mxu0 %v3248
    %3295 = vmatpush1.msra.mxu0 %v3247
    %3296 = vmatprep.subr.mxu0 %v3251
    %3297 = vmatpush1.msra.mxu0 %v3250
    %3298 = vmatprep.subr.mxu0 %v3254
    %3299 = vmatpush1.msra.mxu0 %v3253
    %3300 = vmatprep.subr.mxu0 %v3257
    %3301 = vmatpush1.msra.mxu0 %v3256
    %3302 = vmatprep.subr.mxu0 %v3260
    %3303 = vmatpush1.msra.mxu0 %v3259
    %3304 = vmatprep.subr.mxu0 %v3263
    %3305 = vmatpush1.msra.mxu0 %v3262
    %3306 = vmatprep.subr.mxu0 %v3266
    %3307 = vmatpush1.msra.mxu0 %v3265
    %3308 = vmatprep.subr.mxu0 %v3269
    %3309 = vmatpush1.msra.mxu0 %v3268
    %3310 = vmatprep.subr.mxu0 %v3272
    %3311 = vmatpush1.msra.mxu0 %v3271
    %3312 = vmatprep.subr.mxu0 %v3275
    %3313 = vmatpush1.msra.mxu0 %v3274
    %3314 = vmatprep.subr.mxu0 %v3278
    %3315 = vmatpush1.msra.mxu0 %v3277
    %3316 = vmatprep.subr.mxu0 %v3281
    %3317 = vmatpush1.msra.mxu0 %v3280
    %3318 = vmatprep.subr.mxu0 %v3284
    %3319 = vmatpush1.msra.mxu0 %v3283
    %3320 = vmatprep.subr.mxu0 %v3287
    %3321 = vmatpush1.msra.mxu0 %v3286
    %3322 = vmatprep.subr.mxu0 %v3290
    %3323 = vmatpush1.msra.mxu0 %v3289
    %3324 = vmatprep.subr.mxu0 0.0
    %3325 = vmatpush1.msra.mxu0 0.0
    %3326 = vmatprep.subr.mxu0 0.0
    %3327 = vmatpush1.msra.mxu0 0.0
    %3328 = vmatprep.subr.mxu0 0.0
    %3329 = vmatpush1.msra.mxu0 0.0
    %3330 = vmatprep.subr.mxu0 0.0
    %3331 = vmatpush1.msra.mxu0 0.0
    %3332 = vmatprep.subr.mxu0 0.0
    %3333 = vmatpush1.msra.mxu0 0.0
    %3334 = vmatprep.subr.mxu0 0.0
    %3335 = vmatpush1.msra.mxu0 0.0
    %3336 = vmatprep.subr.mxu0 0.0
    %3337 = vmatpush1.msra.mxu0 0.0
    %3338 = vmatprep.subr.mxu0 0.0
    %3339 = vmatpush1.msra.mxu0 0.0
    %3340 = vmatprep.subr.mxu0 0.0
    %3341 = vmatpush1.msra.mxu0 0.0
    %3342 = vmatprep.subr.mxu0 0.0
    %3343 = vmatpush1.msra.mxu0 0.0
    %3344 = vmatprep.subr.mxu0 0.0
    %3345 = vmatpush1.msra.mxu0 0.0
    %3346 = vmatprep.subr.mxu0 0.0
    %3347 = vmatpush1.msra.mxu0 0.0
    %3348 = vmatprep.subr.mxu0 0.0
    %3349 = vmatpush1.msra.mxu0 0.0
    %3350 = vmatprep.subr.mxu0 0.0
    %3351 = vmatpush1.msra.mxu0 0.0
    %3352 = vmatprep.subr.mxu0 0.0
    %3353 = vmatpush1.msra.mxu0 0.0
    %3354 = vmatprep.subr.mxu0 0.0
    %3355 = vmatpush1.msra.mxu0 0.0
    %3356 = vmatprep.mubr.f32.mxu0 0.0
    %3357 = vmatmul.mubr.f32.gmra.mrb[0].mxu0 %v3238
    %v3358 = vpop.f32.mrb[0].mxu0
    %v3359 = vadd.f32 %v2322, %v3358
    %v3360 = vpop.f32.mrb[0].mxu0
    %v3361 = vadd.f32 %v2326, %v3360
    %3362 = vdwg.mxu0
    %3363 = vmatprep.subr.mxu0 0.0
    %3364 = vmatpush1.msra.mxu0 %v3246
    %3365 = vmatprep.subr.mxu0 0.0
    %3366 = vmatpush1.msra.mxu0 %v3249
    %3367 = vmatprep.subr.mxu0 0.0
    %3368 = vmatpush1.msra.mxu0 %v3252
    %3369 = vmatprep.subr.mxu0 0.0
    %3370 = vmatpush1.msra.mxu0 %v3255
    %3371 = vmatprep.subr.mxu0 0.0
    %3372 = vmatpush1.msra.mxu0 %v3258
    %3373 = vmatprep.subr.mxu0 0.0
    %3374 = vmatpush1.msra.mxu0 %v3261
    %3375 = vmatprep.subr.mxu0 0.0
    %3376 = vmatpush1.msra.mxu0 %v3264
    %3377 = vmatprep.subr.mxu0 0.0
    %3378 = vmatpush1.msra.mxu0 %v3267
    %3379 = vmatprep.subr.mxu0 0.0
    %3380 = vmatpush1.msra.mxu0 %v3270
    %3381 = vmatprep.subr.mxu0 0.0
    %3382 = vmatpush1.msra.mxu0 %v3273
    %3383 = vmatprep.subr.mxu0 0.0
    %3384 = vmatpush1.msra.mxu0 %v3276
    %3385 = vmatprep.subr.mxu0 0.0
    %3386 = vmatpush1.msra.mxu0 %v3279
    %3387 = vmatprep.subr.mxu0 0.0
    %3388 = vmatpush1.msra.mxu0 %v3282
    %3389 = vmatprep.subr.mxu0 0.0
    %3390 = vmatpush1.msra.mxu0 %v3285
    %3391 = vmatprep.subr.mxu0 0.0
    %3392 = vmatpush1.msra.mxu0 %v3288
    %3393 = vmatprep.subr.mxu0 0.0
    %3394 = vmatpush1.msra.mxu0 %v3291
    %3395 = vmatprep.subr.mxu0 0.0
    %3396 = vmatpush1.msra.mxu0 0.0
    %3397 = vmatprep.subr.mxu0 0.0
    %3398 = vmatpush1.msra.mxu0 0.0
    %3399 = vmatprep.subr.mxu0 0.0
    %3400 = vmatpush1.msra.mxu0 0.0
    %3401 = vmatprep.subr.mxu0 0.0
    %3402 = vmatpush1.msra.mxu0 0.0
    %3403 = vmatprep.subr.mxu0 0.0
    %3404 = vmatpush1.msra.mxu0 0.0
    %3405 = vmatprep.subr.mxu0 0.0
    %3406 = vmatpush1.msra.mxu0 0.0
    %3407 = vmatprep.subr.mxu0 0.0
    %3408 = vmatpush1.msra.mxu0 0.0
    %3409 = vmatprep.subr.mxu0 0.0
    %3410 = vmatpush1.msra.mxu0 0.0
    %3411 = vmatprep.subr.mxu0 0.0
    %3412 = vmatpush1.msra.mxu0 0.0
    %3413 = vmatprep.subr.mxu0 0.0
    %3414 = vmatpush1.msra.mxu0 0.0
    %3415 = vmatprep.subr.mxu0 0.0
    %3416 = vmatpush1.msra.mxu0 0.0
    %3417 = vmatprep.subr.mxu0 0.0
    %3418 = vmatpush1.msra.mxu0 0.0
    %3419 = vmatprep.subr.mxu0 0.0
    %3420 = vmatpush1.msra.mxu0 0.0
    %3421 = vmatprep.subr.mxu0 0.0
    %3422 = vmatpush1.msra.mxu0 0.0
    %3423 = vmatprep.subr.mxu0 0.0
    %3424 = vmatpush1.msra.mxu0 0.0
    %3425 = vmatprep.subr.mxu0 0.0
    %3426 = vmatpush1.msra.mxu0 0.0
    %3427 = vmatprep.mubr.f32.mxu0 0.0
    %3428 = vmatmul.mubr.f32.gmra.mrb[0].mxu0 %v3238
    %v3429 = vpop.f32.mrb[0].mxu0
    %v3430 = vadd.f32 %v2330, %v3429
    %v3431 = vpop.f32.mrb[0].mxu0
    %3432 = vdwg.mxu0
    %v3433 = vadd.f32 %v3241, %v3359
    %v3434 = vxor.u32 %v3433, 2147483648
    %v3435 = vmul.f32 %v3434, 1.442695
    %v3436 = vpow.pop %v3435
    %v3437 = vadd.f32 %v3436, 1.0
    %v3438 = vrcp.pop %v3437
    %v3439 = vmul.f32 1.0, %v3438
    %v3440 = vadd.f32 %v3242, %v3361
    %v3441 = vxor.u32 %v3440, 2147483648
    %v3442 = vmul.f32 %v3441, 1.442695
    %v3443 = vpow.pop %v3442
    %v3444 = vadd.f32 %v3443, 1.0
    %v3445 = vrcp.pop %v3444
    %v3446 = vmul.f32 1.0, %v3445
    %v3447 = vmul.f32 %v3439, %v3430
    %v3448 = vadd.f32 %v3243, %v3447
    %v3449 = vtanh.pop %v3448
    %v3450 = vsub.f32 1.0, %v3446
    %v3451 = vmul.f32 %v3450, %v3449
    %v3452 = vmul.f32 %v3446, %v3238
    %v3453 = vadd.f32 %v3451, %v3452
    %s3454 = scalar_lea.vmem [#allocation3], 16
    %3455 = vst [vmem:[%s3454] sm:$0xff] %v3453
    %v3456 = vld [vmem:[%s1215] sm:$0xff]
    %v3457 = vld [vmem:[%s1215 + $0x8] sm:$0xff]
    %v3458 = vld [vmem:[%s1215 + $0x10] sm:$0xff]
    %v3459 = vld [vmem:[#allocation10] sm:$0xff]
    %v3460 = vld [vmem:[#allocation10 + $0x8] sm:$0xff]
    %v3461 = vld [vmem:[#allocation10 + $0x10] sm:$0xff]
    %v3462 = vld [vmem:[#allocation10 + $0x18] sm:$0xff]
    %v3463 = vld [vmem:[#allocation10 + $0x20] sm:$0xff]
    %v3464 = vld [vmem:[#allocation10 + $0x28] sm:$0xff]
    %v3465 = vld [vmem:[#allocation10 + $0x30] sm:$0xff]
    %v3466 = vld [vmem:[#allocation10 + $0x38] sm:$0xff]
    %v3467 = vld [vmem:[#allocation10 + $0x40] sm:$0xff]
    %v3468 = vld [vmem:[#allocation10 + $0x48] sm:$0xff]
    %v3469 = vld [vmem:[#allocation10 + $0x50] sm:$0xff]
    %v3470 = vld [vmem:[#allocation10 + $0x58] sm:$0xff]
    %v3471 = vld [vmem:[#allocation10 + $0x60] sm:$0xff]
    %v3472 = vld [vmem:[#allocation10 + $0x68] sm:$0xff]
    %v3473 = vld [vmem:[#allocation10 + $0x70] sm:$0xff]
    %v3474 = vld [vmem:[#allocation10 + $0x78] sm:$0xff]
    %v3475 = vld [vmem:[#allocation10 + $0x80] sm:$0xff]
    %v3476 = vld [vmem:[#allocation10 + $0x88] sm:$0xff]
    %v3477 = vld [vmem:[#allocation10 + $0x90] sm:$0xff]
    %v3478 = vld [vmem:[#allocation10 + $0x98] sm:$0xff]
    %v3479 = vld [vmem:[#allocation10 + $0xa0] sm:$0xff]
    %v3480 = vld [vmem:[#allocation10 + $0xa8] sm:$0xff]
    %v3481 = vld [vmem:[#allocation10 + $0xb0] sm:$0xff]
    %v3482 = vld [vmem:[#allocation10 + $0xb8] sm:$0xff]
    %v3483 = vld [vmem:[#allocation10 + $0xc0] sm:$0xff]
    %v3484 = vld [vmem:[#allocation10 + $0xc8] sm:$0xff]
    %v3485 = vld [vmem:[#allocation10 + $0xd0] sm:$0xff]
    %v3486 = vld [vmem:[#allocation10 + $0xd8] sm:$0xff]
    %v3487 = vld [vmem:[#allocation10 + $0xe0] sm:$0xff]
    %v3488 = vld [vmem:[#allocation10 + $0xe8] sm:$0xff]
    %v3489 = vld [vmem:[#allocation10 + $0xf0] sm:$0xff]
    %v3490 = vld [vmem:[#allocation10 + $0xf8] sm:$0xff]
    %v3491 = vld [vmem:[#allocation10 + $0x100] sm:$0xff]
    %v3492 = vld [vmem:[#allocation10 + $0x108] sm:$0xff]
    %v3493 = vld [vmem:[#allocation10 + $0x110] sm:$0xff]
    %v3494 = vld [vmem:[#allocation10 + $0x118] sm:$0xff]
    %v3495 = vld [vmem:[#allocation10 + $0x120] sm:$0xff]
    %v3496 = vld [vmem:[#allocation10 + $0x128] sm:$0xff]
    %v3497 = vld [vmem:[#allocation10 + $0x130] sm:$0xff]
    %v3498 = vld [vmem:[#allocation10 + $0x138] sm:$0xff]
    %v3499 = vld [vmem:[#allocation10 + $0x140] sm:$0xff]
    %v3500 = vld [vmem:[#allocation10 + $0x148] sm:$0xff]
    %v3501 = vld [vmem:[#allocation10 + $0x150] sm:$0xff]
    %v3502 = vld [vmem:[#allocation10 + $0x158] sm:$0xff]
    %v3503 = vld [vmem:[#allocation10 + $0x160] sm:$0xff]
    %v3504 = vld [vmem:[#allocation10 + $0x168] sm:$0xff]
    %v3505 = vld [vmem:[#allocation10 + $0x170] sm:$0xff]
    %v3506 = vld [vmem:[#allocation10 + $0x178] sm:$0xff]
    %3507 = vmatprep.subr.mxu0 %v3460
    %3508 = vmatpush1.msra.mxu0 %v3459
    %3509 = vmatprep.subr.mxu0 %v3463
    %3510 = vmatpush1.msra.mxu0 %v3462
    %3511 = vmatprep.subr.mxu0 %v3466
    %3512 = vmatpush1.msra.mxu0 %v3465
    %3513 = vmatprep.subr.mxu0 %v3469
    %3514 = vmatpush1.msra.mxu0 %v3468
    %3515 = vmatprep.subr.mxu0 %v3472
    %3516 = vmatpush1.msra.mxu0 %v3471
    %3517 = vmatprep.subr.mxu0 %v3475
    %3518 = vmatpush1.msra.mxu0 %v3474
    %3519 = vmatprep.subr.mxu0 %v3478
    %3520 = vmatpush1.msra.mxu0 %v3477
    %3521 = vmatprep.subr.mxu0 %v3481
    %3522 = vmatpush1.msra.mxu0 %v3480
    %3523 = vmatprep.subr.mxu0 %v3484
    %3524 = vmatpush1.msra.mxu0 %v3483
    %3525 = vmatprep.subr.mxu0 %v3487
    %3526 = vmatpush1.msra.mxu0 %v3486
    %3527 = vmatprep.subr.mxu0 %v3490
    %3528 = vmatpush1.msra.mxu0 %v3489
    %3529 = vmatprep.subr.mxu0 %v3493
    %3530 = vmatpush1.msra.mxu0 %v3492
    %3531 = vmatprep.subr.mxu0 %v3496
    %3532 = vmatpush1.msra.mxu0 %v3495
    %3533 = vmatprep.subr.mxu0 %v3499
    %3534 = vmatpush1.msra.mxu0 %v3498
    %3535 = vmatprep.subr.mxu0 %v3502
    %3536 = vmatpush1.msra.mxu0 %v3501
    %3537 = vmatprep.subr.mxu0 %v3505
    %3538 = vmatpush1.msra.mxu0 %v3504
    %3539 = vmatprep.subr.mxu0 0.0
    %3540 = vmatpush1.msra.mxu0 0.0
    %3541 = vmatprep.subr.mxu0 0.0
    %3542 = vmatpush1.msra.mxu0 0.0
    %3543 = vmatprep.subr.mxu0 0.0
    %3544 = vmatpush1.msra.mxu0 0.0
    %3545 = vmatprep.subr.mxu0 0.0
    %3546 = vmatpush1.msra.mxu0 0.0
    %3547 = vmatprep.subr.mxu0 0.0
    %3548 = vmatpush1.msra.mxu0 0.0
    %3549 = vmatprep.subr.mxu0 0.0
    %3550 = vmatpush1.msra.mxu0 0.0
    %3551 = vmatprep.subr.mxu0 0.0
    %3552 = vmatpush1.msra.mxu0 0.0
    %3553 = vmatprep.subr.mxu0 0.0
    %3554 = vmatpush1.msra.mxu0 0.0
    %3555 = vmatprep.subr.mxu0 0.0
    %3556 = vmatpush1.msra.mxu0 0.0
    %3557 = vmatprep.subr.mxu0 0.0
    %3558 = vmatpush1.msra.mxu0 0.0
    %3559 = vmatprep.subr.mxu0 0.0
    %3560 = vmatpush1.msra.mxu0 0.0
    %3561 = vmatprep.subr.mxu0 0.0
    %3562 = vmatpush1.msra.mxu0 0.0
    %3563 = vmatprep.subr.mxu0 0.0
    %3564 = vmatpush1.msra.mxu0 0.0
    %3565 = vmatprep.subr.mxu0 0.0
    %3566 = vmatpush1.msra.mxu0 0.0
    %3567 = vmatprep.subr.mxu0 0.0
    %3568 = vmatpush1.msra.mxu0 0.0
    %3569 = vmatprep.subr.mxu0 0.0
    %3570 = vmatpush1.msra.mxu0 0.0
    %3571 = vmatprep.mubr.f32.mxu0 0.0
    %3572 = vmatmul.mubr.f32.gmra.mrb[0].mxu0 %v3453
    %v3573 = vpop.f32.mrb[0].mxu0
    %v3574 = vadd.f32 %v2322, %v3573
    %v3575 = vpop.f32.mrb[0].mxu0
    %v3576 = vadd.f32 %v2326, %v3575
    %3577 = vdwg.mxu0
    %3578 = vmatprep.subr.mxu0 0.0
    %3579 = vmatpush1.msra.mxu0 %v3461
    %3580 = vmatprep.subr.mxu0 0.0
    %3581 = vmatpush1.msra.mxu0 %v3464
    %3582 = vmatprep.subr.mxu0 0.0
    %3583 = vmatpush1.msra.mxu0 %v3467
    %3584 = vmatprep.subr.mxu0 0.0
    %3585 = vmatpush1.msra.mxu0 %v3470
    %3586 = vmatprep.subr.mxu0 0.0
    %3587 = vmatpush1.msra.mxu0 %v3473
    %3588 = vmatprep.subr.mxu0 0.0
    %3589 = vmatpush1.msra.mxu0 %v3476
    %3590 = vmatprep.subr.mxu0 0.0
    %3591 = vmatpush1.msra.mxu0 %v3479
    %3592 = vmatprep.subr.mxu0 0.0
    %3593 = vmatpush1.msra.mxu0 %v3482
    %3594 = vmatprep.subr.mxu0 0.0
    %3595 = vmatpush1.msra.mxu0 %v3485
    %3596 = vmatprep.subr.mxu0 0.0
    %3597 = vmatpush1.msra.mxu0 %v3488
    %3598 = vmatprep.subr.mxu0 0.0
    %3599 = vmatpush1.msra.mxu0 %v3491
    %3600 = vmatprep.subr.mxu0 0.0
    %3601 = vmatpush1.msra.mxu0 %v3494
    %3602 = vmatprep.subr.mxu0 0.0
    %3603 = vmatpush1.msra.mxu0 %v3497
    %3604 = vmatprep.subr.mxu0 0.0
    %3605 = vmatpush1.msra.mxu0 %v3500
    %3606 = vmatprep.subr.mxu0 0.0
    %3607 = vmatpush1.msra.mxu0 %v3503
    %3608 = vmatprep.subr.mxu0 0.0
    %3609 = vmatpush1.msra.mxu0 %v3506
    %3610 = vmatprep.subr.mxu0 0.0
    %3611 = vmatpush1.msra.mxu0 0.0
    %3612 = vmatprep.subr.mxu0 0.0
    %3613 = vmatpush1.msra.mxu0 0.0
    %3614 = vmatprep.subr.mxu0 0.0
    %3615 = vmatpush1.msra.mxu0 0.0
    %3616 = vmatprep.subr.mxu0 0.0
    %3617 = vmatpush1.msra.mxu0 0.0
    %3618 = vmatprep.subr.mxu0 0.0
    %3619 = vmatpush1.msra.mxu0 0.0
    %3620 = vmatprep.subr.mxu0 0.0
    %3621 = vmatpush1.msra.mxu0 0.0
    %3622 = vmatprep.subr.mxu0 0.0
    %3623 = vmatpush1.msra.mxu0 0.0
    %3624 = vmatprep.subr.mxu0 0.0
    %3625 = vmatpush1.msra.mxu0 0.0
    %3626 = vmatprep.subr.mxu0 0.0
    %3627 = vmatpush1.msra.mxu0 0.0
    %3628 = vmatprep.subr.mxu0 0.0
    %3629 = vmatpush1.msra.mxu0 0.0
    %3630 = vmatprep.subr.mxu0 0.0
    %3631 = vmatpush1.msra.mxu0 0.0
    %3632 = vmatprep.subr.mxu0 0.0
    %3633 = vmatpush1.msra.mxu0 0.0
    %3634 = vmatprep.subr.mxu0 0.0
    %3635 = vmatpush1.msra.mxu0 0.0
    %3636 = vmatprep.subr.mxu0 0.0
    %3637 = vmatpush1.msra.mxu0 0.0
    %3638 = vmatprep.subr.mxu0 0.0
    %3639 = vmatpush1.msra.mxu0 0.0
    %3640 = vmatprep.subr.mxu0 0.0
    %3641 = vmatpush1.msra.mxu0 0.0
    %3642 = vmatprep.mubr.f32.mxu0 0.0
    %3643 = vmatmul.mubr.f32.gmra.mrb[0].mxu0 %v3453
    %v3644 = vpop.f32.mrb[0].mxu0
    %v3645 = vadd.f32 %v2330, %v3644
    %v3646 = vpop.f32.mrb[0].mxu0
    %3647 = vdwg.mxu0
    %v3648 = vadd.f32 %v3456, %v3574
    %v3649 = vxor.u32 %v3648, 2147483648
    %v3650 = vmul.f32 %v3649, 1.442695
    %v3651 = vpow.pop %v3650
    %v3652 = vadd.f32 %v3651, 1.0
    %v3653 = vrcp.pop %v3652
    %v3654 = vmul.f32 1.0, %v3653
    %v3655 = vadd.f32 %v3457, %v3576
    %v3656 = vxor.u32 %v3655, 2147483648
    %v3657 = vmul.f32 %v3656, 1.442695
    %v3658 = vpow.pop %v3657
    %v3659 = vadd.f32 %v3658, 1.0
    %v3660 = vrcp.pop %v3659
    %v3661 = vmul.f32 1.0, %v3660
    %v3662 = vmul.f32 %v3654, %v3645
    %v3663 = vadd.f32 %v3458, %v3662
    %v3664 = vtanh.pop %v3663
    %v3665 = vsub.f32 1.0, %v3661
    %v3666 = vmul.f32 %v3665, %v3664
    %v3667 = vmul.f32 %v3661, %v3453
    %v3668 = vadd.f32 %v3666, %v3667
    %s3669 = scalar_lea.vmem [#allocation3], 24
    %3670 = vst [vmem:[%s3669] sm:$0xff] %v3668
    %v3671 = vld [vmem:[#allocation3] sm:$0xff]
    %v3672 = vld [vmem:[#allocation3 + $0x8] sm:$0xff]
    %v3673 = vld [vmem:[#allocation3 + $0x10] sm:$0xff]
    %v3674 = vld [vmem:[#allocation3 + $0x18] sm:$0xff]
    %v3675 = vld [vmem:[#allocation11] sm:$0xff]
    %v3676 = vld [vmem:[#allocation11 + $0x8] sm:$0xff]
    %v3677 = vld [vmem:[#allocation11 + $0x10] sm:$0xff]
    %v3678 = vld [vmem:[#allocation11 + $0x18] sm:$0xff]
    %v3679 = vld [vmem:[#allocation11 + $0x20] sm:$0xff]
    %v3680 = vld [vmem:[#allocation11 + $0x28] sm:$0xff]
    %v3681 = vld [vmem:[#allocation11 + $0x30] sm:$0xff]
    %v3682 = vld [vmem:[#allocation11 + $0x38] sm:$0xff]
    %v3683 = vld [vmem:[#allocation11 + $0x40] sm:$0xff]
    %v3684 = vld [vmem:[#allocation11 + $0x48] sm:$0xff]
    %v3685 = vld [vmem:[#allocation11 + $0x50] sm:$0xff]
    %v3686 = vld [vmem:[#allocation11 + $0x58] sm:$0xff]
    %v3687 = vld [vmem:[#allocation11 + $0x60] sm:$0xff]
    %v3688 = vld [vmem:[#allocation11 + $0x68] sm:$0xff]
    %v3689 = vld [vmem:[#allocation11 + $0x70] sm:$0xff]
    %v3690 = vld [vmem:[#allocation11 + $0x78] sm:$0xff]
    %3691 = vmatprep.subr.mxu0 0.0
    %3692 = vmatpush1.msra.mxu0 %v3675
    %3693 = vmatprep.subr.mxu0 0.0
    %3694 = vmatpush1.msra.mxu0 %v3676
    %3695 = vmatprep.subr.mxu0 0.0
    %3696 = vmatpush1.msra.mxu0 %v3677
    %3697 = vmatprep.subr.mxu0 0.0
    %3698 = vmatpush1.msra.mxu0 %v3678
    %3699 = vmatprep.subr.mxu0 0.0
    %3700 = vmatpush1.msra.mxu0 %v3679
    %3701 = vmatprep.subr.mxu0 0.0
    %3702 = vmatpush1.msra.mxu0 %v3680
    %3703 = vmatprep.subr.mxu0 0.0
    %3704 = vmatpush1.msra.mxu0 %v3681
    %3705 = vmatprep.subr.mxu0 0.0
    %3706 = vmatpush1.msra.mxu0 %v3682
    %3707 = vmatprep.subr.mxu0 0.0
    %3708 = vmatpush1.msra.mxu0 %v3683
    %3709 = vmatprep.subr.mxu0 0.0
    %3710 = vmatpush1.msra.mxu0 %v3684
    %3711 = vmatprep.subr.mxu0 0.0
    %3712 = vmatpush1.msra.mxu0 %v3685
    %3713 = vmatprep.subr.mxu0 0.0
    %3714 = vmatpush1.msra.mxu0 %v3686
    %3715 = vmatprep.subr.mxu0 0.0
    %3716 = vmatpush1.msra.mxu0 %v3687
    %3717 = vmatprep.subr.mxu0 0.0
    %3718 = vmatpush1.msra.mxu0 %v3688
    %3719 = vmatprep.subr.mxu0 0.0
    %3720 = vmatpush1.msra.mxu0 %v3689
    %3721 = vmatprep.subr.mxu0 0.0
    %3722 = vmatpush1.msra.mxu0 %v3690
    %3723 = vmatprep.subr.mxu0 0.0
    %3724 = vmatpush1.msra.mxu0 0.0
    %3725 = vmatprep.subr.mxu0 0.0
    %3726 = vmatpush1.msra.mxu0 0.0
    %3727 = vmatprep.subr.mxu0 0.0
    %3728 = vmatpush1.msra.mxu0 0.0
    %3729 = vmatprep.subr.mxu0 0.0
    %3730 = vmatpush1.msra.mxu0 0.0
    %3731 = vmatprep.subr.mxu0 0.0
    %3732 = vmatpush1.msra.mxu0 0.0
    %3733 = vmatprep.subr.mxu0 0.0
    %3734 = vmatpush1.msra.mxu0 0.0
    %3735 = vmatprep.subr.mxu0 0.0
    %3736 = vmatpush1.msra.mxu0 0.0
    %3737 = vmatprep.subr.mxu0 0.0
    %3738 = vmatpush1.msra.mxu0 0.0
    %3739 = vmatprep.subr.mxu0 0.0
    %3740 = vmatpush1.msra.mxu0 0.0
    %3741 = vmatprep.subr.mxu0 0.0
    %3742 = vmatpush1.msra.mxu0 0.0
    %3743 = vmatprep.subr.mxu0 0.0
    %3744 = vmatpush1.msra.mxu0 0.0
    %3745 = vmatprep.subr.mxu0 0.0
    %3746 = vmatpush1.msra.mxu0 0.0
    %3747 = vmatprep.subr.mxu0 0.0
    %3748 = vmatpush1.msra.mxu0 0.0
    %3749 = vmatprep.subr.mxu0 0.0
    %3750 = vmatpush1.msra.mxu0 0.0
    %3751 = vmatprep.subr.mxu0 0.0
    %3752 = vmatpush1.msra.mxu0 0.0
    %3753 = vmatprep.subr.mxu0 0.0
    %3754 = vmatpush1.msra.mxu0 0.0
    %3755 = vmatprep.mubr.f32.mxu0 0.0
    %3756 = vmatmul.mubr.f32.gmra.mrb[0].mxu0 %v3671
    %v3757 = vpop.f32.mrb[0].mxu0
    %v3758 = vadd.f32 %v105, %v3757
    %v3759 = vpop.f32.mrb[0].mxu0
    %3760 = vmatprep.mubr.f32.mxu0 0.0
    %3761 = vmatmul.mubr.f32.gmra.mrb[0].mxu0 %v3672
    %v3762 = vpop.f32.mrb[0].mxu0
    %v3763 = vadd.f32 %v105, %v3762
    %v3764 = vpop.f32.mrb[0].mxu0
    %3765 = vmatprep.mubr.f32.mxu0 0.0
    %3766 = vmatmul.mubr.f32.gmra.mrb[0].mxu0 %v3673
    %v3767 = vpop.f32.mrb[0].mxu0
    %v3768 = vadd.f32 %v105, %v3767
    %v3769 = vpop.f32.mrb[0].mxu0
    %3770 = vmatprep.mubr.f32.mxu0 0.0
    %3771 = vmatmul.mubr.f32.gmra.mrb[0].mxu0 %v3674
    %v3772 = vpop.f32.mrb[0].mxu0
    %v3773 = vadd.f32 %v105, %v3772
    %v3774 = vpop.f32.mrb[0].mxu0
    %3775 = vdwg.mxu0
    %3776 = vst [vmem:[#allocation13] sm:$0xff] %v3758
    %3777 = vst [vmem:[#allocation13 + $0x8] sm:$0xff] %v3763
    %3778 = vst [vmem:[#allocation13 + $0x10] sm:$0xff] %v3768
    %3779 = vst [vmem:[#allocation13 + $0x18] sm:$0xff] %v3773
    %v3780 = vld [vmem:[%s1432] sm:$0xff]
    %v3781 = vld [vmem:[%s1432 + $0x8] sm:$0xff]
    %v3782 = vld [vmem:[%s1432 + $0x10] sm:$0xff]
    %v3783 = vld [vmem:[#allocation10] sm:$0xff]
    %v3784 = vld [vmem:[#allocation10 + $0x8] sm:$0xff]
    %v3785 = vld [vmem:[#allocation10 + $0x10] sm:$0xff]
    %v3786 = vld [vmem:[#allocation10 + $0x18] sm:$0xff]
    %v3787 = vld [vmem:[#allocation10 + $0x20] sm:$0xff]
    %v3788 = vld [vmem:[#allocation10 + $0x28] sm:$0xff]
    %v3789 = vld [vmem:[#allocation10 + $0x30] sm:$0xff]
    %v3790 = vld [vmem:[#allocation10 + $0x38] sm:$0xff]
    %v3791 = vld [vmem:[#allocation10 + $0x40] sm:$0xff]
    %v3792 = vld [vmem:[#allocation10 + $0x48] sm:$0xff]
    %v3793 = vld [vmem:[#allocation10 + $0x50] sm:$0xff]
    %v3794 = vld [vmem:[#allocation10 + $0x58] sm:$0xff]
    %v3795 = vld [vmem:[#allocation10 + $0x60] sm:$0xff]
    %v3796 = vld [vmem:[#allocation10 + $0x68] sm:$0xff]
    %v3797 = vld [vmem:[#allocation10 + $0x70] sm:$0xff]
    %v3798 = vld [vmem:[#allocation10 + $0x78] sm:$0xff]
    %v3799 = vld [vmem:[#allocation10 + $0x80] sm:$0xff]
    %v3800 = vld [vmem:[#allocation10 + $0x88] sm:$0xff]
    %v3801 = vld [vmem:[#allocation10 + $0x90] sm:$0xff]
    %v3802 = vld [vmem:[#allocation10 + $0x98] sm:$0xff]
    %v3803 = vld [vmem:[#allocation10 + $0xa0] sm:$0xff]
    %v3804 = vld [vmem:[#allocation10 + $0xa8] sm:$0xff]
    %v3805 = vld [vmem:[#allocation10 + $0xb0] sm:$0xff]
    %v3806 = vld [vmem:[#allocation10 + $0xb8] sm:$0xff]
    %v3807 = vld [vmem:[#allocation10 + $0xc0] sm:$0xff]
    %v3808 = vld [vmem:[#allocation10 + $0xc8] sm:$0xff]
    %v3809 = vld [vmem:[#allocation10 + $0xd0] sm:$0xff]
    %v3810 = vld [vmem:[#allocation10 + $0xd8] sm:$0xff]
    %v3811 = vld [vmem:[#allocation10 + $0xe0] sm:$0xff]
    %v3812 = vld [vmem:[#allocation10 + $0xe8] sm:$0xff]
    %v3813 = vld [vmem:[#allocation10 + $0xf0] sm:$0xff]
    %v3814 = vld [vmem:[#allocation10 + $0xf8] sm:$0xff]
    %v3815 = vld [vmem:[#allocation10 + $0x100] sm:$0xff]
    %v3816 = vld [vmem:[#allocation10 + $0x108] sm:$0xff]
    %v3817 = vld [vmem:[#allocation10 + $0x110] sm:$0xff]
    %v3818 = vld [vmem:[#allocation10 + $0x118] sm:$0xff]
    %v3819 = vld [vmem:[#allocation10 + $0x120] sm:$0xff]
    %v3820 = vld [vmem:[#allocation10 + $0x128] sm:$0xff]
    %v3821 = vld [vmem:[#allocation10 + $0x130] sm:$0xff]
    %v3822 = vld [vmem:[#allocation10 + $0x138] sm:$0xff]
    %v3823 = vld [vmem:[#allocation10 + $0x140] sm:$0xff]
    %v3824 = vld [vmem:[#allocation10 + $0x148] sm:$0xff]
    %v3825 = vld [vmem:[#allocation10 + $0x150] sm:$0xff]
    %v3826 = vld [vmem:[#allocation10 + $0x158] sm:$0xff]
    %v3827 = vld [vmem:[#allocation10 + $0x160] sm:$0xff]
    %v3828 = vld [vmem:[#allocation10 + $0x168] sm:$0xff]
    %v3829 = vld [vmem:[#allocation10 + $0x170] sm:$0xff]
    %v3830 = vld [vmem:[#allocation10 + $0x178] sm:$0xff]
    %3831 = vmatprep.subr.mxu0 %v3784
    %3832 = vmatpush1.msra.mxu0 %v3783
    %3833 = vmatprep.subr.mxu0 %v3787
    %3834 = vmatpush1.msra.mxu0 %v3786
    %3835 = vmatprep.subr.mxu0 %v3790
    %3836 = vmatpush1.msra.mxu0 %v3789
    %3837 = vmatprep.subr.mxu0 %v3793
    %3838 = vmatpush1.msra.mxu0 %v3792
    %3839 = vmatprep.subr.mxu0 %v3796
    %3840 = vmatpush1.msra.mxu0 %v3795
    %3841 = vmatprep.subr.mxu0 %v3799
    %3842 = vmatpush1.msra.mxu0 %v3798
    %3843 = vmatprep.subr.mxu0 %v3802
    %3844 = vmatpush1.msra.mxu0 %v3801
    %3845 = vmatprep.subr.mxu0 %v3805
    %3846 = vmatpush1.msra.mxu0 %v3804
    %3847 = vmatprep.subr.mxu0 %v3808
    %3848 = vmatpush1.msra.mxu0 %v3807
    %3849 = vmatprep.subr.mxu0 %v3811
    %3850 = vmatpush1.msra.mxu0 %v3810
    %3851 = vmatprep.subr.mxu0 %v3814
    %3852 = vmatpush1.msra.mxu0 %v3813
    %3853 = vmatprep.subr.mxu0 %v3817
    %3854 = vmatpush1.msra.mxu0 %v3816
    %3855 = vmatprep.subr.mxu0 %v3820
    %3856 = vmatpush1.msra.mxu0 %v3819
    %3857 = vmatprep.subr.mxu0 %v3823
    %3858 = vmatpush1.msra.mxu0 %v3822
    %3859 = vmatprep.subr.mxu0 %v3826
    %3860 = vmatpush1.msra.mxu0 %v3825
    %3861 = vmatprep.subr.mxu0 %v3829
    %3862 = vmatpush1.msra.mxu0 %v3828
    %3863 = vmatprep.subr.mxu0 0.0
    %3864 = vmatpush1.msra.mxu0 0.0
    %3865 = vmatprep.subr.mxu0 0.0
    %3866 = vmatpush1.msra.mxu0 0.0
    %3867 = vmatprep.subr.mxu0 0.0
    %3868 = vmatpush1.msra.mxu0 0.0
    %3869 = vmatprep.subr.mxu0 0.0
    %3870 = vmatpush1.msra.mxu0 0.0
    %3871 = vmatprep.subr.mxu0 0.0
    %3872 = vmatpush1.msra.mxu0 0.0
    %3873 = vmatprep.subr.mxu0 0.0
    %3874 = vmatpush1.msra.mxu0 0.0
    %3875 = vmatprep.subr.mxu0 0.0
    %3876 = vmatpush1.msra.mxu0 0.0
    %3877 = vmatprep.subr.mxu0 0.0
    %3878 = vmatpush1.msra.mxu0 0.0
    %3879 = vmatprep.subr.mxu0 0.0
    %3880 = vmatpush1.msra.mxu0 0.0
    %3881 = vmatprep.subr.mxu0 0.0
    %3882 = vmatpush1.msra.mxu0 0.0
    %3883 = vmatprep.subr.mxu0 0.0
    %3884 = vmatpush1.msra.mxu0 0.0
    %3885 = vmatprep.subr.mxu0 0.0
    %3886 = vmatpush1.msra.mxu0 0.0
    %3887 = vmatprep.subr.mxu0 0.0
    %3888 = vmatpush1.msra.mxu0 0.0
    %3889 = vmatprep.subr.mxu0 0.0
    %3890 = vmatpush1.msra.mxu0 0.0
    %3891 = vmatprep.subr.mxu0 0.0
    %3892 = vmatpush1.msra.mxu0 0.0
    %3893 = vmatprep.subr.mxu0 0.0
    %3894 = vmatpush1.msra.mxu0 0.0
    %3895 = vmatprep.mubr.f32.mxu0 0.0
    %3896 = vmatmul.mubr.f32.gmra.mrb[0].mxu0 %v3668
    %v3897 = vpop.f32.mrb[0].mxu0
    %v3898 = vadd.f32 %v2322, %v3897
    %v3899 = vpop.f32.mrb[0].mxu0
    %v3900 = vadd.f32 %v2326, %v3899
    %3901 = vdwg.mxu0
    %3902 = vmatprep.subr.mxu0 0.0
    %3903 = vmatpush1.msra.mxu0 %v3785
    %3904 = vmatprep.subr.mxu0 0.0
    %3905 = vmatpush1.msra.mxu0 %v3788
    %3906 = vmatprep.subr.mxu0 0.0
    %3907 = vmatpush1.msra.mxu0 %v3791
    %3908 = vmatprep.subr.mxu0 0.0
    %3909 = vmatpush1.msra.mxu0 %v3794
    %3910 = vmatprep.subr.mxu0 0.0
    %3911 = vmatpush1.msra.mxu0 %v3797
    %3912 = vmatprep.subr.mxu0 0.0
    %3913 = vmatpush1.msra.mxu0 %v3800
    %3914 = vmatprep.subr.mxu0 0.0
    %3915 = vmatpush1.msra.mxu0 %v3803
    %3916 = vmatprep.subr.mxu0 0.0
    %3917 = vmatpush1.msra.mxu0 %v3806
    %3918 = vmatprep.subr.mxu0 0.0
    %3919 = vmatpush1.msra.mxu0 %v3809
    %3920 = vmatprep.subr.mxu0 0.0
    %3921 = vmatpush1.msra.mxu0 %v3812
    %3922 = vmatprep.subr.mxu0 0.0
    %3923 = vmatpush1.msra.mxu0 %v3815
    %3924 = vmatprep.subr.mxu0 0.0
    %3925 = vmatpush1.msra.mxu0 %v3818
    %3926 = vmatprep.subr.mxu0 0.0
    %3927 = vmatpush1.msra.mxu0 %v3821
    %3928 = vmatprep.subr.mxu0 0.0
    %3929 = vmatpush1.msra.mxu0 %v3824
    %3930 = vmatprep.subr.mxu0 0.0
    %3931 = vmatpush1.msra.mxu0 %v3827
    %3932 = vmatprep.subr.mxu0 0.0
    %3933 = vmatpush1.msra.mxu0 %v3830
    %3934 = vmatprep.subr.mxu0 0.0
    %3935 = vmatpush1.msra.mxu0 0.0
    %3936 = vmatprep.subr.mxu0 0.0
    %3937 = vmatpush1.msra.mxu0 0.0
    %3938 = vmatprep.subr.mxu0 0.0
    %3939 = vmatpush1.msra.mxu0 0.0
    %3940 = vmatprep.subr.mxu0 0.0
    %3941 = vmatpush1.msra.mxu0 0.0
    %3942 = vmatprep.subr.mxu0 0.0
    %3943 = vmatpush1.msra.mxu0 0.0
    %3944 = vmatprep.subr.mxu0 0.0
    %3945 = vmatpush1.msra.mxu0 0.0
    %3946 = vmatprep.subr.mxu0 0.0
    %3947 = vmatpush1.msra.mxu0 0.0
    %3948 = vmatprep.subr.mxu0 0.0
    %3949 = vmatpush1.msra.mxu0 0.0
    %3950 = vmatprep.subr.mxu0 0.0
    %3951 = vmatpush1.msra.mxu0 0.0
    %3952 = vmatprep.subr.mxu0 0.0
    %3953 = vmatpush1.msra.mxu0 0.0
    %3954 = vmatprep.subr.mxu0 0.0
    %3955 = vmatpush1.msra.mxu0 0.0
    %3956 = vmatprep.subr.mxu0 0.0
    %3957 = vmatpush1.msra.mxu0 0.0
    %3958 = vmatprep.subr.mxu0 0.0
    %3959 = vmatpush1.msra.mxu0 0.0
    %3960 = vmatprep.subr.mxu0 0.0
    %3961 = vmatpush1.msra.mxu0 0.0
    %3962 = vmatprep.subr.mxu0 0.0
    %3963 = vmatpush1.msra.mxu0 0.0
    %3964 = vmatprep.subr.mxu0 0.0
    %3965 = vmatpush1.msra.mxu0 0.0
    %3966 = vmatprep.mubr.f32.mxu0 0.0
    %3967 = vmatmul.mubr.f32.gmra.mrb[0].mxu0 %v3668
    %v3968 = vpop.f32.mrb[0].mxu0
    %v3969 = vadd.f32 %v2330, %v3968
    %v3970 = vpop.f32.mrb[0].mxu0
    %3971 = vdwg.mxu0
    %v3972 = vadd.f32 %v3780, %v3898
    %v3973 = vxor.u32 %v3972, 2147483648
    %v3974 = vmul.f32 %v3973, 1.442695
    %v3975 = vpow.pop %v3974
    %v3976 = vadd.f32 %v3975, 1.0
    %v3977 = vrcp.pop %v3976
    %v3978 = vmul.f32 1.0, %v3977
    %v3979 = vadd.f32 %v3781, %v3900
    %v3980 = vxor.u32 %v3979, 2147483648
    %v3981 = vmul.f32 %v3980, 1.442695
    %v3982 = vpow.pop %v3981
    %v3983 = vadd.f32 %v3982, 1.0
    %v3984 = vrcp.pop %v3983
    %v3985 = vmul.f32 1.0, %v3984
    %v3986 = vmul.f32 %v3978, %v3969
    %v3987 = vadd.f32 %v3782, %v3986
    %v3988 = vtanh.pop %v3987
    %v3989 = vsub.f32 1.0, %v3985
    %v3990 = vmul.f32 %v3989, %v3988
    %v3991 = vmul.f32 %v3985, %v3668
    %v3992 = vadd.f32 %v3990, %v3991
    %s3993 = scalar_lea.vmem [#allocation3], 32
    %3994 = vst [vmem:[%s3993] sm:$0xff] %v3992
    %v3995 = vld [vmem:[%s1649] sm:$0xff]
    %v3996 = vld [vmem:[%s1649 + $0x8] sm:$0xff]
    %v3997 = vld [vmem:[%s1649 + $0x10] sm:$0xff]
    %v3998 = vld [vmem:[#allocation10] sm:$0xff]
    %v3999 = vld [vmem:[#allocation10 + $0x8] sm:$0xff]
    %v4000 = vld [vmem:[#allocation10 + $0x10] sm:$0xff]
    %v4001 = vld [vmem:[#allocation10 + $0x18] sm:$0xff]
    %v4002 = vld [vmem:[#allocation10 + $0x20] sm:$0xff]
    %v4003 = vld [vmem:[#allocation10 + $0x28] sm:$0xff]
    %v4004 = vld [vmem:[#allocation10 + $0x30] sm:$0xff]
    %v4005 = vld [vmem:[#allocation10 + $0x38] sm:$0xff]
    %v4006 = vld [vmem:[#allocation10 + $0x40] sm:$0xff]
    %v4007 = vld [vmem:[#allocation10 + $0x48] sm:$0xff]
    %v4008 = vld [vmem:[#allocation10 + $0x50] sm:$0xff]
    %v4009 = vld [vmem:[#allocation10 + $0x58] sm:$0xff]
    %v4010 = vld [vmem:[#allocation10 + $0x60] sm:$0xff]
    %v4011 = vld [vmem:[#allocation10 + $0x68] sm:$0xff]
    %v4012 = vld [vmem:[#allocation10 + $0x70] sm:$0xff]
    %v4013 = vld [vmem:[#allocation10 + $0x78] sm:$0xff]
    %v4014 = vld [vmem:[#allocation10 + $0x80] sm:$0xff]
    %v4015 = vld [vmem:[#allocation10 + $0x88] sm:$0xff]
    %v4016 = vld [vmem:[#allocation10 + $0x90] sm:$0xff]
    %v4017 = vld [vmem:[#allocation10 + $0x98] sm:$0xff]
    %v4018 = vld [vmem:[#allocation10 + $0xa0] sm:$0xff]
    %v4019 = vld [vmem:[#allocation10 + $0xa8] sm:$0xff]
    %v4020 = vld [vmem:[#allocation10 + $0xb0] sm:$0xff]
    %v4021 = vld [vmem:[#allocation10 + $0xb8] sm:$0xff]
    %v4022 = vld [vmem:[#allocation10 + $0xc0] sm:$0xff]
    %v4023 = vld [vmem:[#allocation10 + $0xc8] sm:$0xff]
    %v4024 = vld [vmem:[#allocation10 + $0xd0] sm:$0xff]
    %v4025 = vld [vmem:[#allocation10 + $0xd8] sm:$0xff]
    %v4026 = vld [vmem:[#allocation10 + $0xe0] sm:$0xff]
    %v4027 = vld [vmem:[#allocation10 + $0xe8] sm:$0xff]
    %v4028 = vld [vmem:[#allocation10 + $0xf0] sm:$0xff]
    %v4029 = vld [vmem:[#allocation10 + $0xf8] sm:$0xff]
    %v4030 = vld [vmem:[#allocation10 + $0x100] sm:$0xff]
    %v4031 = vld [vmem:[#allocation10 + $0x108] sm:$0xff]
    %v4032 = vld [vmem:[#allocation10 + $0x110] sm:$0xff]
    %v4033 = vld [vmem:[#allocation10 + $0x118] sm:$0xff]
    %v4034 = vld [vmem:[#allocation10 + $0x120] sm:$0xff]
    %v4035 = vld [vmem:[#allocation10 + $0x128] sm:$0xff]
    %v4036 = vld [vmem:[#allocation10 + $0x130] sm:$0xff]
    %v4037 = vld [vmem:[#allocation10 + $0x138] sm:$0xff]
    %v4038 = vld [vmem:[#allocation10 + $0x140] sm:$0xff]
    %v4039 = vld [vmem:[#allocation10 + $0x148] sm:$0xff]
    %v4040 = vld [vmem:[#allocation10 + $0x150] sm:$0xff]
    %v4041 = vld [vmem:[#allocation10 + $0x158] sm:$0xff]
    %v4042 = vld [vmem:[#allocation10 + $0x160] sm:$0xff]
    %v4043 = vld [vmem:[#allocation10 + $0x168] sm:$0xff]
    %v4044 = vld [vmem:[#allocation10 + $0x170] sm:$0xff]
    %v4045 = vld [vmem:[#allocation10 + $0x178] sm:$0xff]
    %4046 = vmatprep.subr.mxu0 %v3999
    %4047 = vmatpush1.msra.mxu0 %v3998
    %4048 = vmatprep.subr.mxu0 %v4002
    %4049 = vmatpush1.msra.mxu0 %v4001
    %4050 = vmatprep.subr.mxu0 %v4005
    %4051 = vmatpush1.msra.mxu0 %v4004
    %4052 = vmatprep.subr.mxu0 %v4008
    %4053 = vmatpush1.msra.mxu0 %v4007
    %4054 = vmatprep.subr.mxu0 %v4011
    %4055 = vmatpush1.msra.mxu0 %v4010
    %4056 = vmatprep.subr.mxu0 %v4014
    %4057 = vmatpush1.msra.mxu0 %v4013
    %4058 = vmatprep.subr.mxu0 %v4017
    %4059 = vmatpush1.msra.mxu0 %v4016
    %4060 = vmatprep.subr.mxu0 %v4020
    %4061 = vmatpush1.msra.mxu0 %v4019
    %4062 = vmatprep.subr.mxu0 %v4023
    %4063 = vmatpush1.msra.mxu0 %v4022
    %4064 = vmatprep.subr.mxu0 %v4026
    %4065 = vmatpush1.msra.mxu0 %v4025
    %4066 = vmatprep.subr.mxu0 %v4029
    %4067 = vmatpush1.msra.mxu0 %v4028
    %4068 = vmatprep.subr.mxu0 %v4032
    %4069 = vmatpush1.msra.mxu0 %v4031
    %4070 = vmatprep.subr.mxu0 %v4035
    %4071 = vmatpush1.msra.mxu0 %v4034
    %4072 = vmatprep.subr.mxu0 %v4038
    %4073 = vmatpush1.msra.mxu0 %v4037
    %4074 = vmatprep.subr.mxu0 %v4041
    %4075 = vmatpush1.msra.mxu0 %v4040
    %4076 = vmatprep.subr.mxu0 %v4044
    %4077 = vmatpush1.msra.mxu0 %v4043
    %4078 = vmatprep.subr.mxu0 0.0
    %4079 = vmatpush1.msra.mxu0 0.0
    %4080 = vmatprep.subr.mxu0 0.0
    %4081 = vmatpush1.msra.mxu0 0.0
    %4082 = vmatprep.subr.mxu0 0.0
    %4083 = vmatpush1.msra.mxu0 0.0
    %4084 = vmatprep.subr.mxu0 0.0
    %4085 = vmatpush1.msra.mxu0 0.0
    %4086 = vmatprep.subr.mxu0 0.0
    %4087 = vmatpush1.msra.mxu0 0.0
    %4088 = vmatprep.subr.mxu0 0.0
    %4089 = vmatpush1.msra.mxu0 0.0
    %4090 = vmatprep.subr.mxu0 0.0
    %4091 = vmatpush1.msra.mxu0 0.0
    %4092 = vmatprep.subr.mxu0 0.0
    %4093 = vmatpush1.msra.mxu0 0.0
    %4094 = vmatprep.subr.mxu0 0.0
    %4095 = vmatpush1.msra.mxu0 0.0
    %4096 = vmatprep.subr.mxu0 0.0
    %4097 = vmatpush1.msra.mxu0 0.0
    %4098 = vmatprep.subr.mxu0 0.0
    %4099 = vmatpush1.msra.mxu0 0.0
    %4100 = vmatprep.subr.mxu0 0.0
    %4101 = vmatpush1.msra.mxu0 0.0
    %4102 = vmatprep.subr.mxu0 0.0
    %4103 = vmatpush1.msra.mxu0 0.0
    %4104 = vmatprep.subr.mxu0 0.0
    %4105 = vmatpush1.msra.mxu0 0.0
    %4106 = vmatprep.subr.mxu0 0.0
    %4107 = vmatpush1.msra.mxu0 0.0
    %4108 = vmatprep.subr.mxu0 0.0
    %4109 = vmatpush1.msra.mxu0 0.0
    %4110 = vmatprep.mubr.f32.mxu0 0.0
    %4111 = vmatmul.mubr.f32.gmra.mrb[0].mxu0 %v3992
    %v4112 = vpop.f32.mrb[0].mxu0
    %v4113 = vadd.f32 %v2322, %v4112
    %v4114 = vpop.f32.mrb[0].mxu0
    %v4115 = vadd.f32 %v2326, %v4114
    %4116 = vdwg.mxu0
    %4117 = vmatprep.subr.mxu0 0.0
    %4118 = vmatpush1.msra.mxu0 %v4000
    %4119 = vmatprep.subr.mxu0 0.0
    %4120 = vmatpush1.msra.mxu0 %v4003
    %4121 = vmatprep.subr.mxu0 0.0
    %4122 = vmatpush1.msra.mxu0 %v4006
    %4123 = vmatprep.subr.mxu0 0.0
    %4124 = vmatpush1.msra.mxu0 %v4009
    %4125 = vmatprep.subr.mxu0 0.0
    %4126 = vmatpush1.msra.mxu0 %v4012
    %4127 = vmatprep.subr.mxu0 0.0
    %4128 = vmatpush1.msra.mxu0 %v4015
    %4129 = vmatprep.subr.mxu0 0.0
    %4130 = vmatpush1.msra.mxu0 %v4018
    %4131 = vmatprep.subr.mxu0 0.0
    %4132 = vmatpush1.msra.mxu0 %v4021
    %4133 = vmatprep.subr.mxu0 0.0
    %4134 = vmatpush1.msra.mxu0 %v4024
    %4135 = vmatprep.subr.mxu0 0.0
    %4136 = vmatpush1.msra.mxu0 %v4027
    %4137 = vmatprep.subr.mxu0 0.0
    %4138 = vmatpush1.msra.mxu0 %v4030
    %4139 = vmatprep.subr.mxu0 0.0
    %4140 = vmatpush1.msra.mxu0 %v4033
    %4141 = vmatprep.subr.mxu0 0.0
    %4142 = vmatpush1.msra.mxu0 %v4036
    %4143 = vmatprep.subr.mxu0 0.0
    %4144 = vmatpush1.msra.mxu0 %v4039
    %4145 = vmatprep.subr.mxu0 0.0
    %4146 = vmatpush1.msra.mxu0 %v4042
    %4147 = vmatprep.subr.mxu0 0.0
    %4148 = vmatpush1.msra.mxu0 %v4045
    %4149 = vmatprep.subr.mxu0 0.0
    %4150 = vmatpush1.msra.mxu0 0.0
    %4151 = vmatprep.subr.mxu0 0.0
    %4152 = vmatpush1.msra.mxu0 0.0
    %4153 = vmatprep.subr.mxu0 0.0
    %4154 = vmatpush1.msra.mxu0 0.0
    %4155 = vmatprep.subr.mxu0 0.0
    %4156 = vmatpush1.msra.mxu0 0.0
    %4157 = vmatprep.subr.mxu0 0.0
    %4158 = vmatpush1.msra.mxu0 0.0
    %4159 = vmatprep.subr.mxu0 0.0
    %4160 = vmatpush1.msra.mxu0 0.0
    %4161 = vmatprep.subr.mxu0 0.0
    %4162 = vmatpush1.msra.mxu0 0.0
    %4163 = vmatprep.subr.mxu0 0.0
    %4164 = vmatpush1.msra.mxu0 0.0
    %4165 = vmatprep.subr.mxu0 0.0
    %4166 = vmatpush1.msra.mxu0 0.0
    %4167 = vmatprep.subr.mxu0 0.0
    %4168 = vmatpush1.msra.mxu0 0.0
    %4169 = vmatprep.subr.mxu0 0.0
    %4170 = vmatpush1.msra.mxu0 0.0
    %4171 = vmatprep.subr.mxu0 0.0
    %4172 = vmatpush1.msra.mxu0 0.0
    %4173 = vmatprep.subr.mxu0 0.0
    %4174 = vmatpush1.msra.mxu0 0.0
    %4175 = vmatprep.subr.mxu0 0.0
    %4176 = vmatpush1.msra.mxu0 0.0
    %4177 = vmatprep.subr.mxu0 0.0
    %4178 = vmatpush1.msra.mxu0 0.0
    %4179 = vmatprep.subr.mxu0 0.0
    %4180 = vmatpush1.msra.mxu0 0.0
    %4181 = vmatprep.mubr.f32.mxu0 0.0
    %4182 = vmatmul.mubr.f32.gmra.mrb[0].mxu0 %v3992
    %v4183 = vpop.f32.mrb[0].mxu0
    %v4184 = vadd.f32 %v2330, %v4183
    %v4185 = vpop.f32.mrb[0].mxu0
    %4186 = vdwg.mxu0
    %v4187 = vadd.f32 %v3995, %v4113
    %v4188 = vxor.u32 %v4187, 2147483648
    %v4189 = vmul.f32 %v4188, 1.442695
    %v4190 = vpow.pop %v4189
    %v4191 = vadd.f32 %v4190, 1.0
    %v4192 = vrcp.pop %v4191
    %v4193 = vmul.f32 1.0, %v4192
    %v4194 = vadd.f32 %v3996, %v4115
    %v4195 = vxor.u32 %v4194, 2147483648
    %v4196 = vmul.f32 %v4195, 1.442695
    %v4197 = vpow.pop %v4196
    %v4198 = vadd.f32 %v4197, 1.0
    %v4199 = vrcp.pop %v4198
    %v4200 = vmul.f32 1.0, %v4199
    %v4201 = vmul.f32 %v4193, %v4184
    %v4202 = vadd.f32 %v3997, %v4201
    %v4203 = vtanh.pop %v4202
    %v4204 = vsub.f32 1.0, %v4200
    %v4205 = vmul.f32 %v4204, %v4203
    %v4206 = vmul.f32 %v4200, %v3992
    %v4207 = vadd.f32 %v4205, %v4206
    %s4208 = scalar_lea.vmem [#allocation3], 40
    %4209 = vst [vmem:[%s4208] sm:$0xff] %v4207
    %v4210 = vld [vmem:[%s1866] sm:$0xff]
    %v4211 = vld [vmem:[%s1866 + $0x8] sm:$0xff]
    %v4212 = vld [vmem:[%s1866 + $0x10] sm:$0xff]
    %v4213 = vld [vmem:[#allocation10] sm:$0xff]
    %v4214 = vld [vmem:[#allocation10 + $0x8] sm:$0xff]
    %v4215 = vld [vmem:[#allocation10 + $0x10] sm:$0xff]
    %v4216 = vld [vmem:[#allocation10 + $0x18] sm:$0xff]
    %v4217 = vld [vmem:[#allocation10 + $0x20] sm:$0xff]
    %v4218 = vld [vmem:[#allocation10 + $0x28] sm:$0xff]
    %v4219 = vld [vmem:[#allocation10 + $0x30] sm:$0xff]
    %v4220 = vld [vmem:[#allocation10 + $0x38] sm:$0xff]
    %v4221 = vld [vmem:[#allocation10 + $0x40] sm:$0xff]
    %v4222 = vld [vmem:[#allocation10 + $0x48] sm:$0xff]
    %v4223 = vld [vmem:[#allocation10 + $0x50] sm:$0xff]
    %v4224 = vld [vmem:[#allocation10 + $0x58] sm:$0xff]
    %v4225 = vld [vmem:[#allocation10 + $0x60] sm:$0xff]
    %v4226 = vld [vmem:[#allocation10 + $0x68] sm:$0xff]
    %v4227 = vld [vmem:[#allocation10 + $0x70] sm:$0xff]
    %v4228 = vld [vmem:[#allocation10 + $0x78] sm:$0xff]
    %v4229 = vld [vmem:[#allocation10 + $0x80] sm:$0xff]
    %v4230 = vld [vmem:[#allocation10 + $0x88] sm:$0xff]
    %v4231 = vld [vmem:[#allocation10 + $0x90] sm:$0xff]
    %v4232 = vld [vmem:[#allocation10 + $0x98] sm:$0xff]
    %v4233 = vld [vmem:[#allocation10 + $0xa0] sm:$0xff]
    %v4234 = vld [vmem:[#allocation10 + $0xa8] sm:$0xff]
    %v4235 = vld [vmem:[#allocation10 + $0xb0] sm:$0xff]
    %v4236 = vld [vmem:[#allocation10 + $0xb8] sm:$0xff]
    %v4237 = vld [vmem:[#allocation10 + $0xc0] sm:$0xff]
    %v4238 = vld [vmem:[#allocation10 + $0xc8] sm:$0xff]
    %v4239 = vld [vmem:[#allocation10 + $0xd0] sm:$0xff]
    %v4240 = vld [vmem:[#allocation10 + $0xd8] sm:$0xff]
    %v4241 = vld [vmem:[#allocation10 + $0xe0] sm:$0xff]
    %v4242 = vld [vmem:[#allocation10 + $0xe8] sm:$0xff]
    %v4243 = vld [vmem:[#allocation10 + $0xf0] sm:$0xff]
    %v4244 = vld [vmem:[#allocation10 + $0xf8] sm:$0xff]
    %v4245 = vld [vmem:[#allocation10 + $0x100] sm:$0xff]
    %v4246 = vld [vmem:[#allocation10 + $0x108] sm:$0xff]
    %v4247 = vld [vmem:[#allocation10 + $0x110] sm:$0xff]
    %v4248 = vld [vmem:[#allocation10 + $0x118] sm:$0xff]
    %v4249 = vld [vmem:[#allocation10 + $0x120] sm:$0xff]
    %v4250 = vld [vmem:[#allocation10 + $0x128] sm:$0xff]
    %v4251 = vld [vmem:[#allocation10 + $0x130] sm:$0xff]
    %v4252 = vld [vmem:[#allocation10 + $0x138] sm:$0xff]
    %v4253 = vld [vmem:[#allocation10 + $0x140] sm:$0xff]
    %v4254 = vld [vmem:[#allocation10 + $0x148] sm:$0xff]
    %v4255 = vld [vmem:[#allocation10 + $0x150] sm:$0xff]
    %v4256 = vld [vmem:[#allocation10 + $0x158] sm:$0xff]
    %v4257 = vld [vmem:[#allocation10 + $0x160] sm:$0xff]
    %v4258 = vld [vmem:[#allocation10 + $0x168] sm:$0xff]
    %v4259 = vld [vmem:[#allocation10 + $0x170] sm:$0xff]
    %v4260 = vld [vmem:[#allocation10 + $0x178] sm:$0xff]
    %4261 = vmatprep.subr.mxu0 %v4214
    %4262 = vmatpush1.msra.mxu0 %v4213
    %4263 = vmatprep.subr.mxu0 %v4217
    %4264 = vmatpush1.msra.mxu0 %v4216
    %4265 = vmatprep.subr.mxu0 %v4220
    %4266 = vmatpush1.msra.mxu0 %v4219
    %4267 = vmatprep.subr.mxu0 %v4223
    %4268 = vmatpush1.msra.mxu0 %v4222
    %4269 = vmatprep.subr.mxu0 %v4226
    %4270 = vmatpush1.msra.mxu0 %v4225
    %4271 = vmatprep.subr.mxu0 %v4229
    %4272 = vmatpush1.msra.mxu0 %v4228
    %4273 = vmatprep.subr.mxu0 %v4232
    %4274 = vmatpush1.msra.mxu0 %v4231
    %4275 = vmatprep.subr.mxu0 %v4235
    %4276 = vmatpush1.msra.mxu0 %v4234
    %4277 = vmatprep.subr.mxu0 %v4238
    %4278 = vmatpush1.msra.mxu0 %v4237
    %4279 = vmatprep.subr.mxu0 %v4241
    %4280 = vmatpush1.msra.mxu0 %v4240
    %4281 = vmatprep.subr.mxu0 %v4244
    %4282 = vmatpush1.msra.mxu0 %v4243
    %4283 = vmatprep.subr.mxu0 %v4247
    %4284 = vmatpush1.msra.mxu0 %v4246
    %4285 = vmatprep.subr.mxu0 %v4250
    %4286 = vmatpush1.msra.mxu0 %v4249
    %4287 = vmatprep.subr.mxu0 %v4253
    %4288 = vmatpush1.msra.mxu0 %v4252
    %4289 = vmatprep.subr.mxu0 %v4256
    %4290 = vmatpush1.msra.mxu0 %v4255
    %4291 = vmatprep.subr.mxu0 %v4259
    %4292 = vmatpush1.msra.mxu0 %v4258
    %4293 = vmatprep.subr.mxu0 0.0
    %4294 = vmatpush1.msra.mxu0 0.0
    %4295 = vmatprep.subr.mxu0 0.0
    %4296 = vmatpush1.msra.mxu0 0.0
    %4297 = vmatprep.subr.mxu0 0.0
    %4298 = vmatpush1.msra.mxu0 0.0
    %4299 = vmatprep.subr.mxu0 0.0
    %4300 = vmatpush1.msra.mxu0 0.0
    %4301 = vmatprep.subr.mxu0 0.0
    %4302 = vmatpush1.msra.mxu0 0.0
    %4303 = vmatprep.subr.mxu0 0.0
    %4304 = vmatpush1.msra.mxu0 0.0
    %4305 = vmatprep.subr.mxu0 0.0
    %4306 = vmatpush1.msra.mxu0 0.0
    %4307 = vmatprep.subr.mxu0 0.0
    %4308 = vmatpush1.msra.mxu0 0.0
    %4309 = vmatprep.subr.mxu0 0.0
    %4310 = vmatpush1.msra.mxu0 0.0
    %4311 = vmatprep.subr.mxu0 0.0
    %4312 = vmatpush1.msra.mxu0 0.0
    %4313 = vmatprep.subr.mxu0 0.0
    %4314 = vmatpush1.msra.mxu0 0.0
    %4315 = vmatprep.subr.mxu0 0.0
    %4316 = vmatpush1.msra.mxu0 0.0
    %4317 = vmatprep.subr.mxu0 0.0
    %4318 = vmatpush1.msra.mxu0 0.0
    %4319 = vmatprep.subr.mxu0 0.0
    %4320 = vmatpush1.msra.mxu0 0.0
    %4321 = vmatprep.subr.mxu0 0.0
    %4322 = vmatpush1.msra.mxu0 0.0
    %4323 = vmatprep.subr.mxu0 0.0
    %4324 = vmatpush1.msra.mxu0 0.0
    %4325 = vmatprep.mubr.f32.mxu0 0.0
    %4326 = vmatmul.mubr.f32.gmra.mrb[0].mxu0 %v4207
    %v4327 = vpop.f32.mrb[0].mxu0
    %v4328 = vadd.f32 %v2322, %v4327
    %v4329 = vpop.f32.mrb[0].mxu0
    %v4330 = vadd.f32 %v2326, %v4329
    %4331 = vdwg.mxu0
    %4332 = vmatprep.subr.mxu0 0.0
    %4333 = vmatpush1.msra.mxu0 %v4215
    %4334 = vmatprep.subr.mxu0 0.0
    %4335 = vmatpush1.msra.mxu0 %v4218
    %4336 = vmatprep.subr.mxu0 0.0
    %4337 = vmatpush1.msra.mxu0 %v4221
    %4338 = vmatprep.subr.mxu0 0.0
    %4339 = vmatpush1.msra.mxu0 %v4224
    %4340 = vmatprep.subr.mxu0 0.0
    %4341 = vmatpush1.msra.mxu0 %v4227
    %4342 = vmatprep.subr.mxu0 0.0
    %4343 = vmatpush1.msra.mxu0 %v4230
    %4344 = vmatprep.subr.mxu0 0.0
    %4345 = vmatpush1.msra.mxu0 %v4233
    %4346 = vmatprep.subr.mxu0 0.0
    %4347 = vmatpush1.msra.mxu0 %v4236
    %4348 = vmatprep.subr.mxu0 0.0
    %4349 = vmatpush1.msra.mxu0 %v4239
    %4350 = vmatprep.subr.mxu0 0.0
    %4351 = vmatpush1.msra.mxu0 %v4242
    %4352 = vmatprep.subr.mxu0 0.0
    %4353 = vmatpush1.msra.mxu0 %v4245
    %4354 = vmatprep.subr.mxu0 0.0
    %4355 = vmatpush1.msra.mxu0 %v4248
    %4356 = vmatprep.subr.mxu0 0.0
    %4357 = vmatpush1.msra.mxu0 %v4251
    %4358 = vmatprep.subr.mxu0 0.0
    %4359 = vmatpush1.msra.mxu0 %v4254
    %4360 = vmatprep.subr.mxu0 0.0
    %4361 = vmatpush1.msra.mxu0 %v4257
    %4362 = vmatprep.subr.mxu0 0.0
    %4363 = vmatpush1.msra.mxu0 %v4260
    %4364 = vmatprep.subr.mxu0 0.0
    %4365 = vmatpush1.msra.mxu0 0.0
    %4366 = vmatprep.subr.mxu0 0.0
    %4367 = vmatpush1.msra.mxu0 0.0
    %4368 = vmatprep.subr.mxu0 0.0
    %4369 = vmatpush1.msra.mxu0 0.0
    %4370 = vmatprep.subr.mxu0 0.0
    %4371 = vmatpush1.msra.mxu0 0.0
    %4372 = vmatprep.subr.mxu0 0.0
    %4373 = vmatpush1.msra.mxu0 0.0
    %4374 = vmatprep.subr.mxu0 0.0
    %4375 = vmatpush1.msra.mxu0 0.0
    %4376 = vmatprep.subr.mxu0 0.0
    %4377 = vmatpush1.msra.mxu0 0.0
    %4378 = vmatprep.subr.mxu0 0.0
    %4379 = vmatpush1.msra.mxu0 0.0
    %4380 = vmatprep.subr.mxu0 0.0
    %4381 = vmatpush1.msra.mxu0 0.0
    %4382 = vmatprep.subr.mxu0 0.0
    %4383 = vmatpush1.msra.mxu0 0.0
    %4384 = vmatprep.subr.mxu0 0.0
    %4385 = vmatpush1.msra.mxu0 0.0
    %4386 = vmatprep.subr.mxu0 0.0
    %4387 = vmatpush1.msra.mxu0 0.0
    %4388 = vmatprep.subr.mxu0 0.0
    %4389 = vmatpush1.msra.mxu0 0.0
    %4390 = vmatprep.subr.mxu0 0.0
    %4391 = vmatpush1.msra.mxu0 0.0
    %4392 = vmatprep.subr.mxu0 0.0
    %4393 = vmatpush1.msra.mxu0 0.0
    %4394 = vmatprep.subr.mxu0 0.0
    %4395 = vmatpush1.msra.mxu0 0.0
    %4396 = vmatprep.mubr.f32.mxu0 0.0
    %4397 = vmatmul.mubr.f32.gmra.mrb[0].mxu0 %v4207
    %v4398 = vpop.f32.mrb[0].mxu0
    %v4399 = vadd.f32 %v2330, %v4398
    %v4400 = vpop.f32.mrb[0].mxu0
    %4401 = vdwg.mxu0
    %v4402 = vadd.f32 %v4210, %v4328
    %v4403 = vxor.u32 %v4402, 2147483648
    %v4404 = vmul.f32 %v4403, 1.442695
    %v4405 = vpow.pop %v4404
    %v4406 = vadd.f32 %v4405, 1.0
    %v4407 = vrcp.pop %v4406
    %v4408 = vmul.f32 1.0, %v4407
    %v4409 = vadd.f32 %v4211, %v4330
    %v4410 = vxor.u32 %v4409, 2147483648
    %v4411 = vmul.f32 %v4410, 1.442695
    %v4412 = vpow.pop %v4411
    %v4413 = vadd.f32 %v4412, 1.0
    %v4414 = vrcp.pop %v4413
    %v4415 = vmul.f32 1.0, %v4414
    %v4416 = vmul.f32 %v4408, %v4399
    %v4417 = vadd.f32 %v4212, %v4416
    %v4418 = vtanh.pop %v4417
    %v4419 = vsub.f32 1.0, %v4415
    %v4420 = vmul.f32 %v4419, %v4418
    %v4421 = vmul.f32 %v4415, %v4207
    %v4422 = vadd.f32 %v4420, %v4421
    %s4423 = scalar_lea.vmem [#allocation3], 48
    %4424 = vst [vmem:[%s4423] sm:$0xff] %v4422
    %v4425 = vld [vmem:[%s2083] sm:$0xff]
    %v4426 = vld [vmem:[%s2083 + $0x8] sm:$0xff]
    %v4427 = vld [vmem:[%s2083 + $0x10] sm:$0xff]
    %v4428 = vld [vmem:[#allocation10] sm:$0xff]
    %v4429 = vld [vmem:[#allocation10 + $0x8] sm:$0xff]
    %v4430 = vld [vmem:[#allocation10 + $0x10] sm:$0xff]
    %v4431 = vld [vmem:[#allocation10 + $0x18] sm:$0xff]
    %v4432 = vld [vmem:[#allocation10 + $0x20] sm:$0xff]
    %v4433 = vld [vmem:[#allocation10 + $0x28] sm:$0xff]
    %v4434 = vld [vmem:[#allocation10 + $0x30] sm:$0xff]
    %v4435 = vld [vmem:[#allocation10 + $0x38] sm:$0xff]
    %v4436 = vld [vmem:[#allocation10 + $0x40] sm:$0xff]
    %v4437 = vld [vmem:[#allocation10 + $0x48] sm:$0xff]
    %v4438 = vld [vmem:[#allocation10 + $0x50] sm:$0xff]
    %v4439 = vld [vmem:[#allocation10 + $0x58] sm:$0xff]
    %v4440 = vld [vmem:[#allocation10 + $0x60] sm:$0xff]
    %v4441 = vld [vmem:[#allocation10 + $0x68] sm:$0xff]
    %v4442 = vld [vmem:[#allocation10 + $0x70] sm:$0xff]
    %v4443 = vld [vmem:[#allocation10 + $0x78] sm:$0xff]
    %v4444 = vld [vmem:[#allocation10 + $0x80] sm:$0xff]
    %v4445 = vld [vmem:[#allocation10 + $0x88] sm:$0xff]
    %v4446 = vld [vmem:[#allocation10 + $0x90] sm:$0xff]
    %v4447 = vld [vmem:[#allocation10 + $0x98] sm:$0xff]
    %v4448 = vld [vmem:[#allocation10 + $0xa0] sm:$0xff]
    %v4449 = vld [vmem:[#allocation10 + $0xa8] sm:$0xff]
    %v4450 = vld [vmem:[#allocation10 + $0xb0] sm:$0xff]
    %v4451 = vld [vmem:[#allocation10 + $0xb8] sm:$0xff]
    %v4452 = vld [vmem:[#allocation10 + $0xc0] sm:$0xff]
    %v4453 = vld [vmem:[#allocation10 + $0xc8] sm:$0xff]
    %v4454 = vld [vmem:[#allocation10 + $0xd0] sm:$0xff]
    %v4455 = vld [vmem:[#allocation10 + $0xd8] sm:$0xff]
    %v4456 = vld [vmem:[#allocation10 + $0xe0] sm:$0xff]
    %v4457 = vld [vmem:[#allocation10 + $0xe8] sm:$0xff]
    %v4458 = vld [vmem:[#allocation10 + $0xf0] sm:$0xff]
    %v4459 = vld [vmem:[#allocation10 + $0xf8] sm:$0xff]
    %v4460 = vld [vmem:[#allocation10 + $0x100] sm:$0xff]
    %v4461 = vld [vmem:[#allocation10 + $0x108] sm:$0xff]
    %v4462 = vld [vmem:[#allocation10 + $0x110] sm:$0xff]
    %v4463 = vld [vmem:[#allocation10 + $0x118] sm:$0xff]
    %v4464 = vld [vmem:[#allocation10 + $0x120] sm:$0xff]
    %v4465 = vld [vmem:[#allocation10 + $0x128] sm:$0xff]
    %v4466 = vld [vmem:[#allocation10 + $0x130] sm:$0xff]
    %v4467 = vld [vmem:[#allocation10 + $0x138] sm:$0xff]
    %v4468 = vld [vmem:[#allocation10 + $0x140] sm:$0xff]
    %v4469 = vld [vmem:[#allocation10 + $0x148] sm:$0xff]
    %v4470 = vld [vmem:[#allocation10 + $0x150] sm:$0xff]
    %v4471 = vld [vmem:[#allocation10 + $0x158] sm:$0xff]
    %v4472 = vld [vmem:[#allocation10 + $0x160] sm:$0xff]
    %v4473 = vld [vmem:[#allocation10 + $0x168] sm:$0xff]
    %v4474 = vld [vmem:[#allocation10 + $0x170] sm:$0xff]
    %v4475 = vld [vmem:[#allocation10 + $0x178] sm:$0xff]
    %4476 = vmatprep.subr.mxu0 %v4429
    %4477 = vmatpush1.msra.mxu0 %v4428
    %4478 = vmatprep.subr.mxu0 %v4432
    %4479 = vmatpush1.msra.mxu0 %v4431
    %4480 = vmatprep.subr.mxu0 %v4435
    %4481 = vmatpush1.msra.mxu0 %v4434
    %4482 = vmatprep.subr.mxu0 %v4438
    %4483 = vmatpush1.msra.mxu0 %v4437
    %4484 = vmatprep.subr.mxu0 %v4441
    %4485 = vmatpush1.msra.mxu0 %v4440
    %4486 = vmatprep.subr.mxu0 %v4444
    %4487 = vmatpush1.msra.mxu0 %v4443
    %4488 = vmatprep.subr.mxu0 %v4447
    %4489 = vmatpush1.msra.mxu0 %v4446
    %4490 = vmatprep.subr.mxu0 %v4450
    %4491 = vmatpush1.msra.mxu0 %v4449
    %4492 = vmatprep.subr.mxu0 %v4453
    %4493 = vmatpush1.msra.mxu0 %v4452
    %4494 = vmatprep.subr.mxu0 %v4456
    %4495 = vmatpush1.msra.mxu0 %v4455
    %4496 = vmatprep.subr.mxu0 %v4459
    %4497 = vmatpush1.msra.mxu0 %v4458
    %4498 = vmatprep.subr.mxu0 %v4462
    %4499 = vmatpush1.msra.mxu0 %v4461
    %4500 = vmatprep.subr.mxu0 %v4465
    %4501 = vmatpush1.msra.mxu0 %v4464
    %4502 = vmatprep.subr.mxu0 %v4468
    %4503 = vmatpush1.msra.mxu0 %v4467
    %4504 = vmatprep.subr.mxu0 %v4471
    %4505 = vmatpush1.msra.mxu0 %v4470
    %4506 = vmatprep.subr.mxu0 %v4474
    %4507 = vmatpush1.msra.mxu0 %v4473
    %4508 = vmatprep.subr.mxu0 0.0
    %4509 = vmatpush1.msra.mxu0 0.0
    %4510 = vmatprep.subr.mxu0 0.0
    %4511 = vmatpush1.msra.mxu0 0.0
    %4512 = vmatprep.subr.mxu0 0.0
    %4513 = vmatpush1.msra.mxu0 0.0
    %4514 = vmatprep.subr.mxu0 0.0
    %4515 = vmatpush1.msra.mxu0 0.0
    %4516 = vmatprep.subr.mxu0 0.0
    %4517 = vmatpush1.msra.mxu0 0.0
    %4518 = vmatprep.subr.mxu0 0.0
    %4519 = vmatpush1.msra.mxu0 0.0
    %4520 = vmatprep.subr.mxu0 0.0
    %4521 = vmatpush1.msra.mxu0 0.0
    %4522 = vmatprep.subr.mxu0 0.0
    %4523 = vmatpush1.msra.mxu0 0.0
    %4524 = vmatprep.subr.mxu0 0.0
    %4525 = vmatpush1.msra.mxu0 0.0
    %4526 = vmatprep.subr.mxu0 0.0
    %4527 = vmatpush1.msra.mxu0 0.0
    %4528 = vmatprep.subr.mxu0 0.0
    %4529 = vmatpush1.msra.mxu0 0.0
    %4530 = vmatprep.subr.mxu0 0.0
    %4531 = vmatpush1.msra.mxu0 0.0
    %4532 = vmatprep.subr.mxu0 0.0
    %4533 = vmatpush1.msra.mxu0 0.0
    %4534 = vmatprep.subr.mxu0 0.0
    %4535 = vmatpush1.msra.mxu0 0.0
    %4536 = vmatprep.subr.mxu0 0.0
    %4537 = vmatpush1.msra.mxu0 0.0
    %4538 = vmatprep.subr.mxu0 0.0
    %4539 = vmatpush1.msra.mxu0 0.0
    %4540 = vmatprep.mubr.f32.mxu0 0.0
    %4541 = vmatmul.mubr.f32.gmra.mrb[0].mxu0 %v4422
    %v4542 = vpop.f32.mrb[0].mxu0
    %v4543 = vadd.f32 %v2322, %v4542
    %v4544 = vpop.f32.mrb[0].mxu0
    %v4545 = vadd.f32 %v2326, %v4544
    %4546 = vdwg.mxu0
    %4547 = vmatprep.subr.mxu0 0.0
    %4548 = vmatpush1.msra.mxu0 %v4430
    %4549 = vmatprep.subr.mxu0 0.0
    %4550 = vmatpush1.msra.mxu0 %v4433
    %4551 = vmatprep.subr.mxu0 0.0
    %4552 = vmatpush1.msra.mxu0 %v4436
    %4553 = vmatprep.subr.mxu0 0.0
    %4554 = vmatpush1.msra.mxu0 %v4439
    %4555 = vmatprep.subr.mxu0 0.0
    %4556 = vmatpush1.msra.mxu0 %v4442
    %4557 = vmatprep.subr.mxu0 0.0
    %4558 = vmatpush1.msra.mxu0 %v4445
    %4559 = vmatprep.subr.mxu0 0.0
    %4560 = vmatpush1.msra.mxu0 %v4448
    %4561 = vmatprep.subr.mxu0 0.0
    %4562 = vmatpush1.msra.mxu0 %v4451
    %4563 = vmatprep.subr.mxu0 0.0
    %4564 = vmatpush1.msra.mxu0 %v4454
    %4565 = vmatprep.subr.mxu0 0.0
    %4566 = vmatpush1.msra.mxu0 %v4457
    %4567 = vmatprep.subr.mxu0 0.0
    %4568 = vmatpush1.msra.mxu0 %v4460
    %4569 = vmatprep.subr.mxu0 0.0
    %4570 = vmatpush1.msra.mxu0 %v4463
    %4571 = vmatprep.subr.mxu0 0.0
    %4572 = vmatpush1.msra.mxu0 %v4466
    %4573 = vmatprep.subr.mxu0 0.0
    %4574 = vmatpush1.msra.mxu0 %v4469
    %4575 = vmatprep.subr.mxu0 0.0
    %4576 = vmatpush1.msra.mxu0 %v4472
    %4577 = vmatprep.subr.mxu0 0.0
    %4578 = vmatpush1.msra.mxu0 %v4475
    %4579 = vmatprep.subr.mxu0 0.0
    %4580 = vmatpush1.msra.mxu0 0.0
    %4581 = vmatprep.subr.mxu0 0.0
    %4582 = vmatpush1.msra.mxu0 0.0
    %4583 = vmatprep.subr.mxu0 0.0
    %4584 = vmatpush1.msra.mxu0 0.0
    %4585 = vmatprep.subr.mxu0 0.0
    %4586 = vmatpush1.msra.mxu0 0.0
    %4587 = vmatprep.subr.mxu0 0.0
    %4588 = vmatpush1.msra.mxu0 0.0
    %4589 = vmatprep.subr.mxu0 0.0
    %4590 = vmatpush1.msra.mxu0 0.0
    %4591 = vmatprep.subr.mxu0 0.0
    %4592 = vmatpush1.msra.mxu0 0.0
    %4593 = vmatprep.subr.mxu0 0.0
    %4594 = vmatpush1.msra.mxu0 0.0
    %4595 = vmatprep.subr.mxu0 0.0
    %4596 = vmatpush1.msra.mxu0 0.0
    %4597 = vmatprep.subr.mxu0 0.0
    %4598 = vmatpush1.msra.mxu0 0.0
    %4599 = vmatprep.subr.mxu0 0.0
    %4600 = vmatpush1.msra.mxu0 0.0
    %4601 = vmatprep.subr.mxu0 0.0
    %4602 = vmatpush1.msra.mxu0 0.0
    %4603 = vmatprep.subr.mxu0 0.0
    %4604 = vmatpush1.msra.mxu0 0.0
    %4605 = vmatprep.subr.mxu0 0.0
    %4606 = vmatpush1.msra.mxu0 0.0
    %4607 = vmatprep.subr.mxu0 0.0
    %4608 = vmatpush1.msra.mxu0 0.0
    %4609 = vmatprep.subr.mxu0 0.0
    %4610 = vmatpush1.msra.mxu0 0.0
    %4611 = vmatprep.mubr.f32.mxu0 0.0
    %4612 = vmatmul.mubr.f32.gmra.mrb[0].mxu0 %v4422
    %v4613 = vpop.f32.mrb[0].mxu0
    %v4614 = vadd.f32 %v2330, %v4613
    %v4615 = vpop.f32.mrb[0].mxu0
    %4616 = vdwg.mxu0
    %v4617 = vadd.f32 %v4425, %v4543
    %v4618 = vxor.u32 %v4617, 2147483648
    %v4619 = vmul.f32 %v4618, 1.442695
    %v4620 = vpow.pop %v4619
    %v4621 = vadd.f32 %v4620, 1.0
    %v4622 = vrcp.pop %v4621
    %v4623 = vmul.f32 1.0, %v4622
    %v4624 = vadd.f32 %v4426, %v4545
    %v4625 = vxor.u32 %v4624, 2147483648
    %v4626 = vmul.f32 %v4625, 1.442695
    %v4627 = vpow.pop %v4626
    %v4628 = vadd.f32 %v4627, 1.0
    %v4629 = vrcp.pop %v4628
    %v4630 = vmul.f32 1.0, %v4629
    %v4631 = vmul.f32 %v4623, %v4614
    %v4632 = vadd.f32 %v4427, %v4631
    %v4633 = vtanh.pop %v4632
    %v4634 = vsub.f32 1.0, %v4630
    %v4635 = vmul.f32 %v4634, %v4633
    %v4636 = vmul.f32 %v4630, %v4422
    %v4637 = vadd.f32 %v4635, %v4636
    %s4638 = scalar_lea.vmem [#allocation3], 56
    %4639 = vst [vmem:[%s4638] sm:$0xff] %v4637
    %v4640 = vld [vmem:[#allocation3 + $0x20] sm:$0xff]
    %v4641 = vld [vmem:[#allocation3 + $0x28] sm:$0xff]
    %v4642 = vld [vmem:[#allocation3 + $0x30] sm:$0xff]
    %v4643 = vld [vmem:[#allocation3 + $0x38] sm:$0xff]
    %v4644 = vld [vmem:[#allocation11] sm:$0xff]
    %v4645 = vld [vmem:[#allocation11 + $0x8] sm:$0xff]
    %v4646 = vld [vmem:[#allocation11 + $0x10] sm:$0xff]
    %v4647 = vld [vmem:[#allocation11 + $0x18] sm:$0xff]
    %v4648 = vld [vmem:[#allocation11 + $0x20] sm:$0xff]
    %v4649 = vld [vmem:[#allocation11 + $0x28] sm:$0xff]
    %v4650 = vld [vmem:[#allocation11 + $0x30] sm:$0xff]
    %v4651 = vld [vmem:[#allocation11 + $0x38] sm:$0xff]
    %v4652 = vld [vmem:[#allocation11 + $0x40] sm:$0xff]
    %v4653 = vld [vmem:[#allocation11 + $0x48] sm:$0xff]
    %v4654 = vld [vmem:[#allocation11 + $0x50] sm:$0xff]
    %v4655 = vld [vmem:[#allocation11 + $0x58] sm:$0xff]
    %v4656 = vld [vmem:[#allocation11 + $0x60] sm:$0xff]
    %v4657 = vld [vmem:[#allocation11 + $0x68] sm:$0xff]
    %v4658 = vld [vmem:[#allocation11 + $0x70] sm:$0xff]
    %v4659 = vld [vmem:[#allocation11 + $0x78] sm:$0xff]
    %4660 = vmatprep.subr.mxu0 0.0
    %4661 = vmatpush1.msra.mxu0 %v4644
    %4662 = vmatprep.subr.mxu0 0.0
    %4663 = vmatpush1.msra.mxu0 %v4645
    %4664 = vmatprep.subr.mxu0 0.0
    %4665 = vmatpush1.msra.mxu0 %v4646
    %4666 = vmatprep.subr.mxu0 0.0
    %4667 = vmatpush1.msra.mxu0 %v4647
    %4668 = vmatprep.subr.mxu0 0.0
    %4669 = vmatpush1.msra.mxu0 %v4648
    %4670 = vmatprep.subr.mxu0 0.0
    %4671 = vmatpush1.msra.mxu0 %v4649
    %4672 = vmatprep.subr.mxu0 0.0
    %4673 = vmatpush1.msra.mxu0 %v4650
    %4674 = vmatprep.subr.mxu0 0.0
    %4675 = vmatpush1.msra.mxu0 %v4651
    %4676 = vmatprep.subr.mxu0 0.0
    %4677 = vmatpush1.msra.mxu0 %v4652
    %4678 = vmatprep.subr.mxu0 0.0
    %4679 = vmatpush1.msra.mxu0 %v4653
    %4680 = vmatprep.subr.mxu0 0.0
    %4681 = vmatpush1.msra.mxu0 %v4654
    %4682 = vmatprep.subr.mxu0 0.0
    %4683 = vmatpush1.msra.mxu0 %v4655
    %4684 = vmatprep.subr.mxu0 0.0
    %4685 = vmatpush1.msra.mxu0 %v4656
    %4686 = vmatprep.subr.mxu0 0.0
    %4687 = vmatpush1.msra.mxu0 %v4657
    %4688 = vmatprep.subr.mxu0 0.0
    %4689 = vmatpush1.msra.mxu0 %v4658
    %4690 = vmatprep.subr.mxu0 0.0
    %4691 = vmatpush1.msra.mxu0 %v4659
    %4692 = vmatprep.subr.mxu0 0.0
    %4693 = vmatpush1.msra.mxu0 0.0
    %4694 = vmatprep.subr.mxu0 0.0
    %4695 = vmatpush1.msra.mxu0 0.0
    %4696 = vmatprep.subr.mxu0 0.0
    %4697 = vmatpush1.msra.mxu0 0.0
    %4698 = vmatprep.subr.mxu0 0.0
    %4699 = vmatpush1.msra.mxu0 0.0
    %4700 = vmatprep.subr.mxu0 0.0
    %4701 = vmatpush1.msra.mxu0 0.0
    %4702 = vmatprep.subr.mxu0 0.0
    %4703 = vmatpush1.msra.mxu0 0.0
    %4704 = vmatprep.subr.mxu0 0.0
    %4705 = vmatpush1.msra.mxu0 0.0
    %4706 = vmatprep.subr.mxu0 0.0
    %4707 = vmatpush1.msra.mxu0 0.0
    %4708 = vmatprep.subr.mxu0 0.0
    %4709 = vmatpush1.msra.mxu0 0.0
    %4710 = vmatprep.subr.mxu0 0.0
    %4711 = vmatpush1.msra.mxu0 0.0
    %4712 = vmatprep.subr.mxu0 0.0
    %4713 = vmatpush1.msra.mxu0 0.0
    %4714 = vmatprep.subr.mxu0 0.0
    %4715 = vmatpush1.msra.mxu0 0.0
    %4716 = vmatprep.subr.mxu0 0.0
    %4717 = vmatpush1.msra.mxu0 0.0
    %4718 = vmatprep.subr.mxu0 0.0
    %4719 = vmatpush1.msra.mxu0 0.0
    %4720 = vmatprep.subr.mxu0 0.0
    %4721 = vmatpush1.msra.mxu0 0.0
    %4722 = vmatprep.subr.mxu0 0.0
    %4723 = vmatpush1.msra.mxu0 0.0
    %4724 = vmatprep.mubr.f32.mxu0 0.0
    %4725 = vmatmul.mubr.f32.gmra.mrb[0].mxu0 %v4640
    %v4726 = vpop.f32.mrb[0].mxu0
    %v4727 = vadd.f32 %v105, %v4726
    %v4728 = vpop.f32.mrb[0].mxu0
    %4729 = vmatprep.mubr.f32.mxu0 0.0
    %4730 = vmatmul.mubr.f32.gmra.mrb[0].mxu0 %v4641
    %v4731 = vpop.f32.mrb[0].mxu0
    %v4732 = vadd.f32 %v105, %v4731
    %v4733 = vpop.f32.mrb[0].mxu0
    %4734 = vmatprep.mubr.f32.mxu0 0.0
    %4735 = vmatmul.mubr.f32.gmra.mrb[0].mxu0 %v4642
    %v4736 = vpop.f32.mrb[0].mxu0
    %v4737 = vadd.f32 %v105, %v4736
    %v4738 = vpop.f32.mrb[0].mxu0
    %4739 = vmatprep.mubr.f32.mxu0 0.0
    %4740 = vmatmul.mubr.f32.gmra.mrb[0].mxu0 %v4643
    %v4741 = vpop.f32.mrb[0].mxu0
    %v4742 = vadd.f32 %v105, %v4741
    %v4743 = vpop.f32.mrb[0].mxu0
    %4744 = vdwg.mxu0
    %4745 = vst [vmem:[#allocation13 + $0x20] sm:$0xff] %v4727
    %4746 = vst [vmem:[#allocation13 + $0x28] sm:$0xff] %v4732
    %4747 = vst [vmem:[#allocation13 + $0x30] sm:$0xff] %v4737
    %4748 = vst [vmem:[#allocation13 + $0x38] sm:$0xff] %v4742
    %s4749 = scalar_lea.vmem [#allocation14], 8
    %4750 = vst [vmem:[%s4749] sm:$0xff] %v4637
    // Predicated region
    $region66: #{tpu_custom_call.1} parent=1 // pred_check
      _
    $region67: #{tpu_custom_call.1} parent=1 // pred_check_branch
      %4752 = sbr.rel (0) target = $region69
    $region68: #{tpu_custom_call.1} parent=1 // pred_region
      %s4754 = ssub.s32 1024, 1024
      %4755 = vsyncadd [#allocation7], %s4754
      %s4756 = sshll.u32 [#allocation13], 4
      %s4757 = int_to_ptr.vmem [resolvable:$true] %s4756
      %4762 = dma.vmem_to_hbm [thread:$0]  %s4757, 1024, %s12, [#allocation7], 128, 128, 8
    $region69: #{tpu_custom_call.1} parent=1 // pred_fallthru
      _
    // Predicated region
    $region70: #{tpu_custom_call.1} parent=1 // pred_check
      _
    $region71: #{tpu_custom_call.1} parent=1 // pred_check_branch
      %4764 = sbr.rel (0) target = $region73
    $region72: #{tpu_custom_call.1} parent=1 // pred_region
      %s4766 = ssub.s32 256, 256
      %4767 = vsyncadd [#allocation15], %s4766
      %s4768 = sshll.u32 [#allocation14], 4
      %s4769 = int_to_ptr.vmem [resolvable:$true] %s4768
      %4774 = dma.vmem_to_hbm [thread:$0]  %s4769, 256, %s13, [#allocation15], 128, 128, 8
    $region73: #{tpu_custom_call.1} parent=1 // pred_fallthru
      _
    // Predicated region
    $region74: #{tpu_custom_call.1} parent=1 // pred_check
      _
    $region75: #{tpu_custom_call.1} parent=1 // pred_check_branch
      %4776 = sbr.rel (0) target = $region77
    $region76: #{tpu_custom_call.1} parent=1 // pred_region
      %4777 = dma.done [#allocation7], 1024
    $region77: #{tpu_custom_call.1} parent=1 // pred_fallthru
      _
    // Predicated region
    $region78: #{tpu_custom_call.1} parent=1 // pred_check
      _
    $region79: #{tpu_custom_call.1} parent=1 // pred_check_branch
      %4779 = sbr.rel (0) target = $region81
    $region80: #{tpu_custom_call.1} parent=1 // pred_region
      %4780 = dma.done [#allocation15], 256
    $region81: #{tpu_custom_call.1} parent=1 // pred_fallthru
      _
    %4781 = vsyncpa [#allocation6], 1
    %4782 = vsyncpa [#allocation9], 1
    %4783 = vsyncpa [#allocation12], 1
    %4784 = vsyncpa [#allocation7], 1
    %4785 = vsyncpa [#allocation15], 1

</llo_original>
